<compile_context>
chip_gen: v5e
topology: v5e:2x2
jax: 0.10.0
libtpu: 0.0.40
codegen_flags: <defaults>
</compile_context>

<pallas_src>
import functools

import jax
import jax.numpy as jnp
from jax.experimental import pallas as pl
from jax.experimental.pallas import tpu as pltpu


def _round_up(x, m):
    return (x + m - 1) // m * m


# ----------------------------- Pallas kernel --------------------------------

def _repvgg_conv_kernel(*refs, d_tile, H, W, Hp, Wp, c_in, k_pad):
    """One (batch n, depth-tile) step of the fused 3x3x3 conv + bias + ReLU.

    refs layout:
      refs[0 .. d_tile+1] : (1, 1, Hp, Wp, c_in) padded input planes
                            d*d_tile + j, j = 0..d_tile+1 (compute dtype)
      refs[d_tile+2]      : (k_pad, C_OUT_PAD)   im2col-flattened fused weight
      refs[d_tile+3]      : (1, C_OUT_PAD)       fused bias (f32)
      refs[d_tile+4]      : (1, d_tile, H*W, C_OUT_PAD) lane-dense output block
    """
    planes = refs[:d_tile + 2]
    w_ref = refs[d_tile + 2]
    b_ref = refs[d_tile + 3]
    o_ref = refs[d_tile + 4]

    # (d_tile+2, Hp, Wp, c_in) depth window, built directly in the compute
    # dtype (no f32 round trip for the im2col build).
    win = jnp.concatenate(
        [p[...].reshape(1, Hp, Wp, c_in) for p in planes], axis=0)

    # im2col: for every output voxel of the (d_tile, H, W) tile, its 27*c_in
    # receptive-field vector, ordered (kd, kh, kw, ci) to match the weight
    # layout.  One tap slice covers all d_tile output depths at once.
    pieces = []
    for kd in range(3):
        for kh in range(3):
            for kw in range(3):
                pieces.append(win[kd:kd + d_tile, kh:kh + H, kw:kw + W, :])
    kc = 27 * c_in
    if k_pad > kc:  # pad K to a multiple of 128 -> unmasked MXU K operand
        pieces.append(jnp.zeros((d_tile, H, W, k_pad - kc), dtype=win.dtype))
    slab = jnp.concatenate(pieces, axis=-1)           # (d_tile, H, W, k_pad)
    slab = slab.reshape(d_tile * H * W, k_pad)        # M = d_tile*H*W

    # Single large-M, large-K MXU matmul with f32 accumulation.
    acc = jnp.dot(slab, w_ref[...], preferred_element_type=jnp.float32)
    acc = acc + b_ref[...]                            # bias (f32)
    out = jnp.maximum(acc, 0.0)                       # ReLU
    o_ref[...] = out.reshape(1, d_tile, H * W, -1).astype(o_ref.dtype)


def repvgg_block_pallas(x_ncdhw, w_eq, b_eq, *, compute_dtype=jnp.float32,
                        out_dtype=jnp.float32, d_tile=None):
    """x_ncdhw: (N, Cin, D, H, W). w_eq: (Cout, Cin, 3, 3, 3). b_eq: (Cout,)."""
    N, C_IN, D, H, W = x_ncdhw.shape
    C_OUT = w_eq.shape[0]
    C_OUT_PAD = _round_up(C_OUT, 128)       # lane-dense, unmasked output stores
    K = 27 * C_IN
    K_PAD = _round_up(K, 128)               # unmasked MXU K operand
    Hp, Wp = H + 2, W + 2
    in_isz = jnp.dtype(compute_dtype).itemsize
    out_isz = jnp.dtype(out_dtype).itemsize

    # Per-step resident VMEM for a candidate depth tile: double-buffered plane
    # inputs and output block, weight + bias, im2col slab, f32 accumulator.
    def vmem_bytes(dt):
        m = dt * H * W
        return ((dt + 2) * 2 * Hp * Wp * C_IN * in_isz     # plane inputs (x2 buf)
                + 2 * K_PAD * C_OUT_PAD * in_isz           # weight block
                + 2 * C_OUT_PAD * 4                        # bias
                + 2 * m * C_OUT_PAD * out_isz              # output block (x2 buf)
                + 2 * m * K_PAD * in_isz                   # slab + relayout slack
                + m * C_OUT_PAD * 4)                       # f32 accumulator

    if d_tile is None:
        # Largest depth tile that divides D and fits a v7x-safe ~40 MiB budget
        # (v5e/v6e have 128 MiB VMEM and simply get extra headroom).
        d_tile = 1
        for cand in (8, 4, 2, 1):
            if D % cand == 0 and vmem_bytes(cand) <= (40 << 20):
                d_tile = cand
                break
    assert D % d_tile == 0, "depth must be divisible by the chosen depth tile"

    est = vmem_bytes(d_tile)
    vmem_limit = int(min(max(3 * est // 2 + (8 << 20), 32 << 20), 96 << 20))

    # NCDHW -> NDHWC (channels on the lane axis) + zero halo pad, cast to the
    # compute dtype (halves HBM->VMEM DMA bytes on the bf16 path).  These fuse
    # into one XLA op under jit.
    # TODO(synk): with a channels-last call site (and in-kernel edge guards)
    # the transposes and the padded full-volume copy could be dropped.
    x = jnp.transpose(x_ncdhw, (0, 2, 3, 4, 1))
    x_pad = jnp.pad(x, ((0, 0), (1, 1), (1, 1), (1, 1), (0, 0)))
    x_pad = x_pad.astype(compute_dtype)

    # (Cout, Cin, kd, kh, kw) -> (kd, kh, kw, Cin, Cout) -> (K_PAD, C_OUT_PAD).
    # Row ordering matches the in-kernel im2col concat order.  Weight is stored
    # in the compute dtype (bf16 on the bf16 path) and stays resident (constant
    # index map) across the whole grid.
    w_t = jnp.transpose(w_eq, (2, 3, 4, 1, 0)).reshape(K, C_OUT)
    w2d = jnp.pad(w_t, ((0, K_PAD - K), (0, C_OUT_PAD - C_OUT)))
    w2d = w2d.astype(compute_dtype)
    b2 = jnp.pad(b_eq, (0, C_OUT_PAD - C_OUT)).reshape(1, C_OUT_PAD)
    b2 = b2.astype(jnp.float32)

    kernel = functools.partial(_repvgg_conv_kernel, d_tile=d_tile, H=H, W=W,
                               Hp=Hp, Wp=Wp, c_in=C_IN, k_pad=K_PAD)

    # Each grid step fetches exactly the d_tile+2 padded planes it needs
    # (d_tile fresh + 2 halo) -- no 3x re-fetch of every plane.
    def plane_spec(j):
        return pl.BlockSpec(
            (1, 1, Hp, Wp, C_IN),
            lambda n, d, j=j, dt=d_tile: (n, d * dt + j, 0, 0, 0))

    n_planes = d_tile + 2
    in_specs = [plane_spec(j) for j in range(n_planes)] + [
        pl.BlockSpec((K_PAD, C_OUT_PAD), lambda n, d: (0, 0)),  # resident weight
        pl.BlockSpec((1, C_OUT_PAD), lambda n, d: (0, 0)),      # resident bias
    ]

    flops = 2 * N * D * H * W * K_PAD * C_OUT_PAD
    bytes_accessed = int(
        N * (D // d_tile) * n_planes * Hp * Wp * C_IN * in_isz
        + K_PAD * C_OUT_PAD * in_isz + C_OUT_PAD * 4
        + N * D * H * W * C_OUT_PAD * out_isz)

    out = pl.pallas_call(
        kernel,
        out_shape=jax.ShapeDtypeStruct((N, D, H * W, C_OUT_PAD), out_dtype),
        grid_spec=pltpu.PrefetchScalarGridSpec(
            num_scalar_prefetch=0,
            grid=(N, D // d_tile),
            in_specs=in_specs,
            out_specs=pl.BlockSpec((1, d_tile, H * W, C_OUT_PAD),
                                   lambda n, d: (n, d, 0, 0)),
        ),
        compiler_params=pltpu.CompilerParams(
            dimension_semantics=("parallel", "parallel"),
            vmem_limit_bytes=vmem_limit),
        cost_estimate=pl.CostEstimate(flops=flops, transcendentals=0,
                                      bytes_accessed=bytes_accessed),
    )(*([x_pad] * n_planes), w2d, b2)

    # Drop channel padding, unflatten spatial, back to NCDHW (fuses under jit).
    out = out[..., :C_OUT].reshape(N, D, H, W, C_OUT)
    return jnp.transpose(out, (0, 4, 1, 2, 3))


# --------------------- parameter setup / BN folding (glue) ------------------

def _fuse_conv_bn(weight, gamma, beta, mean, var, eps=1e-5):
    std = jnp.sqrt(var + eps)
    t = (gamma / std).reshape(-1, 1, 1, 1, 1)
    return weight * t, beta - mean * gamma / std


def build_equivalent_kernel_bias(params, in_channels, out_channels, stride=1):
    # dense 3x3x3 branch
    k3, b3 = _fuse_conv_bn(params["w3"], params["g3"], params["beta3"],
                           params["m3"], params["v3"])
    # 1x1x1 branch, padded to 3x3x3 (value at the center tap)
    k1, b1 = _fuse_conv_bn(params["w1"], params["g1"], params["beta1"],
                           params["m1"], params["v1"])
    k1p = jnp.pad(k1, ((0, 0), (0, 0), (1, 1), (1, 1), (1, 1)))
    k, b = k3 + k1p, b3 + b1
    # identity (BN-only) branch exists only when in==out and stride==1,
    # exactly like rbr_identity in the PyTorch module.
    if out_channels == in_channels and stride == 1:
        idk = jnp.zeros((in_channels, in_channels, 3, 3, 3), jnp.float32)
        idk = idk.at[jnp.arange(in_channels),
                     jnp.arange(in_channels), 1, 1, 1].set(1.0)
        kid, bid = _fuse_conv_bn(idk, params["gid"], params["betaid"],
                                 params["mid"], params["vid"])
        k, b = k + kid, b + bid
    return k, b


def init_params(key, in_channels, out_channels):
    ks = jax.random.split(key, 12)
    p = {
        "w3": jax.random.normal(ks[0], (out_channels, in_channels, 3, 3, 3), jnp.float32) * 0.1,
        "g3": jax.random.uniform(ks[1], (out_channels,), jnp.float32, 0.5, 1.5),
        "beta3": jax.random.normal(ks[2], (out_channels,), jnp.float32) * 0.1,
        "m3": jax.random.normal(ks[3], (out_channels,), jnp.float32) * 0.1,
        "v3": jax.random.uniform(ks[4], (out_channels,), jnp.float32, 0.5, 1.5),
        "w1": jax.random.normal(ks[5], (out_channels, in_channels, 1, 1, 1), jnp.float32) * 0.1,
        "g1": jax.random.uniform(ks[6], (out_channels,), jnp.float32, 0.5, 1.5),
        "beta1": jax.random.normal(ks[7], (out_channels,), jnp.float32) * 0.1,
        "m1": jax.random.normal(ks[8], (out_channels,), jnp.float32) * 0.1,
        "v1": jax.random.uniform(ks[9], (out_channels,), jnp.float32, 0.5, 1.5),
        # identity-branch BN (only used when in_channels == out_channels, stride=1)
        "gid": jax.random.uniform(ks[10], (out_channels,), jnp.float32, 0.5, 1.5),
        "betaid": jax.random.normal(ks[11], (out_channels,), jnp.float32) * 0.1,
        "mid": jnp.zeros((out_channels,), jnp.float32),
        "vid": jnp.ones((out_channels,), jnp.float32),
    }
    return p


def reference_forward(x_ncdhw, w_eq, b_eq):
    out = jax.lax.conv_general_dilated(
        x_ncdhw, w_eq, window_strides=(1, 1, 1), padding=[(1, 1)] * 3,
        dimension_numbers=("NCDHW", "OIDHW", "NCDHW"))
    out = out + b_eq[None, :, None, None, None]
    return jnp.maximum(out, 0.0)


# ---------------------------------- main -------------------------------------

if __name__ == "__main__":
    key = jax.random.PRNGKey(0)
    kx, kp, kp2 = jax.random.split(key, 3)

    N, C, D, H, W = 2, 4, 8, 8, 8            # in_channels == out_channels, stride=1
    x = jax.random.normal(kx, (N, C, D, H, W), jnp.float32)

    # --- case 1: in == out channels (identity BN branch active), f32 path ---
    params = init_params(kp, C, C)
    w_eq, b_eq = build_equivalent_kernel_bias(params, C, C)
    ref = jax.block_until_ready(reference_forward(x, w_eq, b_eq))

    fwd_f32 = jax.jit(functools.partial(repvgg_block_pallas,
                                        compute_dtype=jnp.float32,
                                        out_dtype=jnp.float32))
    out = jax.block_until_ready(fwd_f32(x, w_eq, b_eq))
    assert out.shape == ref.shape == (N, C, D, H, W)
    assert jnp.allclose(out, ref, atol=1e-4, rtol=1e-4), "f32 mismatch vs reference"

    # --- case 2: out != in channels (no identity branch), f32 path ---
    C2 = 8
    params2 = init_params(kp2, C, C2)
    w_eq2, b_eq2 = build_equivalent_kernel_bias(params2, C, C2)
    ref2 = jax.block_until_ready(reference_forward(x, w_eq2, b_eq2))
    out2 = jax.block_until_ready(fwd_f32(x, w_eq2, b_eq2))
    assert out2.shape == ref2.shape == (N, C2, D, H, W)
    assert jnp.allclose(out2, ref2, atol=1e-4, rtol=1e-4), "f32 (Cout!=Cin) mismatch"

    # --- case 3: bf16 MXU fast path (bf16 operands + bf16 output, f32 acc) ---
    fwd_bf16 = jax.jit(functools.partial(repvgg_block_pallas,
                                         compute_dtype=jnp.bfloat16,
                                         out_dtype=jnp.bfloat16))
    out_bf16 = jax.block_until_ready(fwd_bf16(x, w_eq, b_eq))
    x_bf = x.astype(jnp.bfloat16).astype(jnp.float32)
    w_bf = w_eq.astype(jnp.bfloat16).astype(jnp.float32)
    ref_bf = jax.block_until_ready(reference_forward(x_bf, w_bf, b_eq))
    assert out_bf16.dtype == jnp.bfloat16
    assert jnp.allclose(out_bf16.astype(jnp.float32), ref_bf,
                        atol=2e-2, rtol=2e-2), "bf16 mismatch"

    print("KERNEL_OK")
</pallas_src>

<mosaic_0001>
module attributes {stable_mosaic.version = 11 : i64} {
  func.func @_repvgg_conv_kernel(%arg0: i32, %arg1: i32, %arg2: memref<1x1x10x10x4xf32, #tpu.memory_space<vmem>>, %arg3: memref<1x1x10x10x4xf32, #tpu.memory_space<vmem>>, %arg4: memref<1x1x10x10x4xf32, #tpu.memory_space<vmem>>, %arg5: memref<1x1x10x10x4xf32, #tpu.memory_space<vmem>>, %arg6: memref<1x1x10x10x4xf32, #tpu.memory_space<vmem>>, %arg7: memref<1x1x10x10x4xf32, #tpu.memory_space<vmem>>, %arg8: memref<1x1x10x10x4xf32, #tpu.memory_space<vmem>>, %arg9: memref<1x1x10x10x4xf32, #tpu.memory_space<vmem>>, %arg10: memref<1x1x10x10x4xf32, #tpu.memory_space<vmem>>, %arg11: memref<1x1x10x10x4xf32, #tpu.memory_space<vmem>>, %arg12: memref<128x128xf32, #tpu.memory_space<vmem>>, %arg13: memref<1x128xf32, #tpu.memory_space<vmem>>, %arg14: memref<1x8x64x128xf32, #tpu.memory_space<vmem>>) attributes {dimension_semantics = [#tpu.dimension_semantics<parallel>, #tpu.dimension_semantics<parallel>], iteration_bounds = array<i64: 2, 1>, scalar_prefetch = 0 : i64, scratch_operands = 0 : i64, tpu.core_type = #tpu.core_type<tc>, window_params = [{transform_indices = @transform_0, window_bounds = array<i64: 1, 1, 10, 10, 4>}, {transform_indices = @transform_1, window_bounds = array<i64: 1, 1, 10, 10, 4>}, {transform_indices = @transform_2, window_bounds = array<i64: 1, 1, 10, 10, 4>}, {transform_indices = @transform_3, window_bounds = array<i64: 1, 1, 10, 10, 4>}, {transform_indices = @transform_4, window_bounds = array<i64: 1, 1, 10, 10, 4>}, {transform_indices = @transform_5, window_bounds = array<i64: 1, 1, 10, 10, 4>}, {transform_indices = @transform_6, window_bounds = array<i64: 1, 1, 10, 10, 4>}, {transform_indices = @transform_7, window_bounds = array<i64: 1, 1, 10, 10, 4>}, {transform_indices = @transform_8, window_bounds = array<i64: 1, 1, 10, 10, 4>}, {transform_indices = @transform_9, window_bounds = array<i64: 1, 1, 10, 10, 4>}, {pipeline_mode = #tpu.pipeline_mode<synchronous>, transform_indices = @transform_10, window_bounds = array<i64: 128, 128>}, {pipeline_mode = #tpu.pipeline_mode<synchronous>, transform_indices = @transform_11, window_bounds = array<i64: 1, 128>}, {transform_indices = @transform_12, window_bounds = array<i64: 1, 8, 64, 128>}]} {
    %c0 = arith.constant 0 : index
    %c0_0 = arith.constant 0 : index
    %c0_1 = arith.constant 0 : index
    %c0_2 = arith.constant 0 : index
    %c0_3 = arith.constant 0 : index
    %0 = vector.load %arg2[%c0, %c0_0, %c0_1, %c0_2, %c0_3] : memref<1x1x10x10x4xf32, #tpu.memory_space<vmem>>, vector<1x1x10x10x4xf32>
    %1 = vector.shape_cast %0 : vector<1x1x10x10x4xf32> to vector<1x10x10x4xf32>
    %c0_4 = arith.constant 0 : index
    %c0_5 = arith.constant 0 : index
    %c0_6 = arith.constant 0 : index
    %c0_7 = arith.constant 0 : index
    %c0_8 = arith.constant 0 : index
    %2 = vector.load %arg3[%c0_4, %c0_5, %c0_6, %c0_7, %c0_8] : memref<1x1x10x10x4xf32, #tpu.memory_space<vmem>>, vector<1x1x10x10x4xf32>
    %3 = vector.shape_cast %2 : vector<1x1x10x10x4xf32> to vector<1x10x10x4xf32>
    %c0_9 = arith.constant 0 : index
    %c0_10 = arith.constant 0 : index
    %c0_11 = arith.constant 0 : index
    %c0_12 = arith.constant 0 : index
    %c0_13 = arith.constant 0 : index
    %4 = vector.load %arg4[%c0_9, %c0_10, %c0_11, %c0_12, %c0_13] : memref<1x1x10x10x4xf32, #tpu.memory_space<vmem>>, vector<1x1x10x10x4xf32>
    %5 = vector.shape_cast %4 : vector<1x1x10x10x4xf32> to vector<1x10x10x4xf32>
    %c0_14 = arith.constant 0 : index
    %c0_15 = arith.constant 0 : index
    %c0_16 = arith.constant 0 : index
    %c0_17 = arith.constant 0 : index
    %c0_18 = arith.constant 0 : index
    %6 = vector.load %arg5[%c0_14, %c0_15, %c0_16, %c0_17, %c0_18] : memref<1x1x10x10x4xf32, #tpu.memory_space<vmem>>, vector<1x1x10x10x4xf32>
    %7 = vector.shape_cast %6 : vector<1x1x10x10x4xf32> to vector<1x10x10x4xf32>
    %c0_19 = arith.constant 0 : index
    %c0_20 = arith.constant 0 : index
    %c0_21 = arith.constant 0 : index
    %c0_22 = arith.constant 0 : index
    %c0_23 = arith.constant 0 : index
    %8 = vector.load %arg6[%c0_19, %c0_20, %c0_21, %c0_22, %c0_23] : memref<1x1x10x10x4xf32, #tpu.memory_space<vmem>>, vector<1x1x10x10x4xf32>
    %9 = vector.shape_cast %8 : vector<1x1x10x10x4xf32> to vector<1x10x10x4xf32>
    %c0_24 = arith.constant 0 : index
    %c0_25 = arith.constant 0 : index
    %c0_26 = arith.constant 0 : index
    %c0_27 = arith.constant 0 : index
    %c0_28 = arith.constant 0 : index
    %10 = vector.load %arg7[%c0_24, %c0_25, %c0_26, %c0_27, %c0_28] : memref<1x1x10x10x4xf32, #tpu.memory_space<vmem>>, vector<1x1x10x10x4xf32>
    %11 = vector.shape_cast %10 : vector<1x1x10x10x4xf32> to vector<1x10x10x4xf32>
    %c0_29 = arith.constant 0 : index
    %c0_30 = arith.constant 0 : index
    %c0_31 = arith.constant 0 : index
    %c0_32 = arith.constant 0 : index
    %c0_33 = arith.constant 0 : index
    %12 = vector.load %arg8[%c0_29, %c0_30, %c0_31, %c0_32, %c0_33] : memref<1x1x10x10x4xf32, #tpu.memory_space<vmem>>, vector<1x1x10x10x4xf32>
    %13 = vector.shape_cast %12 : vector<1x1x10x10x4xf32> to vector<1x10x10x4xf32>
    %c0_34 = arith.constant 0 : index
    %c0_35 = arith.constant 0 : index
    %c0_36 = arith.constant 0 : index
    %c0_37 = arith.constant 0 : index
    %c0_38 = arith.constant 0 : index
    %14 = vector.load %arg9[%c0_34, %c0_35, %c0_36, %c0_37, %c0_38] : memref<1x1x10x10x4xf32, #tpu.memory_space<vmem>>, vector<1x1x10x10x4xf32>
    %15 = vector.shape_cast %14 : vector<1x1x10x10x4xf32> to vector<1x10x10x4xf32>
    %c0_39 = arith.constant 0 : index
    %c0_40 = arith.constant 0 : index
    %c0_41 = arith.constant 0 : index
    %c0_42 = arith.constant 0 : index
    %c0_43 = arith.constant 0 : index
    %16 = vector.load %arg10[%c0_39, %c0_40, %c0_41, %c0_42, %c0_43] : memref<1x1x10x10x4xf32, #tpu.memory_space<vmem>>, vector<1x1x10x10x4xf32>
    %17 = vector.shape_cast %16 : vector<1x1x10x10x4xf32> to vector<1x10x10x4xf32>
    %c0_44 = arith.constant 0 : index
    %c0_45 = arith.constant 0 : index
    %c0_46 = arith.constant 0 : index
    %c0_47 = arith.constant 0 : index
    %c0_48 = arith.constant 0 : index
    %18 = vector.load %arg11[%c0_44, %c0_45, %c0_46, %c0_47, %c0_48] : memref<1x1x10x10x4xf32, #tpu.memory_space<vmem>>, vector<1x1x10x10x4xf32>
    %19 = vector.shape_cast %18 : vector<1x1x10x10x4xf32> to vector<1x10x10x4xf32>
    %20 = tpu.concatenate %1, %3, %5, %7, %9, %11, %13, %15, %17, %19 in 0 : vector<1x10x10x4xf32>, vector<1x10x10x4xf32>, vector<1x10x10x4xf32>, vector<1x10x10x4xf32>, vector<1x10x10x4xf32>, vector<1x10x10x4xf32>, vector<1x10x10x4xf32>, vector<1x10x10x4xf32>, vector<1x10x10x4xf32>, vector<1x10x10x4xf32> -> vector<10x10x10x4xf32>
    %21 = vector.extract_strided_slice %20 {offsets = [0, 0, 0, 0], sizes = [8, 8, 8, 4], strides = [1, 1, 1, 1]} : vector<10x10x10x4xf32> to vector<8x8x8x4xf32>
    %22 = vector.extract_strided_slice %20 {offsets = [0, 0, 1, 0], sizes = [8, 8, 8, 4], strides = [1, 1, 1, 1]} : vector<10x10x10x4xf32> to vector<8x8x8x4xf32>
    %23 = vector.extract_strided_slice %20 {offsets = [0, 0, 2, 0], sizes = [8, 8, 8, 4], strides = [1, 1, 1, 1]} : vector<10x10x10x4xf32> to vector<8x8x8x4xf32>
    %24 = vector.extract_strided_slice %20 {offsets = [0, 1, 0, 0], sizes = [8, 8, 8, 4], strides = [1, 1, 1, 1]} : vector<10x10x10x4xf32> to vector<8x8x8x4xf32>
    %25 = vector.extract_strided_slice %20 {offsets = [0, 1, 1, 0], sizes = [8, 8, 8, 4], strides = [1, 1, 1, 1]} : vector<10x10x10x4xf32> to vector<8x8x8x4xf32>
    %26 = vector.extract_strided_slice %20 {offsets = [0, 1, 2, 0], sizes = [8, 8, 8, 4], strides = [1, 1, 1, 1]} : vector<10x10x10x4xf32> to vector<8x8x8x4xf32>
    %27 = vector.extract_strided_slice %20 {offsets = [0, 2, 0, 0], sizes = [8, 8, 8, 4], strides = [1, 1, 1, 1]} : vector<10x10x10x4xf32> to vector<8x8x8x4xf32>
    %28 = vector.extract_strided_slice %20 {offsets = [0, 2, 1, 0], sizes = [8, 8, 8, 4], strides = [1, 1, 1, 1]} : vector<10x10x10x4xf32> to vector<8x8x8x4xf32>
    %29 = vector.extract_strided_slice %20 {offsets = [0, 2, 2, 0], sizes = [8, 8, 8, 4], strides = [1, 1, 1, 1]} : vector<10x10x10x4xf32> to vector<8x8x8x4xf32>
    %30 = vector.extract_strided_slice %20 {offsets = [1, 0, 0, 0], sizes = [8, 8, 8, 4], strides = [1, 1, 1, 1]} : vector<10x10x10x4xf32> to vector<8x8x8x4xf32>
    %31 = vector.extract_strided_slice %20 {offsets = [1, 0, 1, 0], sizes = [8, 8, 8, 4], strides = [1, 1, 1, 1]} : vector<10x10x10x4xf32> to vector<8x8x8x4xf32>
    %32 = vector.extract_strided_slice %20 {offsets = [1, 0, 2, 0], sizes = [8, 8, 8, 4], strides = [1, 1, 1, 1]} : vector<10x10x10x4xf32> to vector<8x8x8x4xf32>
    %33 = vector.extract_strided_slice %20 {offsets = [1, 1, 0, 0], sizes = [8, 8, 8, 4], strides = [1, 1, 1, 1]} : vector<10x10x10x4xf32> to vector<8x8x8x4xf32>
    %34 = vector.extract_strided_slice %20 {offsets = [1, 1, 1, 0], sizes = [8, 8, 8, 4], strides = [1, 1, 1, 1]} : vector<10x10x10x4xf32> to vector<8x8x8x4xf32>
    %35 = vector.extract_strided_slice %20 {offsets = [1, 1, 2, 0], sizes = [8, 8, 8, 4], strides = [1, 1, 1, 1]} : vector<10x10x10x4xf32> to vector<8x8x8x4xf32>
    %36 = vector.extract_strided_slice %20 {offsets = [1, 2, 0, 0], sizes = [8, 8, 8, 4], strides = [1, 1, 1, 1]} : vector<10x10x10x4xf32> to vector<8x8x8x4xf32>
    %37 = vector.extract_strided_slice %20 {offsets = [1, 2, 1, 0], sizes = [8, 8, 8, 4], strides = [1, 1, 1, 1]} : vector<10x10x10x4xf32> to vector<8x8x8x4xf32>
    %38 = vector.extract_strided_slice %20 {offsets = [1, 2, 2, 0], sizes = [8, 8, 8, 4], strides = [1, 1, 1, 1]} : vector<10x10x10x4xf32> to vector<8x8x8x4xf32>
    %39 = vector.extract_strided_slice %20 {offsets = [2, 0, 0, 0], sizes = [8, 8, 8, 4], strides = [1, 1, 1, 1]} : vector<10x10x10x4xf32> to vector<8x8x8x4xf32>
    %40 = vector.extract_strided_slice %20 {offsets = [2, 0, 1, 0], sizes = [8, 8, 8, 4], strides = [1, 1, 1, 1]} : vector<10x10x10x4xf32> to vector<8x8x8x4xf32>
    %41 = vector.extract_strided_slice %20 {offsets = [2, 0, 2, 0], sizes = [8, 8, 8, 4], strides = [1, 1, 1, 1]} : vector<10x10x10x4xf32> to vector<8x8x8x4xf32>
    %42 = vector.extract_strided_slice %20 {offsets = [2, 1, 0, 0], sizes = [8, 8, 8, 4], strides = [1, 1, 1, 1]} : vector<10x10x10x4xf32> to vector<8x8x8x4xf32>
    %43 = vector.extract_strided_slice %20 {offsets = [2, 1, 1, 0], sizes = [8, 8, 8, 4], strides = [1, 1, 1, 1]} : vector<10x10x10x4xf32> to vector<8x8x8x4xf32>
    %44 = vector.extract_strided_slice %20 {offsets = [2, 1, 2, 0], sizes = [8, 8, 8, 4], strides = [1, 1, 1, 1]} : vector<10x10x10x4xf32> to vector<8x8x8x4xf32>
    %45 = vector.extract_strided_slice %20 {offsets = [2, 2, 0, 0], sizes = [8, 8, 8, 4], strides = [1, 1, 1, 1]} : vector<10x10x10x4xf32> to vector<8x8x8x4xf32>
    %46 = vector.extract_strided_slice %20 {offsets = [2, 2, 1, 0], sizes = [8, 8, 8, 4], strides = [1, 1, 1, 1]} : vector<10x10x10x4xf32> to vector<8x8x8x4xf32>
    %47 = vector.extract_strided_slice %20 {offsets = [2, 2, 2, 0], sizes = [8, 8, 8, 4], strides = [1, 1, 1, 1]} : vector<10x10x10x4xf32> to vector<8x8x8x4xf32>
    %cst = arith.constant 0.000000e+00 : f32
    %48 = vector.broadcast %cst : f32 to vector<8x8x8x20xf32>
    %49 = tpu.concatenate %21, %22, %23, %24, %25, %26, %27, %28, %29, %30, %31, %32, %33, %34, %35, %36 in 3 : vector<8x8x8x4xf32>, vector<8x8x8x4xf32>, vector<8x8x8x4xf32>, vector<8x8x8x4xf32>, vector<8x8x8x4xf32>, vector<8x8x8x4xf32>, vector<8x8x8x4xf32>, vector<8x8x8x4xf32>, vector<8x8x8x4xf32>, vector<8x8x8x4xf32>, vector<8x8x8x4xf32>, vector<8x8x8x4xf32>, vector<8x8x8x4xf32>, vector<8x8x8x4xf32>, vector<8x8x8x4xf32>, vector<8x8x8x4xf32> -> vector<8x8x8x64xf32>
    %50 = tpu.concatenate %37, %38, %39, %40, %41, %42, %43, %44, %45, %46, %47, %48 in 3 : vector<8x8x8x4xf32>, vector<8x8x8x4xf32>, vector<8x8x8x4xf32>, vector<8x8x8x4xf32>, vector<8x8x8x4xf32>, vector<8x8x8x4xf32>, vector<8x8x8x4xf32>, vector<8x8x8x4xf32>, vector<8x8x8x4xf32>, vector<8x8x8x4xf32>, vector<8x8x8x4xf32>, vector<8x8x8x20xf32> -> vector<8x8x8x64xf32>
    %51 = tpu.concatenate %49, %50 in 3 : vector<8x8x8x64xf32>, vector<8x8x8x64xf32> -> vector<8x8x8x128xf32>
    %52 = vector.shape_cast %51 : vector<8x8x8x128xf32> to vector<512x128xf32>
    %c0_49 = arith.constant 0 : index
    %c0_50 = arith.constant 0 : index
    %53 = vector.load %arg12[%c0_49, %c0_50] : memref<128x128xf32, #tpu.memory_space<vmem>>, vector<128x128xf32>
    %cst_51 = arith.constant dense<0.000000e+00> : vector<512x128xf32>
    %54 = tpu.matmul %52, %53, %cst_51 {dimension_numbers = #tpu.dot_dimension_numbers<[1], [0], [0], [1], [0, 0, 1, 1], [], []>} : vector<512x128xf32>, vector<128x128xf32>, vector<512x128xf32> -> vector<512x128xf32>
    %c0_52 = arith.constant 0 : index
    %c0_53 = arith.constant 0 : index
    %55 = vector.load %arg13[%c0_52, %c0_53] : memref<1x128xf32, #tpu.memory_space<vmem>>, vector<1x128xf32>
    %56 = vector.broadcast %55 : vector<1x128xf32> to vector<512x128xf32>
    %57 = arith.addf %54, %56 : vector<512x128xf32>
    %cst_54 = arith.constant 0.000000e+00 : f32
    %58 = vector.broadcast %cst_54 : f32 to vector<512x128xf32>
    %59 = arith.maximumf %57, %58 : vector<512x128xf32>
    %60 = vector.shape_cast %59 : vector<512x128xf32> to vector<1x8x64x128xf32>
    %c0_55 = arith.constant 0 : index
    %c0_56 = arith.constant 0 : index
    %c0_57 = arith.constant 0 : index
    %c0_58 = arith.constant 0 : index
    %61 = vector.load %arg14[%c0_55, %c0_56, %c0_57, %c0_58] : memref<1x8x64x128xf32, #tpu.memory_space<vmem>>, vector<1x8x64x128xf32>
    tpu.vector_store %arg14[%c0_55, %c0_56, %c0_57, %c0_58], %60 {strides = array<i32>} : memref<1x8x64x128xf32, #tpu.memory_space<vmem>>, vector<1x8x64x128xf32>,
    return
  }
  func.func @transform_0(%arg0: i32, %arg1: i32) -> (i32, i32, i32, i32, i32) {
    %c8_i32 = arith.constant 8 : i32
    %0 = arith.muli %arg1, %c8_i32 : i32
    %c0_i32 = arith.constant 0 : i32
    %1 = arith.addi %0, %c0_i32 : i32
    %c0_i32_0 = arith.constant 0 : i32
    %c0_i32_1 = arith.constant 0 : i32
    %c0_i32_2 = arith.constant 0 : i32
    %c0_i32_3 = arith.constant 0 : i32
    return %arg0, %1, %c0_i32_0, %c0_i32_1, %c0_i32_2 : i32, i32, i32, i32, i32
  }
  func.func @transform_1(%arg0: i32, %arg1: i32) -> (i32, i32, i32, i32, i32) {
    %c8_i32 = arith.constant 8 : i32
    %0 = arith.muli %arg1, %c8_i32 : i32
    %c1_i32 = arith.constant 1 : i32
    %1 = arith.addi %0, %c1_i32 : i32
    %c0_i32 = arith.constant 0 : i32
    %c0_i32_0 = arith.constant 0 : i32
    %c0_i32_1 = arith.constant 0 : i32
    %c0_i32_2 = arith.constant 0 : i32
    return %arg0, %1, %c0_i32, %c0_i32_0, %c0_i32_1 : i32, i32, i32, i32, i32
  }
  func.func @transform_2(%arg0: i32, %arg1: i32) -> (i32, i32, i32, i32, i32) {
    %c8_i32 = arith.constant 8 : i32
    %0 = arith.muli %arg1, %c8_i32 : i32
    %c2_i32 = arith.constant 2 : i32
    %1 = arith.addi %0, %c2_i32 : i32
    %c0_i32 = arith.constant 0 : i32
    %c0_i32_0 = arith.constant 0 : i32
    %c0_i32_1 = arith.constant 0 : i32
    %c0_i32_2 = arith.constant 0 : i32
    return %arg0, %1, %c0_i32, %c0_i32_0, %c0_i32_1 : i32, i32, i32, i32, i32
  }
  func.func @transform_3(%arg0: i32, %arg1: i32) -> (i32, i32, i32, i32, i32) {
    %c8_i32 = arith.constant 8 : i32
    %0 = arith.muli %arg1, %c8_i32 : i32
    %c3_i32 = arith.constant 3 : i32
    %1 = arith.addi %0, %c3_i32 : i32
    %c0_i32 = arith.constant 0 : i32
    %c0_i32_0 = arith.constant 0 : i32
    %c0_i32_1 = arith.constant 0 : i32
    %c0_i32_2 = arith.constant 0 : i32
    return %arg0, %1, %c0_i32, %c0_i32_0, %c0_i32_1 : i32, i32, i32, i32, i32
  }
  func.func @transform_4(%arg0: i32, %arg1: i32) -> (i32, i32, i32, i32, i32) {
    %c8_i32 = arith.constant 8 : i32
    %0 = arith.muli %arg1, %c8_i32 : i32
    %c4_i32 = arith.constant 4 : i32
    %1 = arith.addi %0, %c4_i32 : i32
    %c0_i32 = arith.constant 0 : i32
    %c0_i32_0 = arith.constant 0 : i32
    %c0_i32_1 = arith.constant 0 : i32
    %c0_i32_2 = arith.constant 0 : i32
    return %arg0, %1, %c0_i32, %c0_i32_0, %c0_i32_1 : i32, i32, i32, i32, i32
  }
  func.func @transform_5(%arg0: i32, %arg1: i32) -> (i32, i32, i32, i32, i32) {
    %c8_i32 = arith.constant 8 : i32
    %0 = arith.muli %arg1, %c8_i32 : i32
    %c5_i32 = arith.constant 5 : i32
    %1 = arith.addi %0, %c5_i32 : i32
    %c0_i32 = arith.constant 0 : i32
    %c0_i32_0 = arith.constant 0 : i32
    %c0_i32_1 = arith.constant 0 : i32
    %c0_i32_2 = arith.constant 0 : i32
    return %arg0, %1, %c0_i32, %c0_i32_0, %c0_i32_1 : i32, i32, i32, i32, i32
  }
  func.func @transform_6(%arg0: i32, %arg1: i32) -> (i32, i32, i32, i32, i32) {
    %c8_i32 = arith.constant 8 : i32
    %0 = arith.muli %arg1, %c8_i32 : i32
    %c6_i32 = arith.constant 6 : i32
    %1 = arith.addi %0, %c6_i32 : i32
    %c0_i32 = arith.constant 0 : i32
    %c0_i32_0 = arith.constant 0 : i32
    %c0_i32_1 = arith.constant 0 : i32
    %c0_i32_2 = arith.constant 0 : i32
    return %arg0, %1, %c0_i32, %c0_i32_0, %c0_i32_1 : i32, i32, i32, i32, i32
  }
  func.func @transform_7(%arg0: i32, %arg1: i32) -> (i32, i32, i32, i32, i32) {
    %c8_i32 = arith.constant 8 : i32
    %0 = arith.muli %arg1, %c8_i32 : i32
    %c7_i32 = arith.constant 7 : i32
    %1 = arith.addi %0, %c7_i32 : i32
    %c0_i32 = arith.constant 0 : i32
    %c0_i32_0 = arith.constant 0 : i32
    %c0_i32_1 = arith.constant 0 : i32
    %c0_i32_2 = arith.constant 0 : i32
    return %arg0, %1, %c0_i32, %c0_i32_0, %c0_i32_1 : i32, i32, i32, i32, i32
  }
  func.func @transform_8(%arg0: i32, %arg1: i32) -> (i32, i32, i32, i32, i32) {
    %c8_i32 = arith.constant 8 : i32
    %0 = arith.muli %arg1, %c8_i32 : i32
    %c8_i32_0 = arith.constant 8 : i32
    %1 = arith.addi %0, %c8_i32_0 : i32
    %c0_i32 = arith.constant 0 : i32
    %c0_i32_1 = arith.constant 0 : i32
    %c0_i32_2 = arith.constant 0 : i32
    %c0_i32_3 = arith.constant 0 : i32
    return %arg0, %1, %c0_i32, %c0_i32_1, %c0_i32_2 : i32, i32, i32, i32, i32
  }
  func.func @transform_9(%arg0: i32, %arg1: i32) -> (i32, i32, i32, i32, i32) {
    %c8_i32 = arith.constant 8 : i32
    %0 = arith.muli %arg1, %c8_i32 : i32
    %c9_i32 = arith.constant 9 : i32
    %1 = arith.addi %0, %c9_i32 : i32
    %c0_i32 = arith.constant 0 : i32
    %c0_i32_0 = arith.constant 0 : i32
    %c0_i32_1 = arith.constant 0 : i32
    %c0_i32_2 = arith.constant 0 : i32
    return %arg0, %1, %c0_i32, %c0_i32_0, %c0_i32_1 : i32, i32, i32, i32, i32
  }
  func.func @transform_10(%arg0: i32, %arg1: i32) -> (i32, i32) {
    %c0_i32 = arith.constant 0 : i32
    %c0_i32_0 = arith.constant 0 : i32
    %c0_i32_1 = arith.constant 0 : i32
    return %c0_i32, %c0_i32_0 : i32, i32
  }
  func.func @transform_11(%arg0: i32, %arg1: i32) -> (i32, i32) {
    %c0_i32 = arith.constant 0 : i32
    %c0_i32_0 = arith.constant 0 : i32
    %c0_i32_1 = arith.constant 0 : i32
    return %c0_i32, %c0_i32_0 : i32, i32
  }
  func.func @transform_12(%arg0: i32, %arg1: i32) -> (i32, i32, i32, i32) {
    %c0_i32 = arith.constant 0 : i32
    %c0_i32_0 = arith.constant 0 : i32
    %c0_i32_1 = arith.constant 0 : i32
    return %arg0, %arg1, %c0_i32, %c0_i32_0 : i32, i32, i32, i32
  }
}

</mosaic_0001>

<llo_original>
// kernel: repvgg_block_pallas.1
$region0: #{repvgg_block_pallas.1}
  #allocation0 [shape = 'u32[]', space=smem, size = 0x4, offset = 0x4, fixed_abs, tag = 'smem constant byte address 0x4 - core index']
  #allocation1 [shape = 'u32[72,128]{1,0:T(1,128)}', space=vmem, size = 0x9000, scoped, tag = 'internal scratch']
  %s0 = inlined_call_operand.vmem [shape: f32[2,10,10,10,4], index: 0, kind: input, shape index: {}, may-alias: {0,1,2,3,4,5,6,7,8,9}]
  %s1 = inlined_call_operand.vmem [shape: f32[2,10,10,10,4], index: 1, kind: input, shape index: {}, may-alias: {0,1,2,3,4,5,6,7,8,9}]
  %s2 = inlined_call_operand.vmem [shape: f32[2,10,10,10,4], index: 2, kind: input, shape index: {}, may-alias: {0,1,2,3,4,5,6,7,8,9}]
  %s3 = inlined_call_operand.vmem [shape: f32[2,10,10,10,4], index: 3, kind: input, shape index: {}, may-alias: {0,1,2,3,4,5,6,7,8,9}]
  %s4 = inlined_call_operand.vmem [shape: f32[2,10,10,10,4], index: 4, kind: input, shape index: {}, may-alias: {0,1,2,3,4,5,6,7,8,9}]
  %s5 = inlined_call_operand.vmem [shape: f32[2,10,10,10,4], index: 5, kind: input, shape index: {}, may-alias: {0,1,2,3,4,5,6,7,8,9}]
  %s6 = inlined_call_operand.vmem [shape: f32[2,10,10,10,4], index: 6, kind: input, shape index: {}, may-alias: {0,1,2,3,4,5,6,7,8,9}]
  %s7 = inlined_call_operand.vmem [shape: f32[2,10,10,10,4], index: 7, kind: input, shape index: {}, may-alias: {0,1,2,3,4,5,6,7,8,9}]
  %s8 = inlined_call_operand.vmem [shape: f32[2,10,10,10,4], index: 8, kind: input, shape index: {}, may-alias: {0,1,2,3,4,5,6,7,8,9}]
  %s9 = inlined_call_operand.vmem [shape: f32[2,10,10,10,4], index: 9, kind: input, shape index: {}, may-alias: {0,1,2,3,4,5,6,7,8,9}]
  %s10 = inlined_call_operand.vmem [shape: f32[128,128], index: 10, kind: input, shape index: {}]
  %s11 = inlined_call_operand.vmem [shape: f32[1,128], index: 11, kind: input, shape index: {}]
  %s12 = inlined_call_operand.vmem [shape: f32[2,8,64,128], index: 12, kind: output, shape index: {}]
  %s13 = sld [smem:[#allocation0]]
  $region81: #{repvgg_block_pallas.1} parent=0
    _
  %s15 = ssub.s32 1, %s13
  %s16 = scalar_select 0, %s15, %s13
  loop: start=0, step=1, limit=4
  $region2: #{repvgg_block_pallas.1} parent=0 // loop_pre_header
    _
  $region3: #{repvgg_block_pallas.1} parent=0 // loop_header
    %s18 = sphi 0, %s22
    %p19 = scmp.ge.s32.totalorder %s18, 4
    %s25 = sphi 0, %s37
    %s26 = sphi 0, %s33
    %s27 = sphi 0, %s25
    %s28 = sphi 0, %s26
    %s29 = sphi 0, %s27
    %s30 = sphi 0, %s28
    %s44 = sphi 0, %s46
    %s47 = sphi 0, %s44
    %s48 = sphi 0, %s47
    %s64 = sphi 0, %s48
    %s76 = sphi 0, %s78
    %s79 = sphi 0, %s76
    %s80 = sphi 0, %s79
    %s96 = sphi 0, %s80
    %s108 = sphi 0, %s110
    %s111 = sphi 0, %s108
    %s112 = sphi 0, %s111
    %s128 = sphi 0, %s112
    %s140 = sphi 0, %s142
    %s143 = sphi 0, %s140
    %s144 = sphi 0, %s143
    %s160 = sphi 0, %s144
    %s172 = sphi 0, %s174
    %s175 = sphi 0, %s172
    %s176 = sphi 0, %s175
    %s192 = sphi 0, %s176
    %s204 = sphi 0, %s206
    %s207 = sphi 0, %s204
    %s208 = sphi 0, %s207
    %s224 = sphi 0, %s208
    %s236 = sphi 0, %s238
    %s239 = sphi 0, %s236
    %s240 = sphi 0, %s239
    %s256 = sphi 0, %s240
    %s268 = sphi 0, %s270
    %s271 = sphi 0, %s268
    %s272 = sphi 0, %s271
    %s288 = sphi 0, %s272
    %s300 = sphi 0, %s302
    %s303 = sphi 0, %s300
    %s304 = sphi 0, %s303
    %s320 = sphi 0, %s304
    %s332 = sphi 0, %s334
    %s335 = sphi 0, %s332
    %s336 = sphi 0, %s335
    %s352 = sphi 0, %s336
    %s356 = sphi 0, %s356
    %s358 = sphi 0, %s356
    %s359 = sphi 0, %s358
    %s373 = sphi 0, %s359
    %s377 = sphi 0, %s377
    %s379 = sphi 0, %s377
    %s380 = sphi 0, %s379
    %s394 = sphi 0, %s380
    %s402 = sphi 0, %s404
    %s405 = sphi 0, %s402
    %s406 = sphi 0, %s405
    %s422 = sphi 0, %s406
  $region4: #{repvgg_block_pallas.1} parent=0 // loop_header_branch
    %21 = sbr.rel (%p19) target = $region8
  $region5: #{repvgg_block_pallas.1} parent=0 // loop_body
    %s23 = ssub.s32 %s18, 1
    %s24 = ssub.s32 %s18, 2
    %s31 = sadd.s32 1, %s26
    %p32 = scmp.ge.s32.totalorder %s31, 1
    %s33 = scalar_select %p32, 0, %s31
    %s34 = sadd.s32 1, %s25
    %s35 = scalar_select %p32, %s34, %s25
    %p36 = scmp.ge.s32.totalorder %s35, 2
    %s37 = scalar_select %p36, 0, %s35
    %s38 = smul.u32 %s26, 8
    %s39 = smul.u32 %s33, 8
    %s40 = ssub.s32 %s25, %s37
    %s41 = ssub.s32 %s38, %s39
    %s42 = sor.u32 %s40, %s41
    %p43 = scmp.eq.s32.totalorder %s42, 0
    %s45 = sadd.s32 %s44, 1
    %s46 = scalar_select %p43, %s44, %s45
    %p49 = pneg %p43
    %p50 = scmp.eq.s32.totalorder %s18, 1
    %p51 = por %p49, %p50
    %p52 = scmp.ne.s32.totalorder %s44, %s47
    %p53 = scmp.eq.s32.totalorder %s18, 0
    %p54 = por %p52, %p53
    %p55 = scmp.ne.s32.totalorder %s44, %s47
    %p56 = scmp.eq.s32.totalorder %s23, 1
    %p57 = por %p55, %p56
    %p58 = scmp.ne.s32.totalorder %s47, %s48
    %p59 = scmp.eq.s32.totalorder %s23, 0
    %p60 = por %p58, %p59
    %p61 = scmp.ne.s32.totalorder %s47, %s48
    %p62 = scmp.eq.s32.totalorder %s24, 1
    %p63 = por %p61, %p62
    %p65 = scmp.ne.s32.totalorder %s48, %s64
    %p66 = scmp.eq.s32.totalorder %s24, 0
    %p67 = por %p65, %p66
    %s68 = smul.u32 %s26, 8
    %s69 = sadd.s32 %s68, 1
    %s70 = smul.u32 %s33, 8
    %s71 = sadd.s32 %s70, 1
    %s72 = ssub.s32 %s25, %s37
    %s73 = ssub.s32 %s69, %s71
    %s74 = sor.u32 %s72, %s73
    %p75 = scmp.eq.s32.totalorder %s74, 0
    %s77 = sadd.s32 %s76, 1
    %s78 = scalar_select %p75, %s76, %s77
    %p81 = pneg %p75
    %p82 = scmp.eq.s32.totalorder %s18, 1
    %p83 = por %p81, %p82
    %p84 = scmp.ne.s32.totalorder %s76, %s79
    %p85 = scmp.eq.s32.totalorder %s18, 0
    %p86 = por %p84, %p85
    %p87 = scmp.ne.s32.totalorder %s76, %s79
    %p88 = scmp.eq.s32.totalorder %s23, 1
    %p89 = por %p87, %p88
    %p90 = scmp.ne.s32.totalorder %s79, %s80
    %p91 = scmp.eq.s32.totalorder %s23, 0
    %p92 = por %p90, %p91
    %p93 = scmp.ne.s32.totalorder %s79, %s80
    %p94 = scmp.eq.s32.totalorder %s24, 1
    %p95 = por %p93, %p94
    %p97 = scmp.ne.s32.totalorder %s80, %s96
    %p98 = scmp.eq.s32.totalorder %s24, 0
    %p99 = por %p97, %p98
    %s100 = smul.u32 %s26, 8
    %s101 = sadd.s32 %s100, 2
    %s102 = smul.u32 %s33, 8
    %s103 = sadd.s32 %s102, 2
    %s104 = ssub.s32 %s25, %s37
    %s105 = ssub.s32 %s101, %s103
    %s106 = sor.u32 %s104, %s105
    %p107 = scmp.eq.s32.totalorder %s106, 0
    %s109 = sadd.s32 %s108, 1
    %s110 = scalar_select %p107, %s108, %s109
    %p113 = pneg %p107
    %p114 = scmp.eq.s32.totalorder %s18, 1
    %p115 = por %p113, %p114
    %p116 = scmp.ne.s32.totalorder %s108, %s111
    %p117 = scmp.eq.s32.totalorder %s18, 0
    %p118 = por %p116, %p117
    %p119 = scmp.ne.s32.totalorder %s108, %s111
    %p120 = scmp.eq.s32.totalorder %s23, 1
    %p121 = por %p119, %p120
    %p122 = scmp.ne.s32.totalorder %s111, %s112
    %p123 = scmp.eq.s32.totalorder %s23, 0
    %p124 = por %p122, %p123
    %p125 = scmp.ne.s32.totalorder %s111, %s112
    %p126 = scmp.eq.s32.totalorder %s24, 1
    %p127 = por %p125, %p126
    %p129 = scmp.ne.s32.totalorder %s112, %s128
    %p130 = scmp.eq.s32.totalorder %s24, 0
    %p131 = por %p129, %p130
    %s132 = smul.u32 %s26, 8
    %s133 = sadd.s32 %s132, 3
    %s134 = smul.u32 %s33, 8
    %s135 = sadd.s32 %s134, 3
    %s136 = ssub.s32 %s25, %s37
    %s137 = ssub.s32 %s133, %s135
    %s138 = sor.u32 %s136, %s137
    %p139 = scmp.eq.s32.totalorder %s138, 0
    %s141 = sadd.s32 %s140, 1
    %s142 = scalar_select %p139, %s140, %s141
    %p145 = pneg %p139
    %p146 = scmp.eq.s32.totalorder %s18, 1
    %p147 = por %p145, %p146
    %p148 = scmp.ne.s32.totalorder %s140, %s143
    %p149 = scmp.eq.s32.totalorder %s18, 0
    %p150 = por %p148, %p149
    %p151 = scmp.ne.s32.totalorder %s140, %s143
    %p152 = scmp.eq.s32.totalorder %s23, 1
    %p153 = por %p151, %p152
    %p154 = scmp.ne.s32.totalorder %s143, %s144
    %p155 = scmp.eq.s32.totalorder %s23, 0
    %p156 = por %p154, %p155
    %p157 = scmp.ne.s32.totalorder %s143, %s144
    %p158 = scmp.eq.s32.totalorder %s24, 1
    %p159 = por %p157, %p158
    %p161 = scmp.ne.s32.totalorder %s144, %s160
    %p162 = scmp.eq.s32.totalorder %s24, 0
    %p163 = por %p161, %p162
    %s164 = smul.u32 %s26, 8
    %s165 = sadd.s32 %s164, 4
    %s166 = smul.u32 %s33, 8
    %s167 = sadd.s32 %s166, 4
    %s168 = ssub.s32 %s25, %s37
    %s169 = ssub.s32 %s165, %s167
    %s170 = sor.u32 %s168, %s169
    %p171 = scmp.eq.s32.totalorder %s170, 0
    %s173 = sadd.s32 %s172, 1
    %s174 = scalar_select %p171, %s172, %s173
    %p177 = pneg %p171
    %p178 = scmp.eq.s32.totalorder %s18, 1
    %p179 = por %p177, %p178
    %p180 = scmp.ne.s32.totalorder %s172, %s175
    %p181 = scmp.eq.s32.totalorder %s18, 0
    %p182 = por %p180, %p181
    %p183 = scmp.ne.s32.totalorder %s172, %s175
    %p184 = scmp.eq.s32.totalorder %s23, 1
    %p185 = por %p183, %p184
    %p186 = scmp.ne.s32.totalorder %s175, %s176
    %p187 = scmp.eq.s32.totalorder %s23, 0
    %p188 = por %p186, %p187
    %p189 = scmp.ne.s32.totalorder %s175, %s176
    %p190 = scmp.eq.s32.totalorder %s24, 1
    %p191 = por %p189, %p190
    %p193 = scmp.ne.s32.totalorder %s176, %s192
    %p194 = scmp.eq.s32.totalorder %s24, 0
    %p195 = por %p193, %p194
    %s196 = smul.u32 %s26, 8
    %s197 = sadd.s32 %s196, 5
    %s198 = smul.u32 %s33, 8
    %s199 = sadd.s32 %s198, 5
    %s200 = ssub.s32 %s25, %s37
    %s201 = ssub.s32 %s197, %s199
    %s202 = sor.u32 %s200, %s201
    %p203 = scmp.eq.s32.totalorder %s202, 0
    %s205 = sadd.s32 %s204, 1
    %s206 = scalar_select %p203, %s204, %s205
    %p209 = pneg %p203
    %p210 = scmp.eq.s32.totalorder %s18, 1
    %p211 = por %p209, %p210
    %p212 = scmp.ne.s32.totalorder %s204, %s207
    %p213 = scmp.eq.s32.totalorder %s18, 0
    %p214 = por %p212, %p213
    %p215 = scmp.ne.s32.totalorder %s204, %s207
    %p216 = scmp.eq.s32.totalorder %s23, 1
    %p217 = por %p215, %p216
    %p218 = scmp.ne.s32.totalorder %s207, %s208
    %p219 = scmp.eq.s32.totalorder %s23, 0
    %p220 = por %p218, %p219
    %p221 = scmp.ne.s32.totalorder %s207, %s208
    %p222 = scmp.eq.s32.totalorder %s24, 1
    %p223 = por %p221, %p222
    %p225 = scmp.ne.s32.totalorder %s208, %s224
    %p226 = scmp.eq.s32.totalorder %s24, 0
    %p227 = por %p225, %p226
    %s228 = smul.u32 %s26, 8
    %s229 = sadd.s32 %s228, 6
    %s230 = smul.u32 %s33, 8
    %s231 = sadd.s32 %s230, 6
    %s232 = ssub.s32 %s25, %s37
    %s233 = ssub.s32 %s229, %s231
    %s234 = sor.u32 %s232, %s233
    %p235 = scmp.eq.s32.totalorder %s234, 0
    %s237 = sadd.s32 %s236, 1
    %s238 = scalar_select %p235, %s236, %s237
    %p241 = pneg %p235
    %p242 = scmp.eq.s32.totalorder %s18, 1
    %p243 = por %p241, %p242
    %p244 = scmp.ne.s32.totalorder %s236, %s239
    %p245 = scmp.eq.s32.totalorder %s18, 0
    %p246 = por %p244, %p245
    %p247 = scmp.ne.s32.totalorder %s236, %s239
    %p248 = scmp.eq.s32.totalorder %s23, 1
    %p249 = por %p247, %p248
    %p250 = scmp.ne.s32.totalorder %s239, %s240
    %p251 = scmp.eq.s32.totalorder %s23, 0
    %p252 = por %p250, %p251
    %p253 = scmp.ne.s32.totalorder %s239, %s240
    %p254 = scmp.eq.s32.totalorder %s24, 1
    %p255 = por %p253, %p254
    %p257 = scmp.ne.s32.totalorder %s240, %s256
    %p258 = scmp.eq.s32.totalorder %s24, 0
    %p259 = por %p257, %p258
    %s260 = smul.u32 %s26, 8
    %s261 = sadd.s32 %s260, 7
    %s262 = smul.u32 %s33, 8
    %s263 = sadd.s32 %s262, 7
    %s264 = ssub.s32 %s25, %s37
    %s265 = ssub.s32 %s261, %s263
    %s266 = sor.u32 %s264, %s265
    %p267 = scmp.eq.s32.totalorder %s266, 0
    %s269 = sadd.s32 %s268, 1
    %s270 = scalar_select %p267, %s268, %s269
    %p273 = pneg %p267
    %p274 = scmp.eq.s32.totalorder %s18, 1
    %p275 = por %p273, %p274
    %p276 = scmp.ne.s32.totalorder %s268, %s271
    %p277 = scmp.eq.s32.totalorder %s18, 0
    %p278 = por %p276, %p277
    %p279 = scmp.ne.s32.totalorder %s268, %s271
    %p280 = scmp.eq.s32.totalorder %s23, 1
    %p281 = por %p279, %p280
    %p282 = scmp.ne.s32.totalorder %s271, %s272
    %p283 = scmp.eq.s32.totalorder %s23, 0
    %p284 = por %p282, %p283
    %p285 = scmp.ne.s32.totalorder %s271, %s272
    %p286 = scmp.eq.s32.totalorder %s24, 1
    %p287 = por %p285, %p286
    %p289 = scmp.ne.s32.totalorder %s272, %s288
    %p290 = scmp.eq.s32.totalorder %s24, 0
    %p291 = por %p289, %p290
    %s292 = smul.u32 %s26, 8
    %s293 = sadd.s32 %s292, 8
    %s294 = smul.u32 %s33, 8
    %s295 = sadd.s32 %s294, 8
    %s296 = ssub.s32 %s25, %s37
    %s297 = ssub.s32 %s293, %s295
    %s298 = sor.u32 %s296, %s297
    %p299 = scmp.eq.s32.totalorder %s298, 0
    %s301 = sadd.s32 %s300, 1
    %s302 = scalar_select %p299, %s300, %s301
    %p305 = pneg %p299
    %p306 = scmp.eq.s32.totalorder %s18, 1
    %p307 = por %p305, %p306
    %p308 = scmp.ne.s32.totalorder %s300, %s303
    %p309 = scmp.eq.s32.totalorder %s18, 0
    %p310 = por %p308, %p309
    %p311 = scmp.ne.s32.totalorder %s300, %s303
    %p312 = scmp.eq.s32.totalorder %s23, 1
    %p313 = por %p311, %p312
    %p314 = scmp.ne.s32.totalorder %s303, %s304
    %p315 = scmp.eq.s32.totalorder %s23, 0
    %p316 = por %p314, %p315
    %p317 = scmp.ne.s32.totalorder %s303, %s304
    %p318 = scmp.eq.s32.totalorder %s24, 1
    %p319 = por %p317, %p318
    %p321 = scmp.ne.s32.totalorder %s304, %s320
    %p322 = scmp.eq.s32.totalorder %s24, 0
    %p323 = por %p321, %p322
    %s324 = smul.u32 %s26, 8
    %s325 = sadd.s32 %s324, 9
    %s326 = smul.u32 %s33, 8
    %s327 = sadd.s32 %s326, 9
    %s328 = ssub.s32 %s25, %s37
    %s329 = ssub.s32 %s325, %s327
    %s330 = sor.u32 %s328, %s329
    %p331 = scmp.eq.s32.totalorder %s330, 0
    %s333 = sadd.s32 %s332, 1
    %s334 = scalar_select %p331, %s332, %s333
    %p337 = pneg %p331
    %p338 = scmp.eq.s32.totalorder %s18, 1
    %p339 = por %p337, %p338
    %p340 = scmp.ne.s32.totalorder %s332, %s335
    %p341 = scmp.eq.s32.totalorder %s18, 0
    %p342 = por %p340, %p341
    %p343 = scmp.ne.s32.totalorder %s332, %s335
    %p344 = scmp.eq.s32.totalorder %s23, 1
    %p345 = por %p343, %p344
    %p346 = scmp.ne.s32.totalorder %s335, %s336
    %p347 = scmp.eq.s32.totalorder %s23, 0
    %p348 = por %p346, %p347
    %p349 = scmp.ne.s32.totalorder %s335, %s336
    %p350 = scmp.eq.s32.totalorder %s24, 1
    %p351 = por %p349, %p350
    %p353 = scmp.ne.s32.totalorder %s336, %s352
    %p354 = scmp.eq.s32.totalorder %s24, 0
    %p355 = por %p353, %p354
    %s357 = sadd.s32 %s356, 1
    %p360 = scmp.eq.s32.totalorder %s18, 1
    %p361 = scmp.ne.s32.totalorder %s356, %s358
    %p362 = scmp.eq.s32.totalorder %s18, 0
    %p363 = por %p361, %p362
    %p364 = scmp.ne.s32.totalorder %s356, %s358
    %p365 = scmp.eq.s32.totalorder %s23, 1
    %p366 = por %p364, %p365
    %p367 = scmp.ne.s32.totalorder %s358, %s359
    %p368 = scmp.eq.s32.totalorder %s23, 0
    %p369 = por %p367, %p368
    %p370 = scmp.ne.s32.totalorder %s358, %s359
    %p371 = scmp.eq.s32.totalorder %s24, 1
    %p372 = por %p370, %p371
    %p374 = scmp.ne.s32.totalorder %s359, %s373
    %p375 = scmp.eq.s32.totalorder %s24, 0
    %p376 = por %p374, %p375
    %s378 = sadd.s32 %s377, 1
    %p381 = scmp.eq.s32.totalorder %s18, 1
    %p382 = scmp.ne.s32.totalorder %s377, %s379
    %p383 = scmp.eq.s32.totalorder %s18, 0
    %p384 = por %p382, %p383
    %p385 = scmp.ne.s32.totalorder %s377, %s379
    %p386 = scmp.eq.s32.totalorder %s23, 1
    %p387 = por %p385, %p386
    %p388 = scmp.ne.s32.totalorder %s379, %s380
    %p389 = scmp.eq.s32.totalorder %s23, 0
    %p390 = por %p388, %p389
    %p391 = scmp.ne.s32.totalorder %s379, %s380
    %p392 = scmp.eq.s32.totalorder %s24, 1
    %p393 = por %p391, %p392
    %p395 = scmp.ne.s32.totalorder %s380, %s394
    %p396 = scmp.eq.s32.totalorder %s24, 0
    %p397 = por %p395, %p396
    %s398 = ssub.s32 %s25, %s37
    %s399 = ssub.s32 %s26, %s33
    %s400 = sor.u32 %s398, %s399
    %p401 = scmp.eq.s32.totalorder %s400, 0
    %s403 = sadd.s32 %s402, 1
    %s404 = scalar_select %p401, %s402, %s403
    %p407 = pneg %p401
    %p408 = scmp.eq.s32.totalorder %s18, 1
    %p409 = por %p407, %p408
    %p410 = scmp.ne.s32.totalorder %s402, %s405
    %p411 = scmp.eq.s32.totalorder %s18, 0
    %p412 = por %p410, %p411
    %p413 = scmp.ne.s32.totalorder %s402, %s405
    %p414 = scmp.eq.s32.totalorder %s23, 1
    %p415 = por %p413, %p414
    %p416 = scmp.ne.s32.totalorder %s405, %s406
    %p417 = scmp.eq.s32.totalorder %s23, 0
    %p418 = por %p416, %p417
    %p419 = scmp.ne.s32.totalorder %s405, %s406
    %p420 = scmp.eq.s32.totalorder %s24, 1
    %p421 = por %p419, %p420
    %p423 = scmp.ne.s32.totalorder %s406, %s422
    %p424 = scmp.eq.s32.totalorder %s24, 0
    %p425 = por %p423, %p424
    %p426 = scmp.le.s32.totalorder 1, %s18
    %p427 = scmp.lt.s32.totalorder %s18, 3
    %p428 = pnand %p426, %p427
    %p429 = pneg %p428
    // Predicated region
    $region9: #{repvgg_block_pallas.1} parent=5 // pred_check
      _
    $region10: #{repvgg_block_pallas.1} parent=5 // pred_check_branch
      %431 = sbr.rel (%p428) target = $region12
    $region11: #{repvgg_block_pallas.1} parent=5 // pred_region
      %s432 = ssub.s32 %s18, 1
      // Predicated region
      $region13: #{repvgg_block_pallas.1} parent=11 // pred_check
        %p433 = pneg %p369
      $region14: #{repvgg_block_pallas.1} parent=11 // pred_check_branch
        %435 = sbr.rel (%p433) target = $region16
      $region15: #{repvgg_block_pallas.1} parent=11 // pred_region
        _
      $region16: #{repvgg_block_pallas.1} parent=11 // pred_fallthru
        _
      // Predicated region
      $region17: #{repvgg_block_pallas.1} parent=11 // pred_check
        %p436 = pneg %p390
      $region18: #{repvgg_block_pallas.1} parent=11 // pred_check_branch
        %438 = sbr.rel (%p436) target = $region20
      $region19: #{repvgg_block_pallas.1} parent=11 // pred_region
        _
      $region20: #{repvgg_block_pallas.1} parent=11 // pred_fallthru
        _
    $region12: #{repvgg_block_pallas.1} parent=5 // pred_fallthru
      _
    %p439 = scmp.lt.s32.totalorder %s18, 2
    // Predicated region
    $region21: #{repvgg_block_pallas.1} parent=5 // pred_check
      %p440 = pneg %p439
    $region22: #{repvgg_block_pallas.1} parent=5 // pred_check_branch
      %442 = sbr.rel (%p440) target = $region24
    $region23: #{repvgg_block_pallas.1} parent=5 // pred_region
      // Predicated region
      $region25: #{repvgg_block_pallas.1} parent=23 // pred_check
        %p443 = pneg %p54
      $region26: #{repvgg_block_pallas.1} parent=23 // pred_check_branch
        %445 = sbr.rel (%p443) target = $region28
      $region27: #{repvgg_block_pallas.1} parent=23 // pred_region
        %s446 = smul.u32 %s26, 8
        %p447 = scmp.lt.s32.totalorder %s25, 1
        %s448 = scalar_select %p447, %s25, 1
        %p449 = scmp.lt.s32.totalorder %s446, 9
        %s450 = scalar_select %p449, %s446, 9
        %s451 = smul.addr %s450, 20
        %s452 = smul.addr %s448, 200
        %s453 = sadd.s32 %s451, %s452
        %s454 = smul.addr %s453, 8
        %s455 = scalar_lea.vmem %s0, %s454
        %s456 = smul.u32 %s26, 8
      $region28: #{repvgg_block_pallas.1} parent=23 // pred_fallthru
        _
      // Predicated region
      $region29: #{repvgg_block_pallas.1} parent=23 // pred_check
        %p457 = pneg %p86
      $region30: #{repvgg_block_pallas.1} parent=23 // pred_check_branch
        %459 = sbr.rel (%p457) target = $region32
      $region31: #{repvgg_block_pallas.1} parent=23 // pred_region
        %s460 = smul.u32 %s26, 8
        %s461 = sadd.s32 %s460, 1
        %p462 = scmp.lt.s32.totalorder %s25, 1
        %s463 = scalar_select %p462, %s25, 1
        %p464 = scmp.lt.s32.totalorder %s461, 9
        %s465 = scalar_select %p464, %s461, 9
        %s466 = smul.addr %s465, 20
        %s467 = smul.addr %s463, 200
        %s468 = sadd.s32 %s466, %s467
        %s469 = smul.addr %s468, 8
        %s470 = scalar_lea.vmem %s1, %s469
        %s471 = smul.u32 %s26, 8
        %s472 = sadd.s32 %s471, 1
      $region32: #{repvgg_block_pallas.1} parent=23 // pred_fallthru
        _
      // Predicated region
      $region33: #{repvgg_block_pallas.1} parent=23 // pred_check
        %p473 = pneg %p118
      $region34: #{repvgg_block_pallas.1} parent=23 // pred_check_branch
        %475 = sbr.rel (%p473) target = $region36
      $region35: #{repvgg_block_pallas.1} parent=23 // pred_region
        %s476 = smul.u32 %s26, 8
        %s477 = sadd.s32 %s476, 2
        %p478 = scmp.lt.s32.totalorder %s25, 1
        %s479 = scalar_select %p478, %s25, 1
        %p480 = scmp.lt.s32.totalorder %s477, 9
        %s481 = scalar_select %p480, %s477, 9
        %s482 = smul.addr %s481, 20
        %s483 = smul.addr %s479, 200
        %s484 = sadd.s32 %s482, %s483
        %s485 = smul.addr %s484, 8
        %s486 = scalar_lea.vmem %s2, %s485
        %s487 = smul.u32 %s26, 8
        %s488 = sadd.s32 %s487, 2
      $region36: #{repvgg_block_pallas.1} parent=23 // pred_fallthru
        _
      // Predicated region
      $region37: #{repvgg_block_pallas.1} parent=23 // pred_check
        %p489 = pneg %p150
      $region38: #{repvgg_block_pallas.1} parent=23 // pred_check_branch
        %491 = sbr.rel (%p489) target = $region40
      $region39: #{repvgg_block_pallas.1} parent=23 // pred_region
        %s492 = smul.u32 %s26, 8
        %s493 = sadd.s32 %s492, 3
        %p494 = scmp.lt.s32.totalorder %s25, 1
        %s495 = scalar_select %p494, %s25, 1
        %p496 = scmp.lt.s32.totalorder %s493, 9
        %s497 = scalar_select %p496, %s493, 9
        %s498 = smul.addr %s497, 20
        %s499 = smul.addr %s495, 200
        %s500 = sadd.s32 %s498, %s499
        %s501 = smul.addr %s500, 8
        %s502 = scalar_lea.vmem %s3, %s501
        %s503 = smul.u32 %s26, 8
        %s504 = sadd.s32 %s503, 3
      $region40: #{repvgg_block_pallas.1} parent=23 // pred_fallthru
        _
      // Predicated region
      $region41: #{repvgg_block_pallas.1} parent=23 // pred_check
        %p505 = pneg %p182
      $region42: #{repvgg_block_pallas.1} parent=23 // pred_check_branch
        %507 = sbr.rel (%p505) target = $region44
      $region43: #{repvgg_block_pallas.1} parent=23 // pred_region
        %s508 = smul.u32 %s26, 8
        %s509 = sadd.s32 %s508, 4
        %p510 = scmp.lt.s32.totalorder %s25, 1
        %s511 = scalar_select %p510, %s25, 1
        %p512 = scmp.lt.s32.totalorder %s509, 9
        %s513 = scalar_select %p512, %s509, 9
        %s514 = smul.addr %s513, 20
        %s515 = smul.addr %s511, 200
        %s516 = sadd.s32 %s514, %s515
        %s517 = smul.addr %s516, 8
        %s518 = scalar_lea.vmem %s4, %s517
        %s519 = smul.u32 %s26, 8
        %s520 = sadd.s32 %s519, 4
      $region44: #{repvgg_block_pallas.1} parent=23 // pred_fallthru
        _
      // Predicated region
      $region45: #{repvgg_block_pallas.1} parent=23 // pred_check
        %p521 = pneg %p214
      $region46: #{repvgg_block_pallas.1} parent=23 // pred_check_branch
        %523 = sbr.rel (%p521) target = $region48
      $region47: #{repvgg_block_pallas.1} parent=23 // pred_region
        %s524 = smul.u32 %s26, 8
        %s525 = sadd.s32 %s524, 5
        %p526 = scmp.lt.s32.totalorder %s25, 1
        %s527 = scalar_select %p526, %s25, 1
        %p528 = scmp.lt.s32.totalorder %s525, 9
        %s529 = scalar_select %p528, %s525, 9
        %s530 = smul.addr %s529, 20
        %s531 = smul.addr %s527, 200
        %s532 = sadd.s32 %s530, %s531
        %s533 = smul.addr %s532, 8
        %s534 = scalar_lea.vmem %s5, %s533
        %s535 = smul.u32 %s26, 8
        %s536 = sadd.s32 %s535, 5
      $region48: #{repvgg_block_pallas.1} parent=23 // pred_fallthru
        _
      // Predicated region
      $region49: #{repvgg_block_pallas.1} parent=23 // pred_check
        %p537 = pneg %p246
      $region50: #{repvgg_block_pallas.1} parent=23 // pred_check_branch
        %539 = sbr.rel (%p537) target = $region52
      $region51: #{repvgg_block_pallas.1} parent=23 // pred_region
        %s540 = smul.u32 %s26, 8
        %s541 = sadd.s32 %s540, 6
        %p542 = scmp.lt.s32.totalorder %s25, 1
        %s543 = scalar_select %p542, %s25, 1
        %p544 = scmp.lt.s32.totalorder %s541, 9
        %s545 = scalar_select %p544, %s541, 9
        %s546 = smul.addr %s545, 20
        %s547 = smul.addr %s543, 200
        %s548 = sadd.s32 %s546, %s547
        %s549 = smul.addr %s548, 8
        %s550 = scalar_lea.vmem %s6, %s549
        %s551 = smul.u32 %s26, 8
        %s552 = sadd.s32 %s551, 6
      $region52: #{repvgg_block_pallas.1} parent=23 // pred_fallthru
        _
      // Predicated region
      $region53: #{repvgg_block_pallas.1} parent=23 // pred_check
        %p553 = pneg %p278
      $region54: #{repvgg_block_pallas.1} parent=23 // pred_check_branch
        %555 = sbr.rel (%p553) target = $region56
      $region55: #{repvgg_block_pallas.1} parent=23 // pred_region
        %s556 = smul.u32 %s26, 8
        %s557 = sadd.s32 %s556, 7
        %p558 = scmp.lt.s32.totalorder %s25, 1
        %s559 = scalar_select %p558, %s25, 1
        %p560 = scmp.lt.s32.totalorder %s557, 9
        %s561 = scalar_select %p560, %s557, 9
        %s562 = smul.addr %s561, 20
        %s563 = smul.addr %s559, 200
        %s564 = sadd.s32 %s562, %s563
        %s565 = smul.addr %s564, 8
        %s566 = scalar_lea.vmem %s7, %s565
        %s567 = smul.u32 %s26, 8
        %s568 = sadd.s32 %s567, 7
      $region56: #{repvgg_block_pallas.1} parent=23 // pred_fallthru
        _
      // Predicated region
      $region57: #{repvgg_block_pallas.1} parent=23 // pred_check
        %p569 = pneg %p310
      $region58: #{repvgg_block_pallas.1} parent=23 // pred_check_branch
        %571 = sbr.rel (%p569) target = $region60
      $region59: #{repvgg_block_pallas.1} parent=23 // pred_region
        %s572 = smul.u32 %s26, 8
        %s573 = sadd.s32 %s572, 8
        %p574 = scmp.lt.s32.totalorder %s25, 1
        %s575 = scalar_select %p574, %s25, 1
        %p576 = scmp.lt.s32.totalorder %s573, 9
        %s577 = scalar_select %p576, %s573, 9
        %s578 = smul.addr %s577, 20
        %s579 = smul.addr %s575, 200
        %s580 = sadd.s32 %s578, %s579
        %s581 = smul.addr %s580, 8
        %s582 = scalar_lea.vmem %s8, %s581
        %s583 = smul.u32 %s26, 8
        %s584 = sadd.s32 %s583, 8
      $region60: #{repvgg_block_pallas.1} parent=23 // pred_fallthru
        _
      // Predicated region
      $region61: #{repvgg_block_pallas.1} parent=23 // pred_check
        %p585 = pneg %p342
      $region62: #{repvgg_block_pallas.1} parent=23 // pred_check_branch
        %587 = sbr.rel (%p585) target = $region64
      $region63: #{repvgg_block_pallas.1} parent=23 // pred_region
        %s588 = smul.u32 %s26, 8
        %s589 = sadd.s32 %s588, 9
        %p590 = scmp.lt.s32.totalorder %s25, 1
        %s591 = scalar_select %p590, %s25, 1
        %p592 = scmp.lt.s32.totalorder %s589, 9
        %s593 = scalar_select %p592, %s589, 9
        %s594 = smul.addr %s593, 20
        %s595 = smul.addr %s591, 200
        %s596 = sadd.s32 %s594, %s595
        %s597 = smul.addr %s596, 8
        %s598 = scalar_lea.vmem %s9, %s597
        %s599 = smul.u32 %s26, 8
        %s600 = sadd.s32 %s599, 9
      $region64: #{repvgg_block_pallas.1} parent=23 // pred_fallthru
        _
    $region24: #{repvgg_block_pallas.1} parent=5 // pred_fallthru
      _
    %p601 = scmp.le.s32.totalorder 1, %s18
    %p602 = scmp.lt.s32.totalorder %s18, 3
    %p603 = pnand %p601, %p602
    %p604 = pneg %p603
    // Predicated region
    $region65: #{repvgg_block_pallas.1} parent=5 // pred_check
      _
    $region66: #{repvgg_block_pallas.1} parent=5 // pred_check_branch
      %606 = sbr.rel (%p603) target = $region68
    $region67: #{repvgg_block_pallas.1} parent=5 // pred_region
      %s607 = ssub.s32 %s18, 1
      %s608 = smul.u32 %s28, 8
      %p609 = scmp.lt.s32.totalorder %s27, 1
      %s610 = scalar_select %p609, %s27, 1
      %p611 = scmp.lt.s32.totalorder %s608, 9
      %s612 = scalar_select %p611, %s608, 9
      %s613 = smul.addr %s612, 20
      %s614 = smul.addr %s610, 200
      %s615 = sadd.s32 %s613, %s614
      %s616 = smul.addr %s615, 8
      %s617 = scalar_lea.vmem %s0, %s616
      %p618 = pneg %p60
      %p619 = pneg %p57
      %s620 = smul.u32 %s28, 8
      %s621 = sadd.s32 %s620, 1
      %p622 = scmp.lt.s32.totalorder %s27, 1
      %s623 = scalar_select %p622, %s27, 1
      %p624 = scmp.lt.s32.totalorder %s621, 9
      %s625 = scalar_select %p624, %s621, 9
      %s626 = smul.addr %s625, 20
      %s627 = smul.addr %s623, 200
      %s628 = sadd.s32 %s626, %s627
      %s629 = smul.addr %s628, 8
      %s630 = scalar_lea.vmem %s1, %s629
      %p631 = pneg %p92
      %p632 = pneg %p89
      %s633 = smul.u32 %s28, 8
      %s634 = sadd.s32 %s633, 2
      %p635 = scmp.lt.s32.totalorder %s27, 1
      %s636 = scalar_select %p635, %s27, 1
      %p637 = scmp.lt.s32.totalorder %s634, 9
      %s638 = scalar_select %p637, %s634, 9
      %s639 = smul.addr %s638, 20
      %s640 = smul.addr %s636, 200
      %s641 = sadd.s32 %s639, %s640
      %s642 = smul.addr %s641, 8
      %s643 = scalar_lea.vmem %s2, %s642
      %p644 = pneg %p124
      %p645 = pneg %p121
      %s646 = smul.u32 %s28, 8
      %s647 = sadd.s32 %s646, 3
      %p648 = scmp.lt.s32.totalorder %s27, 1
      %s649 = scalar_select %p648, %s27, 1
      %p650 = scmp.lt.s32.totalorder %s647, 9
      %s651 = scalar_select %p650, %s647, 9
      %s652 = smul.addr %s651, 20
      %s653 = smul.addr %s649, 200
      %s654 = sadd.s32 %s652, %s653
      %s655 = smul.addr %s654, 8
      %s656 = scalar_lea.vmem %s3, %s655
      %p657 = pneg %p156
      %p658 = pneg %p153
      %s659 = smul.u32 %s28, 8
      %s660 = sadd.s32 %s659, 4
      %p661 = scmp.lt.s32.totalorder %s27, 1
      %s662 = scalar_select %p661, %s27, 1
      %p663 = scmp.lt.s32.totalorder %s660, 9
      %s664 = scalar_select %p663, %s660, 9
      %s665 = smul.addr %s664, 20
      %s666 = smul.addr %s662, 200
      %s667 = sadd.s32 %s665, %s666
      %s668 = smul.addr %s667, 8
      %s669 = scalar_lea.vmem %s4, %s668
      %p670 = pneg %p188
      %p671 = pneg %p185
      %s672 = smul.u32 %s28, 8
      %s673 = sadd.s32 %s672, 5
      %p674 = scmp.lt.s32.totalorder %s27, 1
      %s675 = scalar_select %p674, %s27, 1
      %p676 = scmp.lt.s32.totalorder %s673, 9
      %s677 = scalar_select %p676, %s673, 9
      %s678 = smul.addr %s677, 20
      %s679 = smul.addr %s675, 200
      %s680 = sadd.s32 %s678, %s679
      %s681 = smul.addr %s680, 8
      %s682 = scalar_lea.vmem %s5, %s681
      %p683 = pneg %p220
      %p684 = pneg %p217
      %s685 = smul.u32 %s28, 8
      %s686 = sadd.s32 %s685, 6
      %p687 = scmp.lt.s32.totalorder %s27, 1
      %s688 = scalar_select %p687, %s27, 1
      %p689 = scmp.lt.s32.totalorder %s686, 9
      %s690 = scalar_select %p689, %s686, 9
      %s691 = smul.addr %s690, 20
      %s692 = smul.addr %s688, 200
      %s693 = sadd.s32 %s691, %s692
      %s694 = smul.addr %s693, 8
      %s695 = scalar_lea.vmem %s6, %s694
      %p696 = pneg %p252
      %p697 = pneg %p249
      %s698 = smul.u32 %s28, 8
      %s699 = sadd.s32 %s698, 7
      %p700 = scmp.lt.s32.totalorder %s27, 1
      %s701 = scalar_select %p700, %s27, 1
      %p702 = scmp.lt.s32.totalorder %s699, 9
      %s703 = scalar_select %p702, %s699, 9
      %s704 = smul.addr %s703, 20
      %s705 = smul.addr %s701, 200
      %s706 = sadd.s32 %s704, %s705
      %s707 = smul.addr %s706, 8
      %s708 = scalar_lea.vmem %s7, %s707
      %p709 = pneg %p284
      %p710 = pneg %p281
      %s711 = smul.u32 %s28, 8
      %s712 = sadd.s32 %s711, 8
      %p713 = scmp.lt.s32.totalorder %s27, 1
      %s714 = scalar_select %p713, %s27, 1
      %p715 = scmp.lt.s32.totalorder %s712, 9
      %s716 = scalar_select %p715, %s712, 9
      %s717 = smul.addr %s716, 20
      %s718 = smul.addr %s714, 200
      %s719 = sadd.s32 %s717, %s718
      %s720 = smul.addr %s719, 8
      %s721 = scalar_lea.vmem %s8, %s720
      %p722 = pneg %p316
      %p723 = pneg %p313
      %s724 = smul.u32 %s28, 8
      %s725 = sadd.s32 %s724, 9
      %p726 = scmp.lt.s32.totalorder %s27, 1
      %s727 = scalar_select %p726, %s27, 1
      %p728 = scmp.lt.s32.totalorder %s725, 9
      %s729 = scalar_select %p728, %s725, 9
      %s730 = smul.addr %s729, 20
      %s731 = smul.addr %s727, 200
      %s732 = sadd.s32 %s730, %s731
      %s733 = smul.addr %s732, 8
      %s734 = scalar_lea.vmem %s9, %s733
      %p735 = pneg %p348
      %p736 = pneg %p345
      %p737 = pneg %p369
      %p738 = pneg %p366
      %p739 = pneg %p390
      %p740 = pneg %p387
      %p741 = pneg %p418
      %p742 = pneg %p415
      %s743 = smul.u32 8, %s28
      %p744 = scmp.lt.s32.totalorder %s27, 1
      %s745 = scalar_select %p744, %s27, 1
      %p746 = scmp.lt.s32.totalorder %s743, 7
      %s747 = scalar_select %p746, %s743, 7
      %s748 = smul.addr %s747, 8
      %s749 = smul.addr %s745, 64
      %s750 = sadd.s32 %s748, %s749
      %s751 = smul.addr %s750, 8
      %s752 = scalar_lea.vmem %s12, %s751
      %s753 = smul.u32 %s28, 8
      %p754 = scmp.lt.s32.totalorder %s27, 1
      %s755 = scalar_select %p754, %s27, 1
      %p756 = scmp.lt.s32.totalorder %s753, 9
      %s757 = scalar_select %p756, %s753, 9
      %s758 = smul.addr %s757, 20
      %s759 = smul.addr %s755, 200
      %s760 = sadd.s32 %s758, %s759
      %s761 = smul.addr %s760, 8
      %s762 = scalar_lea.vmem %s0, %s761
      %s763 = smul.u32 %s28, 8
      %s764 = smul.u32 %s28, 8
      %s765 = sadd.s32 %s764, 1
      %p766 = scmp.lt.s32.totalorder %s27, 1
      %s767 = scalar_select %p766, %s27, 1
      %p768 = scmp.lt.s32.totalorder %s765, 9
      %s769 = scalar_select %p768, %s765, 9
      %s770 = smul.addr %s769, 20
      %s771 = smul.addr %s767, 200
      %s772 = sadd.s32 %s770, %s771
      %s773 = smul.addr %s772, 8
      %s774 = scalar_lea.vmem %s1, %s773
      %s775 = smul.u32 %s28, 8
      %s776 = sadd.s32 %s775, 1
      %s777 = smul.u32 %s28, 8
      %s778 = sadd.s32 %s777, 2
      %p779 = scmp.lt.s32.totalorder %s27, 1
      %s780 = scalar_select %p779, %s27, 1
      %p781 = scmp.lt.s32.totalorder %s778, 9
      %s782 = scalar_select %p781, %s778, 9
      %s783 = smul.addr %s782, 20
      %s784 = smul.addr %s780, 200
      %s785 = sadd.s32 %s783, %s784
      %s786 = smul.addr %s785, 8
      %s787 = scalar_lea.vmem %s2, %s786
      %s788 = smul.u32 %s28, 8
      %s789 = sadd.s32 %s788, 2
      %s790 = smul.u32 %s28, 8
      %s791 = sadd.s32 %s790, 3
      %p792 = scmp.lt.s32.totalorder %s27, 1
      %s793 = scalar_select %p792, %s27, 1
      %p794 = scmp.lt.s32.totalorder %s791, 9
      %s795 = scalar_select %p794, %s791, 9
      %s796 = smul.addr %s795, 20
      %s797 = smul.addr %s793, 200
      %s798 = sadd.s32 %s796, %s797
      %s799 = smul.addr %s798, 8
      %s800 = scalar_lea.vmem %s3, %s799
      %s801 = smul.u32 %s28, 8
      %s802 = sadd.s32 %s801, 3
      %s803 = smul.u32 %s28, 8
      %s804 = sadd.s32 %s803, 4
      %p805 = scmp.lt.s32.totalorder %s27, 1
      %s806 = scalar_select %p805, %s27, 1
      %p807 = scmp.lt.s32.totalorder %s804, 9
      %s808 = scalar_select %p807, %s804, 9
      %s809 = smul.addr %s808, 20
      %s810 = smul.addr %s806, 200
      %s811 = sadd.s32 %s809, %s810
      %s812 = smul.addr %s811, 8
      %s813 = scalar_lea.vmem %s4, %s812
      %s814 = smul.u32 %s28, 8
      %s815 = sadd.s32 %s814, 4
      %s816 = smul.u32 %s28, 8
      %s817 = sadd.s32 %s816, 5
      %p818 = scmp.lt.s32.totalorder %s27, 1
      %s819 = scalar_select %p818, %s27, 1
      %p820 = scmp.lt.s32.totalorder %s817, 9
      %s821 = scalar_select %p820, %s817, 9
      %s822 = smul.addr %s821, 20
      %s823 = smul.addr %s819, 200
      %s824 = sadd.s32 %s822, %s823
      %s825 = smul.addr %s824, 8
      %s826 = scalar_lea.vmem %s5, %s825
      %s827 = smul.u32 %s28, 8
      %s828 = sadd.s32 %s827, 5
      %s829 = smul.u32 %s28, 8
      %s830 = sadd.s32 %s829, 6
      %p831 = scmp.lt.s32.totalorder %s27, 1
      %s832 = scalar_select %p831, %s27, 1
      %p833 = scmp.lt.s32.totalorder %s830, 9
      %s834 = scalar_select %p833, %s830, 9
      %s835 = smul.addr %s834, 20
      %s836 = smul.addr %s832, 200
      %s837 = sadd.s32 %s835, %s836
      %s838 = smul.addr %s837, 8
      %s839 = scalar_lea.vmem %s6, %s838
      %s840 = smul.u32 %s28, 8
      %s841 = sadd.s32 %s840, 6
      %s842 = smul.u32 %s28, 8
      %s843 = sadd.s32 %s842, 7
      %p844 = scmp.lt.s32.totalorder %s27, 1
      %s845 = scalar_select %p844, %s27, 1
      %p846 = scmp.lt.s32.totalorder %s843, 9
      %s847 = scalar_select %p846, %s843, 9
      %s848 = smul.addr %s847, 20
      %s849 = smul.addr %s845, 200
      %s850 = sadd.s32 %s848, %s849
      %s851 = smul.addr %s850, 8
      %s852 = scalar_lea.vmem %s7, %s851
      %s853 = smul.u32 %s28, 8
      %s854 = sadd.s32 %s853, 7
      %s855 = smul.u32 %s28, 8
      %s856 = sadd.s32 %s855, 8
      %p857 = scmp.lt.s32.totalorder %s27, 1
      %s858 = scalar_select %p857, %s27, 1
      %p859 = scmp.lt.s32.totalorder %s856, 9
      %s860 = scalar_select %p859, %s856, 9
      %s861 = smul.addr %s860, 20
      %s862 = smul.addr %s858, 200
      %s863 = sadd.s32 %s861, %s862
      %s864 = smul.addr %s863, 8
      %s865 = scalar_lea.vmem %s8, %s864
      %s866 = smul.u32 %s28, 8
      %s867 = sadd.s32 %s866, 8
      %s868 = smul.u32 %s28, 8
      %s869 = sadd.s32 %s868, 9
      %p870 = scmp.lt.s32.totalorder %s27, 1
      %s871 = scalar_select %p870, %s27, 1
      %p872 = scmp.lt.s32.totalorder %s869, 9
      %s873 = scalar_select %p872, %s869, 9
      %s874 = smul.addr %s873, 20
      %s875 = smul.addr %s871, 200
      %s876 = sadd.s32 %s874, %s875
      %s877 = smul.addr %s876, 8
      %s878 = scalar_lea.vmem %s9, %s877
      %s879 = smul.u32 %s28, 8
      %s880 = sadd.s32 %s879, 9
      %s881 = smul.u32 8, %s28
      %p882 = scmp.lt.s32.totalorder %s27, 1
      %s883 = scalar_select %p882, %s27, 1
      %p884 = scmp.lt.s32.totalorder %s881, 7
      %s885 = scalar_select %p884, %s881, 7
      %s886 = smul.addr %s885, 8
      %s887 = smul.addr %s883, 64
      %s888 = sadd.s32 %s886, %s887
      %s889 = smul.addr %s888, 8
      %s890 = scalar_lea.vmem %s12, %s889
      %s891 = smul.u32 8, %s28
      %v892 = vld [vmem:[%s762] sm:$0xff]
      %v893 = vld [vmem:[%s762 + $0x8] sm:$0x3]
      %v894 = vld [vmem:[%s762 + $0x10] sm:$0xff]
      %v895 = vld [vmem:[%s762 + $0x18] sm:$0x3]
      %v896 = vld [vmem:[%s762 + $0x20] sm:$0xff]
      %v897 = vld [vmem:[%s762 + $0x28] sm:$0x3]
      %v898 = vld [vmem:[%s762 + $0x30] sm:$0xff]
      %v899 = vld [vmem:[%s762 + $0x38] sm:$0x3]
      %v900 = vld [vmem:[%s762 + $0x40] sm:$0xff]
      %v901 = vld [vmem:[%s762 + $0x48] sm:$0x3]
      %v902 = vld [vmem:[%s762 + $0x50] sm:$0xff]
      %v903 = vld [vmem:[%s762 + $0x58] sm:$0x3]
      %v904 = vld [vmem:[%s762 + $0x60] sm:$0xff]
      %v905 = vld [vmem:[%s762 + $0x68] sm:$0x3]
      %v906 = vld [vmem:[%s762 + $0x70] sm:$0xff]
      %v907 = vld [vmem:[%s762 + $0x78] sm:$0x3]
      %v908 = vld [vmem:[%s762 + $0x80] sm:$0xff]
      %v909 = vld [vmem:[%s762 + $0x88] sm:$0x3]
      %v910 = vld [vmem:[%s762 + $0x90] sm:$0xff]
      %v911 = vld [vmem:[%s762 + $0x98] sm:$0x3]
      %v912 = vld [vmem:[%s774] sm:$0xff]
      %v913 = vld [vmem:[%s774 + $0x8] sm:$0x3]
      %v914 = vld [vmem:[%s774 + $0x10] sm:$0xff]
      %v915 = vld [vmem:[%s774 + $0x18] sm:$0x3]
      %v916 = vld [vmem:[%s774 + $0x20] sm:$0xff]
      %v917 = vld [vmem:[%s774 + $0x28] sm:$0x3]
      %v918 = vld [vmem:[%s774 + $0x30] sm:$0xff]
      %v919 = vld [vmem:[%s774 + $0x38] sm:$0x3]
      %v920 = vld [vmem:[%s774 + $0x40] sm:$0xff]
      %v921 = vld [vmem:[%s774 + $0x48] sm:$0x3]
      %v922 = vld [vmem:[%s774 + $0x50] sm:$0xff]
      %v923 = vld [vmem:[%s774 + $0x58] sm:$0x3]
      %v924 = vld [vmem:[%s774 + $0x60] sm:$0xff]
      %v925 = vld [vmem:[%s774 + $0x68] sm:$0x3]
      %v926 = vld [vmem:[%s774 + $0x70] sm:$0xff]
      %v927 = vld [vmem:[%s774 + $0x78] sm:$0x3]
      %v928 = vld [vmem:[%s774 + $0x80] sm:$0xff]
      %v929 = vld [vmem:[%s774 + $0x88] sm:$0x3]
      %v930 = vld [vmem:[%s774 + $0x90] sm:$0xff]
      %v931 = vld [vmem:[%s774 + $0x98] sm:$0x3]
      %v932 = vld [vmem:[%s787] sm:$0xff]
      %v933 = vld [vmem:[%s787 + $0x8] sm:$0x3]
      %v934 = vld [vmem:[%s787 + $0x10] sm:$0xff]
      %v935 = vld [vmem:[%s787 + $0x18] sm:$0x3]
      %v936 = vld [vmem:[%s787 + $0x20] sm:$0xff]
      %v937 = vld [vmem:[%s787 + $0x28] sm:$0x3]
      %v938 = vld [vmem:[%s787 + $0x30] sm:$0xff]
      %v939 = vld [vmem:[%s787 + $0x38] sm:$0x3]
      %v940 = vld [vmem:[%s787 + $0x40] sm:$0xff]
      %v941 = vld [vmem:[%s787 + $0x48] sm:$0x3]
      %v942 = vld [vmem:[%s787 + $0x50] sm:$0xff]
      %v943 = vld [vmem:[%s787 + $0x58] sm:$0x3]
      %v944 = vld [vmem:[%s787 + $0x60] sm:$0xff]
      %v945 = vld [vmem:[%s787 + $0x68] sm:$0x3]
      %v946 = vld [vmem:[%s787 + $0x70] sm:$0xff]
      %v947 = vld [vmem:[%s787 + $0x78] sm:$0x3]
      %v948 = vld [vmem:[%s787 + $0x80] sm:$0xff]
      %v949 = vld [vmem:[%s787 + $0x88] sm:$0x3]
      %v950 = vld [vmem:[%s787 + $0x90] sm:$0xff]
      %v951 = vld [vmem:[%s787 + $0x98] sm:$0x3]
      %v952 = vld [vmem:[%s800] sm:$0xff]
      %v953 = vld [vmem:[%s800 + $0x8] sm:$0x3]
      %v954 = vld [vmem:[%s800 + $0x10] sm:$0xff]
      %v955 = vld [vmem:[%s800 + $0x18] sm:$0x3]
      %v956 = vld [vmem:[%s800 + $0x20] sm:$0xff]
      %v957 = vld [vmem:[%s800 + $0x28] sm:$0x3]
      %v958 = vld [vmem:[%s800 + $0x30] sm:$0xff]
      %v959 = vld [vmem:[%s800 + $0x38] sm:$0x3]
      %v960 = vld [vmem:[%s800 + $0x40] sm:$0xff]
      %v961 = vld [vmem:[%s800 + $0x48] sm:$0x3]
      %v962 = vld [vmem:[%s800 + $0x50] sm:$0xff]
      %v963 = vld [vmem:[%s800 + $0x58] sm:$0x3]
      %v964 = vld [vmem:[%s800 + $0x60] sm:$0xff]
      %v965 = vld [vmem:[%s800 + $0x68] sm:$0x3]
      %v966 = vld [vmem:[%s800 + $0x70] sm:$0xff]
      %v967 = vld [vmem:[%s800 + $0x78] sm:$0x3]
      %v968 = vld [vmem:[%s800 + $0x80] sm:$0xff]
      %v969 = vld [vmem:[%s800 + $0x88] sm:$0x3]
      %v970 = vld [vmem:[%s800 + $0x90] sm:$0xff]
      %v971 = vld [vmem:[%s800 + $0x98] sm:$0x3]
      %v972 = vld [vmem:[%s813] sm:$0xff]
      %v973 = vld [vmem:[%s813 + $0x8] sm:$0x3]
      %v974 = vld [vmem:[%s813 + $0x10] sm:$0xff]
      %v975 = vld [vmem:[%s813 + $0x18] sm:$0x3]
      %v976 = vld [vmem:[%s813 + $0x20] sm:$0xff]
      %v977 = vld [vmem:[%s813 + $0x28] sm:$0x3]
      %v978 = vld [vmem:[%s813 + $0x30] sm:$0xff]
      %v979 = vld [vmem:[%s813 + $0x38] sm:$0x3]
      %v980 = vld [vmem:[%s813 + $0x40] sm:$0xff]
      %v981 = vld [vmem:[%s813 + $0x48] sm:$0x3]
      %v982 = vld [vmem:[%s813 + $0x50] sm:$0xff]
      %v983 = vld [vmem:[%s813 + $0x58] sm:$0x3]
      %v984 = vld [vmem:[%s813 + $0x60] sm:$0xff]
      %v985 = vld [vmem:[%s813 + $0x68] sm:$0x3]
      %v986 = vld [vmem:[%s813 + $0x70] sm:$0xff]
      %v987 = vld [vmem:[%s813 + $0x78] sm:$0x3]
      %v988 = vld [vmem:[%s813 + $0x80] sm:$0xff]
      %v989 = vld [vmem:[%s813 + $0x88] sm:$0x3]
      %v990 = vld [vmem:[%s813 + $0x90] sm:$0xff]
      %v991 = vld [vmem:[%s813 + $0x98] sm:$0x3]
      %v992 = vld [vmem:[%s826] sm:$0xff]
      %v993 = vld [vmem:[%s826 + $0x8] sm:$0x3]
      %v994 = vld [vmem:[%s826 + $0x10] sm:$0xff]
      %v995 = vld [vmem:[%s826 + $0x18] sm:$0x3]
      %v996 = vld [vmem:[%s826 + $0x20] sm:$0xff]
      %v997 = vld [vmem:[%s826 + $0x28] sm:$0x3]
      %v998 = vld [vmem:[%s826 + $0x30] sm:$0xff]
      %v999 = vld [vmem:[%s826 + $0x38] sm:$0x3]
      %v1000 = vld [vmem:[%s826 + $0x40] sm:$0xff]
      %v1001 = vld [vmem:[%s826 + $0x48] sm:$0x3]
      %v1002 = vld [vmem:[%s826 + $0x50] sm:$0xff]
      %v1003 = vld [vmem:[%s826 + $0x58] sm:$0x3]
      %v1004 = vld [vmem:[%s826 + $0x60] sm:$0xff]
      %v1005 = vld [vmem:[%s826 + $0x68] sm:$0x3]
      %v1006 = vld [vmem:[%s826 + $0x70] sm:$0xff]
      %v1007 = vld [vmem:[%s826 + $0x78] sm:$0x3]
      %v1008 = vld [vmem:[%s826 + $0x80] sm:$0xff]
      %v1009 = vld [vmem:[%s826 + $0x88] sm:$0x3]
      %v1010 = vld [vmem:[%s826 + $0x90] sm:$0xff]
      %v1011 = vld [vmem:[%s826 + $0x98] sm:$0x3]
      %v1012 = vld [vmem:[%s839] sm:$0xff]
      %v1013 = vld [vmem:[%s839 + $0x8] sm:$0x3]
      %v1014 = vld [vmem:[%s839 + $0x10] sm:$0xff]
      %v1015 = vld [vmem:[%s839 + $0x18] sm:$0x3]
      %v1016 = vld [vmem:[%s839 + $0x20] sm:$0xff]
      %v1017 = vld [vmem:[%s839 + $0x28] sm:$0x3]
      %v1018 = vld [vmem:[%s839 + $0x30] sm:$0xff]
      %v1019 = vld [vmem:[%s839 + $0x38] sm:$0x3]
      %v1020 = vld [vmem:[%s839 + $0x40] sm:$0xff]
      %v1021 = vld [vmem:[%s839 + $0x48] sm:$0x3]
      %v1022 = vld [vmem:[%s839 + $0x50] sm:$0xff]
      %v1023 = vld [vmem:[%s839 + $0x58] sm:$0x3]
      %v1024 = vld [vmem:[%s839 + $0x60] sm:$0xff]
      %v1025 = vld [vmem:[%s839 + $0x68] sm:$0x3]
      %v1026 = vld [vmem:[%s839 + $0x70] sm:$0xff]
      %v1027 = vld [vmem:[%s839 + $0x78] sm:$0x3]
      %v1028 = vld [vmem:[%s839 + $0x80] sm:$0xff]
      %v1029 = vld [vmem:[%s839 + $0x88] sm:$0x3]
      %v1030 = vld [vmem:[%s839 + $0x90] sm:$0xff]
      %v1031 = vld [vmem:[%s839 + $0x98] sm:$0x3]
      %v1032 = vld [vmem:[%s852] sm:$0xff]
      %v1033 = vld [vmem:[%s852 + $0x8] sm:$0x3]
      %v1034 = vld [vmem:[%s852 + $0x10] sm:$0xff]
      %v1035 = vld [vmem:[%s852 + $0x18] sm:$0x3]
      %v1036 = vld [vmem:[%s852 + $0x20] sm:$0xff]
      %v1037 = vld [vmem:[%s852 + $0x28] sm:$0x3]
      %v1038 = vld [vmem:[%s852 + $0x30] sm:$0xff]
      %v1039 = vld [vmem:[%s852 + $0x38] sm:$0x3]
      %v1040 = vld [vmem:[%s852 + $0x40] sm:$0xff]
      %v1041 = vld [vmem:[%s852 + $0x48] sm:$0x3]
      %v1042 = vld [vmem:[%s852 + $0x50] sm:$0xff]
      %v1043 = vld [vmem:[%s852 + $0x58] sm:$0x3]
      %v1044 = vld [vmem:[%s852 + $0x60] sm:$0xff]
      %v1045 = vld [vmem:[%s852 + $0x68] sm:$0x3]
      %v1046 = vld [vmem:[%s852 + $0x70] sm:$0xff]
      %v1047 = vld [vmem:[%s852 + $0x78] sm:$0x3]
      %v1048 = vld [vmem:[%s852 + $0x80] sm:$0xff]
      %v1049 = vld [vmem:[%s852 + $0x88] sm:$0x3]
      %v1050 = vld [vmem:[%s852 + $0x90] sm:$0xff]
      %v1051 = vld [vmem:[%s852 + $0x98] sm:$0x3]
      %v1052 = vld [vmem:[%s865] sm:$0xff]
      %v1053 = vld [vmem:[%s865 + $0x8] sm:$0x3]
      %v1054 = vld [vmem:[%s865 + $0x10] sm:$0xff]
      %v1055 = vld [vmem:[%s865 + $0x18] sm:$0x3]
      %v1056 = vld [vmem:[%s865 + $0x20] sm:$0xff]
      %v1057 = vld [vmem:[%s865 + $0x28] sm:$0x3]
      %v1058 = vld [vmem:[%s865 + $0x30] sm:$0xff]
      %v1059 = vld [vmem:[%s865 + $0x38] sm:$0x3]
      %v1060 = vld [vmem:[%s865 + $0x40] sm:$0xff]
      %v1061 = vld [vmem:[%s865 + $0x48] sm:$0x3]
      %v1062 = vld [vmem:[%s865 + $0x50] sm:$0xff]
      %v1063 = vld [vmem:[%s865 + $0x58] sm:$0x3]
      %v1064 = vld [vmem:[%s865 + $0x60] sm:$0xff]
      %v1065 = vld [vmem:[%s865 + $0x68] sm:$0x3]
      %v1066 = vld [vmem:[%s865 + $0x70] sm:$0xff]
      %v1067 = vld [vmem:[%s865 + $0x78] sm:$0x3]
      %v1068 = vld [vmem:[%s865 + $0x80] sm:$0xff]
      %v1069 = vld [vmem:[%s865 + $0x88] sm:$0x3]
      %v1070 = vld [vmem:[%s865 + $0x90] sm:$0xff]
      %v1071 = vld [vmem:[%s865 + $0x98] sm:$0x3]
      %v1072 = vld [vmem:[%s878] sm:$0xff]
      %v1073 = vld [vmem:[%s878 + $0x8] sm:$0x3]
      %v1074 = vld [vmem:[%s878 + $0x10] sm:$0xff]
      %v1075 = vld [vmem:[%s878 + $0x18] sm:$0x3]
      %v1076 = vld [vmem:[%s878 + $0x20] sm:$0xff]
      %v1077 = vld [vmem:[%s878 + $0x28] sm:$0x3]
      %v1078 = vld [vmem:[%s878 + $0x30] sm:$0xff]
      %v1079 = vld [vmem:[%s878 + $0x38] sm:$0x3]
      %v1080 = vld [vmem:[%s878 + $0x40] sm:$0xff]
      %v1081 = vld [vmem:[%s878 + $0x48] sm:$0x3]
      %v1082 = vld [vmem:[%s878 + $0x50] sm:$0xff]
      %v1083 = vld [vmem:[%s878 + $0x58] sm:$0x3]
      %v1084 = vld [vmem:[%s878 + $0x60] sm:$0xff]
      %v1085 = vld [vmem:[%s878 + $0x68] sm:$0x3]
      %v1086 = vld [vmem:[%s878 + $0x70] sm:$0xff]
      %v1087 = vld [vmem:[%s878 + $0x78] sm:$0x3]
      %v1088 = vld [vmem:[%s878 + $0x80] sm:$0xff]
      %v1089 = vld [vmem:[%s878 + $0x88] sm:$0x3]
      %v1090 = vld [vmem:[%s878 + $0x90] sm:$0xff]
      %v1091 = vld [vmem:[%s878 + $0x98] sm:$0x3]
      %vm1220 = vcmask 1046528
      %v1221 = vrot.slane %v892, 1
      %v1222 = vrot.slane %v893, 1
      %v1223 = vsel %vm1220, %v1221, %v1222
      %v1224 = vrot.slane %v894, 1
      %v1225 = vrot.slane %v895, 1
      %v1226 = vsel %vm1220, %v1224, %v1225
      %v1227 = vrot.slane %v896, 1
      %v1228 = vrot.slane %v897, 1
      %v1229 = vsel %vm1220, %v1227, %v1228
      %v1230 = vrot.slane %v898, 1
      %v1231 = vrot.slane %v899, 1
      %v1232 = vsel %vm1220, %v1230, %v1231
      %v1233 = vrot.slane %v900, 1
      %v1234 = vrot.slane %v901, 1
      %v1235 = vsel %vm1220, %v1233, %v1234
      %v1236 = vrot.slane %v902, 1
      %v1237 = vrot.slane %v903, 1
      %v1238 = vsel %vm1220, %v1236, %v1237
      %v1239 = vrot.slane %v904, 1
      %v1240 = vrot.slane %v905, 1
      %v1241 = vsel %vm1220, %v1239, %v1240
      %v1242 = vrot.slane %v906, 1
      %v1243 = vrot.slane %v907, 1
      %v1244 = vsel %vm1220, %v1242, %v1243
      %v1245 = vrot.slane %v912, 1
      %v1246 = vrot.slane %v913, 1
      %v1247 = vsel %vm1220, %v1245, %v1246
      %v1248 = vrot.slane %v914, 1
      %v1249 = vrot.slane %v915, 1
      %v1250 = vsel %vm1220, %v1248, %v1249
      %v1251 = vrot.slane %v916, 1
      %v1252 = vrot.slane %v917, 1
      %v1253 = vsel %vm1220, %v1251, %v1252
      %v1254 = vrot.slane %v918, 1
      %v1255 = vrot.slane %v919, 1
      %v1256 = vsel %vm1220, %v1254, %v1255
      %v1257 = vrot.slane %v920, 1
      %v1258 = vrot.slane %v921, 1
      %v1259 = vsel %vm1220, %v1257, %v1258
      %v1260 = vrot.slane %v922, 1
      %v1261 = vrot.slane %v923, 1
      %v1262 = vsel %vm1220, %v1260, %v1261
      %v1263 = vrot.slane %v924, 1
      %v1264 = vrot.slane %v925, 1
      %v1265 = vsel %vm1220, %v1263, %v1264
      %v1266 = vrot.slane %v926, 1
      %v1267 = vrot.slane %v927, 1
      %v1268 = vsel %vm1220, %v1266, %v1267
      %v1269 = vrot.slane %v932, 1
      %v1270 = vrot.slane %v933, 1
      %v1271 = vsel %vm1220, %v1269, %v1270
      %v1272 = vrot.slane %v934, 1
      %v1273 = vrot.slane %v935, 1
      %v1274 = vsel %vm1220, %v1272, %v1273
      %v1275 = vrot.slane %v936, 1
      %v1276 = vrot.slane %v937, 1
      %v1277 = vsel %vm1220, %v1275, %v1276
      %v1278 = vrot.slane %v938, 1
      %v1279 = vrot.slane %v939, 1
      %v1280 = vsel %vm1220, %v1278, %v1279
      %v1281 = vrot.slane %v940, 1
      %v1282 = vrot.slane %v941, 1
      %v1283 = vsel %vm1220, %v1281, %v1282
      %v1284 = vrot.slane %v942, 1
      %v1285 = vrot.slane %v943, 1
      %v1286 = vsel %vm1220, %v1284, %v1285
      %v1287 = vrot.slane %v944, 1
      %v1288 = vrot.slane %v945, 1
      %v1289 = vsel %vm1220, %v1287, %v1288
      %v1290 = vrot.slane %v946, 1
      %v1291 = vrot.slane %v947, 1
      %v1292 = vsel %vm1220, %v1290, %v1291
      %v1293 = vrot.slane %v952, 1
      %v1294 = vrot.slane %v953, 1
      %v1295 = vsel %vm1220, %v1293, %v1294
      %v1296 = vrot.slane %v954, 1
      %v1297 = vrot.slane %v955, 1
      %v1298 = vsel %vm1220, %v1296, %v1297
      %v1299 = vrot.slane %v956, 1
      %v1300 = vrot.slane %v957, 1
      %v1301 = vsel %vm1220, %v1299, %v1300
      %v1302 = vrot.slane %v958, 1
      %v1303 = vrot.slane %v959, 1
      %v1304 = vsel %vm1220, %v1302, %v1303
      %v1305 = vrot.slane %v960, 1
      %v1306 = vrot.slane %v961, 1
      %v1307 = vsel %vm1220, %v1305, %v1306
      %v1308 = vrot.slane %v962, 1
      %v1309 = vrot.slane %v963, 1
      %v1310 = vsel %vm1220, %v1308, %v1309
      %v1311 = vrot.slane %v964, 1
      %v1312 = vrot.slane %v965, 1
      %v1313 = vsel %vm1220, %v1311, %v1312
      %v1314 = vrot.slane %v966, 1
      %v1315 = vrot.slane %v967, 1
      %v1316 = vsel %vm1220, %v1314, %v1315
      %v1317 = vrot.slane %v972, 1
      %v1318 = vrot.slane %v973, 1
      %v1319 = vsel %vm1220, %v1317, %v1318
      %v1320 = vrot.slane %v974, 1
      %v1321 = vrot.slane %v975, 1
      %v1322 = vsel %vm1220, %v1320, %v1321
      %v1323 = vrot.slane %v976, 1
      %v1324 = vrot.slane %v977, 1
      %v1325 = vsel %vm1220, %v1323, %v1324
      %v1326 = vrot.slane %v978, 1
      %v1327 = vrot.slane %v979, 1
      %v1328 = vsel %vm1220, %v1326, %v1327
      %v1329 = vrot.slane %v980, 1
      %v1330 = vrot.slane %v981, 1
      %v1331 = vsel %vm1220, %v1329, %v1330
      %v1332 = vrot.slane %v982, 1
      %v1333 = vrot.slane %v983, 1
      %v1334 = vsel %vm1220, %v1332, %v1333
      %v1335 = vrot.slane %v984, 1
      %v1336 = vrot.slane %v985, 1
      %v1337 = vsel %vm1220, %v1335, %v1336
      %v1338 = vrot.slane %v986, 1
      %v1339 = vrot.slane %v987, 1
      %v1340 = vsel %vm1220, %v1338, %v1339
      %v1341 = vrot.slane %v992, 1
      %v1342 = vrot.slane %v993, 1
      %v1343 = vsel %vm1220, %v1341, %v1342
      %v1344 = vrot.slane %v994, 1
      %v1345 = vrot.slane %v995, 1
      %v1346 = vsel %vm1220, %v1344, %v1345
      %v1347 = vrot.slane %v996, 1
      %v1348 = vrot.slane %v997, 1
      %v1349 = vsel %vm1220, %v1347, %v1348
      %v1350 = vrot.slane %v998, 1
      %v1351 = vrot.slane %v999, 1
      %v1352 = vsel %vm1220, %v1350, %v1351
      %v1353 = vrot.slane %v1000, 1
      %v1354 = vrot.slane %v1001, 1
      %v1355 = vsel %vm1220, %v1353, %v1354
      %v1356 = vrot.slane %v1002, 1
      %v1357 = vrot.slane %v1003, 1
      %v1358 = vsel %vm1220, %v1356, %v1357
      %v1359 = vrot.slane %v1004, 1
      %v1360 = vrot.slane %v1005, 1
      %v1361 = vsel %vm1220, %v1359, %v1360
      %v1362 = vrot.slane %v1006, 1
      %v1363 = vrot.slane %v1007, 1
      %v1364 = vsel %vm1220, %v1362, %v1363
      %v1365 = vrot.slane %v1012, 1
      %v1366 = vrot.slane %v1013, 1
      %v1367 = vsel %vm1220, %v1365, %v1366
      %v1368 = vrot.slane %v1014, 1
      %v1369 = vrot.slane %v1015, 1
      %v1370 = vsel %vm1220, %v1368, %v1369
      %v1371 = vrot.slane %v1016, 1
      %v1372 = vrot.slane %v1017, 1
      %v1373 = vsel %vm1220, %v1371, %v1372
      %v1374 = vrot.slane %v1018, 1
      %v1375 = vrot.slane %v1019, 1
      %v1376 = vsel %vm1220, %v1374, %v1375
      %v1377 = vrot.slane %v1020, 1
      %v1378 = vrot.slane %v1021, 1
      %v1379 = vsel %vm1220, %v1377, %v1378
      %v1380 = vrot.slane %v1022, 1
      %v1381 = vrot.slane %v1023, 1
      %v1382 = vsel %vm1220, %v1380, %v1381
      %v1383 = vrot.slane %v1024, 1
      %v1384 = vrot.slane %v1025, 1
      %v1385 = vsel %vm1220, %v1383, %v1384
      %v1386 = vrot.slane %v1026, 1
      %v1387 = vrot.slane %v1027, 1
      %v1388 = vsel %vm1220, %v1386, %v1387
      %v1389 = vrot.slane %v1032, 1
      %v1390 = vrot.slane %v1033, 1
      %v1391 = vsel %vm1220, %v1389, %v1390
      %v1392 = vrot.slane %v1034, 1
      %v1393 = vrot.slane %v1035, 1
      %v1394 = vsel %vm1220, %v1392, %v1393
      %v1395 = vrot.slane %v1036, 1
      %v1396 = vrot.slane %v1037, 1
      %v1397 = vsel %vm1220, %v1395, %v1396
      %v1398 = vrot.slane %v1038, 1
      %v1399 = vrot.slane %v1039, 1
      %v1400 = vsel %vm1220, %v1398, %v1399
      %v1401 = vrot.slane %v1040, 1
      %v1402 = vrot.slane %v1041, 1
      %v1403 = vsel %vm1220, %v1401, %v1402
      %v1404 = vrot.slane %v1042, 1
      %v1405 = vrot.slane %v1043, 1
      %v1406 = vsel %vm1220, %v1404, %v1405
      %v1407 = vrot.slane %v1044, 1
      %v1408 = vrot.slane %v1045, 1
      %v1409 = vsel %vm1220, %v1407, %v1408
      %v1410 = vrot.slane %v1046, 1
      %v1411 = vrot.slane %v1047, 1
      %v1412 = vsel %vm1220, %v1410, %v1411
      %1413 = vrot.lane.b32.xlu0 %v1223, 4
      %v1414 = vpop.permute.xlu0 %1413
      %1415 = vrot.lane.b32.xlu0 %v1226, 4
      %v1416 = vpop.permute.xlu0 %1415
      %1417 = vrot.lane.b32.xlu0 %v1229, 4
      %v1418 = vpop.permute.xlu0 %1417
      %1419 = vrot.lane.b32.xlu0 %v1232, 4
      %v1420 = vpop.permute.xlu0 %1419
      %1421 = vrot.lane.b32.xlu0 %v1235, 4
      %v1422 = vpop.permute.xlu0 %1421
      %1423 = vrot.lane.b32.xlu0 %v1238, 4
      %v1424 = vpop.permute.xlu0 %1423
      %1425 = vrot.lane.b32.xlu0 %v1241, 4
      %v1426 = vpop.permute.xlu0 %1425
      %1427 = vrot.lane.b32.xlu0 %v1244, 4
      %v1428 = vpop.permute.xlu0 %1427
      %1429 = vrot.lane.b32.xlu0 %v1247, 4
      %v1430 = vpop.permute.xlu0 %1429
      %1431 = vrot.lane.b32.xlu0 %v1250, 4
      %v1432 = vpop.permute.xlu0 %1431
      %1433 = vrot.lane.b32.xlu0 %v1253, 4
      %v1434 = vpop.permute.xlu0 %1433
      %1435 = vrot.lane.b32.xlu0 %v1256, 4
      %v1436 = vpop.permute.xlu0 %1435
      %1437 = vrot.lane.b32.xlu0 %v1259, 4
      %v1438 = vpop.permute.xlu0 %1437
      %1439 = vrot.lane.b32.xlu0 %v1262, 4
      %v1440 = vpop.permute.xlu0 %1439
      %1441 = vrot.lane.b32.xlu0 %v1265, 4
      %v1442 = vpop.permute.xlu0 %1441
      %1443 = vrot.lane.b32.xlu0 %v1268, 4
      %v1444 = vpop.permute.xlu0 %1443
      %1445 = vrot.lane.b32.xlu0 %v1271, 4
      %v1446 = vpop.permute.xlu0 %1445
      %1447 = vrot.lane.b32.xlu0 %v1274, 4
      %v1448 = vpop.permute.xlu0 %1447
      %1449 = vrot.lane.b32.xlu0 %v1277, 4
      %v1450 = vpop.permute.xlu0 %1449
      %1451 = vrot.lane.b32.xlu0 %v1280, 4
      %v1452 = vpop.permute.xlu0 %1451
      %1453 = vrot.lane.b32.xlu0 %v1283, 4
      %v1454 = vpop.permute.xlu0 %1453
      %1455 = vrot.lane.b32.xlu0 %v1286, 4
      %v1456 = vpop.permute.xlu0 %1455
      %1457 = vrot.lane.b32.xlu0 %v1289, 4
      %v1458 = vpop.permute.xlu0 %1457
      %1459 = vrot.lane.b32.xlu0 %v1292, 4
      %v1460 = vpop.permute.xlu0 %1459
      %1461 = vrot.lane.b32.xlu0 %v1295, 4
      %v1462 = vpop.permute.xlu0 %1461
      %1463 = vrot.lane.b32.xlu0 %v1298, 4
      %v1464 = vpop.permute.xlu0 %1463
      %1465 = vrot.lane.b32.xlu0 %v1301, 4
      %v1466 = vpop.permute.xlu0 %1465
      %1467 = vrot.lane.b32.xlu0 %v1304, 4
      %v1468 = vpop.permute.xlu0 %1467
      %1469 = vrot.lane.b32.xlu0 %v1307, 4
      %v1470 = vpop.permute.xlu0 %1469
      %1471 = vrot.lane.b32.xlu0 %v1310, 4
      %v1472 = vpop.permute.xlu0 %1471
      %1473 = vrot.lane.b32.xlu0 %v1313, 4
      %v1474 = vpop.permute.xlu0 %1473
      %1475 = vrot.lane.b32.xlu0 %v1316, 4
      %v1476 = vpop.permute.xlu0 %1475
      %1477 = vrot.lane.b32.xlu0 %v1319, 4
      %v1478 = vpop.permute.xlu0 %1477
      %1479 = vrot.lane.b32.xlu0 %v1322, 4
      %v1480 = vpop.permute.xlu0 %1479
      %1481 = vrot.lane.b32.xlu0 %v1325, 4
      %v1482 = vpop.permute.xlu0 %1481
      %1483 = vrot.lane.b32.xlu0 %v1328, 4
      %v1484 = vpop.permute.xlu0 %1483
      %1485 = vrot.lane.b32.xlu0 %v1331, 4
      %v1486 = vpop.permute.xlu0 %1485
      %1487 = vrot.lane.b32.xlu0 %v1334, 4
      %v1488 = vpop.permute.xlu0 %1487
      %1489 = vrot.lane.b32.xlu0 %v1337, 4
      %v1490 = vpop.permute.xlu0 %1489
      %1491 = vrot.lane.b32.xlu0 %v1340, 4
      %v1492 = vpop.permute.xlu0 %1491
      %1493 = vrot.lane.b32.xlu0 %v1343, 4
      %v1494 = vpop.permute.xlu0 %1493
      %1495 = vrot.lane.b32.xlu0 %v1346, 4
      %v1496 = vpop.permute.xlu0 %1495
      %1497 = vrot.lane.b32.xlu0 %v1349, 4
      %v1498 = vpop.permute.xlu0 %1497
      %1499 = vrot.lane.b32.xlu0 %v1352, 4
      %v1500 = vpop.permute.xlu0 %1499
      %1501 = vrot.lane.b32.xlu0 %v1355, 4
      %v1502 = vpop.permute.xlu0 %1501
      %1503 = vrot.lane.b32.xlu0 %v1358, 4
      %v1504 = vpop.permute.xlu0 %1503
      %1505 = vrot.lane.b32.xlu0 %v1361, 4
      %v1506 = vpop.permute.xlu0 %1505
      %1507 = vrot.lane.b32.xlu0 %v1364, 4
      %v1508 = vpop.permute.xlu0 %1507
      %1509 = vrot.lane.b32.xlu0 %v1367, 4
      %v1510 = vpop.permute.xlu0 %1509
      %1511 = vrot.lane.b32.xlu0 %v1370, 4
      %v1512 = vpop.permute.xlu0 %1511
      %1513 = vrot.lane.b32.xlu0 %v1373, 4
      %v1514 = vpop.permute.xlu0 %1513
      %1515 = vrot.lane.b32.xlu0 %v1376, 4
      %v1516 = vpop.permute.xlu0 %1515
      %1517 = vrot.lane.b32.xlu0 %v1379, 4
      %v1518 = vpop.permute.xlu0 %1517
      %1519 = vrot.lane.b32.xlu0 %v1382, 4
      %v1520 = vpop.permute.xlu0 %1519
      %1521 = vrot.lane.b32.xlu0 %v1385, 4
      %v1522 = vpop.permute.xlu0 %1521
      %1523 = vrot.lane.b32.xlu0 %v1388, 4
      %v1524 = vpop.permute.xlu0 %1523
      %1525 = vrot.lane.b32.xlu0 %v1391, 4
      %v1526 = vpop.permute.xlu0 %1525
      %1527 = vrot.lane.b32.xlu0 %v1394, 4
      %v1528 = vpop.permute.xlu0 %1527
      %1529 = vrot.lane.b32.xlu0 %v1397, 4
      %v1530 = vpop.permute.xlu0 %1529
      %1531 = vrot.lane.b32.xlu0 %v1400, 4
      %v1532 = vpop.permute.xlu0 %1531
      %1533 = vrot.lane.b32.xlu0 %v1403, 4
      %v1534 = vpop.permute.xlu0 %1533
      %1535 = vrot.lane.b32.xlu0 %v1406, 4
      %v1536 = vpop.permute.xlu0 %1535
      %1537 = vrot.lane.b32.xlu0 %v1409, 4
      %v1538 = vpop.permute.xlu0 %1537
      %1539 = vrot.lane.b32.xlu0 %v1412, 4
      %v1540 = vpop.permute.xlu0 %1539
      %vm1605 = vcmask 1045504
      %v1606 = vrot.slane %v892, 2
      %v1607 = vrot.slane %v893, 2
      %v1608 = vsel %vm1605, %v1606, %v1607
      %v1609 = vrot.slane %v894, 2
      %v1610 = vrot.slane %v895, 2
      %v1611 = vsel %vm1605, %v1609, %v1610
      %v1612 = vrot.slane %v896, 2
      %v1613 = vrot.slane %v897, 2
      %v1614 = vsel %vm1605, %v1612, %v1613
      %v1615 = vrot.slane %v898, 2
      %v1616 = vrot.slane %v899, 2
      %v1617 = vsel %vm1605, %v1615, %v1616
      %v1618 = vrot.slane %v900, 2
      %v1619 = vrot.slane %v901, 2
      %v1620 = vsel %vm1605, %v1618, %v1619
      %v1621 = vrot.slane %v902, 2
      %v1622 = vrot.slane %v903, 2
      %v1623 = vsel %vm1605, %v1621, %v1622
      %v1624 = vrot.slane %v904, 2
      %v1625 = vrot.slane %v905, 2
      %v1626 = vsel %vm1605, %v1624, %v1625
      %v1627 = vrot.slane %v906, 2
      %v1628 = vrot.slane %v907, 2
      %v1629 = vsel %vm1605, %v1627, %v1628
      %v1630 = vrot.slane %v912, 2
      %v1631 = vrot.slane %v913, 2
      %v1632 = vsel %vm1605, %v1630, %v1631
      %v1633 = vrot.slane %v914, 2
      %v1634 = vrot.slane %v915, 2
      %v1635 = vsel %vm1605, %v1633, %v1634
      %v1636 = vrot.slane %v916, 2
      %v1637 = vrot.slane %v917, 2
      %v1638 = vsel %vm1605, %v1636, %v1637
      %v1639 = vrot.slane %v918, 2
      %v1640 = vrot.slane %v919, 2
      %v1641 = vsel %vm1605, %v1639, %v1640
      %v1642 = vrot.slane %v920, 2
      %v1643 = vrot.slane %v921, 2
      %v1644 = vsel %vm1605, %v1642, %v1643
      %v1645 = vrot.slane %v922, 2
      %v1646 = vrot.slane %v923, 2
      %v1647 = vsel %vm1605, %v1645, %v1646
      %v1648 = vrot.slane %v924, 2
      %v1649 = vrot.slane %v925, 2
      %v1650 = vsel %vm1605, %v1648, %v1649
      %v1651 = vrot.slane %v926, 2
      %v1652 = vrot.slane %v927, 2
      %v1653 = vsel %vm1605, %v1651, %v1652
      %v1654 = vrot.slane %v932, 2
      %v1655 = vrot.slane %v933, 2
      %v1656 = vsel %vm1605, %v1654, %v1655
      %v1657 = vrot.slane %v934, 2
      %v1658 = vrot.slane %v935, 2
      %v1659 = vsel %vm1605, %v1657, %v1658
      %v1660 = vrot.slane %v936, 2
      %v1661 = vrot.slane %v937, 2
      %v1662 = vsel %vm1605, %v1660, %v1661
      %v1663 = vrot.slane %v938, 2
      %v1664 = vrot.slane %v939, 2
      %v1665 = vsel %vm1605, %v1663, %v1664
      %v1666 = vrot.slane %v940, 2
      %v1667 = vrot.slane %v941, 2
      %v1668 = vsel %vm1605, %v1666, %v1667
      %v1669 = vrot.slane %v942, 2
      %v1670 = vrot.slane %v943, 2
      %v1671 = vsel %vm1605, %v1669, %v1670
      %v1672 = vrot.slane %v944, 2
      %v1673 = vrot.slane %v945, 2
      %v1674 = vsel %vm1605, %v1672, %v1673
      %v1675 = vrot.slane %v946, 2
      %v1676 = vrot.slane %v947, 2
      %v1677 = vsel %vm1605, %v1675, %v1676
      %v1678 = vrot.slane %v952, 2
      %v1679 = vrot.slane %v953, 2
      %v1680 = vsel %vm1605, %v1678, %v1679
      %v1681 = vrot.slane %v954, 2
      %v1682 = vrot.slane %v955, 2
      %v1683 = vsel %vm1605, %v1681, %v1682
      %v1684 = vrot.slane %v956, 2
      %v1685 = vrot.slane %v957, 2
      %v1686 = vsel %vm1605, %v1684, %v1685
      %v1687 = vrot.slane %v958, 2
      %v1688 = vrot.slane %v959, 2
      %v1689 = vsel %vm1605, %v1687, %v1688
      %v1690 = vrot.slane %v960, 2
      %v1691 = vrot.slane %v961, 2
      %v1692 = vsel %vm1605, %v1690, %v1691
      %v1693 = vrot.slane %v962, 2
      %v1694 = vrot.slane %v963, 2
      %v1695 = vsel %vm1605, %v1693, %v1694
      %v1696 = vrot.slane %v964, 2
      %v1697 = vrot.slane %v965, 2
      %v1698 = vsel %vm1605, %v1696, %v1697
      %v1699 = vrot.slane %v966, 2
      %v1700 = vrot.slane %v967, 2
      %v1701 = vsel %vm1605, %v1699, %v1700
      %v1702 = vrot.slane %v972, 2
      %v1703 = vrot.slane %v973, 2
      %v1704 = vsel %vm1605, %v1702, %v1703
      %v1705 = vrot.slane %v974, 2
      %v1706 = vrot.slane %v975, 2
      %v1707 = vsel %vm1605, %v1705, %v1706
      %v1708 = vrot.slane %v976, 2
      %v1709 = vrot.slane %v977, 2
      %v1710 = vsel %vm1605, %v1708, %v1709
      %v1711 = vrot.slane %v978, 2
      %v1712 = vrot.slane %v979, 2
      %v1713 = vsel %vm1605, %v1711, %v1712
      %v1714 = vrot.slane %v980, 2
      %v1715 = vrot.slane %v981, 2
      %v1716 = vsel %vm1605, %v1714, %v1715
      %v1717 = vrot.slane %v982, 2
      %v1718 = vrot.slane %v983, 2
      %v1719 = vsel %vm1605, %v1717, %v1718
      %v1720 = vrot.slane %v984, 2
      %v1721 = vrot.slane %v985, 2
      %v1722 = vsel %vm1605, %v1720, %v1721
      %v1723 = vrot.slane %v986, 2
      %v1724 = vrot.slane %v987, 2
      %v1725 = vsel %vm1605, %v1723, %v1724
      %v1726 = vrot.slane %v992, 2
      %v1727 = vrot.slane %v993, 2
      %v1728 = vsel %vm1605, %v1726, %v1727
      %v1729 = vrot.slane %v994, 2
      %v1730 = vrot.slane %v995, 2
      %v1731 = vsel %vm1605, %v1729, %v1730
      %v1732 = vrot.slane %v996, 2
      %v1733 = vrot.slane %v997, 2
      %v1734 = vsel %vm1605, %v1732, %v1733
      %v1735 = vrot.slane %v998, 2
      %v1736 = vrot.slane %v999, 2
      %v1737 = vsel %vm1605, %v1735, %v1736
      %v1738 = vrot.slane %v1000, 2
      %v1739 = vrot.slane %v1001, 2
      %v1740 = vsel %vm1605, %v1738, %v1739
      %v1741 = vrot.slane %v1002, 2
      %v1742 = vrot.slane %v1003, 2
      %v1743 = vsel %vm1605, %v1741, %v1742
      %v1744 = vrot.slane %v1004, 2
      %v1745 = vrot.slane %v1005, 2
      %v1746 = vsel %vm1605, %v1744, %v1745
      %v1747 = vrot.slane %v1006, 2
      %v1748 = vrot.slane %v1007, 2
      %v1749 = vsel %vm1605, %v1747, %v1748
      %v1750 = vrot.slane %v1012, 2
      %v1751 = vrot.slane %v1013, 2
      %v1752 = vsel %vm1605, %v1750, %v1751
      %v1753 = vrot.slane %v1014, 2
      %v1754 = vrot.slane %v1015, 2
      %v1755 = vsel %vm1605, %v1753, %v1754
      %v1756 = vrot.slane %v1016, 2
      %v1757 = vrot.slane %v1017, 2
      %v1758 = vsel %vm1605, %v1756, %v1757
      %v1759 = vrot.slane %v1018, 2
      %v1760 = vrot.slane %v1019, 2
      %v1761 = vsel %vm1605, %v1759, %v1760
      %v1762 = vrot.slane %v1020, 2
      %v1763 = vrot.slane %v1021, 2
      %v1764 = vsel %vm1605, %v1762, %v1763
      %v1765 = vrot.slane %v1022, 2
      %v1766 = vrot.slane %v1023, 2
      %v1767 = vsel %vm1605, %v1765, %v1766
      %v1768 = vrot.slane %v1024, 2
      %v1769 = vrot.slane %v1025, 2
      %v1770 = vsel %vm1605, %v1768, %v1769
      %v1771 = vrot.slane %v1026, 2
      %v1772 = vrot.slane %v1027, 2
      %v1773 = vsel %vm1605, %v1771, %v1772
      %v1774 = vrot.slane %v1032, 2
      %v1775 = vrot.slane %v1033, 2
      %v1776 = vsel %vm1605, %v1774, %v1775
      %v1777 = vrot.slane %v1034, 2
      %v1778 = vrot.slane %v1035, 2
      %v1779 = vsel %vm1605, %v1777, %v1778
      %v1780 = vrot.slane %v1036, 2
      %v1781 = vrot.slane %v1037, 2
      %v1782 = vsel %vm1605, %v1780, %v1781
      %v1783 = vrot.slane %v1038, 2
      %v1784 = vrot.slane %v1039, 2
      %v1785 = vsel %vm1605, %v1783, %v1784
      %v1786 = vrot.slane %v1040, 2
      %v1787 = vrot.slane %v1041, 2
      %v1788 = vsel %vm1605, %v1786, %v1787
      %v1789 = vrot.slane %v1042, 2
      %v1790 = vrot.slane %v1043, 2
      %v1791 = vsel %vm1605, %v1789, %v1790
      %v1792 = vrot.slane %v1044, 2
      %v1793 = vrot.slane %v1045, 2
      %v1794 = vsel %vm1605, %v1792, %v1793
      %v1795 = vrot.slane %v1046, 2
      %v1796 = vrot.slane %v1047, 2
      %v1797 = vsel %vm1605, %v1795, %v1796
      %1798 = vrot.lane.b32.xlu0 %v1608, 8
      %v1799 = vpop.permute.xlu0 %1798
      %1800 = vrot.lane.b32.xlu0 %v1611, 8
      %v1801 = vpop.permute.xlu0 %1800
      %1802 = vrot.lane.b32.xlu0 %v1614, 8
      %v1803 = vpop.permute.xlu0 %1802
      %1804 = vrot.lane.b32.xlu0 %v1617, 8
      %v1805 = vpop.permute.xlu0 %1804
      %1806 = vrot.lane.b32.xlu0 %v1620, 8
      %v1807 = vpop.permute.xlu0 %1806
      %1808 = vrot.lane.b32.xlu0 %v1623, 8
      %v1809 = vpop.permute.xlu0 %1808
      %1810 = vrot.lane.b32.xlu0 %v1626, 8
      %v1811 = vpop.permute.xlu0 %1810
      %1812 = vrot.lane.b32.xlu0 %v1629, 8
      %v1813 = vpop.permute.xlu0 %1812
      %1814 = vrot.lane.b32.xlu0 %v1632, 8
      %v1815 = vpop.permute.xlu0 %1814
      %1816 = vrot.lane.b32.xlu0 %v1635, 8
      %v1817 = vpop.permute.xlu0 %1816
      %1818 = vrot.lane.b32.xlu0 %v1638, 8
      %v1819 = vpop.permute.xlu0 %1818
      %1820 = vrot.lane.b32.xlu0 %v1641, 8
      %v1821 = vpop.permute.xlu0 %1820
      %1822 = vrot.lane.b32.xlu0 %v1644, 8
      %v1823 = vpop.permute.xlu0 %1822
      %1824 = vrot.lane.b32.xlu0 %v1647, 8
      %v1825 = vpop.permute.xlu0 %1824
      %1826 = vrot.lane.b32.xlu0 %v1650, 8
      %v1827 = vpop.permute.xlu0 %1826
      %1828 = vrot.lane.b32.xlu0 %v1653, 8
      %v1829 = vpop.permute.xlu0 %1828
      %1830 = vrot.lane.b32.xlu0 %v1656, 8
      %v1831 = vpop.permute.xlu0 %1830
      %1832 = vrot.lane.b32.xlu0 %v1659, 8
      %v1833 = vpop.permute.xlu0 %1832
      %1834 = vrot.lane.b32.xlu0 %v1662, 8
      %v1835 = vpop.permute.xlu0 %1834
      %1836 = vrot.lane.b32.xlu0 %v1665, 8
      %v1837 = vpop.permute.xlu0 %1836
      %1838 = vrot.lane.b32.xlu0 %v1668, 8
      %v1839 = vpop.permute.xlu0 %1838
      %1840 = vrot.lane.b32.xlu0 %v1671, 8
      %v1841 = vpop.permute.xlu0 %1840
      %1842 = vrot.lane.b32.xlu0 %v1674, 8
      %v1843 = vpop.permute.xlu0 %1842
      %1844 = vrot.lane.b32.xlu0 %v1677, 8
      %v1845 = vpop.permute.xlu0 %1844
      %1846 = vrot.lane.b32.xlu0 %v1680, 8
      %v1847 = vpop.permute.xlu0 %1846
      %1848 = vrot.lane.b32.xlu0 %v1683, 8
      %v1849 = vpop.permute.xlu0 %1848
      %1850 = vrot.lane.b32.xlu0 %v1686, 8
      %v1851 = vpop.permute.xlu0 %1850
      %1852 = vrot.lane.b32.xlu0 %v1689, 8
      %v1853 = vpop.permute.xlu0 %1852
      %1854 = vrot.lane.b32.xlu0 %v1692, 8
      %v1855 = vpop.permute.xlu0 %1854
      %1856 = vrot.lane.b32.xlu0 %v1695, 8
      %v1857 = vpop.permute.xlu0 %1856
      %1858 = vrot.lane.b32.xlu0 %v1698, 8
      %v1859 = vpop.permute.xlu0 %1858
      %1860 = vrot.lane.b32.xlu0 %v1701, 8
      %v1861 = vpop.permute.xlu0 %1860
      %1862 = vrot.lane.b32.xlu0 %v1704, 8
      %v1863 = vpop.permute.xlu0 %1862
      %1864 = vrot.lane.b32.xlu0 %v1707, 8
      %v1865 = vpop.permute.xlu0 %1864
      %1866 = vrot.lane.b32.xlu0 %v1710, 8
      %v1867 = vpop.permute.xlu0 %1866
      %1868 = vrot.lane.b32.xlu0 %v1713, 8
      %v1869 = vpop.permute.xlu0 %1868
      %1870 = vrot.lane.b32.xlu0 %v1716, 8
      %v1871 = vpop.permute.xlu0 %1870
      %1872 = vrot.lane.b32.xlu0 %v1719, 8
      %v1873 = vpop.permute.xlu0 %1872
      %1874 = vrot.lane.b32.xlu0 %v1722, 8
      %v1875 = vpop.permute.xlu0 %1874
      %1876 = vrot.lane.b32.xlu0 %v1725, 8
      %v1877 = vpop.permute.xlu0 %1876
      %1878 = vrot.lane.b32.xlu0 %v1728, 8
      %v1879 = vpop.permute.xlu0 %1878
      %1880 = vrot.lane.b32.xlu0 %v1731, 8
      %v1881 = vpop.permute.xlu0 %1880
      %1882 = vrot.lane.b32.xlu0 %v1734, 8
      %v1883 = vpop.permute.xlu0 %1882
      %1884 = vrot.lane.b32.xlu0 %v1737, 8
      %v1885 = vpop.permute.xlu0 %1884
      %1886 = vrot.lane.b32.xlu0 %v1740, 8
      %v1887 = vpop.permute.xlu0 %1886
      %1888 = vrot.lane.b32.xlu0 %v1743, 8
      %v1889 = vpop.permute.xlu0 %1888
      %1890 = vrot.lane.b32.xlu0 %v1746, 8
      %v1891 = vpop.permute.xlu0 %1890
      %1892 = vrot.lane.b32.xlu0 %v1749, 8
      %v1893 = vpop.permute.xlu0 %1892
      %1894 = vrot.lane.b32.xlu0 %v1752, 8
      %v1895 = vpop.permute.xlu0 %1894
      %1896 = vrot.lane.b32.xlu0 %v1755, 8
      %v1897 = vpop.permute.xlu0 %1896
      %1898 = vrot.lane.b32.xlu0 %v1758, 8
      %v1899 = vpop.permute.xlu0 %1898
      %1900 = vrot.lane.b32.xlu0 %v1761, 8
      %v1901 = vpop.permute.xlu0 %1900
      %1902 = vrot.lane.b32.xlu0 %v1764, 8
      %v1903 = vpop.permute.xlu0 %1902
      %1904 = vrot.lane.b32.xlu0 %v1767, 8
      %v1905 = vpop.permute.xlu0 %1904
      %1906 = vrot.lane.b32.xlu0 %v1770, 8
      %v1907 = vpop.permute.xlu0 %1906
      %1908 = vrot.lane.b32.xlu0 %v1773, 8
      %v1909 = vpop.permute.xlu0 %1908
      %1910 = vrot.lane.b32.xlu0 %v1776, 8
      %v1911 = vpop.permute.xlu0 %1910
      %1912 = vrot.lane.b32.xlu0 %v1779, 8
      %v1913 = vpop.permute.xlu0 %1912
      %1914 = vrot.lane.b32.xlu0 %v1782, 8
      %v1915 = vpop.permute.xlu0 %1914
      %1916 = vrot.lane.b32.xlu0 %v1785, 8
      %v1917 = vpop.permute.xlu0 %1916
      %1918 = vrot.lane.b32.xlu0 %v1788, 8
      %v1919 = vpop.permute.xlu0 %1918
      %1920 = vrot.lane.b32.xlu0 %v1791, 8
      %v1921 = vpop.permute.xlu0 %1920
      %1922 = vrot.lane.b32.xlu0 %v1794, 8
      %v1923 = vpop.permute.xlu0 %1922
      %1924 = vrot.lane.b32.xlu0 %v1797, 8
      %v1925 = vpop.permute.xlu0 %1924
      %1998 = vrot.lane.b32.xlu0 %v894, 12
      %v1999 = vpop.permute.xlu0 %1998
      %2000 = vrot.lane.b32.xlu0 %v896, 12
      %v2001 = vpop.permute.xlu0 %2000
      %2002 = vrot.lane.b32.xlu0 %v898, 12
      %v2003 = vpop.permute.xlu0 %2002
      %2004 = vrot.lane.b32.xlu0 %v900, 12
      %v2005 = vpop.permute.xlu0 %2004
      %2006 = vrot.lane.b32.xlu0 %v902, 12
      %v2007 = vpop.permute.xlu0 %2006
      %2008 = vrot.lane.b32.xlu0 %v904, 12
      %v2009 = vpop.permute.xlu0 %2008
      %2010 = vrot.lane.b32.xlu0 %v906, 12
      %v2011 = vpop.permute.xlu0 %2010
      %2012 = vrot.lane.b32.xlu0 %v908, 12
      %v2013 = vpop.permute.xlu0 %2012
      %2014 = vrot.lane.b32.xlu0 %v914, 12
      %v2015 = vpop.permute.xlu0 %2014
      %2016 = vrot.lane.b32.xlu0 %v916, 12
      %v2017 = vpop.permute.xlu0 %2016
      %2018 = vrot.lane.b32.xlu0 %v918, 12
      %v2019 = vpop.permute.xlu0 %2018
      %2020 = vrot.lane.b32.xlu0 %v920, 12
      %v2021 = vpop.permute.xlu0 %2020
      %2022 = vrot.lane.b32.xlu0 %v922, 12
      %v2023 = vpop.permute.xlu0 %2022
      %2024 = vrot.lane.b32.xlu0 %v924, 12
      %v2025 = vpop.permute.xlu0 %2024
      %2026 = vrot.lane.b32.xlu0 %v926, 12
      %v2027 = vpop.permute.xlu0 %2026
      %2028 = vrot.lane.b32.xlu0 %v928, 12
      %v2029 = vpop.permute.xlu0 %2028
      %2030 = vrot.lane.b32.xlu0 %v934, 12
      %v2031 = vpop.permute.xlu0 %2030
      %2032 = vrot.lane.b32.xlu0 %v936, 12
      %v2033 = vpop.permute.xlu0 %2032
      %2034 = vrot.lane.b32.xlu0 %v938, 12
      %v2035 = vpop.permute.xlu0 %2034
      %2036 = vrot.lane.b32.xlu0 %v940, 12
      %v2037 = vpop.permute.xlu0 %2036
      %2038 = vrot.lane.b32.xlu0 %v942, 12
      %v2039 = vpop.permute.xlu0 %2038
      %2040 = vrot.lane.b32.xlu0 %v944, 12
      %v2041 = vpop.permute.xlu0 %2040
      %2042 = vrot.lane.b32.xlu0 %v946, 12
      %v2043 = vpop.permute.xlu0 %2042
      %2044 = vrot.lane.b32.xlu0 %v948, 12
      %v2045 = vpop.permute.xlu0 %2044
      %2046 = vrot.lane.b32.xlu0 %v954, 12
      %v2047 = vpop.permute.xlu0 %2046
      %2048 = vrot.lane.b32.xlu0 %v956, 12
      %v2049 = vpop.permute.xlu0 %2048
      %2050 = vrot.lane.b32.xlu0 %v958, 12
      %v2051 = vpop.permute.xlu0 %2050
      %2052 = vrot.lane.b32.xlu0 %v960, 12
      %v2053 = vpop.permute.xlu0 %2052
      %2054 = vrot.lane.b32.xlu0 %v962, 12
      %v2055 = vpop.permute.xlu0 %2054
      %2056 = vrot.lane.b32.xlu0 %v964, 12
      %v2057 = vpop.permute.xlu0 %2056
      %2058 = vrot.lane.b32.xlu0 %v966, 12
      %v2059 = vpop.permute.xlu0 %2058
      %2060 = vrot.lane.b32.xlu0 %v968, 12
      %v2061 = vpop.permute.xlu0 %2060
      %2062 = vrot.lane.b32.xlu0 %v974, 12
      %v2063 = vpop.permute.xlu0 %2062
      %2064 = vrot.lane.b32.xlu0 %v976, 12
      %v2065 = vpop.permute.xlu0 %2064
      %2066 = vrot.lane.b32.xlu0 %v978, 12
      %v2067 = vpop.permute.xlu0 %2066
      %2068 = vrot.lane.b32.xlu0 %v980, 12
      %v2069 = vpop.permute.xlu0 %2068
      %2070 = vrot.lane.b32.xlu0 %v982, 12
      %v2071 = vpop.permute.xlu0 %2070
      %2072 = vrot.lane.b32.xlu0 %v984, 12
      %v2073 = vpop.permute.xlu0 %2072
      %2074 = vrot.lane.b32.xlu0 %v986, 12
      %v2075 = vpop.permute.xlu0 %2074
      %2076 = vrot.lane.b32.xlu0 %v988, 12
      %v2077 = vpop.permute.xlu0 %2076
      %2078 = vrot.lane.b32.xlu0 %v994, 12
      %v2079 = vpop.permute.xlu0 %2078
      %2080 = vrot.lane.b32.xlu0 %v996, 12
      %v2081 = vpop.permute.xlu0 %2080
      %2082 = vrot.lane.b32.xlu0 %v998, 12
      %v2083 = vpop.permute.xlu0 %2082
      %2084 = vrot.lane.b32.xlu0 %v1000, 12
      %v2085 = vpop.permute.xlu0 %2084
      %2086 = vrot.lane.b32.xlu0 %v1002, 12
      %v2087 = vpop.permute.xlu0 %2086
      %2088 = vrot.lane.b32.xlu0 %v1004, 12
      %v2089 = vpop.permute.xlu0 %2088
      %2090 = vrot.lane.b32.xlu0 %v1006, 12
      %v2091 = vpop.permute.xlu0 %2090
      %2092 = vrot.lane.b32.xlu0 %v1008, 12
      %v2093 = vpop.permute.xlu0 %2092
      %2094 = vrot.lane.b32.xlu0 %v1014, 12
      %v2095 = vpop.permute.xlu0 %2094
      %2096 = vrot.lane.b32.xlu0 %v1016, 12
      %v2097 = vpop.permute.xlu0 %2096
      %2098 = vrot.lane.b32.xlu0 %v1018, 12
      %v2099 = vpop.permute.xlu0 %2098
      %2100 = vrot.lane.b32.xlu0 %v1020, 12
      %v2101 = vpop.permute.xlu0 %2100
      %2102 = vrot.lane.b32.xlu0 %v1022, 12
      %v2103 = vpop.permute.xlu0 %2102
      %2104 = vrot.lane.b32.xlu0 %v1024, 12
      %v2105 = vpop.permute.xlu0 %2104
      %2106 = vrot.lane.b32.xlu0 %v1026, 12
      %v2107 = vpop.permute.xlu0 %2106
      %2108 = vrot.lane.b32.xlu0 %v1028, 12
      %v2109 = vpop.permute.xlu0 %2108
      %2110 = vrot.lane.b32.xlu0 %v1034, 12
      %v2111 = vpop.permute.xlu0 %2110
      %2112 = vrot.lane.b32.xlu0 %v1036, 12
      %v2113 = vpop.permute.xlu0 %2112
      %2114 = vrot.lane.b32.xlu0 %v1038, 12
      %v2115 = vpop.permute.xlu0 %2114
      %2116 = vrot.lane.b32.xlu0 %v1040, 12
      %v2117 = vpop.permute.xlu0 %2116
      %2118 = vrot.lane.b32.xlu0 %v1042, 12
      %v2119 = vpop.permute.xlu0 %2118
      %2120 = vrot.lane.b32.xlu0 %v1044, 12
      %v2121 = vpop.permute.xlu0 %2120
      %2122 = vrot.lane.b32.xlu0 %v1046, 12
      %v2123 = vpop.permute.xlu0 %2122
      %2124 = vrot.lane.b32.xlu0 %v1048, 12
      %v2125 = vpop.permute.xlu0 %2124
      %v2198 = vrot.slane %v908, 1
      %v2199 = vrot.slane %v909, 1
      %v2200 = vsel %vm1220, %v2198, %v2199
      %v2201 = vrot.slane %v928, 1
      %v2202 = vrot.slane %v929, 1
      %v2203 = vsel %vm1220, %v2201, %v2202
      %v2204 = vrot.slane %v948, 1
      %v2205 = vrot.slane %v949, 1
      %v2206 = vsel %vm1220, %v2204, %v2205
      %v2207 = vrot.slane %v968, 1
      %v2208 = vrot.slane %v969, 1
      %v2209 = vsel %vm1220, %v2207, %v2208
      %v2210 = vrot.slane %v988, 1
      %v2211 = vrot.slane %v989, 1
      %v2212 = vsel %vm1220, %v2210, %v2211
      %v2213 = vrot.slane %v1008, 1
      %v2214 = vrot.slane %v1009, 1
      %v2215 = vsel %vm1220, %v2213, %v2214
      %v2216 = vrot.slane %v1028, 1
      %v2217 = vrot.slane %v1029, 1
      %v2218 = vsel %vm1220, %v2216, %v2217
      %v2219 = vrot.slane %v1048, 1
      %v2220 = vrot.slane %v1049, 1
      %v2221 = vsel %vm1220, %v2219, %v2220
      %2222 = vrot.lane.b32.xlu0 %v1226, 16
      %v2223 = vpop.permute.xlu0 %2222
      %2224 = vrot.lane.b32.xlu0 %v1229, 16
      %v2225 = vpop.permute.xlu0 %2224
      %2226 = vrot.lane.b32.xlu0 %v1232, 16
      %v2227 = vpop.permute.xlu0 %2226
      %2228 = vrot.lane.b32.xlu0 %v1235, 16
      %v2229 = vpop.permute.xlu0 %2228
      %2230 = vrot.lane.b32.xlu0 %v1238, 16
      %v2231 = vpop.permute.xlu0 %2230
      %2232 = vrot.lane.b32.xlu0 %v1241, 16
      %v2233 = vpop.permute.xlu0 %2232
      %2234 = vrot.lane.b32.xlu0 %v1244, 16
      %v2235 = vpop.permute.xlu0 %2234
      %2236 = vrot.lane.b32.xlu0 %v2200, 16
      %v2237 = vpop.permute.xlu0 %2236
      %2238 = vrot.lane.b32.xlu0 %v1250, 16
      %v2239 = vpop.permute.xlu0 %2238
      %2240 = vrot.lane.b32.xlu0 %v1253, 16
      %v2241 = vpop.permute.xlu0 %2240
      %2242 = vrot.lane.b32.xlu0 %v1256, 16
      %v2243 = vpop.permute.xlu0 %2242
      %2244 = vrot.lane.b32.xlu0 %v1259, 16
      %v2245 = vpop.permute.xlu0 %2244
      %2246 = vrot.lane.b32.xlu0 %v1262, 16
      %v2247 = vpop.permute.xlu0 %2246
      %2248 = vrot.lane.b32.xlu0 %v1265, 16
      %v2249 = vpop.permute.xlu0 %2248
      %2250 = vrot.lane.b32.xlu0 %v1268, 16
      %v2251 = vpop.permute.xlu0 %2250
      %2252 = vrot.lane.b32.xlu0 %v2203, 16
      %v2253 = vpop.permute.xlu0 %2252
      %2254 = vrot.lane.b32.xlu0 %v1274, 16
      %v2255 = vpop.permute.xlu0 %2254
      %2256 = vrot.lane.b32.xlu0 %v1277, 16
      %v2257 = vpop.permute.xlu0 %2256
      %2258 = vrot.lane.b32.xlu0 %v1280, 16
      %v2259 = vpop.permute.xlu0 %2258
      %2260 = vrot.lane.b32.xlu0 %v1283, 16
      %v2261 = vpop.permute.xlu0 %2260
      %2262 = vrot.lane.b32.xlu0 %v1286, 16
      %v2263 = vpop.permute.xlu0 %2262
      %2264 = vrot.lane.b32.xlu0 %v1289, 16
      %v2265 = vpop.permute.xlu0 %2264
      %2266 = vrot.lane.b32.xlu0 %v1292, 16
      %v2267 = vpop.permute.xlu0 %2266
      %2268 = vrot.lane.b32.xlu0 %v2206, 16
      %v2269 = vpop.permute.xlu0 %2268
      %2270 = vrot.lane.b32.xlu0 %v1298, 16
      %v2271 = vpop.permute.xlu0 %2270
      %2272 = vrot.lane.b32.xlu0 %v1301, 16
      %v2273 = vpop.permute.xlu0 %2272
      %2274 = vrot.lane.b32.xlu0 %v1304, 16
      %v2275 = vpop.permute.xlu0 %2274
      %2276 = vrot.lane.b32.xlu0 %v1307, 16
      %v2277 = vpop.permute.xlu0 %2276
      %2278 = vrot.lane.b32.xlu0 %v1310, 16
      %v2279 = vpop.permute.xlu0 %2278
      %2280 = vrot.lane.b32.xlu0 %v1313, 16
      %v2281 = vpop.permute.xlu0 %2280
      %2282 = vrot.lane.b32.xlu0 %v1316, 16
      %v2283 = vpop.permute.xlu0 %2282
      %2284 = vrot.lane.b32.xlu0 %v2209, 16
      %v2285 = vpop.permute.xlu0 %2284
      %2286 = vrot.lane.b32.xlu0 %v1322, 16
      %v2287 = vpop.permute.xlu0 %2286
      %2288 = vrot.lane.b32.xlu0 %v1325, 16
      %v2289 = vpop.permute.xlu0 %2288
      %2290 = vrot.lane.b32.xlu0 %v1328, 16
      %v2291 = vpop.permute.xlu0 %2290
      %2292 = vrot.lane.b32.xlu0 %v1331, 16
      %v2293 = vpop.permute.xlu0 %2292
      %2294 = vrot.lane.b32.xlu0 %v1334, 16
      %v2295 = vpop.permute.xlu0 %2294
      %2296 = vrot.lane.b32.xlu0 %v1337, 16
      %v2297 = vpop.permute.xlu0 %2296
      %2298 = vrot.lane.b32.xlu0 %v1340, 16
      %v2299 = vpop.permute.xlu0 %2298
      %2300 = vrot.lane.b32.xlu0 %v2212, 16
      %v2301 = vpop.permute.xlu0 %2300
      %2302 = vrot.lane.b32.xlu0 %v1346, 16
      %v2303 = vpop.permute.xlu0 %2302
      %2304 = vrot.lane.b32.xlu0 %v1349, 16
      %v2305 = vpop.permute.xlu0 %2304
      %2306 = vrot.lane.b32.xlu0 %v1352, 16
      %v2307 = vpop.permute.xlu0 %2306
      %2308 = vrot.lane.b32.xlu0 %v1355, 16
      %v2309 = vpop.permute.xlu0 %2308
      %2310 = vrot.lane.b32.xlu0 %v1358, 16
      %v2311 = vpop.permute.xlu0 %2310
      %2312 = vrot.lane.b32.xlu0 %v1361, 16
      %v2313 = vpop.permute.xlu0 %2312
      %2314 = vrot.lane.b32.xlu0 %v1364, 16
      %v2315 = vpop.permute.xlu0 %2314
      %2316 = vrot.lane.b32.xlu0 %v2215, 16
      %v2317 = vpop.permute.xlu0 %2316
      %2318 = vrot.lane.b32.xlu0 %v1370, 16
      %v2319 = vpop.permute.xlu0 %2318
      %2320 = vrot.lane.b32.xlu0 %v1373, 16
      %v2321 = vpop.permute.xlu0 %2320
      %2322 = vrot.lane.b32.xlu0 %v1376, 16
      %v2323 = vpop.permute.xlu0 %2322
      %2324 = vrot.lane.b32.xlu0 %v1379, 16
      %v2325 = vpop.permute.xlu0 %2324
      %2326 = vrot.lane.b32.xlu0 %v1382, 16
      %v2327 = vpop.permute.xlu0 %2326
      %2328 = vrot.lane.b32.xlu0 %v1385, 16
      %v2329 = vpop.permute.xlu0 %2328
      %2330 = vrot.lane.b32.xlu0 %v1388, 16
      %v2331 = vpop.permute.xlu0 %2330
      %2332 = vrot.lane.b32.xlu0 %v2218, 16
      %v2333 = vpop.permute.xlu0 %2332
      %2334 = vrot.lane.b32.xlu0 %v1394, 16
      %v2335 = vpop.permute.xlu0 %2334
      %2336 = vrot.lane.b32.xlu0 %v1397, 16
      %v2337 = vpop.permute.xlu0 %2336
      %2338 = vrot.lane.b32.xlu0 %v1400, 16
      %v2339 = vpop.permute.xlu0 %2338
      %2340 = vrot.lane.b32.xlu0 %v1403, 16
      %v2341 = vpop.permute.xlu0 %2340
      %2342 = vrot.lane.b32.xlu0 %v1406, 16
      %v2343 = vpop.permute.xlu0 %2342
      %2344 = vrot.lane.b32.xlu0 %v1409, 16
      %v2345 = vpop.permute.xlu0 %2344
      %2346 = vrot.lane.b32.xlu0 %v1412, 16
      %v2347 = vpop.permute.xlu0 %2346
      %2348 = vrot.lane.b32.xlu0 %v2221, 16
      %v2349 = vpop.permute.xlu0 %2348
      %v2414 = vrot.slane %v908, 2
      %v2415 = vrot.slane %v909, 2
      %v2416 = vsel %vm1605, %v2414, %v2415
      %v2417 = vrot.slane %v928, 2
      %v2418 = vrot.slane %v929, 2
      %v2419 = vsel %vm1605, %v2417, %v2418
      %v2420 = vrot.slane %v948, 2
      %v2421 = vrot.slane %v949, 2
      %v2422 = vsel %vm1605, %v2420, %v2421
      %v2423 = vrot.slane %v968, 2
      %v2424 = vrot.slane %v969, 2
      %v2425 = vsel %vm1605, %v2423, %v2424
      %v2426 = vrot.slane %v988, 2
      %v2427 = vrot.slane %v989, 2
      %v2428 = vsel %vm1605, %v2426, %v2427
      %v2429 = vrot.slane %v1008, 2
      %v2430 = vrot.slane %v1009, 2
      %v2431 = vsel %vm1605, %v2429, %v2430
      %v2432 = vrot.slane %v1028, 2
      %v2433 = vrot.slane %v1029, 2
      %v2434 = vsel %vm1605, %v2432, %v2433
      %v2435 = vrot.slane %v1048, 2
      %v2436 = vrot.slane %v1049, 2
      %v2437 = vsel %vm1605, %v2435, %v2436
      %2438 = vrot.lane.b32.xlu0 %v1611, 20
      %v2439 = vpop.permute.xlu0 %2438
      %2440 = vrot.lane.b32.xlu0 %v1614, 20
      %v2441 = vpop.permute.xlu0 %2440
      %2442 = vrot.lane.b32.xlu0 %v1617, 20
      %v2443 = vpop.permute.xlu0 %2442
      %2444 = vrot.lane.b32.xlu0 %v1620, 20
      %v2445 = vpop.permute.xlu0 %2444
      %2446 = vrot.lane.b32.xlu0 %v1623, 20
      %v2447 = vpop.permute.xlu0 %2446
      %2448 = vrot.lane.b32.xlu0 %v1626, 20
      %v2449 = vpop.permute.xlu0 %2448
      %2450 = vrot.lane.b32.xlu0 %v1629, 20
      %v2451 = vpop.permute.xlu0 %2450
      %2452 = vrot.lane.b32.xlu0 %v2416, 20
      %v2453 = vpop.permute.xlu0 %2452
      %2454 = vrot.lane.b32.xlu0 %v1635, 20
      %v2455 = vpop.permute.xlu0 %2454
      %2456 = vrot.lane.b32.xlu0 %v1638, 20
      %v2457 = vpop.permute.xlu0 %2456
      %2458 = vrot.lane.b32.xlu0 %v1641, 20
      %v2459 = vpop.permute.xlu0 %2458
      %2460 = vrot.lane.b32.xlu0 %v1644, 20
      %v2461 = vpop.permute.xlu0 %2460
      %2462 = vrot.lane.b32.xlu0 %v1647, 20
      %v2463 = vpop.permute.xlu0 %2462
      %2464 = vrot.lane.b32.xlu0 %v1650, 20
      %v2465 = vpop.permute.xlu0 %2464
      %2466 = vrot.lane.b32.xlu0 %v1653, 20
      %v2467 = vpop.permute.xlu0 %2466
      %2468 = vrot.lane.b32.xlu0 %v2419, 20
      %v2469 = vpop.permute.xlu0 %2468
      %2470 = vrot.lane.b32.xlu0 %v1659, 20
      %v2471 = vpop.permute.xlu0 %2470
      %2472 = vrot.lane.b32.xlu0 %v1662, 20
      %v2473 = vpop.permute.xlu0 %2472
      %2474 = vrot.lane.b32.xlu0 %v1665, 20
      %v2475 = vpop.permute.xlu0 %2474
      %2476 = vrot.lane.b32.xlu0 %v1668, 20
      %v2477 = vpop.permute.xlu0 %2476
      %2478 = vrot.lane.b32.xlu0 %v1671, 20
      %v2479 = vpop.permute.xlu0 %2478
      %2480 = vrot.lane.b32.xlu0 %v1674, 20
      %v2481 = vpop.permute.xlu0 %2480
      %2482 = vrot.lane.b32.xlu0 %v1677, 20
      %v2483 = vpop.permute.xlu0 %2482
      %2484 = vrot.lane.b32.xlu0 %v2422, 20
      %v2485 = vpop.permute.xlu0 %2484
      %2486 = vrot.lane.b32.xlu0 %v1683, 20
      %v2487 = vpop.permute.xlu0 %2486
      %2488 = vrot.lane.b32.xlu0 %v1686, 20
      %v2489 = vpop.permute.xlu0 %2488
      %2490 = vrot.lane.b32.xlu0 %v1689, 20
      %v2491 = vpop.permute.xlu0 %2490
      %2492 = vrot.lane.b32.xlu0 %v1692, 20
      %v2493 = vpop.permute.xlu0 %2492
      %2494 = vrot.lane.b32.xlu0 %v1695, 20
      %v2495 = vpop.permute.xlu0 %2494
      %2496 = vrot.lane.b32.xlu0 %v1698, 20
      %v2497 = vpop.permute.xlu0 %2496
      %2498 = vrot.lane.b32.xlu0 %v1701, 20
      %v2499 = vpop.permute.xlu0 %2498
      %2500 = vrot.lane.b32.xlu0 %v2425, 20
      %v2501 = vpop.permute.xlu0 %2500
      %2502 = vrot.lane.b32.xlu0 %v1707, 20
      %v2503 = vpop.permute.xlu0 %2502
      %2504 = vrot.lane.b32.xlu0 %v1710, 20
      %v2505 = vpop.permute.xlu0 %2504
      %2506 = vrot.lane.b32.xlu0 %v1713, 20
      %v2507 = vpop.permute.xlu0 %2506
      %2508 = vrot.lane.b32.xlu0 %v1716, 20
      %v2509 = vpop.permute.xlu0 %2508
      %2510 = vrot.lane.b32.xlu0 %v1719, 20
      %v2511 = vpop.permute.xlu0 %2510
      %2512 = vrot.lane.b32.xlu0 %v1722, 20
      %v2513 = vpop.permute.xlu0 %2512
      %2514 = vrot.lane.b32.xlu0 %v1725, 20
      %v2515 = vpop.permute.xlu0 %2514
      %2516 = vrot.lane.b32.xlu0 %v2428, 20
      %v2517 = vpop.permute.xlu0 %2516
      %2518 = vrot.lane.b32.xlu0 %v1731, 20
      %v2519 = vpop.permute.xlu0 %2518
      %2520 = vrot.lane.b32.xlu0 %v1734, 20
      %v2521 = vpop.permute.xlu0 %2520
      %2522 = vrot.lane.b32.xlu0 %v1737, 20
      %v2523 = vpop.permute.xlu0 %2522
      %2524 = vrot.lane.b32.xlu0 %v1740, 20
      %v2525 = vpop.permute.xlu0 %2524
      %2526 = vrot.lane.b32.xlu0 %v1743, 20
      %v2527 = vpop.permute.xlu0 %2526
      %2528 = vrot.lane.b32.xlu0 %v1746, 20
      %v2529 = vpop.permute.xlu0 %2528
      %2530 = vrot.lane.b32.xlu0 %v1749, 20
      %v2531 = vpop.permute.xlu0 %2530
      %2532 = vrot.lane.b32.xlu0 %v2431, 20
      %v2533 = vpop.permute.xlu0 %2532
      %2534 = vrot.lane.b32.xlu0 %v1755, 20
      %v2535 = vpop.permute.xlu0 %2534
      %2536 = vrot.lane.b32.xlu0 %v1758, 20
      %v2537 = vpop.permute.xlu0 %2536
      %2538 = vrot.lane.b32.xlu0 %v1761, 20
      %v2539 = vpop.permute.xlu0 %2538
      %2540 = vrot.lane.b32.xlu0 %v1764, 20
      %v2541 = vpop.permute.xlu0 %2540
      %2542 = vrot.lane.b32.xlu0 %v1767, 20
      %v2543 = vpop.permute.xlu0 %2542
      %2544 = vrot.lane.b32.xlu0 %v1770, 20
      %v2545 = vpop.permute.xlu0 %2544
      %2546 = vrot.lane.b32.xlu0 %v1773, 20
      %v2547 = vpop.permute.xlu0 %2546
      %2548 = vrot.lane.b32.xlu0 %v2434, 20
      %v2549 = vpop.permute.xlu0 %2548
      %2550 = vrot.lane.b32.xlu0 %v1779, 20
      %v2551 = vpop.permute.xlu0 %2550
      %2552 = vrot.lane.b32.xlu0 %v1782, 20
      %v2553 = vpop.permute.xlu0 %2552
      %2554 = vrot.lane.b32.xlu0 %v1785, 20
      %v2555 = vpop.permute.xlu0 %2554
      %2556 = vrot.lane.b32.xlu0 %v1788, 20
      %v2557 = vpop.permute.xlu0 %2556
      %2558 = vrot.lane.b32.xlu0 %v1791, 20
      %v2559 = vpop.permute.xlu0 %2558
      %2560 = vrot.lane.b32.xlu0 %v1794, 20
      %v2561 = vpop.permute.xlu0 %2560
      %2562 = vrot.lane.b32.xlu0 %v1797, 20
      %v2563 = vpop.permute.xlu0 %2562
      %2564 = vrot.lane.b32.xlu0 %v2437, 20
      %v2565 = vpop.permute.xlu0 %2564
      %2638 = vrot.lane.b32.xlu0 %v896, 24
      %v2639 = vpop.permute.xlu0 %2638
      %2640 = vrot.lane.b32.xlu0 %v898, 24
      %v2641 = vpop.permute.xlu0 %2640
      %2642 = vrot.lane.b32.xlu0 %v900, 24
      %v2643 = vpop.permute.xlu0 %2642
      %2644 = vrot.lane.b32.xlu0 %v902, 24
      %v2645 = vpop.permute.xlu0 %2644
      %2646 = vrot.lane.b32.xlu0 %v904, 24
      %v2647 = vpop.permute.xlu0 %2646
      %2648 = vrot.lane.b32.xlu0 %v906, 24
      %v2649 = vpop.permute.xlu0 %2648
      %2650 = vrot.lane.b32.xlu0 %v908, 24
      %v2651 = vpop.permute.xlu0 %2650
      %2652 = vrot.lane.b32.xlu0 %v910, 24
      %v2653 = vpop.permute.xlu0 %2652
      %2654 = vrot.lane.b32.xlu0 %v916, 24
      %v2655 = vpop.permute.xlu0 %2654
      %2656 = vrot.lane.b32.xlu0 %v918, 24
      %v2657 = vpop.permute.xlu0 %2656
      %2658 = vrot.lane.b32.xlu0 %v920, 24
      %v2659 = vpop.permute.xlu0 %2658
      %2660 = vrot.lane.b32.xlu0 %v922, 24
      %v2661 = vpop.permute.xlu0 %2660
      %2662 = vrot.lane.b32.xlu0 %v924, 24
      %v2663 = vpop.permute.xlu0 %2662
      %2664 = vrot.lane.b32.xlu0 %v926, 24
      %v2665 = vpop.permute.xlu0 %2664
      %2666 = vrot.lane.b32.xlu0 %v928, 24
      %v2667 = vpop.permute.xlu0 %2666
      %2668 = vrot.lane.b32.xlu0 %v930, 24
      %v2669 = vpop.permute.xlu0 %2668
      %2670 = vrot.lane.b32.xlu0 %v936, 24
      %v2671 = vpop.permute.xlu0 %2670
      %2672 = vrot.lane.b32.xlu0 %v938, 24
      %v2673 = vpop.permute.xlu0 %2672
      %2674 = vrot.lane.b32.xlu0 %v940, 24
      %v2675 = vpop.permute.xlu0 %2674
      %2676 = vrot.lane.b32.xlu0 %v942, 24
      %v2677 = vpop.permute.xlu0 %2676
      %2678 = vrot.lane.b32.xlu0 %v944, 24
      %v2679 = vpop.permute.xlu0 %2678
      %2680 = vrot.lane.b32.xlu0 %v946, 24
      %v2681 = vpop.permute.xlu0 %2680
      %2682 = vrot.lane.b32.xlu0 %v948, 24
      %v2683 = vpop.permute.xlu0 %2682
      %2684 = vrot.lane.b32.xlu0 %v950, 24
      %v2685 = vpop.permute.xlu0 %2684
      %2686 = vrot.lane.b32.xlu0 %v956, 24
      %v2687 = vpop.permute.xlu0 %2686
      %2688 = vrot.lane.b32.xlu0 %v958, 24
      %v2689 = vpop.permute.xlu0 %2688
      %2690 = vrot.lane.b32.xlu0 %v960, 24
      %v2691 = vpop.permute.xlu0 %2690
      %2692 = vrot.lane.b32.xlu0 %v962, 24
      %v2693 = vpop.permute.xlu0 %2692
      %2694 = vrot.lane.b32.xlu0 %v964, 24
      %v2695 = vpop.permute.xlu0 %2694
      %2696 = vrot.lane.b32.xlu0 %v966, 24
      %v2697 = vpop.permute.xlu0 %2696
      %2698 = vrot.lane.b32.xlu0 %v968, 24
      %v2699 = vpop.permute.xlu0 %2698
      %2700 = vrot.lane.b32.xlu0 %v970, 24
      %v2701 = vpop.permute.xlu0 %2700
      %2702 = vrot.lane.b32.xlu0 %v976, 24
      %v2703 = vpop.permute.xlu0 %2702
      %2704 = vrot.lane.b32.xlu0 %v978, 24
      %v2705 = vpop.permute.xlu0 %2704
      %2706 = vrot.lane.b32.xlu0 %v980, 24
      %v2707 = vpop.permute.xlu0 %2706
      %2708 = vrot.lane.b32.xlu0 %v982, 24
      %v2709 = vpop.permute.xlu0 %2708
      %2710 = vrot.lane.b32.xlu0 %v984, 24
      %v2711 = vpop.permute.xlu0 %2710
      %2712 = vrot.lane.b32.xlu0 %v986, 24
      %v2713 = vpop.permute.xlu0 %2712
      %2714 = vrot.lane.b32.xlu0 %v988, 24
      %v2715 = vpop.permute.xlu0 %2714
      %2716 = vrot.lane.b32.xlu0 %v990, 24
      %v2717 = vpop.permute.xlu0 %2716
      %2718 = vrot.lane.b32.xlu0 %v996, 24
      %v2719 = vpop.permute.xlu0 %2718
      %2720 = vrot.lane.b32.xlu0 %v998, 24
      %v2721 = vpop.permute.xlu0 %2720
      %2722 = vrot.lane.b32.xlu0 %v1000, 24
      %v2723 = vpop.permute.xlu0 %2722
      %2724 = vrot.lane.b32.xlu0 %v1002, 24
      %v2725 = vpop.permute.xlu0 %2724
      %2726 = vrot.lane.b32.xlu0 %v1004, 24
      %v2727 = vpop.permute.xlu0 %2726
      %2728 = vrot.lane.b32.xlu0 %v1006, 24
      %v2729 = vpop.permute.xlu0 %2728
      %2730 = vrot.lane.b32.xlu0 %v1008, 24
      %v2731 = vpop.permute.xlu0 %2730
      %2732 = vrot.lane.b32.xlu0 %v1010, 24
      %v2733 = vpop.permute.xlu0 %2732
      %2734 = vrot.lane.b32.xlu0 %v1016, 24
      %v2735 = vpop.permute.xlu0 %2734
      %2736 = vrot.lane.b32.xlu0 %v1018, 24
      %v2737 = vpop.permute.xlu0 %2736
      %2738 = vrot.lane.b32.xlu0 %v1020, 24
      %v2739 = vpop.permute.xlu0 %2738
      %2740 = vrot.lane.b32.xlu0 %v1022, 24
      %v2741 = vpop.permute.xlu0 %2740
      %2742 = vrot.lane.b32.xlu0 %v1024, 24
      %v2743 = vpop.permute.xlu0 %2742
      %2744 = vrot.lane.b32.xlu0 %v1026, 24
      %v2745 = vpop.permute.xlu0 %2744
      %2746 = vrot.lane.b32.xlu0 %v1028, 24
      %v2747 = vpop.permute.xlu0 %2746
      %2748 = vrot.lane.b32.xlu0 %v1030, 24
      %v2749 = vpop.permute.xlu0 %2748
      %2750 = vrot.lane.b32.xlu0 %v1036, 24
      %v2751 = vpop.permute.xlu0 %2750
      %2752 = vrot.lane.b32.xlu0 %v1038, 24
      %v2753 = vpop.permute.xlu0 %2752
      %2754 = vrot.lane.b32.xlu0 %v1040, 24
      %v2755 = vpop.permute.xlu0 %2754
      %2756 = vrot.lane.b32.xlu0 %v1042, 24
      %v2757 = vpop.permute.xlu0 %2756
      %2758 = vrot.lane.b32.xlu0 %v1044, 24
      %v2759 = vpop.permute.xlu0 %2758
      %2760 = vrot.lane.b32.xlu0 %v1046, 24
      %v2761 = vpop.permute.xlu0 %2760
      %2762 = vrot.lane.b32.xlu0 %v1048, 24
      %v2763 = vpop.permute.xlu0 %2762
      %2764 = vrot.lane.b32.xlu0 %v1050, 24
      %v2765 = vpop.permute.xlu0 %2764
      %v2838 = vrot.slane %v910, 1
      %v2839 = vrot.slane %v911, 1
      %v2840 = vsel %vm1220, %v2838, %v2839
      %v2841 = vrot.slane %v930, 1
      %v2842 = vrot.slane %v931, 1
      %v2843 = vsel %vm1220, %v2841, %v2842
      %v2844 = vrot.slane %v950, 1
      %v2845 = vrot.slane %v951, 1
      %v2846 = vsel %vm1220, %v2844, %v2845
      %v2847 = vrot.slane %v970, 1
      %v2848 = vrot.slane %v971, 1
      %v2849 = vsel %vm1220, %v2847, %v2848
      %v2850 = vrot.slane %v990, 1
      %v2851 = vrot.slane %v991, 1
      %v2852 = vsel %vm1220, %v2850, %v2851
      %v2853 = vrot.slane %v1010, 1
      %v2854 = vrot.slane %v1011, 1
      %v2855 = vsel %vm1220, %v2853, %v2854
      %v2856 = vrot.slane %v1030, 1
      %v2857 = vrot.slane %v1031, 1
      %v2858 = vsel %vm1220, %v2856, %v2857
      %v2859 = vrot.slane %v1050, 1
      %v2860 = vrot.slane %v1051, 1
      %v2861 = vsel %vm1220, %v2859, %v2860
      %2862 = vrot.lane.b32.xlu0 %v1229, 28
      %v2863 = vpop.permute.xlu0 %2862
      %2864 = vrot.lane.b32.xlu0 %v1232, 28
      %v2865 = vpop.permute.xlu0 %2864
      %2866 = vrot.lane.b32.xlu0 %v1235, 28
      %v2867 = vpop.permute.xlu0 %2866
      %2868 = vrot.lane.b32.xlu0 %v1238, 28
      %v2869 = vpop.permute.xlu0 %2868
      %2870 = vrot.lane.b32.xlu0 %v1241, 28
      %v2871 = vpop.permute.xlu0 %2870
      %2872 = vrot.lane.b32.xlu0 %v1244, 28
      %v2873 = vpop.permute.xlu0 %2872
      %2874 = vrot.lane.b32.xlu0 %v2200, 28
      %v2875 = vpop.permute.xlu0 %2874
      %2876 = vrot.lane.b32.xlu0 %v2840, 28
      %v2877 = vpop.permute.xlu0 %2876
      %2878 = vrot.lane.b32.xlu0 %v1253, 28
      %v2879 = vpop.permute.xlu0 %2878
      %2880 = vrot.lane.b32.xlu0 %v1256, 28
      %v2881 = vpop.permute.xlu0 %2880
      %2882 = vrot.lane.b32.xlu0 %v1259, 28
      %v2883 = vpop.permute.xlu0 %2882
      %2884 = vrot.lane.b32.xlu0 %v1262, 28
      %v2885 = vpop.permute.xlu0 %2884
      %2886 = vrot.lane.b32.xlu0 %v1265, 28
      %v2887 = vpop.permute.xlu0 %2886
      %2888 = vrot.lane.b32.xlu0 %v1268, 28
      %v2889 = vpop.permute.xlu0 %2888
      %2890 = vrot.lane.b32.xlu0 %v2203, 28
      %v2891 = vpop.permute.xlu0 %2890
      %2892 = vrot.lane.b32.xlu0 %v2843, 28
      %v2893 = vpop.permute.xlu0 %2892
      %2894 = vrot.lane.b32.xlu0 %v1277, 28
      %v2895 = vpop.permute.xlu0 %2894
      %2896 = vrot.lane.b32.xlu0 %v1280, 28
      %v2897 = vpop.permute.xlu0 %2896
      %2898 = vrot.lane.b32.xlu0 %v1283, 28
      %v2899 = vpop.permute.xlu0 %2898
      %2900 = vrot.lane.b32.xlu0 %v1286, 28
      %v2901 = vpop.permute.xlu0 %2900
      %2902 = vrot.lane.b32.xlu0 %v1289, 28
      %v2903 = vpop.permute.xlu0 %2902
      %2904 = vrot.lane.b32.xlu0 %v1292, 28
      %v2905 = vpop.permute.xlu0 %2904
      %2906 = vrot.lane.b32.xlu0 %v2206, 28
      %v2907 = vpop.permute.xlu0 %2906
      %2908 = vrot.lane.b32.xlu0 %v2846, 28
      %v2909 = vpop.permute.xlu0 %2908
      %2910 = vrot.lane.b32.xlu0 %v1301, 28
      %v2911 = vpop.permute.xlu0 %2910
      %2912 = vrot.lane.b32.xlu0 %v1304, 28
      %v2913 = vpop.permute.xlu0 %2912
      %2914 = vrot.lane.b32.xlu0 %v1307, 28
      %v2915 = vpop.permute.xlu0 %2914
      %2916 = vrot.lane.b32.xlu0 %v1310, 28
      %v2917 = vpop.permute.xlu0 %2916
      %2918 = vrot.lane.b32.xlu0 %v1313, 28
      %v2919 = vpop.permute.xlu0 %2918
      %2920 = vrot.lane.b32.xlu0 %v1316, 28
      %v2921 = vpop.permute.xlu0 %2920
      %2922 = vrot.lane.b32.xlu0 %v2209, 28
      %v2923 = vpop.permute.xlu0 %2922
      %2924 = vrot.lane.b32.xlu0 %v2849, 28
      %v2925 = vpop.permute.xlu0 %2924
      %2926 = vrot.lane.b32.xlu0 %v1325, 28
      %v2927 = vpop.permute.xlu0 %2926
      %2928 = vrot.lane.b32.xlu0 %v1328, 28
      %v2929 = vpop.permute.xlu0 %2928
      %2930 = vrot.lane.b32.xlu0 %v1331, 28
      %v2931 = vpop.permute.xlu0 %2930
      %2932 = vrot.lane.b32.xlu0 %v1334, 28
      %v2933 = vpop.permute.xlu0 %2932
      %2934 = vrot.lane.b32.xlu0 %v1337, 28
      %v2935 = vpop.permute.xlu0 %2934
      %2936 = vrot.lane.b32.xlu0 %v1340, 28
      %v2937 = vpop.permute.xlu0 %2936
      %2938 = vrot.lane.b32.xlu0 %v2212, 28
      %v2939 = vpop.permute.xlu0 %2938
      %2940 = vrot.lane.b32.xlu0 %v2852, 28
      %v2941 = vpop.permute.xlu0 %2940
      %2942 = vrot.lane.b32.xlu0 %v1349, 28
      %v2943 = vpop.permute.xlu0 %2942
      %2944 = vrot.lane.b32.xlu0 %v1352, 28
      %v2945 = vpop.permute.xlu0 %2944
      %2946 = vrot.lane.b32.xlu0 %v1355, 28
      %v2947 = vpop.permute.xlu0 %2946
      %2948 = vrot.lane.b32.xlu0 %v1358, 28
      %v2949 = vpop.permute.xlu0 %2948
      %2950 = vrot.lane.b32.xlu0 %v1361, 28
      %v2951 = vpop.permute.xlu0 %2950
      %2952 = vrot.lane.b32.xlu0 %v1364, 28
      %v2953 = vpop.permute.xlu0 %2952
      %2954 = vrot.lane.b32.xlu0 %v2215, 28
      %v2955 = vpop.permute.xlu0 %2954
      %2956 = vrot.lane.b32.xlu0 %v2855, 28
      %v2957 = vpop.permute.xlu0 %2956
      %2958 = vrot.lane.b32.xlu0 %v1373, 28
      %v2959 = vpop.permute.xlu0 %2958
      %2960 = vrot.lane.b32.xlu0 %v1376, 28
      %v2961 = vpop.permute.xlu0 %2960
      %2962 = vrot.lane.b32.xlu0 %v1379, 28
      %v2963 = vpop.permute.xlu0 %2962
      %2964 = vrot.lane.b32.xlu0 %v1382, 28
      %v2965 = vpop.permute.xlu0 %2964
      %2966 = vrot.lane.b32.xlu0 %v1385, 28
      %v2967 = vpop.permute.xlu0 %2966
      %2968 = vrot.lane.b32.xlu0 %v1388, 28
      %v2969 = vpop.permute.xlu0 %2968
      %2970 = vrot.lane.b32.xlu0 %v2218, 28
      %v2971 = vpop.permute.xlu0 %2970
      %2972 = vrot.lane.b32.xlu0 %v2858, 28
      %v2973 = vpop.permute.xlu0 %2972
      %2974 = vrot.lane.b32.xlu0 %v1397, 28
      %v2975 = vpop.permute.xlu0 %2974
      %2976 = vrot.lane.b32.xlu0 %v1400, 28
      %v2977 = vpop.permute.xlu0 %2976
      %2978 = vrot.lane.b32.xlu0 %v1403, 28
      %v2979 = vpop.permute.xlu0 %2978
      %2980 = vrot.lane.b32.xlu0 %v1406, 28
      %v2981 = vpop.permute.xlu0 %2980
      %2982 = vrot.lane.b32.xlu0 %v1409, 28
      %v2983 = vpop.permute.xlu0 %2982
      %2984 = vrot.lane.b32.xlu0 %v1412, 28
      %v2985 = vpop.permute.xlu0 %2984
      %2986 = vrot.lane.b32.xlu0 %v2221, 28
      %v2987 = vpop.permute.xlu0 %2986
      %2988 = vrot.lane.b32.xlu0 %v2861, 28
      %v2989 = vpop.permute.xlu0 %2988
      %v3054 = vrot.slane %v910, 2
      %v3055 = vrot.slane %v911, 2
      %v3056 = vsel %vm1605, %v3054, %v3055
      %v3057 = vrot.slane %v930, 2
      %v3058 = vrot.slane %v931, 2
      %v3059 = vsel %vm1605, %v3057, %v3058
      %v3060 = vrot.slane %v950, 2
      %v3061 = vrot.slane %v951, 2
      %v3062 = vsel %vm1605, %v3060, %v3061
      %v3063 = vrot.slane %v970, 2
      %v3064 = vrot.slane %v971, 2
      %v3065 = vsel %vm1605, %v3063, %v3064
      %v3066 = vrot.slane %v990, 2
      %v3067 = vrot.slane %v991, 2
      %v3068 = vsel %vm1605, %v3066, %v3067
      %v3069 = vrot.slane %v1010, 2
      %v3070 = vrot.slane %v1011, 2
      %v3071 = vsel %vm1605, %v3069, %v3070
      %v3072 = vrot.slane %v1030, 2
      %v3073 = vrot.slane %v1031, 2
      %v3074 = vsel %vm1605, %v3072, %v3073
      %v3075 = vrot.slane %v1050, 2
      %v3076 = vrot.slane %v1051, 2
      %v3077 = vsel %vm1605, %v3075, %v3076
      %3078 = vrot.lane.b32.xlu0 %v1614, 32
      %v3079 = vpop.permute.xlu0 %3078
      %3080 = vrot.lane.b32.xlu0 %v1617, 32
      %v3081 = vpop.permute.xlu0 %3080
      %3082 = vrot.lane.b32.xlu0 %v1620, 32
      %v3083 = vpop.permute.xlu0 %3082
      %3084 = vrot.lane.b32.xlu0 %v1623, 32
      %v3085 = vpop.permute.xlu0 %3084
      %3086 = vrot.lane.b32.xlu0 %v1626, 32
      %v3087 = vpop.permute.xlu0 %3086
      %3088 = vrot.lane.b32.xlu0 %v1629, 32
      %v3089 = vpop.permute.xlu0 %3088
      %3090 = vrot.lane.b32.xlu0 %v2416, 32
      %v3091 = vpop.permute.xlu0 %3090
      %3092 = vrot.lane.b32.xlu0 %v3056, 32
      %v3093 = vpop.permute.xlu0 %3092
      %3094 = vrot.lane.b32.xlu0 %v1638, 32
      %v3095 = vpop.permute.xlu0 %3094
      %3096 = vrot.lane.b32.xlu0 %v1641, 32
      %v3097 = vpop.permute.xlu0 %3096
      %3098 = vrot.lane.b32.xlu0 %v1644, 32
      %v3099 = vpop.permute.xlu0 %3098
      %3100 = vrot.lane.b32.xlu0 %v1647, 32
      %v3101 = vpop.permute.xlu0 %3100
      %3102 = vrot.lane.b32.xlu0 %v1650, 32
      %v3103 = vpop.permute.xlu0 %3102
      %3104 = vrot.lane.b32.xlu0 %v1653, 32
      %v3105 = vpop.permute.xlu0 %3104
      %3106 = vrot.lane.b32.xlu0 %v2419, 32
      %v3107 = vpop.permute.xlu0 %3106
      %3108 = vrot.lane.b32.xlu0 %v3059, 32
      %v3109 = vpop.permute.xlu0 %3108
      %3110 = vrot.lane.b32.xlu0 %v1662, 32
      %v3111 = vpop.permute.xlu0 %3110
      %3112 = vrot.lane.b32.xlu0 %v1665, 32
      %v3113 = vpop.permute.xlu0 %3112
      %3114 = vrot.lane.b32.xlu0 %v1668, 32
      %v3115 = vpop.permute.xlu0 %3114
      %3116 = vrot.lane.b32.xlu0 %v1671, 32
      %v3117 = vpop.permute.xlu0 %3116
      %3118 = vrot.lane.b32.xlu0 %v1674, 32
      %v3119 = vpop.permute.xlu0 %3118
      %3120 = vrot.lane.b32.xlu0 %v1677, 32
      %v3121 = vpop.permute.xlu0 %3120
      %3122 = vrot.lane.b32.xlu0 %v2422, 32
      %v3123 = vpop.permute.xlu0 %3122
      %3124 = vrot.lane.b32.xlu0 %v3062, 32
      %v3125 = vpop.permute.xlu0 %3124
      %3126 = vrot.lane.b32.xlu0 %v1686, 32
      %v3127 = vpop.permute.xlu0 %3126
      %3128 = vrot.lane.b32.xlu0 %v1689, 32
      %v3129 = vpop.permute.xlu0 %3128
      %3130 = vrot.lane.b32.xlu0 %v1692, 32
      %v3131 = vpop.permute.xlu0 %3130
      %3132 = vrot.lane.b32.xlu0 %v1695, 32
      %v3133 = vpop.permute.xlu0 %3132
      %3134 = vrot.lane.b32.xlu0 %v1698, 32
      %v3135 = vpop.permute.xlu0 %3134
      %3136 = vrot.lane.b32.xlu0 %v1701, 32
      %v3137 = vpop.permute.xlu0 %3136
      %3138 = vrot.lane.b32.xlu0 %v2425, 32
      %v3139 = vpop.permute.xlu0 %3138
      %3140 = vrot.lane.b32.xlu0 %v3065, 32
      %v3141 = vpop.permute.xlu0 %3140
      %3142 = vrot.lane.b32.xlu0 %v1710, 32
      %v3143 = vpop.permute.xlu0 %3142
      %3144 = vrot.lane.b32.xlu0 %v1713, 32
      %v3145 = vpop.permute.xlu0 %3144
      %3146 = vrot.lane.b32.xlu0 %v1716, 32
      %v3147 = vpop.permute.xlu0 %3146
      %3148 = vrot.lane.b32.xlu0 %v1719, 32
      %v3149 = vpop.permute.xlu0 %3148
      %3150 = vrot.lane.b32.xlu0 %v1722, 32
      %v3151 = vpop.permute.xlu0 %3150
      %3152 = vrot.lane.b32.xlu0 %v1725, 32
      %v3153 = vpop.permute.xlu0 %3152
      %3154 = vrot.lane.b32.xlu0 %v2428, 32
      %v3155 = vpop.permute.xlu0 %3154
      %3156 = vrot.lane.b32.xlu0 %v3068, 32
      %v3157 = vpop.permute.xlu0 %3156
      %3158 = vrot.lane.b32.xlu0 %v1734, 32
      %v3159 = vpop.permute.xlu0 %3158
      %3160 = vrot.lane.b32.xlu0 %v1737, 32
      %v3161 = vpop.permute.xlu0 %3160
      %3162 = vrot.lane.b32.xlu0 %v1740, 32
      %v3163 = vpop.permute.xlu0 %3162
      %3164 = vrot.lane.b32.xlu0 %v1743, 32
      %v3165 = vpop.permute.xlu0 %3164
      %3166 = vrot.lane.b32.xlu0 %v1746, 32
      %v3167 = vpop.permute.xlu0 %3166
      %3168 = vrot.lane.b32.xlu0 %v1749, 32
      %v3169 = vpop.permute.xlu0 %3168
      %3170 = vrot.lane.b32.xlu0 %v2431, 32
      %v3171 = vpop.permute.xlu0 %3170
      %3172 = vrot.lane.b32.xlu0 %v3071, 32
      %v3173 = vpop.permute.xlu0 %3172
      %3174 = vrot.lane.b32.xlu0 %v1758, 32
      %v3175 = vpop.permute.xlu0 %3174
      %3176 = vrot.lane.b32.xlu0 %v1761, 32
      %v3177 = vpop.permute.xlu0 %3176
      %3178 = vrot.lane.b32.xlu0 %v1764, 32
      %v3179 = vpop.permute.xlu0 %3178
      %3180 = vrot.lane.b32.xlu0 %v1767, 32
      %v3181 = vpop.permute.xlu0 %3180
      %3182 = vrot.lane.b32.xlu0 %v1770, 32
      %v3183 = vpop.permute.xlu0 %3182
      %3184 = vrot.lane.b32.xlu0 %v1773, 32
      %v3185 = vpop.permute.xlu0 %3184
      %3186 = vrot.lane.b32.xlu0 %v2434, 32
      %v3187 = vpop.permute.xlu0 %3186
      %3188 = vrot.lane.b32.xlu0 %v3074, 32
      %v3189 = vpop.permute.xlu0 %3188
      %3190 = vrot.lane.b32.xlu0 %v1782, 32
      %v3191 = vpop.permute.xlu0 %3190
      %3192 = vrot.lane.b32.xlu0 %v1785, 32
      %v3193 = vpop.permute.xlu0 %3192
      %3194 = vrot.lane.b32.xlu0 %v1788, 32
      %v3195 = vpop.permute.xlu0 %3194
      %3196 = vrot.lane.b32.xlu0 %v1791, 32
      %v3197 = vpop.permute.xlu0 %3196
      %3198 = vrot.lane.b32.xlu0 %v1794, 32
      %v3199 = vpop.permute.xlu0 %3198
      %3200 = vrot.lane.b32.xlu0 %v1797, 32
      %v3201 = vpop.permute.xlu0 %3200
      %3202 = vrot.lane.b32.xlu0 %v2437, 32
      %v3203 = vpop.permute.xlu0 %3202
      %3204 = vrot.lane.b32.xlu0 %v3077, 32
      %v3205 = vpop.permute.xlu0 %3204
      %3278 = vrot.lane.b32.xlu0 %v912, 36
      %v3279 = vpop.permute.xlu0 %3278
      %3280 = vrot.lane.b32.xlu0 %v914, 36
      %v3281 = vpop.permute.xlu0 %3280
      %3282 = vrot.lane.b32.xlu0 %v916, 36
      %v3283 = vpop.permute.xlu0 %3282
      %3284 = vrot.lane.b32.xlu0 %v918, 36
      %v3285 = vpop.permute.xlu0 %3284
      %3286 = vrot.lane.b32.xlu0 %v920, 36
      %v3287 = vpop.permute.xlu0 %3286
      %3288 = vrot.lane.b32.xlu0 %v922, 36
      %v3289 = vpop.permute.xlu0 %3288
      %3290 = vrot.lane.b32.xlu0 %v924, 36
      %v3291 = vpop.permute.xlu0 %3290
      %3292 = vrot.lane.b32.xlu0 %v926, 36
      %v3293 = vpop.permute.xlu0 %3292
      %3294 = vrot.lane.b32.xlu0 %v932, 36
      %v3295 = vpop.permute.xlu0 %3294
      %3296 = vrot.lane.b32.xlu0 %v934, 36
      %v3297 = vpop.permute.xlu0 %3296
      %3298 = vrot.lane.b32.xlu0 %v936, 36
      %v3299 = vpop.permute.xlu0 %3298
      %3300 = vrot.lane.b32.xlu0 %v938, 36
      %v3301 = vpop.permute.xlu0 %3300
      %3302 = vrot.lane.b32.xlu0 %v940, 36
      %v3303 = vpop.permute.xlu0 %3302
      %3304 = vrot.lane.b32.xlu0 %v942, 36
      %v3305 = vpop.permute.xlu0 %3304
      %3306 = vrot.lane.b32.xlu0 %v944, 36
      %v3307 = vpop.permute.xlu0 %3306
      %3308 = vrot.lane.b32.xlu0 %v946, 36
      %v3309 = vpop.permute.xlu0 %3308
      %3310 = vrot.lane.b32.xlu0 %v952, 36
      %v3311 = vpop.permute.xlu0 %3310
      %3312 = vrot.lane.b32.xlu0 %v954, 36
      %v3313 = vpop.permute.xlu0 %3312
      %3314 = vrot.lane.b32.xlu0 %v956, 36
      %v3315 = vpop.permute.xlu0 %3314
      %3316 = vrot.lane.b32.xlu0 %v958, 36
      %v3317 = vpop.permute.xlu0 %3316
      %3318 = vrot.lane.b32.xlu0 %v960, 36
      %v3319 = vpop.permute.xlu0 %3318
      %3320 = vrot.lane.b32.xlu0 %v962, 36
      %v3321 = vpop.permute.xlu0 %3320
      %3322 = vrot.lane.b32.xlu0 %v964, 36
      %v3323 = vpop.permute.xlu0 %3322
      %3324 = vrot.lane.b32.xlu0 %v966, 36
      %v3325 = vpop.permute.xlu0 %3324
      %3326 = vrot.lane.b32.xlu0 %v972, 36
      %v3327 = vpop.permute.xlu0 %3326
      %3328 = vrot.lane.b32.xlu0 %v974, 36
      %v3329 = vpop.permute.xlu0 %3328
      %3330 = vrot.lane.b32.xlu0 %v976, 36
      %v3331 = vpop.permute.xlu0 %3330
      %3332 = vrot.lane.b32.xlu0 %v978, 36
      %v3333 = vpop.permute.xlu0 %3332
      %3334 = vrot.lane.b32.xlu0 %v980, 36
      %v3335 = vpop.permute.xlu0 %3334
      %3336 = vrot.lane.b32.xlu0 %v982, 36
      %v3337 = vpop.permute.xlu0 %3336
      %3338 = vrot.lane.b32.xlu0 %v984, 36
      %v3339 = vpop.permute.xlu0 %3338
      %3340 = vrot.lane.b32.xlu0 %v986, 36
      %v3341 = vpop.permute.xlu0 %3340
      %3342 = vrot.lane.b32.xlu0 %v992, 36
      %v3343 = vpop.permute.xlu0 %3342
      %3344 = vrot.lane.b32.xlu0 %v994, 36
      %v3345 = vpop.permute.xlu0 %3344
      %3346 = vrot.lane.b32.xlu0 %v996, 36
      %v3347 = vpop.permute.xlu0 %3346
      %3348 = vrot.lane.b32.xlu0 %v998, 36
      %v3349 = vpop.permute.xlu0 %3348
      %3350 = vrot.lane.b32.xlu0 %v1000, 36
      %v3351 = vpop.permute.xlu0 %3350
      %3352 = vrot.lane.b32.xlu0 %v1002, 36
      %v3353 = vpop.permute.xlu0 %3352
      %3354 = vrot.lane.b32.xlu0 %v1004, 36
      %v3355 = vpop.permute.xlu0 %3354
      %3356 = vrot.lane.b32.xlu0 %v1006, 36
      %v3357 = vpop.permute.xlu0 %3356
      %3358 = vrot.lane.b32.xlu0 %v1012, 36
      %v3359 = vpop.permute.xlu0 %3358
      %3360 = vrot.lane.b32.xlu0 %v1014, 36
      %v3361 = vpop.permute.xlu0 %3360
      %3362 = vrot.lane.b32.xlu0 %v1016, 36
      %v3363 = vpop.permute.xlu0 %3362
      %3364 = vrot.lane.b32.xlu0 %v1018, 36
      %v3365 = vpop.permute.xlu0 %3364
      %3366 = vrot.lane.b32.xlu0 %v1020, 36
      %v3367 = vpop.permute.xlu0 %3366
      %3368 = vrot.lane.b32.xlu0 %v1022, 36
      %v3369 = vpop.permute.xlu0 %3368
      %3370 = vrot.lane.b32.xlu0 %v1024, 36
      %v3371 = vpop.permute.xlu0 %3370
      %3372 = vrot.lane.b32.xlu0 %v1026, 36
      %v3373 = vpop.permute.xlu0 %3372
      %3374 = vrot.lane.b32.xlu0 %v1032, 36
      %v3375 = vpop.permute.xlu0 %3374
      %3376 = vrot.lane.b32.xlu0 %v1034, 36
      %v3377 = vpop.permute.xlu0 %3376
      %3378 = vrot.lane.b32.xlu0 %v1036, 36
      %v3379 = vpop.permute.xlu0 %3378
      %3380 = vrot.lane.b32.xlu0 %v1038, 36
      %v3381 = vpop.permute.xlu0 %3380
      %3382 = vrot.lane.b32.xlu0 %v1040, 36
      %v3383 = vpop.permute.xlu0 %3382
      %3384 = vrot.lane.b32.xlu0 %v1042, 36
      %v3385 = vpop.permute.xlu0 %3384
      %3386 = vrot.lane.b32.xlu0 %v1044, 36
      %v3387 = vpop.permute.xlu0 %3386
      %3388 = vrot.lane.b32.xlu0 %v1046, 36
      %v3389 = vpop.permute.xlu0 %3388
      %3390 = vrot.lane.b32.xlu0 %v1052, 36
      %v3391 = vpop.permute.xlu0 %3390
      %3392 = vrot.lane.b32.xlu0 %v1054, 36
      %v3393 = vpop.permute.xlu0 %3392
      %3394 = vrot.lane.b32.xlu0 %v1056, 36
      %v3395 = vpop.permute.xlu0 %3394
      %3396 = vrot.lane.b32.xlu0 %v1058, 36
      %v3397 = vpop.permute.xlu0 %3396
      %3398 = vrot.lane.b32.xlu0 %v1060, 36
      %v3399 = vpop.permute.xlu0 %3398
      %3400 = vrot.lane.b32.xlu0 %v1062, 36
      %v3401 = vpop.permute.xlu0 %3400
      %3402 = vrot.lane.b32.xlu0 %v1064, 36
      %v3403 = vpop.permute.xlu0 %3402
      %3404 = vrot.lane.b32.xlu0 %v1066, 36
      %v3405 = vpop.permute.xlu0 %3404
      %v3478 = vrot.slane %v1052, 1
      %v3479 = vrot.slane %v1053, 1
      %v3480 = vsel %vm1220, %v3478, %v3479
      %v3481 = vrot.slane %v1054, 1
      %v3482 = vrot.slane %v1055, 1
      %v3483 = vsel %vm1220, %v3481, %v3482
      %v3484 = vrot.slane %v1056, 1
      %v3485 = vrot.slane %v1057, 1
      %v3486 = vsel %vm1220, %v3484, %v3485
      %v3487 = vrot.slane %v1058, 1
      %v3488 = vrot.slane %v1059, 1
      %v3489 = vsel %vm1220, %v3487, %v3488
      %v3490 = vrot.slane %v1060, 1
      %v3491 = vrot.slane %v1061, 1
      %v3492 = vsel %vm1220, %v3490, %v3491
      %v3493 = vrot.slane %v1062, 1
      %v3494 = vrot.slane %v1063, 1
      %v3495 = vsel %vm1220, %v3493, %v3494
      %v3496 = vrot.slane %v1064, 1
      %v3497 = vrot.slane %v1065, 1
      %v3498 = vsel %vm1220, %v3496, %v3497
      %v3499 = vrot.slane %v1066, 1
      %v3500 = vrot.slane %v1067, 1
      %v3501 = vsel %vm1220, %v3499, %v3500
      %3502 = vrot.lane.b32.xlu0 %v1247, 40
      %v3503 = vpop.permute.xlu0 %3502
      %3504 = vrot.lane.b32.xlu0 %v1250, 40
      %v3505 = vpop.permute.xlu0 %3504
      %3506 = vrot.lane.b32.xlu0 %v1253, 40
      %v3507 = vpop.permute.xlu0 %3506
      %3508 = vrot.lane.b32.xlu0 %v1256, 40
      %v3509 = vpop.permute.xlu0 %3508
      %3510 = vrot.lane.b32.xlu0 %v1259, 40
      %v3511 = vpop.permute.xlu0 %3510
      %3512 = vrot.lane.b32.xlu0 %v1262, 40
      %v3513 = vpop.permute.xlu0 %3512
      %3514 = vrot.lane.b32.xlu0 %v1265, 40
      %v3515 = vpop.permute.xlu0 %3514
      %3516 = vrot.lane.b32.xlu0 %v1268, 40
      %v3517 = vpop.permute.xlu0 %3516
      %3518 = vrot.lane.b32.xlu0 %v1271, 40
      %v3519 = vpop.permute.xlu0 %3518
      %3520 = vrot.lane.b32.xlu0 %v1274, 40
      %v3521 = vpop.permute.xlu0 %3520
      %3522 = vrot.lane.b32.xlu0 %v1277, 40
      %v3523 = vpop.permute.xlu0 %3522
      %3524 = vrot.lane.b32.xlu0 %v1280, 40
      %v3525 = vpop.permute.xlu0 %3524
      %3526 = vrot.lane.b32.xlu0 %v1283, 40
      %v3527 = vpop.permute.xlu0 %3526
      %3528 = vrot.lane.b32.xlu0 %v1286, 40
      %v3529 = vpop.permute.xlu0 %3528
      %3530 = vrot.lane.b32.xlu0 %v1289, 40
      %v3531 = vpop.permute.xlu0 %3530
      %3532 = vrot.lane.b32.xlu0 %v1292, 40
      %v3533 = vpop.permute.xlu0 %3532
      %3534 = vrot.lane.b32.xlu0 %v1295, 40
      %v3535 = vpop.permute.xlu0 %3534
      %3536 = vrot.lane.b32.xlu0 %v1298, 40
      %v3537 = vpop.permute.xlu0 %3536
      %3538 = vrot.lane.b32.xlu0 %v1301, 40
      %v3539 = vpop.permute.xlu0 %3538
      %3540 = vrot.lane.b32.xlu0 %v1304, 40
      %v3541 = vpop.permute.xlu0 %3540
      %3542 = vrot.lane.b32.xlu0 %v1307, 40
      %v3543 = vpop.permute.xlu0 %3542
      %3544 = vrot.lane.b32.xlu0 %v1310, 40
      %v3545 = vpop.permute.xlu0 %3544
      %3546 = vrot.lane.b32.xlu0 %v1313, 40
      %v3547 = vpop.permute.xlu0 %3546
      %3548 = vrot.lane.b32.xlu0 %v1316, 40
      %v3549 = vpop.permute.xlu0 %3548
      %3550 = vrot.lane.b32.xlu0 %v1319, 40
      %v3551 = vpop.permute.xlu0 %3550
      %3552 = vrot.lane.b32.xlu0 %v1322, 40
      %v3553 = vpop.permute.xlu0 %3552
      %3554 = vrot.lane.b32.xlu0 %v1325, 40
      %v3555 = vpop.permute.xlu0 %3554
      %3556 = vrot.lane.b32.xlu0 %v1328, 40
      %v3557 = vpop.permute.xlu0 %3556
      %3558 = vrot.lane.b32.xlu0 %v1331, 40
      %v3559 = vpop.permute.xlu0 %3558
      %3560 = vrot.lane.b32.xlu0 %v1334, 40
      %v3561 = vpop.permute.xlu0 %3560
      %3562 = vrot.lane.b32.xlu0 %v1337, 40
      %v3563 = vpop.permute.xlu0 %3562
      %3564 = vrot.lane.b32.xlu0 %v1340, 40
      %v3565 = vpop.permute.xlu0 %3564
      %3566 = vrot.lane.b32.xlu0 %v1343, 40
      %v3567 = vpop.permute.xlu0 %3566
      %3568 = vrot.lane.b32.xlu0 %v1346, 40
      %v3569 = vpop.permute.xlu0 %3568
      %3570 = vrot.lane.b32.xlu0 %v1349, 40
      %v3571 = vpop.permute.xlu0 %3570
      %3572 = vrot.lane.b32.xlu0 %v1352, 40
      %v3573 = vpop.permute.xlu0 %3572
      %3574 = vrot.lane.b32.xlu0 %v1355, 40
      %v3575 = vpop.permute.xlu0 %3574
      %3576 = vrot.lane.b32.xlu0 %v1358, 40
      %v3577 = vpop.permute.xlu0 %3576
      %3578 = vrot.lane.b32.xlu0 %v1361, 40
      %v3579 = vpop.permute.xlu0 %3578
      %3580 = vrot.lane.b32.xlu0 %v1364, 40
      %v3581 = vpop.permute.xlu0 %3580
      %3582 = vrot.lane.b32.xlu0 %v1367, 40
      %v3583 = vpop.permute.xlu0 %3582
      %3584 = vrot.lane.b32.xlu0 %v1370, 40
      %v3585 = vpop.permute.xlu0 %3584
      %3586 = vrot.lane.b32.xlu0 %v1373, 40
      %v3587 = vpop.permute.xlu0 %3586
      %3588 = vrot.lane.b32.xlu0 %v1376, 40
      %v3589 = vpop.permute.xlu0 %3588
      %3590 = vrot.lane.b32.xlu0 %v1379, 40
      %v3591 = vpop.permute.xlu0 %3590
      %3592 = vrot.lane.b32.xlu0 %v1382, 40
      %v3593 = vpop.permute.xlu0 %3592
      %3594 = vrot.lane.b32.xlu0 %v1385, 40
      %v3595 = vpop.permute.xlu0 %3594
      %3596 = vrot.lane.b32.xlu0 %v1388, 40
      %v3597 = vpop.permute.xlu0 %3596
      %3598 = vrot.lane.b32.xlu0 %v1391, 40
      %v3599 = vpop.permute.xlu0 %3598
      %3600 = vrot.lane.b32.xlu0 %v1394, 40
      %v3601 = vpop.permute.xlu0 %3600
      %3602 = vrot.lane.b32.xlu0 %v1397, 40
      %v3603 = vpop.permute.xlu0 %3602
      %3604 = vrot.lane.b32.xlu0 %v1400, 40
      %v3605 = vpop.permute.xlu0 %3604
      %3606 = vrot.lane.b32.xlu0 %v1403, 40
      %v3607 = vpop.permute.xlu0 %3606
      %3608 = vrot.lane.b32.xlu0 %v1406, 40
      %v3609 = vpop.permute.xlu0 %3608
      %3610 = vrot.lane.b32.xlu0 %v1409, 40
      %v3611 = vpop.permute.xlu0 %3610
      %3612 = vrot.lane.b32.xlu0 %v1412, 40
      %v3613 = vpop.permute.xlu0 %3612
      %3614 = vrot.lane.b32.xlu0 %v3480, 40
      %v3615 = vpop.permute.xlu0 %3614
      %3616 = vrot.lane.b32.xlu0 %v3483, 40
      %v3617 = vpop.permute.xlu0 %3616
      %3618 = vrot.lane.b32.xlu0 %v3486, 40
      %v3619 = vpop.permute.xlu0 %3618
      %3620 = vrot.lane.b32.xlu0 %v3489, 40
      %v3621 = vpop.permute.xlu0 %3620
      %3622 = vrot.lane.b32.xlu0 %v3492, 40
      %v3623 = vpop.permute.xlu0 %3622
      %3624 = vrot.lane.b32.xlu0 %v3495, 40
      %v3625 = vpop.permute.xlu0 %3624
      %3626 = vrot.lane.b32.xlu0 %v3498, 40
      %v3627 = vpop.permute.xlu0 %3626
      %3628 = vrot.lane.b32.xlu0 %v3501, 40
      %v3629 = vpop.permute.xlu0 %3628
      %v3694 = vrot.slane %v1052, 2
      %v3695 = vrot.slane %v1053, 2
      %v3696 = vsel %vm1605, %v3694, %v3695
      %v3697 = vrot.slane %v1054, 2
      %v3698 = vrot.slane %v1055, 2
      %v3699 = vsel %vm1605, %v3697, %v3698
      %v3700 = vrot.slane %v1056, 2
      %v3701 = vrot.slane %v1057, 2
      %v3702 = vsel %vm1605, %v3700, %v3701
      %v3703 = vrot.slane %v1058, 2
      %v3704 = vrot.slane %v1059, 2
      %v3705 = vsel %vm1605, %v3703, %v3704
      %v3706 = vrot.slane %v1060, 2
      %v3707 = vrot.slane %v1061, 2
      %v3708 = vsel %vm1605, %v3706, %v3707
      %v3709 = vrot.slane %v1062, 2
      %v3710 = vrot.slane %v1063, 2
      %v3711 = vsel %vm1605, %v3709, %v3710
      %v3712 = vrot.slane %v1064, 2
      %v3713 = vrot.slane %v1065, 2
      %v3714 = vsel %vm1605, %v3712, %v3713
      %v3715 = vrot.slane %v1066, 2
      %v3716 = vrot.slane %v1067, 2
      %v3717 = vsel %vm1605, %v3715, %v3716
      %3718 = vrot.lane.b32.xlu0 %v1632, 44
      %v3719 = vpop.permute.xlu0 %3718
      %3720 = vrot.lane.b32.xlu0 %v1635, 44
      %v3721 = vpop.permute.xlu0 %3720
      %3722 = vrot.lane.b32.xlu0 %v1638, 44
      %v3723 = vpop.permute.xlu0 %3722
      %3724 = vrot.lane.b32.xlu0 %v1641, 44
      %v3725 = vpop.permute.xlu0 %3724
      %3726 = vrot.lane.b32.xlu0 %v1644, 44
      %v3727 = vpop.permute.xlu0 %3726
      %3728 = vrot.lane.b32.xlu0 %v1647, 44
      %v3729 = vpop.permute.xlu0 %3728
      %3730 = vrot.lane.b32.xlu0 %v1650, 44
      %v3731 = vpop.permute.xlu0 %3730
      %3732 = vrot.lane.b32.xlu0 %v1653, 44
      %v3733 = vpop.permute.xlu0 %3732
      %3734 = vrot.lane.b32.xlu0 %v1656, 44
      %v3735 = vpop.permute.xlu0 %3734
      %3736 = vrot.lane.b32.xlu0 %v1659, 44
      %v3737 = vpop.permute.xlu0 %3736
      %3738 = vrot.lane.b32.xlu0 %v1662, 44
      %v3739 = vpop.permute.xlu0 %3738
      %3740 = vrot.lane.b32.xlu0 %v1665, 44
      %v3741 = vpop.permute.xlu0 %3740
      %3742 = vrot.lane.b32.xlu0 %v1668, 44
      %v3743 = vpop.permute.xlu0 %3742
      %3744 = vrot.lane.b32.xlu0 %v1671, 44
      %v3745 = vpop.permute.xlu0 %3744
      %3746 = vrot.lane.b32.xlu0 %v1674, 44
      %v3747 = vpop.permute.xlu0 %3746
      %3748 = vrot.lane.b32.xlu0 %v1677, 44
      %v3749 = vpop.permute.xlu0 %3748
      %3750 = vrot.lane.b32.xlu0 %v1680, 44
      %v3751 = vpop.permute.xlu0 %3750
      %3752 = vrot.lane.b32.xlu0 %v1683, 44
      %v3753 = vpop.permute.xlu0 %3752
      %3754 = vrot.lane.b32.xlu0 %v1686, 44
      %v3755 = vpop.permute.xlu0 %3754
      %3756 = vrot.lane.b32.xlu0 %v1689, 44
      %v3757 = vpop.permute.xlu0 %3756
      %3758 = vrot.lane.b32.xlu0 %v1692, 44
      %v3759 = vpop.permute.xlu0 %3758
      %3760 = vrot.lane.b32.xlu0 %v1695, 44
      %v3761 = vpop.permute.xlu0 %3760
      %3762 = vrot.lane.b32.xlu0 %v1698, 44
      %v3763 = vpop.permute.xlu0 %3762
      %3764 = vrot.lane.b32.xlu0 %v1701, 44
      %v3765 = vpop.permute.xlu0 %3764
      %3766 = vrot.lane.b32.xlu0 %v1704, 44
      %v3767 = vpop.permute.xlu0 %3766
      %3768 = vrot.lane.b32.xlu0 %v1707, 44
      %v3769 = vpop.permute.xlu0 %3768
      %3770 = vrot.lane.b32.xlu0 %v1710, 44
      %v3771 = vpop.permute.xlu0 %3770
      %3772 = vrot.lane.b32.xlu0 %v1713, 44
      %v3773 = vpop.permute.xlu0 %3772
      %3774 = vrot.lane.b32.xlu0 %v1716, 44
      %v3775 = vpop.permute.xlu0 %3774
      %3776 = vrot.lane.b32.xlu0 %v1719, 44
      %v3777 = vpop.permute.xlu0 %3776
      %3778 = vrot.lane.b32.xlu0 %v1722, 44
      %v3779 = vpop.permute.xlu0 %3778
      %3780 = vrot.lane.b32.xlu0 %v1725, 44
      %v3781 = vpop.permute.xlu0 %3780
      %3782 = vrot.lane.b32.xlu0 %v1728, 44
      %v3783 = vpop.permute.xlu0 %3782
      %3784 = vrot.lane.b32.xlu0 %v1731, 44
      %v3785 = vpop.permute.xlu0 %3784
      %3786 = vrot.lane.b32.xlu0 %v1734, 44
      %v3787 = vpop.permute.xlu0 %3786
      %3788 = vrot.lane.b32.xlu0 %v1737, 44
      %v3789 = vpop.permute.xlu0 %3788
      %3790 = vrot.lane.b32.xlu0 %v1740, 44
      %v3791 = vpop.permute.xlu0 %3790
      %3792 = vrot.lane.b32.xlu0 %v1743, 44
      %v3793 = vpop.permute.xlu0 %3792
      %3794 = vrot.lane.b32.xlu0 %v1746, 44
      %v3795 = vpop.permute.xlu0 %3794
      %3796 = vrot.lane.b32.xlu0 %v1749, 44
      %v3797 = vpop.permute.xlu0 %3796
      %3798 = vrot.lane.b32.xlu0 %v1752, 44
      %v3799 = vpop.permute.xlu0 %3798
      %3800 = vrot.lane.b32.xlu0 %v1755, 44
      %v3801 = vpop.permute.xlu0 %3800
      %3802 = vrot.lane.b32.xlu0 %v1758, 44
      %v3803 = vpop.permute.xlu0 %3802
      %3804 = vrot.lane.b32.xlu0 %v1761, 44
      %v3805 = vpop.permute.xlu0 %3804
      %3806 = vrot.lane.b32.xlu0 %v1764, 44
      %v3807 = vpop.permute.xlu0 %3806
      %3808 = vrot.lane.b32.xlu0 %v1767, 44
      %v3809 = vpop.permute.xlu0 %3808
      %3810 = vrot.lane.b32.xlu0 %v1770, 44
      %v3811 = vpop.permute.xlu0 %3810
      %3812 = vrot.lane.b32.xlu0 %v1773, 44
      %v3813 = vpop.permute.xlu0 %3812
      %3814 = vrot.lane.b32.xlu0 %v1776, 44
      %v3815 = vpop.permute.xlu0 %3814
      %3816 = vrot.lane.b32.xlu0 %v1779, 44
      %v3817 = vpop.permute.xlu0 %3816
      %3818 = vrot.lane.b32.xlu0 %v1782, 44
      %v3819 = vpop.permute.xlu0 %3818
      %3820 = vrot.lane.b32.xlu0 %v1785, 44
      %v3821 = vpop.permute.xlu0 %3820
      %3822 = vrot.lane.b32.xlu0 %v1788, 44
      %v3823 = vpop.permute.xlu0 %3822
      %3824 = vrot.lane.b32.xlu0 %v1791, 44
      %v3825 = vpop.permute.xlu0 %3824
      %3826 = vrot.lane.b32.xlu0 %v1794, 44
      %v3827 = vpop.permute.xlu0 %3826
      %3828 = vrot.lane.b32.xlu0 %v1797, 44
      %v3829 = vpop.permute.xlu0 %3828
      %3830 = vrot.lane.b32.xlu0 %v3696, 44
      %v3831 = vpop.permute.xlu0 %3830
      %3832 = vrot.lane.b32.xlu0 %v3699, 44
      %v3833 = vpop.permute.xlu0 %3832
      %3834 = vrot.lane.b32.xlu0 %v3702, 44
      %v3835 = vpop.permute.xlu0 %3834
      %3836 = vrot.lane.b32.xlu0 %v3705, 44
      %v3837 = vpop.permute.xlu0 %3836
      %3838 = vrot.lane.b32.xlu0 %v3708, 44
      %v3839 = vpop.permute.xlu0 %3838
      %3840 = vrot.lane.b32.xlu0 %v3711, 44
      %v3841 = vpop.permute.xlu0 %3840
      %3842 = vrot.lane.b32.xlu0 %v3714, 44
      %v3843 = vpop.permute.xlu0 %3842
      %3844 = vrot.lane.b32.xlu0 %v3717, 44
      %v3845 = vpop.permute.xlu0 %3844
      %3911 = vrot.lane.b32.xlu0 %v914, 48
      %v3912 = vpop.permute.xlu0 %3911
      %3913 = vrot.lane.b32.xlu0 %v916, 48
      %v3914 = vpop.permute.xlu0 %3913
      %3915 = vrot.lane.b32.xlu0 %v918, 48
      %v3916 = vpop.permute.xlu0 %3915
      %3917 = vrot.lane.b32.xlu0 %v920, 48
      %v3918 = vpop.permute.xlu0 %3917
      %3919 = vrot.lane.b32.xlu0 %v922, 48
      %v3920 = vpop.permute.xlu0 %3919
      %3921 = vrot.lane.b32.xlu0 %v924, 48
      %v3922 = vpop.permute.xlu0 %3921
      %3923 = vrot.lane.b32.xlu0 %v926, 48
      %v3924 = vpop.permute.xlu0 %3923
      %3925 = vrot.lane.b32.xlu0 %v928, 48
      %v3926 = vpop.permute.xlu0 %3925
      %3927 = vrot.lane.b32.xlu0 %v934, 48
      %v3928 = vpop.permute.xlu0 %3927
      %3929 = vrot.lane.b32.xlu0 %v936, 48
      %v3930 = vpop.permute.xlu0 %3929
      %3931 = vrot.lane.b32.xlu0 %v938, 48
      %v3932 = vpop.permute.xlu0 %3931
      %3933 = vrot.lane.b32.xlu0 %v940, 48
      %v3934 = vpop.permute.xlu0 %3933
      %3935 = vrot.lane.b32.xlu0 %v942, 48
      %v3936 = vpop.permute.xlu0 %3935
      %3937 = vrot.lane.b32.xlu0 %v944, 48
      %v3938 = vpop.permute.xlu0 %3937
      %3939 = vrot.lane.b32.xlu0 %v946, 48
      %v3940 = vpop.permute.xlu0 %3939
      %3941 = vrot.lane.b32.xlu0 %v948, 48
      %v3942 = vpop.permute.xlu0 %3941
      %3943 = vrot.lane.b32.xlu0 %v954, 48
      %v3944 = vpop.permute.xlu0 %3943
      %3945 = vrot.lane.b32.xlu0 %v956, 48
      %v3946 = vpop.permute.xlu0 %3945
      %3947 = vrot.lane.b32.xlu0 %v958, 48
      %v3948 = vpop.permute.xlu0 %3947
      %3949 = vrot.lane.b32.xlu0 %v960, 48
      %v3950 = vpop.permute.xlu0 %3949
      %3951 = vrot.lane.b32.xlu0 %v962, 48
      %v3952 = vpop.permute.xlu0 %3951
      %3953 = vrot.lane.b32.xlu0 %v964, 48
      %v3954 = vpop.permute.xlu0 %3953
      %3955 = vrot.lane.b32.xlu0 %v966, 48
      %v3956 = vpop.permute.xlu0 %3955
      %3957 = vrot.lane.b32.xlu0 %v968, 48
      %v3958 = vpop.permute.xlu0 %3957
      %3959 = vrot.lane.b32.xlu0 %v974, 48
      %v3960 = vpop.permute.xlu0 %3959
      %3961 = vrot.lane.b32.xlu0 %v976, 48
      %v3962 = vpop.permute.xlu0 %3961
      %3963 = vrot.lane.b32.xlu0 %v978, 48
      %v3964 = vpop.permute.xlu0 %3963
      %3965 = vrot.lane.b32.xlu0 %v980, 48
      %v3966 = vpop.permute.xlu0 %3965
      %3967 = vrot.lane.b32.xlu0 %v982, 48
      %v3968 = vpop.permute.xlu0 %3967
      %3969 = vrot.lane.b32.xlu0 %v984, 48
      %v3970 = vpop.permute.xlu0 %3969
      %3971 = vrot.lane.b32.xlu0 %v986, 48
      %v3972 = vpop.permute.xlu0 %3971
      %3973 = vrot.lane.b32.xlu0 %v988, 48
      %v3974 = vpop.permute.xlu0 %3973
      %3975 = vrot.lane.b32.xlu0 %v994, 48
      %v3976 = vpop.permute.xlu0 %3975
      %3977 = vrot.lane.b32.xlu0 %v996, 48
      %v3978 = vpop.permute.xlu0 %3977
      %3979 = vrot.lane.b32.xlu0 %v998, 48
      %v3980 = vpop.permute.xlu0 %3979
      %3981 = vrot.lane.b32.xlu0 %v1000, 48
      %v3982 = vpop.permute.xlu0 %3981
      %3983 = vrot.lane.b32.xlu0 %v1002, 48
      %v3984 = vpop.permute.xlu0 %3983
      %3985 = vrot.lane.b32.xlu0 %v1004, 48
      %v3986 = vpop.permute.xlu0 %3985
      %3987 = vrot.lane.b32.xlu0 %v1006, 48
      %v3988 = vpop.permute.xlu0 %3987
      %3989 = vrot.lane.b32.xlu0 %v1008, 48
      %v3990 = vpop.permute.xlu0 %3989
      %3991 = vrot.lane.b32.xlu0 %v1014, 48
      %v3992 = vpop.permute.xlu0 %3991
      %3993 = vrot.lane.b32.xlu0 %v1016, 48
      %v3994 = vpop.permute.xlu0 %3993
      %3995 = vrot.lane.b32.xlu0 %v1018, 48
      %v3996 = vpop.permute.xlu0 %3995
      %3997 = vrot.lane.b32.xlu0 %v1020, 48
      %v3998 = vpop.permute.xlu0 %3997
      %3999 = vrot.lane.b32.xlu0 %v1022, 48
      %v4000 = vpop.permute.xlu0 %3999
      %4001 = vrot.lane.b32.xlu0 %v1024, 48
      %v4002 = vpop.permute.xlu0 %4001
      %4003 = vrot.lane.b32.xlu0 %v1026, 48
      %v4004 = vpop.permute.xlu0 %4003
      %4005 = vrot.lane.b32.xlu0 %v1028, 48
      %v4006 = vpop.permute.xlu0 %4005
      %4007 = vrot.lane.b32.xlu0 %v1034, 48
      %v4008 = vpop.permute.xlu0 %4007
      %4009 = vrot.lane.b32.xlu0 %v1036, 48
      %v4010 = vpop.permute.xlu0 %4009
      %4011 = vrot.lane.b32.xlu0 %v1038, 48
      %v4012 = vpop.permute.xlu0 %4011
      %4013 = vrot.lane.b32.xlu0 %v1040, 48
      %v4014 = vpop.permute.xlu0 %4013
      %4015 = vrot.lane.b32.xlu0 %v1042, 48
      %v4016 = vpop.permute.xlu0 %4015
      %4017 = vrot.lane.b32.xlu0 %v1044, 48
      %v4018 = vpop.permute.xlu0 %4017
      %4019 = vrot.lane.b32.xlu0 %v1046, 48
      %v4020 = vpop.permute.xlu0 %4019
      %4021 = vrot.lane.b32.xlu0 %v1048, 48
      %v4022 = vpop.permute.xlu0 %4021
      %4023 = vrot.lane.b32.xlu0 %v1054, 48
      %v4024 = vpop.permute.xlu0 %4023
      %4025 = vrot.lane.b32.xlu0 %v1056, 48
      %v4026 = vpop.permute.xlu0 %4025
      %4027 = vrot.lane.b32.xlu0 %v1058, 48
      %v4028 = vpop.permute.xlu0 %4027
      %4029 = vrot.lane.b32.xlu0 %v1060, 48
      %v4030 = vpop.permute.xlu0 %4029
      %4031 = vrot.lane.b32.xlu0 %v1062, 48
      %v4032 = vpop.permute.xlu0 %4031
      %4033 = vrot.lane.b32.xlu0 %v1064, 48
      %v4034 = vpop.permute.xlu0 %4033
      %4035 = vrot.lane.b32.xlu0 %v1066, 48
      %v4036 = vpop.permute.xlu0 %4035
      %4037 = vrot.lane.b32.xlu0 %v1068, 48
      %v4038 = vpop.permute.xlu0 %4037
      %v4104 = vrot.slane %v1068, 1
      %v4105 = vrot.slane %v1069, 1
      %v4106 = vsel %vm1220, %v4104, %v4105
      %4107 = vrot.lane.b32.xlu0 %v1250, 52
      %v4108 = vpop.permute.xlu0 %4107
      %4109 = vrot.lane.b32.xlu0 %v1253, 52
      %v4110 = vpop.permute.xlu0 %4109
      %4111 = vrot.lane.b32.xlu0 %v1256, 52
      %v4112 = vpop.permute.xlu0 %4111
      %4113 = vrot.lane.b32.xlu0 %v1259, 52
      %v4114 = vpop.permute.xlu0 %4113
      %4115 = vrot.lane.b32.xlu0 %v1262, 52
      %v4116 = vpop.permute.xlu0 %4115
      %4117 = vrot.lane.b32.xlu0 %v1265, 52
      %v4118 = vpop.permute.xlu0 %4117
      %4119 = vrot.lane.b32.xlu0 %v1268, 52
      %v4120 = vpop.permute.xlu0 %4119
      %4121 = vrot.lane.b32.xlu0 %v2203, 52
      %v4122 = vpop.permute.xlu0 %4121
      %4123 = vrot.lane.b32.xlu0 %v1274, 52
      %v4124 = vpop.permute.xlu0 %4123
      %4125 = vrot.lane.b32.xlu0 %v1277, 52
      %v4126 = vpop.permute.xlu0 %4125
      %4127 = vrot.lane.b32.xlu0 %v1280, 52
      %v4128 = vpop.permute.xlu0 %4127
      %4129 = vrot.lane.b32.xlu0 %v1283, 52
      %v4130 = vpop.permute.xlu0 %4129
      %4131 = vrot.lane.b32.xlu0 %v1286, 52
      %v4132 = vpop.permute.xlu0 %4131
      %4133 = vrot.lane.b32.xlu0 %v1289, 52
      %v4134 = vpop.permute.xlu0 %4133
      %4135 = vrot.lane.b32.xlu0 %v1292, 52
      %v4136 = vpop.permute.xlu0 %4135
      %4137 = vrot.lane.b32.xlu0 %v2206, 52
      %v4138 = vpop.permute.xlu0 %4137
      %4139 = vrot.lane.b32.xlu0 %v1298, 52
      %v4140 = vpop.permute.xlu0 %4139
      %4141 = vrot.lane.b32.xlu0 %v1301, 52
      %v4142 = vpop.permute.xlu0 %4141
      %4143 = vrot.lane.b32.xlu0 %v1304, 52
      %v4144 = vpop.permute.xlu0 %4143
      %4145 = vrot.lane.b32.xlu0 %v1307, 52
      %v4146 = vpop.permute.xlu0 %4145
      %4147 = vrot.lane.b32.xlu0 %v1310, 52
      %v4148 = vpop.permute.xlu0 %4147
      %4149 = vrot.lane.b32.xlu0 %v1313, 52
      %v4150 = vpop.permute.xlu0 %4149
      %4151 = vrot.lane.b32.xlu0 %v1316, 52
      %v4152 = vpop.permute.xlu0 %4151
      %4153 = vrot.lane.b32.xlu0 %v2209, 52
      %v4154 = vpop.permute.xlu0 %4153
      %4155 = vrot.lane.b32.xlu0 %v1322, 52
      %v4156 = vpop.permute.xlu0 %4155
      %4157 = vrot.lane.b32.xlu0 %v1325, 52
      %v4158 = vpop.permute.xlu0 %4157
      %4159 = vrot.lane.b32.xlu0 %v1328, 52
      %v4160 = vpop.permute.xlu0 %4159
      %4161 = vrot.lane.b32.xlu0 %v1331, 52
      %v4162 = vpop.permute.xlu0 %4161
      %4163 = vrot.lane.b32.xlu0 %v1334, 52
      %v4164 = vpop.permute.xlu0 %4163
      %4165 = vrot.lane.b32.xlu0 %v1337, 52
      %v4166 = vpop.permute.xlu0 %4165
      %4167 = vrot.lane.b32.xlu0 %v1340, 52
      %v4168 = vpop.permute.xlu0 %4167
      %4169 = vrot.lane.b32.xlu0 %v2212, 52
      %v4170 = vpop.permute.xlu0 %4169
      %4171 = vrot.lane.b32.xlu0 %v1346, 52
      %v4172 = vpop.permute.xlu0 %4171
      %4173 = vrot.lane.b32.xlu0 %v1349, 52
      %v4174 = vpop.permute.xlu0 %4173
      %4175 = vrot.lane.b32.xlu0 %v1352, 52
      %v4176 = vpop.permute.xlu0 %4175
      %4177 = vrot.lane.b32.xlu0 %v1355, 52
      %v4178 = vpop.permute.xlu0 %4177
      %4179 = vrot.lane.b32.xlu0 %v1358, 52
      %v4180 = vpop.permute.xlu0 %4179
      %4181 = vrot.lane.b32.xlu0 %v1361, 52
      %v4182 = vpop.permute.xlu0 %4181
      %4183 = vrot.lane.b32.xlu0 %v1364, 52
      %v4184 = vpop.permute.xlu0 %4183
      %4185 = vrot.lane.b32.xlu0 %v2215, 52
      %v4186 = vpop.permute.xlu0 %4185
      %4187 = vrot.lane.b32.xlu0 %v1370, 52
      %v4188 = vpop.permute.xlu0 %4187
      %4189 = vrot.lane.b32.xlu0 %v1373, 52
      %v4190 = vpop.permute.xlu0 %4189
      %4191 = vrot.lane.b32.xlu0 %v1376, 52
      %v4192 = vpop.permute.xlu0 %4191
      %4193 = vrot.lane.b32.xlu0 %v1379, 52
      %v4194 = vpop.permute.xlu0 %4193
      %4195 = vrot.lane.b32.xlu0 %v1382, 52
      %v4196 = vpop.permute.xlu0 %4195
      %4197 = vrot.lane.b32.xlu0 %v1385, 52
      %v4198 = vpop.permute.xlu0 %4197
      %4199 = vrot.lane.b32.xlu0 %v1388, 52
      %v4200 = vpop.permute.xlu0 %4199
      %4201 = vrot.lane.b32.xlu0 %v2218, 52
      %v4202 = vpop.permute.xlu0 %4201
      %4203 = vrot.lane.b32.xlu0 %v1394, 52
      %v4204 = vpop.permute.xlu0 %4203
      %4205 = vrot.lane.b32.xlu0 %v1397, 52
      %v4206 = vpop.permute.xlu0 %4205
      %4207 = vrot.lane.b32.xlu0 %v1400, 52
      %v4208 = vpop.permute.xlu0 %4207
      %4209 = vrot.lane.b32.xlu0 %v1403, 52
      %v4210 = vpop.permute.xlu0 %4209
      %4211 = vrot.lane.b32.xlu0 %v1406, 52
      %v4212 = vpop.permute.xlu0 %4211
      %4213 = vrot.lane.b32.xlu0 %v1409, 52
      %v4214 = vpop.permute.xlu0 %4213
      %4215 = vrot.lane.b32.xlu0 %v1412, 52
      %v4216 = vpop.permute.xlu0 %4215
      %4217 = vrot.lane.b32.xlu0 %v2221, 52
      %v4218 = vpop.permute.xlu0 %4217
      %4219 = vrot.lane.b32.xlu0 %v3483, 52
      %v4220 = vpop.permute.xlu0 %4219
      %4221 = vrot.lane.b32.xlu0 %v3486, 52
      %v4222 = vpop.permute.xlu0 %4221
      %4223 = vrot.lane.b32.xlu0 %v3489, 52
      %v4224 = vpop.permute.xlu0 %4223
      %4225 = vrot.lane.b32.xlu0 %v3492, 52
      %v4226 = vpop.permute.xlu0 %4225
      %4227 = vrot.lane.b32.xlu0 %v3495, 52
      %v4228 = vpop.permute.xlu0 %4227
      %4229 = vrot.lane.b32.xlu0 %v3498, 52
      %v4230 = vpop.permute.xlu0 %4229
      %4231 = vrot.lane.b32.xlu0 %v3501, 52
      %v4232 = vpop.permute.xlu0 %4231
      %4233 = vrot.lane.b32.xlu0 %v4106, 52
      %v4234 = vpop.permute.xlu0 %4233
      %v4299 = vrot.slane %v1068, 2
      %v4300 = vrot.slane %v1069, 2
      %v4301 = vsel %vm1605, %v4299, %v4300
      %4302 = vrot.lane.b32.xlu0 %v1635, 56
      %v4303 = vpop.permute.xlu0 %4302
      %4304 = vrot.lane.b32.xlu0 %v1638, 56
      %v4305 = vpop.permute.xlu0 %4304
      %4306 = vrot.lane.b32.xlu0 %v1641, 56
      %v4307 = vpop.permute.xlu0 %4306
      %4308 = vrot.lane.b32.xlu0 %v1644, 56
      %v4309 = vpop.permute.xlu0 %4308
      %4310 = vrot.lane.b32.xlu0 %v1647, 56
      %v4311 = vpop.permute.xlu0 %4310
      %4312 = vrot.lane.b32.xlu0 %v1650, 56
      %v4313 = vpop.permute.xlu0 %4312
      %4314 = vrot.lane.b32.xlu0 %v1653, 56
      %v4315 = vpop.permute.xlu0 %4314
      %4316 = vrot.lane.b32.xlu0 %v2419, 56
      %v4317 = vpop.permute.xlu0 %4316
      %4318 = vrot.lane.b32.xlu0 %v1659, 56
      %v4319 = vpop.permute.xlu0 %4318
      %4320 = vrot.lane.b32.xlu0 %v1662, 56
      %v4321 = vpop.permute.xlu0 %4320
      %4322 = vrot.lane.b32.xlu0 %v1665, 56
      %v4323 = vpop.permute.xlu0 %4322
      %4324 = vrot.lane.b32.xlu0 %v1668, 56
      %v4325 = vpop.permute.xlu0 %4324
      %4326 = vrot.lane.b32.xlu0 %v1671, 56
      %v4327 = vpop.permute.xlu0 %4326
      %4328 = vrot.lane.b32.xlu0 %v1674, 56
      %v4329 = vpop.permute.xlu0 %4328
      %4330 = vrot.lane.b32.xlu0 %v1677, 56
      %v4331 = vpop.permute.xlu0 %4330
      %4332 = vrot.lane.b32.xlu0 %v2422, 56
      %v4333 = vpop.permute.xlu0 %4332
      %4334 = vrot.lane.b32.xlu0 %v1683, 56
      %v4335 = vpop.permute.xlu0 %4334
      %4336 = vrot.lane.b32.xlu0 %v1686, 56
      %v4337 = vpop.permute.xlu0 %4336
      %4338 = vrot.lane.b32.xlu0 %v1689, 56
      %v4339 = vpop.permute.xlu0 %4338
      %4340 = vrot.lane.b32.xlu0 %v1692, 56
      %v4341 = vpop.permute.xlu0 %4340
      %4342 = vrot.lane.b32.xlu0 %v1695, 56
      %v4343 = vpop.permute.xlu0 %4342
      %4344 = vrot.lane.b32.xlu0 %v1698, 56
      %v4345 = vpop.permute.xlu0 %4344
      %4346 = vrot.lane.b32.xlu0 %v1701, 56
      %v4347 = vpop.permute.xlu0 %4346
      %4348 = vrot.lane.b32.xlu0 %v2425, 56
      %v4349 = vpop.permute.xlu0 %4348
      %4350 = vrot.lane.b32.xlu0 %v1707, 56
      %v4351 = vpop.permute.xlu0 %4350
      %4352 = vrot.lane.b32.xlu0 %v1710, 56
      %v4353 = vpop.permute.xlu0 %4352
      %4354 = vrot.lane.b32.xlu0 %v1713, 56
      %v4355 = vpop.permute.xlu0 %4354
      %4356 = vrot.lane.b32.xlu0 %v1716, 56
      %v4357 = vpop.permute.xlu0 %4356
      %4358 = vrot.lane.b32.xlu0 %v1719, 56
      %v4359 = vpop.permute.xlu0 %4358
      %4360 = vrot.lane.b32.xlu0 %v1722, 56
      %v4361 = vpop.permute.xlu0 %4360
      %4362 = vrot.lane.b32.xlu0 %v1725, 56
      %v4363 = vpop.permute.xlu0 %4362
      %4364 = vrot.lane.b32.xlu0 %v2428, 56
      %v4365 = vpop.permute.xlu0 %4364
      %4366 = vrot.lane.b32.xlu0 %v1731, 56
      %v4367 = vpop.permute.xlu0 %4366
      %4368 = vrot.lane.b32.xlu0 %v1734, 56
      %v4369 = vpop.permute.xlu0 %4368
      %4370 = vrot.lane.b32.xlu0 %v1737, 56
      %v4371 = vpop.permute.xlu0 %4370
      %4372 = vrot.lane.b32.xlu0 %v1740, 56
      %v4373 = vpop.permute.xlu0 %4372
      %4374 = vrot.lane.b32.xlu0 %v1743, 56
      %v4375 = vpop.permute.xlu0 %4374
      %4376 = vrot.lane.b32.xlu0 %v1746, 56
      %v4377 = vpop.permute.xlu0 %4376
      %4378 = vrot.lane.b32.xlu0 %v1749, 56
      %v4379 = vpop.permute.xlu0 %4378
      %4380 = vrot.lane.b32.xlu0 %v2431, 56
      %v4381 = vpop.permute.xlu0 %4380
      %4382 = vrot.lane.b32.xlu0 %v1755, 56
      %v4383 = vpop.permute.xlu0 %4382
      %4384 = vrot.lane.b32.xlu0 %v1758, 56
      %v4385 = vpop.permute.xlu0 %4384
      %4386 = vrot.lane.b32.xlu0 %v1761, 56
      %v4387 = vpop.permute.xlu0 %4386
      %4388 = vrot.lane.b32.xlu0 %v1764, 56
      %v4389 = vpop.permute.xlu0 %4388
      %4390 = vrot.lane.b32.xlu0 %v1767, 56
      %v4391 = vpop.permute.xlu0 %4390
      %4392 = vrot.lane.b32.xlu0 %v1770, 56
      %v4393 = vpop.permute.xlu0 %4392
      %4394 = vrot.lane.b32.xlu0 %v1773, 56
      %v4395 = vpop.permute.xlu0 %4394
      %4396 = vrot.lane.b32.xlu0 %v2434, 56
      %v4397 = vpop.permute.xlu0 %4396
      %4398 = vrot.lane.b32.xlu0 %v1779, 56
      %v4399 = vpop.permute.xlu0 %4398
      %4400 = vrot.lane.b32.xlu0 %v1782, 56
      %v4401 = vpop.permute.xlu0 %4400
      %4402 = vrot.lane.b32.xlu0 %v1785, 56
      %v4403 = vpop.permute.xlu0 %4402
      %4404 = vrot.lane.b32.xlu0 %v1788, 56
      %v4405 = vpop.permute.xlu0 %4404
      %4406 = vrot.lane.b32.xlu0 %v1791, 56
      %v4407 = vpop.permute.xlu0 %4406
      %4408 = vrot.lane.b32.xlu0 %v1794, 56
      %v4409 = vpop.permute.xlu0 %4408
      %4410 = vrot.lane.b32.xlu0 %v1797, 56
      %v4411 = vpop.permute.xlu0 %4410
      %4412 = vrot.lane.b32.xlu0 %v2437, 56
      %v4413 = vpop.permute.xlu0 %4412
      %4414 = vrot.lane.b32.xlu0 %v3699, 56
      %v4415 = vpop.permute.xlu0 %4414
      %4416 = vrot.lane.b32.xlu0 %v3702, 56
      %v4417 = vpop.permute.xlu0 %4416
      %4418 = vrot.lane.b32.xlu0 %v3705, 56
      %v4419 = vpop.permute.xlu0 %4418
      %4420 = vrot.lane.b32.xlu0 %v3708, 56
      %v4421 = vpop.permute.xlu0 %4420
      %4422 = vrot.lane.b32.xlu0 %v3711, 56
      %v4423 = vpop.permute.xlu0 %4422
      %4424 = vrot.lane.b32.xlu0 %v3714, 56
      %v4425 = vpop.permute.xlu0 %4424
      %4426 = vrot.lane.b32.xlu0 %v3717, 56
      %v4427 = vpop.permute.xlu0 %4426
      %4428 = vrot.lane.b32.xlu0 %v4301, 56
      %v4429 = vpop.permute.xlu0 %4428
      %4495 = vrot.lane.b32.xlu0 %v916, 60
      %v4496 = vpop.permute.xlu0 %4495
      %4497 = vrot.lane.b32.xlu0 %v918, 60
      %v4498 = vpop.permute.xlu0 %4497
      %4499 = vrot.lane.b32.xlu0 %v920, 60
      %v4500 = vpop.permute.xlu0 %4499
      %4501 = vrot.lane.b32.xlu0 %v922, 60
      %v4502 = vpop.permute.xlu0 %4501
      %4503 = vrot.lane.b32.xlu0 %v924, 60
      %v4504 = vpop.permute.xlu0 %4503
      %4505 = vrot.lane.b32.xlu0 %v926, 60
      %v4506 = vpop.permute.xlu0 %4505
      %4507 = vrot.lane.b32.xlu0 %v928, 60
      %v4508 = vpop.permute.xlu0 %4507
      %4509 = vrot.lane.b32.xlu0 %v930, 60
      %v4510 = vpop.permute.xlu0 %4509
      %4511 = vrot.lane.b32.xlu0 %v936, 60
      %v4512 = vpop.permute.xlu0 %4511
      %4513 = vrot.lane.b32.xlu0 %v938, 60
      %v4514 = vpop.permute.xlu0 %4513
      %4515 = vrot.lane.b32.xlu0 %v940, 60
      %v4516 = vpop.permute.xlu0 %4515
      %4517 = vrot.lane.b32.xlu0 %v942, 60
      %v4518 = vpop.permute.xlu0 %4517
      %4519 = vrot.lane.b32.xlu0 %v944, 60
      %v4520 = vpop.permute.xlu0 %4519
      %4521 = vrot.lane.b32.xlu0 %v946, 60
      %v4522 = vpop.permute.xlu0 %4521
      %4523 = vrot.lane.b32.xlu0 %v948, 60
      %v4524 = vpop.permute.xlu0 %4523
      %4525 = vrot.lane.b32.xlu0 %v950, 60
      %v4526 = vpop.permute.xlu0 %4525
      %4527 = vrot.lane.b32.xlu0 %v956, 60
      %v4528 = vpop.permute.xlu0 %4527
      %4529 = vrot.lane.b32.xlu0 %v958, 60
      %v4530 = vpop.permute.xlu0 %4529
      %4531 = vrot.lane.b32.xlu0 %v960, 60
      %v4532 = vpop.permute.xlu0 %4531
      %4533 = vrot.lane.b32.xlu0 %v962, 60
      %v4534 = vpop.permute.xlu0 %4533
      %4535 = vrot.lane.b32.xlu0 %v964, 60
      %v4536 = vpop.permute.xlu0 %4535
      %4537 = vrot.lane.b32.xlu0 %v966, 60
      %v4538 = vpop.permute.xlu0 %4537
      %4539 = vrot.lane.b32.xlu0 %v968, 60
      %v4540 = vpop.permute.xlu0 %4539
      %4541 = vrot.lane.b32.xlu0 %v970, 60
      %v4542 = vpop.permute.xlu0 %4541
      %4543 = vrot.lane.b32.xlu0 %v976, 60
      %v4544 = vpop.permute.xlu0 %4543
      %4545 = vrot.lane.b32.xlu0 %v978, 60
      %v4546 = vpop.permute.xlu0 %4545
      %4547 = vrot.lane.b32.xlu0 %v980, 60
      %v4548 = vpop.permute.xlu0 %4547
      %4549 = vrot.lane.b32.xlu0 %v982, 60
      %v4550 = vpop.permute.xlu0 %4549
      %4551 = vrot.lane.b32.xlu0 %v984, 60
      %v4552 = vpop.permute.xlu0 %4551
      %4553 = vrot.lane.b32.xlu0 %v986, 60
      %v4554 = vpop.permute.xlu0 %4553
      %4555 = vrot.lane.b32.xlu0 %v988, 60
      %v4556 = vpop.permute.xlu0 %4555
      %4557 = vrot.lane.b32.xlu0 %v990, 60
      %v4558 = vpop.permute.xlu0 %4557
      %4559 = vrot.lane.b32.xlu0 %v996, 60
      %v4560 = vpop.permute.xlu0 %4559
      %4561 = vrot.lane.b32.xlu0 %v998, 60
      %v4562 = vpop.permute.xlu0 %4561
      %4563 = vrot.lane.b32.xlu0 %v1000, 60
      %v4564 = vpop.permute.xlu0 %4563
      %4565 = vrot.lane.b32.xlu0 %v1002, 60
      %v4566 = vpop.permute.xlu0 %4565
      %4567 = vrot.lane.b32.xlu0 %v1004, 60
      %v4568 = vpop.permute.xlu0 %4567
      %4569 = vrot.lane.b32.xlu0 %v1006, 60
      %v4570 = vpop.permute.xlu0 %4569
      %4571 = vrot.lane.b32.xlu0 %v1008, 60
      %v4572 = vpop.permute.xlu0 %4571
      %4573 = vrot.lane.b32.xlu0 %v1010, 60
      %v4574 = vpop.permute.xlu0 %4573
      %4575 = vrot.lane.b32.xlu0 %v1016, 60
      %v4576 = vpop.permute.xlu0 %4575
      %4577 = vrot.lane.b32.xlu0 %v1018, 60
      %v4578 = vpop.permute.xlu0 %4577
      %4579 = vrot.lane.b32.xlu0 %v1020, 60
      %v4580 = vpop.permute.xlu0 %4579
      %4581 = vrot.lane.b32.xlu0 %v1022, 60
      %v4582 = vpop.permute.xlu0 %4581
      %4583 = vrot.lane.b32.xlu0 %v1024, 60
      %v4584 = vpop.permute.xlu0 %4583
      %4585 = vrot.lane.b32.xlu0 %v1026, 60
      %v4586 = vpop.permute.xlu0 %4585
      %4587 = vrot.lane.b32.xlu0 %v1028, 60
      %v4588 = vpop.permute.xlu0 %4587
      %4589 = vrot.lane.b32.xlu0 %v1030, 60
      %v4590 = vpop.permute.xlu0 %4589
      %4591 = vrot.lane.b32.xlu0 %v1036, 60
      %v4592 = vpop.permute.xlu0 %4591
      %4593 = vrot.lane.b32.xlu0 %v1038, 60
      %v4594 = vpop.permute.xlu0 %4593
      %4595 = vrot.lane.b32.xlu0 %v1040, 60
      %v4596 = vpop.permute.xlu0 %4595
      %4597 = vrot.lane.b32.xlu0 %v1042, 60
      %v4598 = vpop.permute.xlu0 %4597
      %4599 = vrot.lane.b32.xlu0 %v1044, 60
      %v4600 = vpop.permute.xlu0 %4599
      %4601 = vrot.lane.b32.xlu0 %v1046, 60
      %v4602 = vpop.permute.xlu0 %4601
      %4603 = vrot.lane.b32.xlu0 %v1048, 60
      %v4604 = vpop.permute.xlu0 %4603
      %4605 = vrot.lane.b32.xlu0 %v1050, 60
      %v4606 = vpop.permute.xlu0 %4605
      %4607 = vrot.lane.b32.xlu0 %v1056, 60
      %v4608 = vpop.permute.xlu0 %4607
      %4609 = vrot.lane.b32.xlu0 %v1058, 60
      %v4610 = vpop.permute.xlu0 %4609
      %4611 = vrot.lane.b32.xlu0 %v1060, 60
      %v4612 = vpop.permute.xlu0 %4611
      %4613 = vrot.lane.b32.xlu0 %v1062, 60
      %v4614 = vpop.permute.xlu0 %4613
      %4615 = vrot.lane.b32.xlu0 %v1064, 60
      %v4616 = vpop.permute.xlu0 %4615
      %4617 = vrot.lane.b32.xlu0 %v1066, 60
      %v4618 = vpop.permute.xlu0 %4617
      %4619 = vrot.lane.b32.xlu0 %v1068, 60
      %v4620 = vpop.permute.xlu0 %4619
      %4621 = vrot.lane.b32.xlu0 %v1070, 60
      %v4622 = vpop.permute.xlu0 %4621
      %vm4687 = vcmask 31744
      %v4688 = vsel %vm4687, %v892, %v1414
      %v4689 = vsel %vm4687, %v894, %v1416
      %v4690 = vsel %vm4687, %v896, %v1418
      %v4691 = vsel %vm4687, %v898, %v1420
      %v4692 = vsel %vm4687, %v900, %v1422
      %v4693 = vsel %vm4687, %v902, %v1424
      %v4694 = vsel %vm4687, %v904, %v1426
      %v4695 = vsel %vm4687, %v906, %v1428
      %v4696 = vsel %vm4687, %v912, %v1430
      %v4697 = vsel %vm4687, %v914, %v1432
      %v4698 = vsel %vm4687, %v916, %v1434
      %v4699 = vsel %vm4687, %v918, %v1436
      %v4700 = vsel %vm4687, %v920, %v1438
      %v4701 = vsel %vm4687, %v922, %v1440
      %v4702 = vsel %vm4687, %v924, %v1442
      %v4703 = vsel %vm4687, %v926, %v1444
      %v4704 = vsel %vm4687, %v932, %v1446
      %v4705 = vsel %vm4687, %v934, %v1448
      %v4706 = vsel %vm4687, %v936, %v1450
      %v4707 = vsel %vm4687, %v938, %v1452
      %v4708 = vsel %vm4687, %v940, %v1454
      %v4709 = vsel %vm4687, %v942, %v1456
      %v4710 = vsel %vm4687, %v944, %v1458
      %v4711 = vsel %vm4687, %v946, %v1460
      %v4712 = vsel %vm4687, %v952, %v1462
      %v4713 = vsel %vm4687, %v954, %v1464
      %v4714 = vsel %vm4687, %v956, %v1466
      %v4715 = vsel %vm4687, %v958, %v1468
      %v4716 = vsel %vm4687, %v960, %v1470
      %v4717 = vsel %vm4687, %v962, %v1472
      %v4718 = vsel %vm4687, %v964, %v1474
      %v4719 = vsel %vm4687, %v966, %v1476
      %v4720 = vsel %vm4687, %v972, %v1478
      %v4721 = vsel %vm4687, %v974, %v1480
      %v4722 = vsel %vm4687, %v976, %v1482
      %v4723 = vsel %vm4687, %v978, %v1484
      %v4724 = vsel %vm4687, %v980, %v1486
      %v4725 = vsel %vm4687, %v982, %v1488
      %v4726 = vsel %vm4687, %v984, %v1490
      %v4727 = vsel %vm4687, %v986, %v1492
      %v4728 = vsel %vm4687, %v992, %v1494
      %v4729 = vsel %vm4687, %v994, %v1496
      %v4730 = vsel %vm4687, %v996, %v1498
      %v4731 = vsel %vm4687, %v998, %v1500
      %v4732 = vsel %vm4687, %v1000, %v1502
      %v4733 = vsel %vm4687, %v1002, %v1504
      %v4734 = vsel %vm4687, %v1004, %v1506
      %v4735 = vsel %vm4687, %v1006, %v1508
      %v4736 = vsel %vm4687, %v1012, %v1510
      %v4737 = vsel %vm4687, %v1014, %v1512
      %v4738 = vsel %vm4687, %v1016, %v1514
      %v4739 = vsel %vm4687, %v1018, %v1516
      %v4740 = vsel %vm4687, %v1020, %v1518
      %v4741 = vsel %vm4687, %v1022, %v1520
      %v4742 = vsel %vm4687, %v1024, %v1522
      %v4743 = vsel %vm4687, %v1026, %v1524
      %v4744 = vsel %vm4687, %v1032, %v1526
      %v4745 = vsel %vm4687, %v1034, %v1528
      %v4746 = vsel %vm4687, %v1036, %v1530
      %v4747 = vsel %vm4687, %v1038, %v1532
      %v4748 = vsel %vm4687, %v1040, %v1534
      %v4749 = vsel %vm4687, %v1042, %v1536
      %v4750 = vsel %vm4687, %v1044, %v1538
      %v4751 = vsel %vm4687, %v1046, %v1540
      %vm4752 = vcmask 64512
      %v4753 = vsel %vm4752, %v4688, %v1799
      %v4754 = vsel %vm4752, %v4689, %v1801
      %v4755 = vsel %vm4752, %v4690, %v1803
      %v4756 = vsel %vm4752, %v4691, %v1805
      %v4757 = vsel %vm4752, %v4692, %v1807
      %v4758 = vsel %vm4752, %v4693, %v1809
      %v4759 = vsel %vm4752, %v4694, %v1811
      %v4760 = vsel %vm4752, %v4695, %v1813
      %v4761 = vsel %vm4752, %v4696, %v1815
      %v4762 = vsel %vm4752, %v4697, %v1817
      %v4763 = vsel %vm4752, %v4698, %v1819
      %v4764 = vsel %vm4752, %v4699, %v1821
      %v4765 = vsel %vm4752, %v4700, %v1823
      %v4766 = vsel %vm4752, %v4701, %v1825
      %v4767 = vsel %vm4752, %v4702, %v1827
      %v4768 = vsel %vm4752, %v4703, %v1829
      %v4769 = vsel %vm4752, %v4704, %v1831
      %v4770 = vsel %vm4752, %v4705, %v1833
      %v4771 = vsel %vm4752, %v4706, %v1835
      %v4772 = vsel %vm4752, %v4707, %v1837
      %v4773 = vsel %vm4752, %v4708, %v1839
      %v4774 = vsel %vm4752, %v4709, %v1841
      %v4775 = vsel %vm4752, %v4710, %v1843
      %v4776 = vsel %vm4752, %v4711, %v1845
      %v4777 = vsel %vm4752, %v4712, %v1847
      %v4778 = vsel %vm4752, %v4713, %v1849
      %v4779 = vsel %vm4752, %v4714, %v1851
      %v4780 = vsel %vm4752, %v4715, %v1853
      %v4781 = vsel %vm4752, %v4716, %v1855
      %v4782 = vsel %vm4752, %v4717, %v1857
      %v4783 = vsel %vm4752, %v4718, %v1859
      %v4784 = vsel %vm4752, %v4719, %v1861
      %v4785 = vsel %vm4752, %v4720, %v1863
      %v4786 = vsel %vm4752, %v4721, %v1865
      %v4787 = vsel %vm4752, %v4722, %v1867
      %v4788 = vsel %vm4752, %v4723, %v1869
      %v4789 = vsel %vm4752, %v4724, %v1871
      %v4790 = vsel %vm4752, %v4725, %v1873
      %v4791 = vsel %vm4752, %v4726, %v1875
      %v4792 = vsel %vm4752, %v4727, %v1877
      %v4793 = vsel %vm4752, %v4728, %v1879
      %v4794 = vsel %vm4752, %v4729, %v1881
      %v4795 = vsel %vm4752, %v4730, %v1883
      %v4796 = vsel %vm4752, %v4731, %v1885
      %v4797 = vsel %vm4752, %v4732, %v1887
      %v4798 = vsel %vm4752, %v4733, %v1889
      %v4799 = vsel %vm4752, %v4734, %v1891
      %v4800 = vsel %vm4752, %v4735, %v1893
      %v4801 = vsel %vm4752, %v4736, %v1895
      %v4802 = vsel %vm4752, %v4737, %v1897
      %v4803 = vsel %vm4752, %v4738, %v1899
      %v4804 = vsel %vm4752, %v4739, %v1901
      %v4805 = vsel %vm4752, %v4740, %v1903
      %v4806 = vsel %vm4752, %v4741, %v1905
      %v4807 = vsel %vm4752, %v4742, %v1907
      %v4808 = vsel %vm4752, %v4743, %v1909
      %v4809 = vsel %vm4752, %v4744, %v1911
      %v4810 = vsel %vm4752, %v4745, %v1913
      %v4811 = vsel %vm4752, %v4746, %v1915
      %v4812 = vsel %vm4752, %v4747, %v1917
      %v4813 = vsel %vm4752, %v4748, %v1919
      %v4814 = vsel %vm4752, %v4749, %v1921
      %v4815 = vsel %vm4752, %v4750, %v1923
      %v4816 = vsel %vm4752, %v4751, %v1925
      %vm4817 = vcmask 97280
      %v4818 = vsel %vm4817, %v4753, %v1999
      %v4819 = vsel %vm4817, %v4754, %v2001
      %v4820 = vsel %vm4817, %v4755, %v2003
      %v4821 = vsel %vm4817, %v4756, %v2005
      %v4822 = vsel %vm4817, %v4757, %v2007
      %v4823 = vsel %vm4817, %v4758, %v2009
      %v4824 = vsel %vm4817, %v4759, %v2011
      %v4825 = vsel %vm4817, %v4760, %v2013
      %v4826 = vsel %vm4817, %v4761, %v2015
      %v4827 = vsel %vm4817, %v4762, %v2017
      %v4828 = vsel %vm4817, %v4763, %v2019
      %v4829 = vsel %vm4817, %v4764, %v2021
      %v4830 = vsel %vm4817, %v4765, %v2023
      %v4831 = vsel %vm4817, %v4766, %v2025
      %v4832 = vsel %vm4817, %v4767, %v2027
      %v4833 = vsel %vm4817, %v4768, %v2029
      %v4834 = vsel %vm4817, %v4769, %v2031
      %v4835 = vsel %vm4817, %v4770, %v2033
      %v4836 = vsel %vm4817, %v4771, %v2035
      %v4837 = vsel %vm4817, %v4772, %v2037
      %v4838 = vsel %vm4817, %v4773, %v2039
      %v4839 = vsel %vm4817, %v4774, %v2041
      %v4840 = vsel %vm4817, %v4775, %v2043
      %v4841 = vsel %vm4817, %v4776, %v2045
      %v4842 = vsel %vm4817, %v4777, %v2047
      %v4843 = vsel %vm4817, %v4778, %v2049
      %v4844 = vsel %vm4817, %v4779, %v2051
      %v4845 = vsel %vm4817, %v4780, %v2053
      %v4846 = vsel %vm4817, %v4781, %v2055
      %v4847 = vsel %vm4817, %v4782, %v2057
      %v4848 = vsel %vm4817, %v4783, %v2059
      %v4849 = vsel %vm4817, %v4784, %v2061
      %v4850 = vsel %vm4817, %v4785, %v2063
      %v4851 = vsel %vm4817, %v4786, %v2065
      %v4852 = vsel %vm4817, %v4787, %v2067
      %v4853 = vsel %vm4817, %v4788, %v2069
      %v4854 = vsel %vm4817, %v4789, %v2071
      %v4855 = vsel %vm4817, %v4790, %v2073
      %v4856 = vsel %vm4817, %v4791, %v2075
      %v4857 = vsel %vm4817, %v4792, %v2077
      %v4858 = vsel %vm4817, %v4793, %v2079
      %v4859 = vsel %vm4817, %v4794, %v2081
      %v4860 = vsel %vm4817, %v4795, %v2083
      %v4861 = vsel %vm4817, %v4796, %v2085
      %v4862 = vsel %vm4817, %v4797, %v2087
      %v4863 = vsel %vm4817, %v4798, %v2089
      %v4864 = vsel %vm4817, %v4799, %v2091
      %v4865 = vsel %vm4817, %v4800, %v2093
      %v4866 = vsel %vm4817, %v4801, %v2095
      %v4867 = vsel %vm4817, %v4802, %v2097
      %v4868 = vsel %vm4817, %v4803, %v2099
      %v4869 = vsel %vm4817, %v4804, %v2101
      %v4870 = vsel %vm4817, %v4805, %v2103
      %v4871 = vsel %vm4817, %v4806, %v2105
      %v4872 = vsel %vm4817, %v4807, %v2107
      %v4873 = vsel %vm4817, %v4808, %v2109
      %v4874 = vsel %vm4817, %v4809, %v2111
      %v4875 = vsel %vm4817, %v4810, %v2113
      %v4876 = vsel %vm4817, %v4811, %v2115
      %v4877 = vsel %vm4817, %v4812, %v2117
      %v4878 = vsel %vm4817, %v4813, %v2119
      %v4879 = vsel %vm4817, %v4814, %v2121
      %v4880 = vsel %vm4817, %v4815, %v2123
      %v4881 = vsel %vm4817, %v4816, %v2125
      %vm4882 = vcmask 130048
      %v4883 = vsel %vm4882, %v4818, %v2223
      %v4884 = vsel %vm4882, %v4819, %v2225
      %v4885 = vsel %vm4882, %v4820, %v2227
      %v4886 = vsel %vm4882, %v4821, %v2229
      %v4887 = vsel %vm4882, %v4822, %v2231
      %v4888 = vsel %vm4882, %v4823, %v2233
      %v4889 = vsel %vm4882, %v4824, %v2235
      %v4890 = vsel %vm4882, %v4825, %v2237
      %v4891 = vsel %vm4882, %v4826, %v2239
      %v4892 = vsel %vm4882, %v4827, %v2241
      %v4893 = vsel %vm4882, %v4828, %v2243
      %v4894 = vsel %vm4882, %v4829, %v2245
      %v4895 = vsel %vm4882, %v4830, %v2247
      %v4896 = vsel %vm4882, %v4831, %v2249
      %v4897 = vsel %vm4882, %v4832, %v2251
      %v4898 = vsel %vm4882, %v4833, %v2253
      %v4899 = vsel %vm4882, %v4834, %v2255
      %v4900 = vsel %vm4882, %v4835, %v2257
      %v4901 = vsel %vm4882, %v4836, %v2259
      %v4902 = vsel %vm4882, %v4837, %v2261
      %v4903 = vsel %vm4882, %v4838, %v2263
      %v4904 = vsel %vm4882, %v4839, %v2265
      %v4905 = vsel %vm4882, %v4840, %v2267
      %v4906 = vsel %vm4882, %v4841, %v2269
      %v4907 = vsel %vm4882, %v4842, %v2271
      %v4908 = vsel %vm4882, %v4843, %v2273
      %v4909 = vsel %vm4882, %v4844, %v2275
      %v4910 = vsel %vm4882, %v4845, %v2277
      %v4911 = vsel %vm4882, %v4846, %v2279
      %v4912 = vsel %vm4882, %v4847, %v2281
      %v4913 = vsel %vm4882, %v4848, %v2283
      %v4914 = vsel %vm4882, %v4849, %v2285
      %v4915 = vsel %vm4882, %v4850, %v2287
      %v4916 = vsel %vm4882, %v4851, %v2289
      %v4917 = vsel %vm4882, %v4852, %v2291
      %v4918 = vsel %vm4882, %v4853, %v2293
      %v4919 = vsel %vm4882, %v4854, %v2295
      %v4920 = vsel %vm4882, %v4855, %v2297
      %v4921 = vsel %vm4882, %v4856, %v2299
      %v4922 = vsel %vm4882, %v4857, %v2301
      %v4923 = vsel %vm4882, %v4858, %v2303
      %v4924 = vsel %vm4882, %v4859, %v2305
      %v4925 = vsel %vm4882, %v4860, %v2307
      %v4926 = vsel %vm4882, %v4861, %v2309
      %v4927 = vsel %vm4882, %v4862, %v2311
      %v4928 = vsel %vm4882, %v4863, %v2313
      %v4929 = vsel %vm4882, %v4864, %v2315
      %v4930 = vsel %vm4882, %v4865, %v2317
      %v4931 = vsel %vm4882, %v4866, %v2319
      %v4932 = vsel %vm4882, %v4867, %v2321
      %v4933 = vsel %vm4882, %v4868, %v2323
      %v4934 = vsel %vm4882, %v4869, %v2325
      %v4935 = vsel %vm4882, %v4870, %v2327
      %v4936 = vsel %vm4882, %v4871, %v2329
      %v4937 = vsel %vm4882, %v4872, %v2331
      %v4938 = vsel %vm4882, %v4873, %v2333
      %v4939 = vsel %vm4882, %v4874, %v2335
      %v4940 = vsel %vm4882, %v4875, %v2337
      %v4941 = vsel %vm4882, %v4876, %v2339
      %v4942 = vsel %vm4882, %v4877, %v2341
      %v4943 = vsel %vm4882, %v4878, %v2343
      %v4944 = vsel %vm4882, %v4879, %v2345
      %v4945 = vsel %vm4882, %v4880, %v2347
      %v4946 = vsel %vm4882, %v4881, %v2349
      %vm4947 = vcmask 162816
      %v4948 = vsel %vm4947, %v4883, %v2439
      %v4949 = vsel %vm4947, %v4884, %v2441
      %v4950 = vsel %vm4947, %v4885, %v2443
      %v4951 = vsel %vm4947, %v4886, %v2445
      %v4952 = vsel %vm4947, %v4887, %v2447
      %v4953 = vsel %vm4947, %v4888, %v2449
      %v4954 = vsel %vm4947, %v4889, %v2451
      %v4955 = vsel %vm4947, %v4890, %v2453
      %v4956 = vsel %vm4947, %v4891, %v2455
      %v4957 = vsel %vm4947, %v4892, %v2457
      %v4958 = vsel %vm4947, %v4893, %v2459
      %v4959 = vsel %vm4947, %v4894, %v2461
      %v4960 = vsel %vm4947, %v4895, %v2463
      %v4961 = vsel %vm4947, %v4896, %v2465
      %v4962 = vsel %vm4947, %v4897, %v2467
      %v4963 = vsel %vm4947, %v4898, %v2469
      %v4964 = vsel %vm4947, %v4899, %v2471
      %v4965 = vsel %vm4947, %v4900, %v2473
      %v4966 = vsel %vm4947, %v4901, %v2475
      %v4967 = vsel %vm4947, %v4902, %v2477
      %v4968 = vsel %vm4947, %v4903, %v2479
      %v4969 = vsel %vm4947, %v4904, %v2481
      %v4970 = vsel %vm4947, %v4905, %v2483
      %v4971 = vsel %vm4947, %v4906, %v2485
      %v4972 = vsel %vm4947, %v4907, %v2487
      %v4973 = vsel %vm4947, %v4908, %v2489
      %v4974 = vsel %vm4947, %v4909, %v2491
      %v4975 = vsel %vm4947, %v4910, %v2493
      %v4976 = vsel %vm4947, %v4911, %v2495
      %v4977 = vsel %vm4947, %v4912, %v2497
      %v4978 = vsel %vm4947, %v4913, %v2499
      %v4979 = vsel %vm4947, %v4914, %v2501
      %v4980 = vsel %vm4947, %v4915, %v2503
      %v4981 = vsel %vm4947, %v4916, %v2505
      %v4982 = vsel %vm4947, %v4917, %v2507
      %v4983 = vsel %vm4947, %v4918, %v2509
      %v4984 = vsel %vm4947, %v4919, %v2511
      %v4985 = vsel %vm4947, %v4920, %v2513
      %v4986 = vsel %vm4947, %v4921, %v2515
      %v4987 = vsel %vm4947, %v4922, %v2517
      %v4988 = vsel %vm4947, %v4923, %v2519
      %v4989 = vsel %vm4947, %v4924, %v2521
      %v4990 = vsel %vm4947, %v4925, %v2523
      %v4991 = vsel %vm4947, %v4926, %v2525
      %v4992 = vsel %vm4947, %v4927, %v2527
      %v4993 = vsel %vm4947, %v4928, %v2529
      %v4994 = vsel %vm4947, %v4929, %v2531
      %v4995 = vsel %vm4947, %v4930, %v2533
      %v4996 = vsel %vm4947, %v4931, %v2535
      %v4997 = vsel %vm4947, %v4932, %v2537
      %v4998 = vsel %vm4947, %v4933, %v2539
      %v4999 = vsel %vm4947, %v4934, %v2541
      %v5000 = vsel %vm4947, %v4935, %v2543
      %v5001 = vsel %vm4947, %v4936, %v2545
      %v5002 = vsel %vm4947, %v4937, %v2547
      %v5003 = vsel %vm4947, %v4938, %v2549
      %v5004 = vsel %vm4947, %v4939, %v2551
      %v5005 = vsel %vm4947, %v4940, %v2553
      %v5006 = vsel %vm4947, %v4941, %v2555
      %v5007 = vsel %vm4947, %v4942, %v2557
      %v5008 = vsel %vm4947, %v4943, %v2559
      %v5009 = vsel %vm4947, %v4944, %v2561
      %v5010 = vsel %vm4947, %v4945, %v2563
      %v5011 = vsel %vm4947, %v4946, %v2565
      %vm5012 = vcmask 195584
      %v5013 = vsel %vm5012, %v4948, %v2639
      %v5014 = vsel %vm5012, %v4949, %v2641
      %v5015 = vsel %vm5012, %v4950, %v2643
      %v5016 = vsel %vm5012, %v4951, %v2645
      %v5017 = vsel %vm5012, %v4952, %v2647
      %v5018 = vsel %vm5012, %v4953, %v2649
      %v5019 = vsel %vm5012, %v4954, %v2651
      %v5020 = vsel %vm5012, %v4955, %v2653
      %v5021 = vsel %vm5012, %v4956, %v2655
      %v5022 = vsel %vm5012, %v4957, %v2657
      %v5023 = vsel %vm5012, %v4958, %v2659
      %v5024 = vsel %vm5012, %v4959, %v2661
      %v5025 = vsel %vm5012, %v4960, %v2663
      %v5026 = vsel %vm5012, %v4961, %v2665
      %v5027 = vsel %vm5012, %v4962, %v2667
      %v5028 = vsel %vm5012, %v4963, %v2669
      %v5029 = vsel %vm5012, %v4964, %v2671
      %v5030 = vsel %vm5012, %v4965, %v2673
      %v5031 = vsel %vm5012, %v4966, %v2675
      %v5032 = vsel %vm5012, %v4967, %v2677
      %v5033 = vsel %vm5012, %v4968, %v2679
      %v5034 = vsel %vm5012, %v4969, %v2681
      %v5035 = vsel %vm5012, %v4970, %v2683
      %v5036 = vsel %vm5012, %v4971, %v2685
      %v5037 = vsel %vm5012, %v4972, %v2687
      %v5038 = vsel %vm5012, %v4973, %v2689
      %v5039 = vsel %vm5012, %v4974, %v2691
      %v5040 = vsel %vm5012, %v4975, %v2693
      %v5041 = vsel %vm5012, %v4976, %v2695
      %v5042 = vsel %vm5012, %v4977, %v2697
      %v5043 = vsel %vm5012, %v4978, %v2699
      %v5044 = vsel %vm5012, %v4979, %v2701
      %v5045 = vsel %vm5012, %v4980, %v2703
      %v5046 = vsel %vm5012, %v4981, %v2705
      %v5047 = vsel %vm5012, %v4982, %v2707
      %v5048 = vsel %vm5012, %v4983, %v2709
      %v5049 = vsel %vm5012, %v4984, %v2711
      %v5050 = vsel %vm5012, %v4985, %v2713
      %v5051 = vsel %vm5012, %v4986, %v2715
      %v5052 = vsel %vm5012, %v4987, %v2717
      %v5053 = vsel %vm5012, %v4988, %v2719
      %v5054 = vsel %vm5012, %v4989, %v2721
      %v5055 = vsel %vm5012, %v4990, %v2723
      %v5056 = vsel %vm5012, %v4991, %v2725
      %v5057 = vsel %vm5012, %v4992, %v2727
      %v5058 = vsel %vm5012, %v4993, %v2729
      %v5059 = vsel %vm5012, %v4994, %v2731
      %v5060 = vsel %vm5012, %v4995, %v2733
      %v5061 = vsel %vm5012, %v4996, %v2735
      %v5062 = vsel %vm5012, %v4997, %v2737
      %v5063 = vsel %vm5012, %v4998, %v2739
      %v5064 = vsel %vm5012, %v4999, %v2741
      %v5065 = vsel %vm5012, %v5000, %v2743
      %v5066 = vsel %vm5012, %v5001, %v2745
      %v5067 = vsel %vm5012, %v5002, %v2747
      %v5068 = vsel %vm5012, %v5003, %v2749
      %v5069 = vsel %vm5012, %v5004, %v2751
      %v5070 = vsel %vm5012, %v5005, %v2753
      %v5071 = vsel %vm5012, %v5006, %v2755
      %v5072 = vsel %vm5012, %v5007, %v2757
      %v5073 = vsel %vm5012, %v5008, %v2759
      %v5074 = vsel %vm5012, %v5009, %v2761
      %v5075 = vsel %vm5012, %v5010, %v2763
      %v5076 = vsel %vm5012, %v5011, %v2765
      %vm5077 = vcmask 228352
      %v5078 = vsel %vm5077, %v5013, %v2863
      %v5079 = vsel %vm5077, %v5014, %v2865
      %v5080 = vsel %vm5077, %v5015, %v2867
      %v5081 = vsel %vm5077, %v5016, %v2869
      %v5082 = vsel %vm5077, %v5017, %v2871
      %v5083 = vsel %vm5077, %v5018, %v2873
      %v5084 = vsel %vm5077, %v5019, %v2875
      %v5085 = vsel %vm5077, %v5020, %v2877
      %v5086 = vsel %vm5077, %v5021, %v2879
      %v5087 = vsel %vm5077, %v5022, %v2881
      %v5088 = vsel %vm5077, %v5023, %v2883
      %v5089 = vsel %vm5077, %v5024, %v2885
      %v5090 = vsel %vm5077, %v5025, %v2887
      %v5091 = vsel %vm5077, %v5026, %v2889
      %v5092 = vsel %vm5077, %v5027, %v2891
      %v5093 = vsel %vm5077, %v5028, %v2893
      %v5094 = vsel %vm5077, %v5029, %v2895
      %v5095 = vsel %vm5077, %v5030, %v2897
      %v5096 = vsel %vm5077, %v5031, %v2899
      %v5097 = vsel %vm5077, %v5032, %v2901
      %v5098 = vsel %vm5077, %v5033, %v2903
      %v5099 = vsel %vm5077, %v5034, %v2905
      %v5100 = vsel %vm5077, %v5035, %v2907
      %v5101 = vsel %vm5077, %v5036, %v2909
      %v5102 = vsel %vm5077, %v5037, %v2911
      %v5103 = vsel %vm5077, %v5038, %v2913
      %v5104 = vsel %vm5077, %v5039, %v2915
      %v5105 = vsel %vm5077, %v5040, %v2917
      %v5106 = vsel %vm5077, %v5041, %v2919
      %v5107 = vsel %vm5077, %v5042, %v2921
      %v5108 = vsel %vm5077, %v5043, %v2923
      %v5109 = vsel %vm5077, %v5044, %v2925
      %v5110 = vsel %vm5077, %v5045, %v2927
      %v5111 = vsel %vm5077, %v5046, %v2929
      %v5112 = vsel %vm5077, %v5047, %v2931
      %v5113 = vsel %vm5077, %v5048, %v2933
      %v5114 = vsel %vm5077, %v5049, %v2935
      %v5115 = vsel %vm5077, %v5050, %v2937
      %v5116 = vsel %vm5077, %v5051, %v2939
      %v5117 = vsel %vm5077, %v5052, %v2941
      %v5118 = vsel %vm5077, %v5053, %v2943
      %v5119 = vsel %vm5077, %v5054, %v2945
      %v5120 = vsel %vm5077, %v5055, %v2947
      %v5121 = vsel %vm5077, %v5056, %v2949
      %v5122 = vsel %vm5077, %v5057, %v2951
      %v5123 = vsel %vm5077, %v5058, %v2953
      %v5124 = vsel %vm5077, %v5059, %v2955
      %v5125 = vsel %vm5077, %v5060, %v2957
      %v5126 = vsel %vm5077, %v5061, %v2959
      %v5127 = vsel %vm5077, %v5062, %v2961
      %v5128 = vsel %vm5077, %v5063, %v2963
      %v5129 = vsel %vm5077, %v5064, %v2965
      %v5130 = vsel %vm5077, %v5065, %v2967
      %v5131 = vsel %vm5077, %v5066, %v2969
      %v5132 = vsel %vm5077, %v5067, %v2971
      %v5133 = vsel %vm5077, %v5068, %v2973
      %v5134 = vsel %vm5077, %v5069, %v2975
      %v5135 = vsel %vm5077, %v5070, %v2977
      %v5136 = vsel %vm5077, %v5071, %v2979
      %v5137 = vsel %vm5077, %v5072, %v2981
      %v5138 = vsel %vm5077, %v5073, %v2983
      %v5139 = vsel %vm5077, %v5074, %v2985
      %v5140 = vsel %vm5077, %v5075, %v2987
      %v5141 = vsel %vm5077, %v5076, %v2989
      %vm5142 = vcmask 261120
      %v5143 = vsel %vm5142, %v5078, %v3079
      %v5144 = vsel %vm5142, %v5079, %v3081
      %v5145 = vsel %vm5142, %v5080, %v3083
      %v5146 = vsel %vm5142, %v5081, %v3085
      %v5147 = vsel %vm5142, %v5082, %v3087
      %v5148 = vsel %vm5142, %v5083, %v3089
      %v5149 = vsel %vm5142, %v5084, %v3091
      %v5150 = vsel %vm5142, %v5085, %v3093
      %v5151 = vsel %vm5142, %v5086, %v3095
      %v5152 = vsel %vm5142, %v5087, %v3097
      %v5153 = vsel %vm5142, %v5088, %v3099
      %v5154 = vsel %vm5142, %v5089, %v3101
      %v5155 = vsel %vm5142, %v5090, %v3103
      %v5156 = vsel %vm5142, %v5091, %v3105
      %v5157 = vsel %vm5142, %v5092, %v3107
      %v5158 = vsel %vm5142, %v5093, %v3109
      %v5159 = vsel %vm5142, %v5094, %v3111
      %v5160 = vsel %vm5142, %v5095, %v3113
      %v5161 = vsel %vm5142, %v5096, %v3115
      %v5162 = vsel %vm5142, %v5097, %v3117
      %v5163 = vsel %vm5142, %v5098, %v3119
      %v5164 = vsel %vm5142, %v5099, %v3121
      %v5165 = vsel %vm5142, %v5100, %v3123
      %v5166 = vsel %vm5142, %v5101, %v3125
      %v5167 = vsel %vm5142, %v5102, %v3127
      %v5168 = vsel %vm5142, %v5103, %v3129
      %v5169 = vsel %vm5142, %v5104, %v3131
      %v5170 = vsel %vm5142, %v5105, %v3133
      %v5171 = vsel %vm5142, %v5106, %v3135
      %v5172 = vsel %vm5142, %v5107, %v3137
      %v5173 = vsel %vm5142, %v5108, %v3139
      %v5174 = vsel %vm5142, %v5109, %v3141
      %v5175 = vsel %vm5142, %v5110, %v3143
      %v5176 = vsel %vm5142, %v5111, %v3145
      %v5177 = vsel %vm5142, %v5112, %v3147
      %v5178 = vsel %vm5142, %v5113, %v3149
      %v5179 = vsel %vm5142, %v5114, %v3151
      %v5180 = vsel %vm5142, %v5115, %v3153
      %v5181 = vsel %vm5142, %v5116, %v3155
      %v5182 = vsel %vm5142, %v5117, %v3157
      %v5183 = vsel %vm5142, %v5118, %v3159
      %v5184 = vsel %vm5142, %v5119, %v3161
      %v5185 = vsel %vm5142, %v5120, %v3163
      %v5186 = vsel %vm5142, %v5121, %v3165
      %v5187 = vsel %vm5142, %v5122, %v3167
      %v5188 = vsel %vm5142, %v5123, %v3169
      %v5189 = vsel %vm5142, %v5124, %v3171
      %v5190 = vsel %vm5142, %v5125, %v3173
      %v5191 = vsel %vm5142, %v5126, %v3175
      %v5192 = vsel %vm5142, %v5127, %v3177
      %v5193 = vsel %vm5142, %v5128, %v3179
      %v5194 = vsel %vm5142, %v5129, %v3181
      %v5195 = vsel %vm5142, %v5130, %v3183
      %v5196 = vsel %vm5142, %v5131, %v3185
      %v5197 = vsel %vm5142, %v5132, %v3187
      %v5198 = vsel %vm5142, %v5133, %v3189
      %v5199 = vsel %vm5142, %v5134, %v3191
      %v5200 = vsel %vm5142, %v5135, %v3193
      %v5201 = vsel %vm5142, %v5136, %v3195
      %v5202 = vsel %vm5142, %v5137, %v3197
      %v5203 = vsel %vm5142, %v5138, %v3199
      %v5204 = vsel %vm5142, %v5139, %v3201
      %v5205 = vsel %vm5142, %v5140, %v3203
      %v5206 = vsel %vm5142, %v5141, %v3205
      %vm5207 = vcmask 293888
      %v5208 = vsel %vm5207, %v5143, %v3279
      %v5209 = vsel %vm5207, %v5144, %v3281
      %v5210 = vsel %vm5207, %v5145, %v3283
      %v5211 = vsel %vm5207, %v5146, %v3285
      %v5212 = vsel %vm5207, %v5147, %v3287
      %v5213 = vsel %vm5207, %v5148, %v3289
      %v5214 = vsel %vm5207, %v5149, %v3291
      %v5215 = vsel %vm5207, %v5150, %v3293
      %v5216 = vsel %vm5207, %v5151, %v3295
      %v5217 = vsel %vm5207, %v5152, %v3297
      %v5218 = vsel %vm5207, %v5153, %v3299
      %v5219 = vsel %vm5207, %v5154, %v3301
      %v5220 = vsel %vm5207, %v5155, %v3303
      %v5221 = vsel %vm5207, %v5156, %v3305
      %v5222 = vsel %vm5207, %v5157, %v3307
      %v5223 = vsel %vm5207, %v5158, %v3309
      %v5224 = vsel %vm5207, %v5159, %v3311
      %v5225 = vsel %vm5207, %v5160, %v3313
      %v5226 = vsel %vm5207, %v5161, %v3315
      %v5227 = vsel %vm5207, %v5162, %v3317
      %v5228 = vsel %vm5207, %v5163, %v3319
      %v5229 = vsel %vm5207, %v5164, %v3321
      %v5230 = vsel %vm5207, %v5165, %v3323
      %v5231 = vsel %vm5207, %v5166, %v3325
      %v5232 = vsel %vm5207, %v5167, %v3327
      %v5233 = vsel %vm5207, %v5168, %v3329
      %v5234 = vsel %vm5207, %v5169, %v3331
      %v5235 = vsel %vm5207, %v5170, %v3333
      %v5236 = vsel %vm5207, %v5171, %v3335
      %v5237 = vsel %vm5207, %v5172, %v3337
      %v5238 = vsel %vm5207, %v5173, %v3339
      %v5239 = vsel %vm5207, %v5174, %v3341
      %v5240 = vsel %vm5207, %v5175, %v3343
      %v5241 = vsel %vm5207, %v5176, %v3345
      %v5242 = vsel %vm5207, %v5177, %v3347
      %v5243 = vsel %vm5207, %v5178, %v3349
      %v5244 = vsel %vm5207, %v5179, %v3351
      %v5245 = vsel %vm5207, %v5180, %v3353
      %v5246 = vsel %vm5207, %v5181, %v3355
      %v5247 = vsel %vm5207, %v5182, %v3357
      %v5248 = vsel %vm5207, %v5183, %v3359
      %v5249 = vsel %vm5207, %v5184, %v3361
      %v5250 = vsel %vm5207, %v5185, %v3363
      %v5251 = vsel %vm5207, %v5186, %v3365
      %v5252 = vsel %vm5207, %v5187, %v3367
      %v5253 = vsel %vm5207, %v5188, %v3369
      %v5254 = vsel %vm5207, %v5189, %v3371
      %v5255 = vsel %vm5207, %v5190, %v3373
      %v5256 = vsel %vm5207, %v5191, %v3375
      %v5257 = vsel %vm5207, %v5192, %v3377
      %v5258 = vsel %vm5207, %v5193, %v3379
      %v5259 = vsel %vm5207, %v5194, %v3381
      %v5260 = vsel %vm5207, %v5195, %v3383
      %v5261 = vsel %vm5207, %v5196, %v3385
      %v5262 = vsel %vm5207, %v5197, %v3387
      %v5263 = vsel %vm5207, %v5198, %v3389
      %v5264 = vsel %vm5207, %v5199, %v3391
      %v5265 = vsel %vm5207, %v5200, %v3393
      %v5266 = vsel %vm5207, %v5201, %v3395
      %v5267 = vsel %vm5207, %v5202, %v3397
      %v5268 = vsel %vm5207, %v5203, %v3399
      %v5269 = vsel %vm5207, %v5204, %v3401
      %v5270 = vsel %vm5207, %v5205, %v3403
      %v5271 = vsel %vm5207, %v5206, %v3405
      %vm5272 = vcmask 326656
      %v5273 = vsel %vm5272, %v5208, %v3503
      %v5274 = vsel %vm5272, %v5209, %v3505
      %v5275 = vsel %vm5272, %v5210, %v3507
      %v5276 = vsel %vm5272, %v5211, %v3509
      %v5277 = vsel %vm5272, %v5212, %v3511
      %v5278 = vsel %vm5272, %v5213, %v3513
      %v5279 = vsel %vm5272, %v5214, %v3515
      %v5280 = vsel %vm5272, %v5215, %v3517
      %v5281 = vsel %vm5272, %v5216, %v3519
      %v5282 = vsel %vm5272, %v5217, %v3521
      %v5283 = vsel %vm5272, %v5218, %v3523
      %v5284 = vsel %vm5272, %v5219, %v3525
      %v5285 = vsel %vm5272, %v5220, %v3527
      %v5286 = vsel %vm5272, %v5221, %v3529
      %v5287 = vsel %vm5272, %v5222, %v3531
      %v5288 = vsel %vm5272, %v5223, %v3533
      %v5289 = vsel %vm5272, %v5224, %v3535
      %v5290 = vsel %vm5272, %v5225, %v3537
      %v5291 = vsel %vm5272, %v5226, %v3539
      %v5292 = vsel %vm5272, %v5227, %v3541
      %v5293 = vsel %vm5272, %v5228, %v3543
      %v5294 = vsel %vm5272, %v5229, %v3545
      %v5295 = vsel %vm5272, %v5230, %v3547
      %v5296 = vsel %vm5272, %v5231, %v3549
      %v5297 = vsel %vm5272, %v5232, %v3551
      %v5298 = vsel %vm5272, %v5233, %v3553
      %v5299 = vsel %vm5272, %v5234, %v3555
      %v5300 = vsel %vm5272, %v5235, %v3557
      %v5301 = vsel %vm5272, %v5236, %v3559
      %v5302 = vsel %vm5272, %v5237, %v3561
      %v5303 = vsel %vm5272, %v5238, %v3563
      %v5304 = vsel %vm5272, %v5239, %v3565
      %v5305 = vsel %vm5272, %v5240, %v3567
      %v5306 = vsel %vm5272, %v5241, %v3569
      %v5307 = vsel %vm5272, %v5242, %v3571
      %v5308 = vsel %vm5272, %v5243, %v3573
      %v5309 = vsel %vm5272, %v5244, %v3575
      %v5310 = vsel %vm5272, %v5245, %v3577
      %v5311 = vsel %vm5272, %v5246, %v3579
      %v5312 = vsel %vm5272, %v5247, %v3581
      %v5313 = vsel %vm5272, %v5248, %v3583
      %v5314 = vsel %vm5272, %v5249, %v3585
      %v5315 = vsel %vm5272, %v5250, %v3587
      %v5316 = vsel %vm5272, %v5251, %v3589
      %v5317 = vsel %vm5272, %v5252, %v3591
      %v5318 = vsel %vm5272, %v5253, %v3593
      %v5319 = vsel %vm5272, %v5254, %v3595
      %v5320 = vsel %vm5272, %v5255, %v3597
      %v5321 = vsel %vm5272, %v5256, %v3599
      %v5322 = vsel %vm5272, %v5257, %v3601
      %v5323 = vsel %vm5272, %v5258, %v3603
      %v5324 = vsel %vm5272, %v5259, %v3605
      %v5325 = vsel %vm5272, %v5260, %v3607
      %v5326 = vsel %vm5272, %v5261, %v3609
      %v5327 = vsel %vm5272, %v5262, %v3611
      %v5328 = vsel %vm5272, %v5263, %v3613
      %v5329 = vsel %vm5272, %v5264, %v3615
      %v5330 = vsel %vm5272, %v5265, %v3617
      %v5331 = vsel %vm5272, %v5266, %v3619
      %v5332 = vsel %vm5272, %v5267, %v3621
      %v5333 = vsel %vm5272, %v5268, %v3623
      %v5334 = vsel %vm5272, %v5269, %v3625
      %v5335 = vsel %vm5272, %v5270, %v3627
      %v5336 = vsel %vm5272, %v5271, %v3629
      %vm5337 = vcmask 359424
      %v5338 = vsel %vm5337, %v5273, %v3719
      %v5339 = vsel %vm5337, %v5274, %v3721
      %v5340 = vsel %vm5337, %v5275, %v3723
      %v5341 = vsel %vm5337, %v5276, %v3725
      %v5342 = vsel %vm5337, %v5277, %v3727
      %v5343 = vsel %vm5337, %v5278, %v3729
      %v5344 = vsel %vm5337, %v5279, %v3731
      %v5345 = vsel %vm5337, %v5280, %v3733
      %v5346 = vsel %vm5337, %v5281, %v3735
      %v5347 = vsel %vm5337, %v5282, %v3737
      %v5348 = vsel %vm5337, %v5283, %v3739
      %v5349 = vsel %vm5337, %v5284, %v3741
      %v5350 = vsel %vm5337, %v5285, %v3743
      %v5351 = vsel %vm5337, %v5286, %v3745
      %v5352 = vsel %vm5337, %v5287, %v3747
      %v5353 = vsel %vm5337, %v5288, %v3749
      %v5354 = vsel %vm5337, %v5289, %v3751
      %v5355 = vsel %vm5337, %v5290, %v3753
      %v5356 = vsel %vm5337, %v5291, %v3755
      %v5357 = vsel %vm5337, %v5292, %v3757
      %v5358 = vsel %vm5337, %v5293, %v3759
      %v5359 = vsel %vm5337, %v5294, %v3761
      %v5360 = vsel %vm5337, %v5295, %v3763
      %v5361 = vsel %vm5337, %v5296, %v3765
      %v5362 = vsel %vm5337, %v5297, %v3767
      %v5363 = vsel %vm5337, %v5298, %v3769
      %v5364 = vsel %vm5337, %v5299, %v3771
      %v5365 = vsel %vm5337, %v5300, %v3773
      %v5366 = vsel %vm5337, %v5301, %v3775
      %v5367 = vsel %vm5337, %v5302, %v3777
      %v5368 = vsel %vm5337, %v5303, %v3779
      %v5369 = vsel %vm5337, %v5304, %v3781
      %v5370 = vsel %vm5337, %v5305, %v3783
      %v5371 = vsel %vm5337, %v5306, %v3785
      %v5372 = vsel %vm5337, %v5307, %v3787
      %v5373 = vsel %vm5337, %v5308, %v3789
      %v5374 = vsel %vm5337, %v5309, %v3791
      %v5375 = vsel %vm5337, %v5310, %v3793
      %v5376 = vsel %vm5337, %v5311, %v3795
      %v5377 = vsel %vm5337, %v5312, %v3797
      %v5378 = vsel %vm5337, %v5313, %v3799
      %v5379 = vsel %vm5337, %v5314, %v3801
      %v5380 = vsel %vm5337, %v5315, %v3803
      %v5381 = vsel %vm5337, %v5316, %v3805
      %v5382 = vsel %vm5337, %v5317, %v3807
      %v5383 = vsel %vm5337, %v5318, %v3809
      %v5384 = vsel %vm5337, %v5319, %v3811
      %v5385 = vsel %vm5337, %v5320, %v3813
      %v5386 = vsel %vm5337, %v5321, %v3815
      %v5387 = vsel %vm5337, %v5322, %v3817
      %v5388 = vsel %vm5337, %v5323, %v3819
      %v5389 = vsel %vm5337, %v5324, %v3821
      %v5390 = vsel %vm5337, %v5325, %v3823
      %v5391 = vsel %vm5337, %v5326, %v3825
      %v5392 = vsel %vm5337, %v5327, %v3827
      %v5393 = vsel %vm5337, %v5328, %v3829
      %v5394 = vsel %vm5337, %v5329, %v3831
      %v5395 = vsel %vm5337, %v5330, %v3833
      %v5396 = vsel %vm5337, %v5331, %v3835
      %v5397 = vsel %vm5337, %v5332, %v3837
      %v5398 = vsel %vm5337, %v5333, %v3839
      %v5399 = vsel %vm5337, %v5334, %v3841
      %v5400 = vsel %vm5337, %v5335, %v3843
      %v5401 = vsel %vm5337, %v5336, %v3845
      %vm5402 = vcmask 392192
      %v5403 = vsel %vm5402, %v5338, %v3912
      %v5404 = vsel %vm5402, %v5339, %v3914
      %v5405 = vsel %vm5402, %v5340, %v3916
      %v5406 = vsel %vm5402, %v5341, %v3918
      %v5407 = vsel %vm5402, %v5342, %v3920
      %v5408 = vsel %vm5402, %v5343, %v3922
      %v5409 = vsel %vm5402, %v5344, %v3924
      %v5410 = vsel %vm5402, %v5345, %v3926
      %v5411 = vsel %vm5402, %v5346, %v3928
      %v5412 = vsel %vm5402, %v5347, %v3930
      %v5413 = vsel %vm5402, %v5348, %v3932
      %v5414 = vsel %vm5402, %v5349, %v3934
      %v5415 = vsel %vm5402, %v5350, %v3936
      %v5416 = vsel %vm5402, %v5351, %v3938
      %v5417 = vsel %vm5402, %v5352, %v3940
      %v5418 = vsel %vm5402, %v5353, %v3942
      %v5419 = vsel %vm5402, %v5354, %v3944
      %v5420 = vsel %vm5402, %v5355, %v3946
      %v5421 = vsel %vm5402, %v5356, %v3948
      %v5422 = vsel %vm5402, %v5357, %v3950
      %v5423 = vsel %vm5402, %v5358, %v3952
      %v5424 = vsel %vm5402, %v5359, %v3954
      %v5425 = vsel %vm5402, %v5360, %v3956
      %v5426 = vsel %vm5402, %v5361, %v3958
      %v5427 = vsel %vm5402, %v5362, %v3960
      %v5428 = vsel %vm5402, %v5363, %v3962
      %v5429 = vsel %vm5402, %v5364, %v3964
      %v5430 = vsel %vm5402, %v5365, %v3966
      %v5431 = vsel %vm5402, %v5366, %v3968
      %v5432 = vsel %vm5402, %v5367, %v3970
      %v5433 = vsel %vm5402, %v5368, %v3972
      %v5434 = vsel %vm5402, %v5369, %v3974
      %v5435 = vsel %vm5402, %v5370, %v3976
      %v5436 = vsel %vm5402, %v5371, %v3978
      %v5437 = vsel %vm5402, %v5372, %v3980
      %v5438 = vsel %vm5402, %v5373, %v3982
      %v5439 = vsel %vm5402, %v5374, %v3984
      %v5440 = vsel %vm5402, %v5375, %v3986
      %v5441 = vsel %vm5402, %v5376, %v3988
      %v5442 = vsel %vm5402, %v5377, %v3990
      %v5443 = vsel %vm5402, %v5378, %v3992
      %v5444 = vsel %vm5402, %v5379, %v3994
      %v5445 = vsel %vm5402, %v5380, %v3996
      %v5446 = vsel %vm5402, %v5381, %v3998
      %v5447 = vsel %vm5402, %v5382, %v4000
      %v5448 = vsel %vm5402, %v5383, %v4002
      %v5449 = vsel %vm5402, %v5384, %v4004
      %v5450 = vsel %vm5402, %v5385, %v4006
      %v5451 = vsel %vm5402, %v5386, %v4008
      %v5452 = vsel %vm5402, %v5387, %v4010
      %v5453 = vsel %vm5402, %v5388, %v4012
      %v5454 = vsel %vm5402, %v5389, %v4014
      %v5455 = vsel %vm5402, %v5390, %v4016
      %v5456 = vsel %vm5402, %v5391, %v4018
      %v5457 = vsel %vm5402, %v5392, %v4020
      %v5458 = vsel %vm5402, %v5393, %v4022
      %v5459 = vsel %vm5402, %v5394, %v4024
      %v5460 = vsel %vm5402, %v5395, %v4026
      %v5461 = vsel %vm5402, %v5396, %v4028
      %v5462 = vsel %vm5402, %v5397, %v4030
      %v5463 = vsel %vm5402, %v5398, %v4032
      %v5464 = vsel %vm5402, %v5399, %v4034
      %v5465 = vsel %vm5402, %v5400, %v4036
      %v5466 = vsel %vm5402, %v5401, %v4038
      %vm5467 = vcmask 424960
      %v5468 = vsel %vm5467, %v5403, %v4108
      %v5469 = vsel %vm5467, %v5404, %v4110
      %v5470 = vsel %vm5467, %v5405, %v4112
      %v5471 = vsel %vm5467, %v5406, %v4114
      %v5472 = vsel %vm5467, %v5407, %v4116
      %v5473 = vsel %vm5467, %v5408, %v4118
      %v5474 = vsel %vm5467, %v5409, %v4120
      %v5475 = vsel %vm5467, %v5410, %v4122
      %v5476 = vsel %vm5467, %v5411, %v4124
      %v5477 = vsel %vm5467, %v5412, %v4126
      %v5478 = vsel %vm5467, %v5413, %v4128
      %v5479 = vsel %vm5467, %v5414, %v4130
      %v5480 = vsel %vm5467, %v5415, %v4132
      %v5481 = vsel %vm5467, %v5416, %v4134
      %v5482 = vsel %vm5467, %v5417, %v4136
      %v5483 = vsel %vm5467, %v5418, %v4138
      %v5484 = vsel %vm5467, %v5419, %v4140
      %v5485 = vsel %vm5467, %v5420, %v4142
      %v5486 = vsel %vm5467, %v5421, %v4144
      %v5487 = vsel %vm5467, %v5422, %v4146
      %v5488 = vsel %vm5467, %v5423, %v4148
      %v5489 = vsel %vm5467, %v5424, %v4150
      %v5490 = vsel %vm5467, %v5425, %v4152
      %v5491 = vsel %vm5467, %v5426, %v4154
      %v5492 = vsel %vm5467, %v5427, %v4156
      %v5493 = vsel %vm5467, %v5428, %v4158
      %v5494 = vsel %vm5467, %v5429, %v4160
      %v5495 = vsel %vm5467, %v5430, %v4162
      %v5496 = vsel %vm5467, %v5431, %v4164
      %v5497 = vsel %vm5467, %v5432, %v4166
      %v5498 = vsel %vm5467, %v5433, %v4168
      %v5499 = vsel %vm5467, %v5434, %v4170
      %v5500 = vsel %vm5467, %v5435, %v4172
      %v5501 = vsel %vm5467, %v5436, %v4174
      %v5502 = vsel %vm5467, %v5437, %v4176
      %v5503 = vsel %vm5467, %v5438, %v4178
      %v5504 = vsel %vm5467, %v5439, %v4180
      %v5505 = vsel %vm5467, %v5440, %v4182
      %v5506 = vsel %vm5467, %v5441, %v4184
      %v5507 = vsel %vm5467, %v5442, %v4186
      %v5508 = vsel %vm5467, %v5443, %v4188
      %v5509 = vsel %vm5467, %v5444, %v4190
      %v5510 = vsel %vm5467, %v5445, %v4192
      %v5511 = vsel %vm5467, %v5446, %v4194
      %v5512 = vsel %vm5467, %v5447, %v4196
      %v5513 = vsel %vm5467, %v5448, %v4198
      %v5514 = vsel %vm5467, %v5449, %v4200
      %v5515 = vsel %vm5467, %v5450, %v4202
      %v5516 = vsel %vm5467, %v5451, %v4204
      %v5517 = vsel %vm5467, %v5452, %v4206
      %v5518 = vsel %vm5467, %v5453, %v4208
      %v5519 = vsel %vm5467, %v5454, %v4210
      %v5520 = vsel %vm5467, %v5455, %v4212
      %v5521 = vsel %vm5467, %v5456, %v4214
      %v5522 = vsel %vm5467, %v5457, %v4216
      %v5523 = vsel %vm5467, %v5458, %v4218
      %v5524 = vsel %vm5467, %v5459, %v4220
      %v5525 = vsel %vm5467, %v5460, %v4222
      %v5526 = vsel %vm5467, %v5461, %v4224
      %v5527 = vsel %vm5467, %v5462, %v4226
      %v5528 = vsel %vm5467, %v5463, %v4228
      %v5529 = vsel %vm5467, %v5464, %v4230
      %v5530 = vsel %vm5467, %v5465, %v4232
      %v5531 = vsel %vm5467, %v5466, %v4234
      %vm5532 = vcmask 457728
      %v5533 = vsel %vm5532, %v5468, %v4303
      %v5534 = vsel %vm5532, %v5469, %v4305
      %v5535 = vsel %vm5532, %v5470, %v4307
      %v5536 = vsel %vm5532, %v5471, %v4309
      %v5537 = vsel %vm5532, %v5472, %v4311
      %v5538 = vsel %vm5532, %v5473, %v4313
      %v5539 = vsel %vm5532, %v5474, %v4315
      %v5540 = vsel %vm5532, %v5475, %v4317
      %v5541 = vsel %vm5532, %v5476, %v4319
      %v5542 = vsel %vm5532, %v5477, %v4321
      %v5543 = vsel %vm5532, %v5478, %v4323
      %v5544 = vsel %vm5532, %v5479, %v4325
      %v5545 = vsel %vm5532, %v5480, %v4327
      %v5546 = vsel %vm5532, %v5481, %v4329
      %v5547 = vsel %vm5532, %v5482, %v4331
      %v5548 = vsel %vm5532, %v5483, %v4333
      %v5549 = vsel %vm5532, %v5484, %v4335
      %v5550 = vsel %vm5532, %v5485, %v4337
      %v5551 = vsel %vm5532, %v5486, %v4339
      %v5552 = vsel %vm5532, %v5487, %v4341
      %v5553 = vsel %vm5532, %v5488, %v4343
      %v5554 = vsel %vm5532, %v5489, %v4345
      %v5555 = vsel %vm5532, %v5490, %v4347
      %v5556 = vsel %vm5532, %v5491, %v4349
      %v5557 = vsel %vm5532, %v5492, %v4351
      %v5558 = vsel %vm5532, %v5493, %v4353
      %v5559 = vsel %vm5532, %v5494, %v4355
      %v5560 = vsel %vm5532, %v5495, %v4357
      %v5561 = vsel %vm5532, %v5496, %v4359
      %v5562 = vsel %vm5532, %v5497, %v4361
      %v5563 = vsel %vm5532, %v5498, %v4363
      %v5564 = vsel %vm5532, %v5499, %v4365
      %v5565 = vsel %vm5532, %v5500, %v4367
      %v5566 = vsel %vm5532, %v5501, %v4369
      %v5567 = vsel %vm5532, %v5502, %v4371
      %v5568 = vsel %vm5532, %v5503, %v4373
      %v5569 = vsel %vm5532, %v5504, %v4375
      %v5570 = vsel %vm5532, %v5505, %v4377
      %v5571 = vsel %vm5532, %v5506, %v4379
      %v5572 = vsel %vm5532, %v5507, %v4381
      %v5573 = vsel %vm5532, %v5508, %v4383
      %v5574 = vsel %vm5532, %v5509, %v4385
      %v5575 = vsel %vm5532, %v5510, %v4387
      %v5576 = vsel %vm5532, %v5511, %v4389
      %v5577 = vsel %vm5532, %v5512, %v4391
      %v5578 = vsel %vm5532, %v5513, %v4393
      %v5579 = vsel %vm5532, %v5514, %v4395
      %v5580 = vsel %vm5532, %v5515, %v4397
      %v5581 = vsel %vm5532, %v5516, %v4399
      %v5582 = vsel %vm5532, %v5517, %v4401
      %v5583 = vsel %vm5532, %v5518, %v4403
      %v5584 = vsel %vm5532, %v5519, %v4405
      %v5585 = vsel %vm5532, %v5520, %v4407
      %v5586 = vsel %vm5532, %v5521, %v4409
      %v5587 = vsel %vm5532, %v5522, %v4411
      %v5588 = vsel %vm5532, %v5523, %v4413
      %v5589 = vsel %vm5532, %v5524, %v4415
      %v5590 = vsel %vm5532, %v5525, %v4417
      %v5591 = vsel %vm5532, %v5526, %v4419
      %v5592 = vsel %vm5532, %v5527, %v4421
      %v5593 = vsel %vm5532, %v5528, %v4423
      %v5594 = vsel %vm5532, %v5529, %v4425
      %v5595 = vsel %vm5532, %v5530, %v4427
      %v5596 = vsel %vm5532, %v5531, %v4429
      %vm5597 = vcmask 490496
      %v5598 = vsel %vm5597, %v5533, %v4496
      %v5599 = vsel %vm5597, %v5534, %v4498
      %v5600 = vsel %vm5597, %v5535, %v4500
      %v5601 = vsel %vm5597, %v5536, %v4502
      %v5602 = vsel %vm5597, %v5537, %v4504
      %v5603 = vsel %vm5597, %v5538, %v4506
      %v5604 = vsel %vm5597, %v5539, %v4508
      %v5605 = vsel %vm5597, %v5540, %v4510
      %v5606 = vsel %vm5597, %v5541, %v4512
      %v5607 = vsel %vm5597, %v5542, %v4514
      %v5608 = vsel %vm5597, %v5543, %v4516
      %v5609 = vsel %vm5597, %v5544, %v4518
      %v5610 = vsel %vm5597, %v5545, %v4520
      %v5611 = vsel %vm5597, %v5546, %v4522
      %v5612 = vsel %vm5597, %v5547, %v4524
      %v5613 = vsel %vm5597, %v5548, %v4526
      %v5614 = vsel %vm5597, %v5549, %v4528
      %v5615 = vsel %vm5597, %v5550, %v4530
      %v5616 = vsel %vm5597, %v5551, %v4532
      %v5617 = vsel %vm5597, %v5552, %v4534
      %v5618 = vsel %vm5597, %v5553, %v4536
      %v5619 = vsel %vm5597, %v5554, %v4538
      %v5620 = vsel %vm5597, %v5555, %v4540
      %v5621 = vsel %vm5597, %v5556, %v4542
      %v5622 = vsel %vm5597, %v5557, %v4544
      %v5623 = vsel %vm5597, %v5558, %v4546
      %v5624 = vsel %vm5597, %v5559, %v4548
      %v5625 = vsel %vm5597, %v5560, %v4550
      %v5626 = vsel %vm5597, %v5561, %v4552
      %v5627 = vsel %vm5597, %v5562, %v4554
      %v5628 = vsel %vm5597, %v5563, %v4556
      %v5629 = vsel %vm5597, %v5564, %v4558
      %v5630 = vsel %vm5597, %v5565, %v4560
      %v5631 = vsel %vm5597, %v5566, %v4562
      %v5632 = vsel %vm5597, %v5567, %v4564
      %v5633 = vsel %vm5597, %v5568, %v4566
      %v5634 = vsel %vm5597, %v5569, %v4568
      %v5635 = vsel %vm5597, %v5570, %v4570
      %v5636 = vsel %vm5597, %v5571, %v4572
      %v5637 = vsel %vm5597, %v5572, %v4574
      %v5638 = vsel %vm5597, %v5573, %v4576
      %v5639 = vsel %vm5597, %v5574, %v4578
      %v5640 = vsel %vm5597, %v5575, %v4580
      %v5641 = vsel %vm5597, %v5576, %v4582
      %v5642 = vsel %vm5597, %v5577, %v4584
      %v5643 = vsel %vm5597, %v5578, %v4586
      %v5644 = vsel %vm5597, %v5579, %v4588
      %v5645 = vsel %vm5597, %v5580, %v4590
      %v5646 = vsel %vm5597, %v5581, %v4592
      %v5647 = vsel %vm5597, %v5582, %v4594
      %v5648 = vsel %vm5597, %v5583, %v4596
      %v5649 = vsel %vm5597, %v5584, %v4598
      %v5650 = vsel %vm5597, %v5585, %v4600
      %v5651 = vsel %vm5597, %v5586, %v4602
      %v5652 = vsel %vm5597, %v5587, %v4604
      %v5653 = vsel %vm5597, %v5588, %v4606
      %v5654 = vsel %vm5597, %v5589, %v4608
      %v5655 = vsel %vm5597, %v5590, %v4610
      %v5656 = vsel %vm5597, %v5591, %v4612
      %v5657 = vsel %vm5597, %v5592, %v4614
      %v5658 = vsel %vm5597, %v5593, %v4616
      %v5659 = vsel %vm5597, %v5594, %v4618
      %v5660 = vsel %vm5597, %v5595, %v4620
      %v5661 = vsel %vm5597, %v5596, %v4622
      %v5663 = vrot.slane %v1070, 1
      %v5664 = vrot.slane %v1071, 1
      %v5665 = vsel %vm1220, %v5663, %v5664
      %5666 = vrot.lane.b32.xlu0 %v1252, 4
      %v5667 = vpop.permute.xlu0 %5666
      %5668 = vrot.lane.b32.xlu0 %v1255, 4
      %v5669 = vpop.permute.xlu0 %5668
      %5670 = vrot.lane.b32.xlu0 %v1258, 4
      %v5671 = vpop.permute.xlu0 %5670
      %5672 = vrot.lane.b32.xlu0 %v1261, 4
      %v5673 = vpop.permute.xlu0 %5672
      %5674 = vrot.lane.b32.xlu0 %v1264, 4
      %v5675 = vpop.permute.xlu0 %5674
      %5676 = vrot.lane.b32.xlu0 %v1267, 4
      %v5677 = vpop.permute.xlu0 %5676
      %5678 = vrot.lane.b32.xlu0 %v2203, 4
      %v5679 = vpop.permute.xlu0 %5678
      %5680 = vrot.lane.b32.xlu0 %v2202, 4
      %v5681 = vpop.permute.xlu0 %5680
      %5682 = vrot.lane.b32.xlu0 %v2843, 4
      %v5683 = vpop.permute.xlu0 %5682
      %5684 = vrot.lane.b32.xlu0 %v2842, 4
      %v5685 = vpop.permute.xlu0 %5684
      %5686 = vrot.lane.b32.xlu0 %v1276, 4
      %v5687 = vpop.permute.xlu0 %5686
      %5688 = vrot.lane.b32.xlu0 %v1279, 4
      %v5689 = vpop.permute.xlu0 %5688
      %5690 = vrot.lane.b32.xlu0 %v1282, 4
      %v5691 = vpop.permute.xlu0 %5690
      %5692 = vrot.lane.b32.xlu0 %v1285, 4
      %v5693 = vpop.permute.xlu0 %5692
      %5694 = vrot.lane.b32.xlu0 %v1288, 4
      %v5695 = vpop.permute.xlu0 %5694
      %5696 = vrot.lane.b32.xlu0 %v1291, 4
      %v5697 = vpop.permute.xlu0 %5696
      %5698 = vrot.lane.b32.xlu0 %v2206, 4
      %v5699 = vpop.permute.xlu0 %5698
      %5700 = vrot.lane.b32.xlu0 %v2205, 4
      %v5701 = vpop.permute.xlu0 %5700
      %5702 = vrot.lane.b32.xlu0 %v2846, 4
      %v5703 = vpop.permute.xlu0 %5702
      %5704 = vrot.lane.b32.xlu0 %v2845, 4
      %v5705 = vpop.permute.xlu0 %5704
      %5706 = vrot.lane.b32.xlu0 %v1300, 4
      %v5707 = vpop.permute.xlu0 %5706
      %5708 = vrot.lane.b32.xlu0 %v1303, 4
      %v5709 = vpop.permute.xlu0 %5708
      %5710 = vrot.lane.b32.xlu0 %v1306, 4
      %v5711 = vpop.permute.xlu0 %5710
      %5712 = vrot.lane.b32.xlu0 %v1309, 4
      %v5713 = vpop.permute.xlu0 %5712
      %5714 = vrot.lane.b32.xlu0 %v1312, 4
      %v5715 = vpop.permute.xlu0 %5714
      %5716 = vrot.lane.b32.xlu0 %v1315, 4
      %v5717 = vpop.permute.xlu0 %5716
      %5718 = vrot.lane.b32.xlu0 %v2209, 4
      %v5719 = vpop.permute.xlu0 %5718
      %5720 = vrot.lane.b32.xlu0 %v2208, 4
      %v5721 = vpop.permute.xlu0 %5720
      %5722 = vrot.lane.b32.xlu0 %v2849, 4
      %v5723 = vpop.permute.xlu0 %5722
      %5724 = vrot.lane.b32.xlu0 %v2848, 4
      %v5725 = vpop.permute.xlu0 %5724
      %5726 = vrot.lane.b32.xlu0 %v1324, 4
      %v5727 = vpop.permute.xlu0 %5726
      %5728 = vrot.lane.b32.xlu0 %v1327, 4
      %v5729 = vpop.permute.xlu0 %5728
      %5730 = vrot.lane.b32.xlu0 %v1330, 4
      %v5731 = vpop.permute.xlu0 %5730
      %5732 = vrot.lane.b32.xlu0 %v1333, 4
      %v5733 = vpop.permute.xlu0 %5732
      %5734 = vrot.lane.b32.xlu0 %v1336, 4
      %v5735 = vpop.permute.xlu0 %5734
      %5736 = vrot.lane.b32.xlu0 %v1339, 4
      %v5737 = vpop.permute.xlu0 %5736
      %5738 = vrot.lane.b32.xlu0 %v2212, 4
      %v5739 = vpop.permute.xlu0 %5738
      %5740 = vrot.lane.b32.xlu0 %v2211, 4
      %v5741 = vpop.permute.xlu0 %5740
      %5742 = vrot.lane.b32.xlu0 %v2852, 4
      %v5743 = vpop.permute.xlu0 %5742
      %5744 = vrot.lane.b32.xlu0 %v2851, 4
      %v5745 = vpop.permute.xlu0 %5744
      %5746 = vrot.lane.b32.xlu0 %v1348, 4
      %v5747 = vpop.permute.xlu0 %5746
      %5748 = vrot.lane.b32.xlu0 %v1351, 4
      %v5749 = vpop.permute.xlu0 %5748
      %5750 = vrot.lane.b32.xlu0 %v1354, 4
      %v5751 = vpop.permute.xlu0 %5750
      %5752 = vrot.lane.b32.xlu0 %v1357, 4
      %v5753 = vpop.permute.xlu0 %5752
      %5754 = vrot.lane.b32.xlu0 %v1360, 4
      %v5755 = vpop.permute.xlu0 %5754
      %5756 = vrot.lane.b32.xlu0 %v1363, 4
      %v5757 = vpop.permute.xlu0 %5756
      %5758 = vrot.lane.b32.xlu0 %v2215, 4
      %v5759 = vpop.permute.xlu0 %5758
      %5760 = vrot.lane.b32.xlu0 %v2214, 4
      %v5761 = vpop.permute.xlu0 %5760
      %5762 = vrot.lane.b32.xlu0 %v2855, 4
      %v5763 = vpop.permute.xlu0 %5762
      %5764 = vrot.lane.b32.xlu0 %v2854, 4
      %v5765 = vpop.permute.xlu0 %5764
      %5766 = vrot.lane.b32.xlu0 %v1372, 4
      %v5767 = vpop.permute.xlu0 %5766
      %5768 = vrot.lane.b32.xlu0 %v1375, 4
      %v5769 = vpop.permute.xlu0 %5768
      %5770 = vrot.lane.b32.xlu0 %v1378, 4
      %v5771 = vpop.permute.xlu0 %5770
      %5772 = vrot.lane.b32.xlu0 %v1381, 4
      %v5773 = vpop.permute.xlu0 %5772
      %5774 = vrot.lane.b32.xlu0 %v1384, 4
      %v5775 = vpop.permute.xlu0 %5774
      %5776 = vrot.lane.b32.xlu0 %v1387, 4
      %v5777 = vpop.permute.xlu0 %5776
      %5778 = vrot.lane.b32.xlu0 %v2218, 4
      %v5779 = vpop.permute.xlu0 %5778
      %5780 = vrot.lane.b32.xlu0 %v2217, 4
      %v5781 = vpop.permute.xlu0 %5780
      %5782 = vrot.lane.b32.xlu0 %v2858, 4
      %v5783 = vpop.permute.xlu0 %5782
      %5784 = vrot.lane.b32.xlu0 %v2857, 4
      %v5785 = vpop.permute.xlu0 %5784
      %5786 = vrot.lane.b32.xlu0 %v1396, 4
      %v5787 = vpop.permute.xlu0 %5786
      %5788 = vrot.lane.b32.xlu0 %v1399, 4
      %v5789 = vpop.permute.xlu0 %5788
      %5790 = vrot.lane.b32.xlu0 %v1402, 4
      %v5791 = vpop.permute.xlu0 %5790
      %5792 = vrot.lane.b32.xlu0 %v1405, 4
      %v5793 = vpop.permute.xlu0 %5792
      %5794 = vrot.lane.b32.xlu0 %v1408, 4
      %v5795 = vpop.permute.xlu0 %5794
      %5796 = vrot.lane.b32.xlu0 %v1411, 4
      %v5797 = vpop.permute.xlu0 %5796
      %5798 = vrot.lane.b32.xlu0 %v2221, 4
      %v5799 = vpop.permute.xlu0 %5798
      %5800 = vrot.lane.b32.xlu0 %v2220, 4
      %v5801 = vpop.permute.xlu0 %5800
      %5802 = vrot.lane.b32.xlu0 %v2861, 4
      %v5803 = vpop.permute.xlu0 %5802
      %5804 = vrot.lane.b32.xlu0 %v2860, 4
      %v5805 = vpop.permute.xlu0 %5804
      %5806 = vrot.lane.b32.xlu0 %v3486, 4
      %v5807 = vpop.permute.xlu0 %5806
      %5808 = vrot.lane.b32.xlu0 %v3485, 4
      %v5809 = vpop.permute.xlu0 %5808
      %5810 = vrot.lane.b32.xlu0 %v3489, 4
      %v5811 = vpop.permute.xlu0 %5810
      %5812 = vrot.lane.b32.xlu0 %v3488, 4
      %v5813 = vpop.permute.xlu0 %5812
      %5814 = vrot.lane.b32.xlu0 %v3492, 4
      %v5815 = vpop.permute.xlu0 %5814
      %5816 = vrot.lane.b32.xlu0 %v3491, 4
      %v5817 = vpop.permute.xlu0 %5816
      %5818 = vrot.lane.b32.xlu0 %v3495, 4
      %v5819 = vpop.permute.xlu0 %5818
      %5820 = vrot.lane.b32.xlu0 %v3494, 4
      %v5821 = vpop.permute.xlu0 %5820
      %5822 = vrot.lane.b32.xlu0 %v3498, 4
      %v5823 = vpop.permute.xlu0 %5822
      %5824 = vrot.lane.b32.xlu0 %v3497, 4
      %v5825 = vpop.permute.xlu0 %5824
      %5826 = vrot.lane.b32.xlu0 %v3501, 4
      %v5827 = vpop.permute.xlu0 %5826
      %5828 = vrot.lane.b32.xlu0 %v3500, 4
      %v5829 = vpop.permute.xlu0 %5828
      %5830 = vrot.lane.b32.xlu0 %v4106, 4
      %v5831 = vpop.permute.xlu0 %5830
      %5832 = vrot.lane.b32.xlu0 %v4105, 4
      %v5833 = vpop.permute.xlu0 %5832
      %5834 = vrot.lane.b32.xlu0 %v5665, 4
      %v5835 = vpop.permute.xlu0 %5834
      %5836 = vrot.lane.b32.xlu0 %v5664, 4
      %v5837 = vpop.permute.xlu0 %5836
      %v5932 = vrot.slane %v932, 7
      %v5933 = vrot.slane %v934, 7
      %v5934 = vrot.slane %v936, 7
      %v5935 = vrot.slane %v938, 7
      %v5936 = vrot.slane %v940, 7
      %v5937 = vrot.slane %v942, 7
      %v5938 = vrot.slane %v944, 7
      %v5939 = vrot.slane %v946, 7
      %v5940 = vrot.slane %v952, 7
      %v5941 = vrot.slane %v954, 7
      %v5942 = vrot.slane %v956, 7
      %v5943 = vrot.slane %v958, 7
      %v5944 = vrot.slane %v960, 7
      %v5945 = vrot.slane %v962, 7
      %v5946 = vrot.slane %v964, 7
      %v5947 = vrot.slane %v966, 7
      %v5948 = vrot.slane %v972, 7
      %v5949 = vrot.slane %v974, 7
      %v5950 = vrot.slane %v976, 7
      %v5951 = vrot.slane %v978, 7
      %v5952 = vrot.slane %v980, 7
      %v5953 = vrot.slane %v982, 7
      %v5954 = vrot.slane %v984, 7
      %v5955 = vrot.slane %v986, 7
      %v5956 = vrot.slane %v992, 7
      %v5957 = vrot.slane %v994, 7
      %v5958 = vrot.slane %v996, 7
      %v5959 = vrot.slane %v998, 7
      %v5960 = vrot.slane %v1000, 7
      %v5961 = vrot.slane %v1002, 7
      %v5962 = vrot.slane %v1004, 7
      %v5963 = vrot.slane %v1006, 7
      %v5964 = vrot.slane %v1012, 7
      %v5965 = vrot.slane %v1014, 7
      %v5966 = vrot.slane %v1016, 7
      %v5967 = vrot.slane %v1018, 7
      %v5968 = vrot.slane %v1020, 7
      %v5969 = vrot.slane %v1022, 7
      %v5970 = vrot.slane %v1024, 7
      %v5971 = vrot.slane %v1026, 7
      %v5972 = vrot.slane %v1032, 7
      %v5973 = vrot.slane %v1034, 7
      %v5974 = vrot.slane %v1036, 7
      %v5975 = vrot.slane %v1038, 7
      %v5976 = vrot.slane %v1040, 7
      %v5977 = vrot.slane %v1042, 7
      %v5978 = vrot.slane %v1044, 7
      %v5979 = vrot.slane %v1046, 7
      %v5980 = vrot.slane %v1052, 7
      %v5981 = vrot.slane %v1054, 7
      %v5982 = vrot.slane %v1056, 7
      %v5983 = vrot.slane %v1058, 7
      %v5984 = vrot.slane %v1060, 7
      %v5985 = vrot.slane %v1062, 7
      %v5986 = vrot.slane %v1064, 7
      %v5987 = vrot.slane %v1066, 7
      %v5988 = vrot.slane %v1072, 7
      %v5989 = vrot.slane %v1074, 7
      %v5990 = vrot.slane %v1076, 7
      %v5991 = vrot.slane %v1078, 7
      %v5992 = vrot.slane %v1080, 7
      %v5993 = vrot.slane %v1082, 7
      %v5994 = vrot.slane %v1084, 7
      %v5995 = vrot.slane %v1086, 7
      %5996 = vrot.lane.b32.xlu0 %v5932, 8
      %v5997 = vpop.permute.xlu0 %5996
      %5998 = vrot.lane.b32.xlu0 %v5933, 8
      %v5999 = vpop.permute.xlu0 %5998
      %6000 = vrot.lane.b32.xlu0 %v5934, 8
      %v6001 = vpop.permute.xlu0 %6000
      %6002 = vrot.lane.b32.xlu0 %v5935, 8
      %v6003 = vpop.permute.xlu0 %6002
      %6004 = vrot.lane.b32.xlu0 %v5936, 8
      %v6005 = vpop.permute.xlu0 %6004
      %6006 = vrot.lane.b32.xlu0 %v5937, 8
      %v6007 = vpop.permute.xlu0 %6006
      %6008 = vrot.lane.b32.xlu0 %v5938, 8
      %v6009 = vpop.permute.xlu0 %6008
      %6010 = vrot.lane.b32.xlu0 %v5939, 8
      %v6011 = vpop.permute.xlu0 %6010
      %6012 = vrot.lane.b32.xlu0 %v5940, 8
      %v6013 = vpop.permute.xlu0 %6012
      %6014 = vrot.lane.b32.xlu0 %v5941, 8
      %v6015 = vpop.permute.xlu0 %6014
      %6016 = vrot.lane.b32.xlu0 %v5942, 8
      %v6017 = vpop.permute.xlu0 %6016
      %6018 = vrot.lane.b32.xlu0 %v5943, 8
      %v6019 = vpop.permute.xlu0 %6018
      %6020 = vrot.lane.b32.xlu0 %v5944, 8
      %v6021 = vpop.permute.xlu0 %6020
      %6022 = vrot.lane.b32.xlu0 %v5945, 8
      %v6023 = vpop.permute.xlu0 %6022
      %6024 = vrot.lane.b32.xlu0 %v5946, 8
      %v6025 = vpop.permute.xlu0 %6024
      %6026 = vrot.lane.b32.xlu0 %v5947, 8
      %v6027 = vpop.permute.xlu0 %6026
      %6028 = vrot.lane.b32.xlu0 %v5948, 8
      %v6029 = vpop.permute.xlu0 %6028
      %6030 = vrot.lane.b32.xlu0 %v5949, 8
      %v6031 = vpop.permute.xlu0 %6030
      %6032 = vrot.lane.b32.xlu0 %v5950, 8
      %v6033 = vpop.permute.xlu0 %6032
      %6034 = vrot.lane.b32.xlu0 %v5951, 8
      %v6035 = vpop.permute.xlu0 %6034
      %6036 = vrot.lane.b32.xlu0 %v5952, 8
      %v6037 = vpop.permute.xlu0 %6036
      %6038 = vrot.lane.b32.xlu0 %v5953, 8
      %v6039 = vpop.permute.xlu0 %6038
      %6040 = vrot.lane.b32.xlu0 %v5954, 8
      %v6041 = vpop.permute.xlu0 %6040
      %6042 = vrot.lane.b32.xlu0 %v5955, 8
      %v6043 = vpop.permute.xlu0 %6042
      %6044 = vrot.lane.b32.xlu0 %v5956, 8
      %v6045 = vpop.permute.xlu0 %6044
      %6046 = vrot.lane.b32.xlu0 %v5957, 8
      %v6047 = vpop.permute.xlu0 %6046
      %6048 = vrot.lane.b32.xlu0 %v5958, 8
      %v6049 = vpop.permute.xlu0 %6048
      %6050 = vrot.lane.b32.xlu0 %v5959, 8
      %v6051 = vpop.permute.xlu0 %6050
      %6052 = vrot.lane.b32.xlu0 %v5960, 8
      %v6053 = vpop.permute.xlu0 %6052
      %6054 = vrot.lane.b32.xlu0 %v5961, 8
      %v6055 = vpop.permute.xlu0 %6054
      %6056 = vrot.lane.b32.xlu0 %v5962, 8
      %v6057 = vpop.permute.xlu0 %6056
      %6058 = vrot.lane.b32.xlu0 %v5963, 8
      %v6059 = vpop.permute.xlu0 %6058
      %6060 = vrot.lane.b32.xlu0 %v5964, 8
      %v6061 = vpop.permute.xlu0 %6060
      %6062 = vrot.lane.b32.xlu0 %v5965, 8
      %v6063 = vpop.permute.xlu0 %6062
      %6064 = vrot.lane.b32.xlu0 %v5966, 8
      %v6065 = vpop.permute.xlu0 %6064
      %6066 = vrot.lane.b32.xlu0 %v5967, 8
      %v6067 = vpop.permute.xlu0 %6066
      %6068 = vrot.lane.b32.xlu0 %v5968, 8
      %v6069 = vpop.permute.xlu0 %6068
      %6070 = vrot.lane.b32.xlu0 %v5969, 8
      %v6071 = vpop.permute.xlu0 %6070
      %6072 = vrot.lane.b32.xlu0 %v5970, 8
      %v6073 = vpop.permute.xlu0 %6072
      %6074 = vrot.lane.b32.xlu0 %v5971, 8
      %v6075 = vpop.permute.xlu0 %6074
      %6076 = vrot.lane.b32.xlu0 %v5972, 8
      %v6077 = vpop.permute.xlu0 %6076
      %6078 = vrot.lane.b32.xlu0 %v5973, 8
      %v6079 = vpop.permute.xlu0 %6078
      %6080 = vrot.lane.b32.xlu0 %v5974, 8
      %v6081 = vpop.permute.xlu0 %6080
      %6082 = vrot.lane.b32.xlu0 %v5975, 8
      %v6083 = vpop.permute.xlu0 %6082
      %6084 = vrot.lane.b32.xlu0 %v5976, 8
      %v6085 = vpop.permute.xlu0 %6084
      %6086 = vrot.lane.b32.xlu0 %v5977, 8
      %v6087 = vpop.permute.xlu0 %6086
      %6088 = vrot.lane.b32.xlu0 %v5978, 8
      %v6089 = vpop.permute.xlu0 %6088
      %6090 = vrot.lane.b32.xlu0 %v5979, 8
      %v6091 = vpop.permute.xlu0 %6090
      %6092 = vrot.lane.b32.xlu0 %v5980, 8
      %v6093 = vpop.permute.xlu0 %6092
      %6094 = vrot.lane.b32.xlu0 %v5981, 8
      %v6095 = vpop.permute.xlu0 %6094
      %6096 = vrot.lane.b32.xlu0 %v5982, 8
      %v6097 = vpop.permute.xlu0 %6096
      %6098 = vrot.lane.b32.xlu0 %v5983, 8
      %v6099 = vpop.permute.xlu0 %6098
      %6100 = vrot.lane.b32.xlu0 %v5984, 8
      %v6101 = vpop.permute.xlu0 %6100
      %6102 = vrot.lane.b32.xlu0 %v5985, 8
      %v6103 = vpop.permute.xlu0 %6102
      %6104 = vrot.lane.b32.xlu0 %v5986, 8
      %v6105 = vpop.permute.xlu0 %6104
      %6106 = vrot.lane.b32.xlu0 %v5987, 8
      %v6107 = vpop.permute.xlu0 %6106
      %6108 = vrot.lane.b32.xlu0 %v5988, 8
      %v6109 = vpop.permute.xlu0 %6108
      %6110 = vrot.lane.b32.xlu0 %v5989, 8
      %v6111 = vpop.permute.xlu0 %6110
      %6112 = vrot.lane.b32.xlu0 %v5990, 8
      %v6113 = vpop.permute.xlu0 %6112
      %6114 = vrot.lane.b32.xlu0 %v5991, 8
      %v6115 = vpop.permute.xlu0 %6114
      %6116 = vrot.lane.b32.xlu0 %v5992, 8
      %v6117 = vpop.permute.xlu0 %6116
      %6118 = vrot.lane.b32.xlu0 %v5993, 8
      %v6119 = vpop.permute.xlu0 %6118
      %6120 = vrot.lane.b32.xlu0 %v5994, 8
      %v6121 = vpop.permute.xlu0 %6120
      %6122 = vrot.lane.b32.xlu0 %v5995, 8
      %v6123 = vpop.permute.xlu0 %6122
      %6196 = vrot.lane.b32.xlu0 %v932, 12
      %v6197 = vpop.permute.xlu0 %6196
      %6198 = vrot.lane.b32.xlu0 %v933, 12
      %v6199 = vpop.permute.xlu0 %6198
      %6200 = vrot.lane.b32.xlu0 %v935, 12
      %v6201 = vpop.permute.xlu0 %6200
      %6202 = vrot.lane.b32.xlu0 %v937, 12
      %v6203 = vpop.permute.xlu0 %6202
      %6204 = vrot.lane.b32.xlu0 %v939, 12
      %v6205 = vpop.permute.xlu0 %6204
      %6206 = vrot.lane.b32.xlu0 %v941, 12
      %v6207 = vpop.permute.xlu0 %6206
      %6208 = vrot.lane.b32.xlu0 %v943, 12
      %v6209 = vpop.permute.xlu0 %6208
      %6210 = vrot.lane.b32.xlu0 %v945, 12
      %v6211 = vpop.permute.xlu0 %6210
      %6212 = vrot.lane.b32.xlu0 %v947, 12
      %v6213 = vpop.permute.xlu0 %6212
      %6214 = vrot.lane.b32.xlu0 %v952, 12
      %v6215 = vpop.permute.xlu0 %6214
      %6216 = vrot.lane.b32.xlu0 %v953, 12
      %v6217 = vpop.permute.xlu0 %6216
      %6218 = vrot.lane.b32.xlu0 %v955, 12
      %v6219 = vpop.permute.xlu0 %6218
      %6220 = vrot.lane.b32.xlu0 %v957, 12
      %v6221 = vpop.permute.xlu0 %6220
      %6222 = vrot.lane.b32.xlu0 %v959, 12
      %v6223 = vpop.permute.xlu0 %6222
      %6224 = vrot.lane.b32.xlu0 %v961, 12
      %v6225 = vpop.permute.xlu0 %6224
      %6226 = vrot.lane.b32.xlu0 %v963, 12
      %v6227 = vpop.permute.xlu0 %6226
      %6228 = vrot.lane.b32.xlu0 %v965, 12
      %v6229 = vpop.permute.xlu0 %6228
      %6230 = vrot.lane.b32.xlu0 %v967, 12
      %v6231 = vpop.permute.xlu0 %6230
      %6232 = vrot.lane.b32.xlu0 %v972, 12
      %v6233 = vpop.permute.xlu0 %6232
      %6234 = vrot.lane.b32.xlu0 %v973, 12
      %v6235 = vpop.permute.xlu0 %6234
      %6236 = vrot.lane.b32.xlu0 %v975, 12
      %v6237 = vpop.permute.xlu0 %6236
      %6238 = vrot.lane.b32.xlu0 %v977, 12
      %v6239 = vpop.permute.xlu0 %6238
      %6240 = vrot.lane.b32.xlu0 %v979, 12
      %v6241 = vpop.permute.xlu0 %6240
      %6242 = vrot.lane.b32.xlu0 %v981, 12
      %v6243 = vpop.permute.xlu0 %6242
      %6244 = vrot.lane.b32.xlu0 %v983, 12
      %v6245 = vpop.permute.xlu0 %6244
      %6246 = vrot.lane.b32.xlu0 %v985, 12
      %v6247 = vpop.permute.xlu0 %6246
      %6248 = vrot.lane.b32.xlu0 %v987, 12
      %v6249 = vpop.permute.xlu0 %6248
      %6250 = vrot.lane.b32.xlu0 %v992, 12
      %v6251 = vpop.permute.xlu0 %6250
      %6252 = vrot.lane.b32.xlu0 %v993, 12
      %v6253 = vpop.permute.xlu0 %6252
      %6254 = vrot.lane.b32.xlu0 %v995, 12
      %v6255 = vpop.permute.xlu0 %6254
      %6256 = vrot.lane.b32.xlu0 %v997, 12
      %v6257 = vpop.permute.xlu0 %6256
      %6258 = vrot.lane.b32.xlu0 %v999, 12
      %v6259 = vpop.permute.xlu0 %6258
      %6260 = vrot.lane.b32.xlu0 %v1001, 12
      %v6261 = vpop.permute.xlu0 %6260
      %6262 = vrot.lane.b32.xlu0 %v1003, 12
      %v6263 = vpop.permute.xlu0 %6262
      %6264 = vrot.lane.b32.xlu0 %v1005, 12
      %v6265 = vpop.permute.xlu0 %6264
      %6266 = vrot.lane.b32.xlu0 %v1007, 12
      %v6267 = vpop.permute.xlu0 %6266
      %6268 = vrot.lane.b32.xlu0 %v1012, 12
      %v6269 = vpop.permute.xlu0 %6268
      %6270 = vrot.lane.b32.xlu0 %v1013, 12
      %v6271 = vpop.permute.xlu0 %6270
      %6272 = vrot.lane.b32.xlu0 %v1015, 12
      %v6273 = vpop.permute.xlu0 %6272
      %6274 = vrot.lane.b32.xlu0 %v1017, 12
      %v6275 = vpop.permute.xlu0 %6274
      %6276 = vrot.lane.b32.xlu0 %v1019, 12
      %v6277 = vpop.permute.xlu0 %6276
      %6278 = vrot.lane.b32.xlu0 %v1021, 12
      %v6279 = vpop.permute.xlu0 %6278
      %6280 = vrot.lane.b32.xlu0 %v1023, 12
      %v6281 = vpop.permute.xlu0 %6280
      %6282 = vrot.lane.b32.xlu0 %v1025, 12
      %v6283 = vpop.permute.xlu0 %6282
      %6284 = vrot.lane.b32.xlu0 %v1027, 12
      %v6285 = vpop.permute.xlu0 %6284
      %6286 = vrot.lane.b32.xlu0 %v1032, 12
      %v6287 = vpop.permute.xlu0 %6286
      %6288 = vrot.lane.b32.xlu0 %v1033, 12
      %v6289 = vpop.permute.xlu0 %6288
      %6290 = vrot.lane.b32.xlu0 %v1035, 12
      %v6291 = vpop.permute.xlu0 %6290
      %6292 = vrot.lane.b32.xlu0 %v1037, 12
      %v6293 = vpop.permute.xlu0 %6292
      %6294 = vrot.lane.b32.xlu0 %v1039, 12
      %v6295 = vpop.permute.xlu0 %6294
      %6296 = vrot.lane.b32.xlu0 %v1041, 12
      %v6297 = vpop.permute.xlu0 %6296
      %6298 = vrot.lane.b32.xlu0 %v1043, 12
      %v6299 = vpop.permute.xlu0 %6298
      %6300 = vrot.lane.b32.xlu0 %v1045, 12
      %v6301 = vpop.permute.xlu0 %6300
      %6302 = vrot.lane.b32.xlu0 %v1047, 12
      %v6303 = vpop.permute.xlu0 %6302
      %6304 = vrot.lane.b32.xlu0 %v1052, 12
      %v6305 = vpop.permute.xlu0 %6304
      %6306 = vrot.lane.b32.xlu0 %v1053, 12
      %v6307 = vpop.permute.xlu0 %6306
      %6308 = vrot.lane.b32.xlu0 %v1054, 12
      %v6309 = vpop.permute.xlu0 %6308
      %6310 = vrot.lane.b32.xlu0 %v1055, 12
      %v6311 = vpop.permute.xlu0 %6310
      %6312 = vrot.lane.b32.xlu0 %v1056, 12
      %v6313 = vpop.permute.xlu0 %6312
      %6314 = vrot.lane.b32.xlu0 %v1057, 12
      %v6315 = vpop.permute.xlu0 %6314
      %6316 = vrot.lane.b32.xlu0 %v1058, 12
      %v6317 = vpop.permute.xlu0 %6316
      %6318 = vrot.lane.b32.xlu0 %v1059, 12
      %v6319 = vpop.permute.xlu0 %6318
      %6320 = vrot.lane.b32.xlu0 %v1060, 12
      %v6321 = vpop.permute.xlu0 %6320
      %6322 = vrot.lane.b32.xlu0 %v1061, 12
      %v6323 = vpop.permute.xlu0 %6322
      %6324 = vrot.lane.b32.xlu0 %v1062, 12
      %v6325 = vpop.permute.xlu0 %6324
      %6326 = vrot.lane.b32.xlu0 %v1063, 12
      %v6327 = vpop.permute.xlu0 %6326
      %6328 = vrot.lane.b32.xlu0 %v1064, 12
      %v6329 = vpop.permute.xlu0 %6328
      %6330 = vrot.lane.b32.xlu0 %v1065, 12
      %v6331 = vpop.permute.xlu0 %6330
      %6332 = vrot.lane.b32.xlu0 %v1066, 12
      %v6333 = vpop.permute.xlu0 %6332
      %6334 = vrot.lane.b32.xlu0 %v1067, 12
      %v6335 = vpop.permute.xlu0 %6334
      %6336 = vrot.lane.b32.xlu0 %v1072, 12
      %v6337 = vpop.permute.xlu0 %6336
      %6338 = vrot.lane.b32.xlu0 %v1073, 12
      %v6339 = vpop.permute.xlu0 %6338
      %6340 = vrot.lane.b32.xlu0 %v1074, 12
      %v6341 = vpop.permute.xlu0 %6340
      %6342 = vrot.lane.b32.xlu0 %v1075, 12
      %v6343 = vpop.permute.xlu0 %6342
      %6344 = vrot.lane.b32.xlu0 %v1076, 12
      %v6345 = vpop.permute.xlu0 %6344
      %6346 = vrot.lane.b32.xlu0 %v1077, 12
      %v6347 = vpop.permute.xlu0 %6346
      %6348 = vrot.lane.b32.xlu0 %v1078, 12
      %v6349 = vpop.permute.xlu0 %6348
      %6350 = vrot.lane.b32.xlu0 %v1079, 12
      %v6351 = vpop.permute.xlu0 %6350
      %6352 = vrot.lane.b32.xlu0 %v1080, 12
      %v6353 = vpop.permute.xlu0 %6352
      %6354 = vrot.lane.b32.xlu0 %v1081, 12
      %v6355 = vpop.permute.xlu0 %6354
      %6356 = vrot.lane.b32.xlu0 %v1082, 12
      %v6357 = vpop.permute.xlu0 %6356
      %6358 = vrot.lane.b32.xlu0 %v1083, 12
      %v6359 = vpop.permute.xlu0 %6358
      %6360 = vrot.lane.b32.xlu0 %v1084, 12
      %v6361 = vpop.permute.xlu0 %6360
      %6362 = vrot.lane.b32.xlu0 %v1085, 12
      %v6363 = vpop.permute.xlu0 %6362
      %6364 = vrot.lane.b32.xlu0 %v1086, 12
      %v6365 = vpop.permute.xlu0 %6364
      %6366 = vrot.lane.b32.xlu0 %v1087, 12
      %v6367 = vpop.permute.xlu0 %6366
      %v6454 = vrot.slane %v1072, 1
      %v6455 = vrot.slane %v1073, 1
      %v6456 = vsel %vm1220, %v6454, %v6455
      %v6457 = vrot.slane %v1074, 1
      %v6458 = vrot.slane %v1075, 1
      %v6459 = vsel %vm1220, %v6457, %v6458
      %v6460 = vrot.slane %v1076, 1
      %v6461 = vrot.slane %v1077, 1
      %v6462 = vsel %vm1220, %v6460, %v6461
      %v6463 = vrot.slane %v1078, 1
      %v6464 = vrot.slane %v1079, 1
      %v6465 = vsel %vm1220, %v6463, %v6464
      %v6466 = vrot.slane %v1080, 1
      %v6467 = vrot.slane %v1081, 1
      %v6468 = vsel %vm1220, %v6466, %v6467
      %v6469 = vrot.slane %v1082, 1
      %v6470 = vrot.slane %v1083, 1
      %v6471 = vsel %vm1220, %v6469, %v6470
      %v6472 = vrot.slane %v1084, 1
      %v6473 = vrot.slane %v1085, 1
      %v6474 = vsel %vm1220, %v6472, %v6473
      %v6475 = vrot.slane %v1086, 1
      %v6476 = vrot.slane %v1087, 1
      %v6477 = vsel %vm1220, %v6475, %v6476
      %6478 = vrot.lane.b32.xlu0 %v1271, 16
      %v6479 = vpop.permute.xlu0 %6478
      %6480 = vrot.lane.b32.xlu0 %v1270, 16
      %v6481 = vpop.permute.xlu0 %6480
      %6482 = vrot.lane.b32.xlu0 %v1273, 16
      %v6483 = vpop.permute.xlu0 %6482
      %6484 = vrot.lane.b32.xlu0 %v1276, 16
      %v6485 = vpop.permute.xlu0 %6484
      %6486 = vrot.lane.b32.xlu0 %v1279, 16
      %v6487 = vpop.permute.xlu0 %6486
      %6488 = vrot.lane.b32.xlu0 %v1282, 16
      %v6489 = vpop.permute.xlu0 %6488
      %6490 = vrot.lane.b32.xlu0 %v1285, 16
      %v6491 = vpop.permute.xlu0 %6490
      %6492 = vrot.lane.b32.xlu0 %v1288, 16
      %v6493 = vpop.permute.xlu0 %6492
      %6494 = vrot.lane.b32.xlu0 %v1291, 16
      %v6495 = vpop.permute.xlu0 %6494
      %6496 = vrot.lane.b32.xlu0 %v1295, 16
      %v6497 = vpop.permute.xlu0 %6496
      %6498 = vrot.lane.b32.xlu0 %v1294, 16
      %v6499 = vpop.permute.xlu0 %6498
      %6500 = vrot.lane.b32.xlu0 %v1297, 16
      %v6501 = vpop.permute.xlu0 %6500
      %6502 = vrot.lane.b32.xlu0 %v1300, 16
      %v6503 = vpop.permute.xlu0 %6502
      %6504 = vrot.lane.b32.xlu0 %v1303, 16
      %v6505 = vpop.permute.xlu0 %6504
      %6506 = vrot.lane.b32.xlu0 %v1306, 16
      %v6507 = vpop.permute.xlu0 %6506
      %6508 = vrot.lane.b32.xlu0 %v1309, 16
      %v6509 = vpop.permute.xlu0 %6508
      %6510 = vrot.lane.b32.xlu0 %v1312, 16
      %v6511 = vpop.permute.xlu0 %6510
      %6512 = vrot.lane.b32.xlu0 %v1315, 16
      %v6513 = vpop.permute.xlu0 %6512
      %6514 = vrot.lane.b32.xlu0 %v1319, 16
      %v6515 = vpop.permute.xlu0 %6514
      %6516 = vrot.lane.b32.xlu0 %v1318, 16
      %v6517 = vpop.permute.xlu0 %6516
      %6518 = vrot.lane.b32.xlu0 %v1321, 16
      %v6519 = vpop.permute.xlu0 %6518
      %6520 = vrot.lane.b32.xlu0 %v1324, 16
      %v6521 = vpop.permute.xlu0 %6520
      %6522 = vrot.lane.b32.xlu0 %v1327, 16
      %v6523 = vpop.permute.xlu0 %6522
      %6524 = vrot.lane.b32.xlu0 %v1330, 16
      %v6525 = vpop.permute.xlu0 %6524
      %6526 = vrot.lane.b32.xlu0 %v1333, 16
      %v6527 = vpop.permute.xlu0 %6526
      %6528 = vrot.lane.b32.xlu0 %v1336, 16
      %v6529 = vpop.permute.xlu0 %6528
      %6530 = vrot.lane.b32.xlu0 %v1339, 16
      %v6531 = vpop.permute.xlu0 %6530
      %6532 = vrot.lane.b32.xlu0 %v1343, 16
      %v6533 = vpop.permute.xlu0 %6532
      %6534 = vrot.lane.b32.xlu0 %v1342, 16
      %v6535 = vpop.permute.xlu0 %6534
      %6536 = vrot.lane.b32.xlu0 %v1345, 16
      %v6537 = vpop.permute.xlu0 %6536
      %6538 = vrot.lane.b32.xlu0 %v1348, 16
      %v6539 = vpop.permute.xlu0 %6538
      %6540 = vrot.lane.b32.xlu0 %v1351, 16
      %v6541 = vpop.permute.xlu0 %6540
      %6542 = vrot.lane.b32.xlu0 %v1354, 16
      %v6543 = vpop.permute.xlu0 %6542
      %6544 = vrot.lane.b32.xlu0 %v1357, 16
      %v6545 = vpop.permute.xlu0 %6544
      %6546 = vrot.lane.b32.xlu0 %v1360, 16
      %v6547 = vpop.permute.xlu0 %6546
      %6548 = vrot.lane.b32.xlu0 %v1363, 16
      %v6549 = vpop.permute.xlu0 %6548
      %6550 = vrot.lane.b32.xlu0 %v1367, 16
      %v6551 = vpop.permute.xlu0 %6550
      %6552 = vrot.lane.b32.xlu0 %v1366, 16
      %v6553 = vpop.permute.xlu0 %6552
      %6554 = vrot.lane.b32.xlu0 %v1369, 16
      %v6555 = vpop.permute.xlu0 %6554
      %6556 = vrot.lane.b32.xlu0 %v1372, 16
      %v6557 = vpop.permute.xlu0 %6556
      %6558 = vrot.lane.b32.xlu0 %v1375, 16
      %v6559 = vpop.permute.xlu0 %6558
      %6560 = vrot.lane.b32.xlu0 %v1378, 16
      %v6561 = vpop.permute.xlu0 %6560
      %6562 = vrot.lane.b32.xlu0 %v1381, 16
      %v6563 = vpop.permute.xlu0 %6562
      %6564 = vrot.lane.b32.xlu0 %v1384, 16
      %v6565 = vpop.permute.xlu0 %6564
      %6566 = vrot.lane.b32.xlu0 %v1387, 16
      %v6567 = vpop.permute.xlu0 %6566
      %6568 = vrot.lane.b32.xlu0 %v1391, 16
      %v6569 = vpop.permute.xlu0 %6568
      %6570 = vrot.lane.b32.xlu0 %v1390, 16
      %v6571 = vpop.permute.xlu0 %6570
      %6572 = vrot.lane.b32.xlu0 %v1393, 16
      %v6573 = vpop.permute.xlu0 %6572
      %6574 = vrot.lane.b32.xlu0 %v1396, 16
      %v6575 = vpop.permute.xlu0 %6574
      %6576 = vrot.lane.b32.xlu0 %v1399, 16
      %v6577 = vpop.permute.xlu0 %6576
      %6578 = vrot.lane.b32.xlu0 %v1402, 16
      %v6579 = vpop.permute.xlu0 %6578
      %6580 = vrot.lane.b32.xlu0 %v1405, 16
      %v6581 = vpop.permute.xlu0 %6580
      %6582 = vrot.lane.b32.xlu0 %v1408, 16
      %v6583 = vpop.permute.xlu0 %6582
      %6584 = vrot.lane.b32.xlu0 %v1411, 16
      %v6585 = vpop.permute.xlu0 %6584
      %6586 = vrot.lane.b32.xlu0 %v3480, 16
      %v6587 = vpop.permute.xlu0 %6586
      %6588 = vrot.lane.b32.xlu0 %v3479, 16
      %v6589 = vpop.permute.xlu0 %6588
      %6590 = vrot.lane.b32.xlu0 %v3483, 16
      %v6591 = vpop.permute.xlu0 %6590
      %6592 = vrot.lane.b32.xlu0 %v3482, 16
      %v6593 = vpop.permute.xlu0 %6592
      %6594 = vrot.lane.b32.xlu0 %v3486, 16
      %v6595 = vpop.permute.xlu0 %6594
      %6596 = vrot.lane.b32.xlu0 %v3485, 16
      %v6597 = vpop.permute.xlu0 %6596
      %6598 = vrot.lane.b32.xlu0 %v3489, 16
      %v6599 = vpop.permute.xlu0 %6598
      %6600 = vrot.lane.b32.xlu0 %v3488, 16
      %v6601 = vpop.permute.xlu0 %6600
      %6602 = vrot.lane.b32.xlu0 %v3492, 16
      %v6603 = vpop.permute.xlu0 %6602
      %6604 = vrot.lane.b32.xlu0 %v3491, 16
      %v6605 = vpop.permute.xlu0 %6604
      %6606 = vrot.lane.b32.xlu0 %v3495, 16
      %v6607 = vpop.permute.xlu0 %6606
      %6608 = vrot.lane.b32.xlu0 %v3494, 16
      %v6609 = vpop.permute.xlu0 %6608
      %6610 = vrot.lane.b32.xlu0 %v3498, 16
      %v6611 = vpop.permute.xlu0 %6610
      %6612 = vrot.lane.b32.xlu0 %v3497, 16
      %v6613 = vpop.permute.xlu0 %6612
      %6614 = vrot.lane.b32.xlu0 %v3501, 16
      %v6615 = vpop.permute.xlu0 %6614
      %6616 = vrot.lane.b32.xlu0 %v3500, 16
      %v6617 = vpop.permute.xlu0 %6616
      %6618 = vrot.lane.b32.xlu0 %v6456, 16
      %v6619 = vpop.permute.xlu0 %6618
      %6620 = vrot.lane.b32.xlu0 %v6455, 16
      %v6621 = vpop.permute.xlu0 %6620
      %6622 = vrot.lane.b32.xlu0 %v6459, 16
      %v6623 = vpop.permute.xlu0 %6622
      %6624 = vrot.lane.b32.xlu0 %v6458, 16
      %v6625 = vpop.permute.xlu0 %6624
      %6626 = vrot.lane.b32.xlu0 %v6462, 16
      %v6627 = vpop.permute.xlu0 %6626
      %6628 = vrot.lane.b32.xlu0 %v6461, 16
      %v6629 = vpop.permute.xlu0 %6628
      %6630 = vrot.lane.b32.xlu0 %v6465, 16
      %v6631 = vpop.permute.xlu0 %6630
      %6632 = vrot.lane.b32.xlu0 %v6464, 16
      %v6633 = vpop.permute.xlu0 %6632
      %6634 = vrot.lane.b32.xlu0 %v6468, 16
      %v6635 = vpop.permute.xlu0 %6634
      %6636 = vrot.lane.b32.xlu0 %v6467, 16
      %v6637 = vpop.permute.xlu0 %6636
      %6638 = vrot.lane.b32.xlu0 %v6471, 16
      %v6639 = vpop.permute.xlu0 %6638
      %6640 = vrot.lane.b32.xlu0 %v6470, 16
      %v6641 = vpop.permute.xlu0 %6640
      %6642 = vrot.lane.b32.xlu0 %v6474, 16
      %v6643 = vpop.permute.xlu0 %6642
      %6644 = vrot.lane.b32.xlu0 %v6473, 16
      %v6645 = vpop.permute.xlu0 %6644
      %6646 = vrot.lane.b32.xlu0 %v6477, 16
      %v6647 = vpop.permute.xlu0 %6646
      %6648 = vrot.lane.b32.xlu0 %v6476, 16
      %v6649 = vpop.permute.xlu0 %6648
      %v6737 = vrot.slane %v948, 7
      %v6738 = vrot.slane %v968, 7
      %v6739 = vrot.slane %v988, 7
      %v6740 = vrot.slane %v1008, 7
      %v6741 = vrot.slane %v1028, 7
      %v6742 = vrot.slane %v1048, 7
      %v6743 = vrot.slane %v1068, 7
      %v6744 = vrot.slane %v1088, 7
      %6745 = vrot.lane.b32.xlu0 %v5933, 20
      %v6746 = vpop.permute.xlu0 %6745
      %6747 = vrot.lane.b32.xlu0 %v5934, 20
      %v6748 = vpop.permute.xlu0 %6747
      %6749 = vrot.lane.b32.xlu0 %v5935, 20
      %v6750 = vpop.permute.xlu0 %6749
      %6751 = vrot.lane.b32.xlu0 %v5936, 20
      %v6752 = vpop.permute.xlu0 %6751
      %6753 = vrot.lane.b32.xlu0 %v5937, 20
      %v6754 = vpop.permute.xlu0 %6753
      %6755 = vrot.lane.b32.xlu0 %v5938, 20
      %v6756 = vpop.permute.xlu0 %6755
      %6757 = vrot.lane.b32.xlu0 %v5939, 20
      %v6758 = vpop.permute.xlu0 %6757
      %6759 = vrot.lane.b32.xlu0 %v6737, 20
      %v6760 = vpop.permute.xlu0 %6759
      %6761 = vrot.lane.b32.xlu0 %v5941, 20
      %v6762 = vpop.permute.xlu0 %6761
      %6763 = vrot.lane.b32.xlu0 %v5942, 20
      %v6764 = vpop.permute.xlu0 %6763
      %6765 = vrot.lane.b32.xlu0 %v5943, 20
      %v6766 = vpop.permute.xlu0 %6765
      %6767 = vrot.lane.b32.xlu0 %v5944, 20
      %v6768 = vpop.permute.xlu0 %6767
      %6769 = vrot.lane.b32.xlu0 %v5945, 20
      %v6770 = vpop.permute.xlu0 %6769
      %6771 = vrot.lane.b32.xlu0 %v5946, 20
      %v6772 = vpop.permute.xlu0 %6771
      %6773 = vrot.lane.b32.xlu0 %v5947, 20
      %v6774 = vpop.permute.xlu0 %6773
      %6775 = vrot.lane.b32.xlu0 %v6738, 20
      %v6776 = vpop.permute.xlu0 %6775
      %6777 = vrot.lane.b32.xlu0 %v5949, 20
      %v6778 = vpop.permute.xlu0 %6777
      %6779 = vrot.lane.b32.xlu0 %v5950, 20
      %v6780 = vpop.permute.xlu0 %6779
      %6781 = vrot.lane.b32.xlu0 %v5951, 20
      %v6782 = vpop.permute.xlu0 %6781
      %6783 = vrot.lane.b32.xlu0 %v5952, 20
      %v6784 = vpop.permute.xlu0 %6783
      %6785 = vrot.lane.b32.xlu0 %v5953, 20
      %v6786 = vpop.permute.xlu0 %6785
      %6787 = vrot.lane.b32.xlu0 %v5954, 20
      %v6788 = vpop.permute.xlu0 %6787
      %6789 = vrot.lane.b32.xlu0 %v5955, 20
      %v6790 = vpop.permute.xlu0 %6789
      %6791 = vrot.lane.b32.xlu0 %v6739, 20
      %v6792 = vpop.permute.xlu0 %6791
      %6793 = vrot.lane.b32.xlu0 %v5957, 20
      %v6794 = vpop.permute.xlu0 %6793
      %6795 = vrot.lane.b32.xlu0 %v5958, 20
      %v6796 = vpop.permute.xlu0 %6795
      %6797 = vrot.lane.b32.xlu0 %v5959, 20
      %v6798 = vpop.permute.xlu0 %6797
      %6799 = vrot.lane.b32.xlu0 %v5960, 20
      %v6800 = vpop.permute.xlu0 %6799
      %6801 = vrot.lane.b32.xlu0 %v5961, 20
      %v6802 = vpop.permute.xlu0 %6801
      %6803 = vrot.lane.b32.xlu0 %v5962, 20
      %v6804 = vpop.permute.xlu0 %6803
      %6805 = vrot.lane.b32.xlu0 %v5963, 20
      %v6806 = vpop.permute.xlu0 %6805
      %6807 = vrot.lane.b32.xlu0 %v6740, 20
      %v6808 = vpop.permute.xlu0 %6807
      %6809 = vrot.lane.b32.xlu0 %v5965, 20
      %v6810 = vpop.permute.xlu0 %6809
      %6811 = vrot.lane.b32.xlu0 %v5966, 20
      %v6812 = vpop.permute.xlu0 %6811
      %6813 = vrot.lane.b32.xlu0 %v5967, 20
      %v6814 = vpop.permute.xlu0 %6813
      %6815 = vrot.lane.b32.xlu0 %v5968, 20
      %v6816 = vpop.permute.xlu0 %6815
      %6817 = vrot.lane.b32.xlu0 %v5969, 20
      %v6818 = vpop.permute.xlu0 %6817
      %6819 = vrot.lane.b32.xlu0 %v5970, 20
      %v6820 = vpop.permute.xlu0 %6819
      %6821 = vrot.lane.b32.xlu0 %v5971, 20
      %v6822 = vpop.permute.xlu0 %6821
      %6823 = vrot.lane.b32.xlu0 %v6741, 20
      %v6824 = vpop.permute.xlu0 %6823
      %6825 = vrot.lane.b32.xlu0 %v5973, 20
      %v6826 = vpop.permute.xlu0 %6825
      %6827 = vrot.lane.b32.xlu0 %v5974, 20
      %v6828 = vpop.permute.xlu0 %6827
      %6829 = vrot.lane.b32.xlu0 %v5975, 20
      %v6830 = vpop.permute.xlu0 %6829
      %6831 = vrot.lane.b32.xlu0 %v5976, 20
      %v6832 = vpop.permute.xlu0 %6831
      %6833 = vrot.lane.b32.xlu0 %v5977, 20
      %v6834 = vpop.permute.xlu0 %6833
      %6835 = vrot.lane.b32.xlu0 %v5978, 20
      %v6836 = vpop.permute.xlu0 %6835
      %6837 = vrot.lane.b32.xlu0 %v5979, 20
      %v6838 = vpop.permute.xlu0 %6837
      %6839 = vrot.lane.b32.xlu0 %v6742, 20
      %v6840 = vpop.permute.xlu0 %6839
      %6841 = vrot.lane.b32.xlu0 %v5981, 20
      %v6842 = vpop.permute.xlu0 %6841
      %6843 = vrot.lane.b32.xlu0 %v5982, 20
      %v6844 = vpop.permute.xlu0 %6843
      %6845 = vrot.lane.b32.xlu0 %v5983, 20
      %v6846 = vpop.permute.xlu0 %6845
      %6847 = vrot.lane.b32.xlu0 %v5984, 20
      %v6848 = vpop.permute.xlu0 %6847
      %6849 = vrot.lane.b32.xlu0 %v5985, 20
      %v6850 = vpop.permute.xlu0 %6849
      %6851 = vrot.lane.b32.xlu0 %v5986, 20
      %v6852 = vpop.permute.xlu0 %6851
      %6853 = vrot.lane.b32.xlu0 %v5987, 20
      %v6854 = vpop.permute.xlu0 %6853
      %6855 = vrot.lane.b32.xlu0 %v6743, 20
      %v6856 = vpop.permute.xlu0 %6855
      %6857 = vrot.lane.b32.xlu0 %v5989, 20
      %v6858 = vpop.permute.xlu0 %6857
      %6859 = vrot.lane.b32.xlu0 %v5990, 20
      %v6860 = vpop.permute.xlu0 %6859
      %6861 = vrot.lane.b32.xlu0 %v5991, 20
      %v6862 = vpop.permute.xlu0 %6861
      %6863 = vrot.lane.b32.xlu0 %v5992, 20
      %v6864 = vpop.permute.xlu0 %6863
      %6865 = vrot.lane.b32.xlu0 %v5993, 20
      %v6866 = vpop.permute.xlu0 %6865
      %6867 = vrot.lane.b32.xlu0 %v5994, 20
      %v6868 = vpop.permute.xlu0 %6867
      %6869 = vrot.lane.b32.xlu0 %v5995, 20
      %v6870 = vpop.permute.xlu0 %6869
      %6871 = vrot.lane.b32.xlu0 %v6744, 20
      %v6872 = vpop.permute.xlu0 %6871
      %6938 = vrot.lane.b32.xlu0 %v934, 24
      %v6939 = vpop.permute.xlu0 %6938
      %6940 = vrot.lane.b32.xlu0 %v935, 24
      %v6941 = vpop.permute.xlu0 %6940
      %6942 = vrot.lane.b32.xlu0 %v937, 24
      %v6943 = vpop.permute.xlu0 %6942
      %6944 = vrot.lane.b32.xlu0 %v939, 24
      %v6945 = vpop.permute.xlu0 %6944
      %6946 = vrot.lane.b32.xlu0 %v941, 24
      %v6947 = vpop.permute.xlu0 %6946
      %6948 = vrot.lane.b32.xlu0 %v943, 24
      %v6949 = vpop.permute.xlu0 %6948
      %6950 = vrot.lane.b32.xlu0 %v945, 24
      %v6951 = vpop.permute.xlu0 %6950
      %6952 = vrot.lane.b32.xlu0 %v947, 24
      %v6953 = vpop.permute.xlu0 %6952
      %6954 = vrot.lane.b32.xlu0 %v949, 24
      %v6955 = vpop.permute.xlu0 %6954
      %6956 = vrot.lane.b32.xlu0 %v954, 24
      %v6957 = vpop.permute.xlu0 %6956
      %6958 = vrot.lane.b32.xlu0 %v955, 24
      %v6959 = vpop.permute.xlu0 %6958
      %6960 = vrot.lane.b32.xlu0 %v957, 24
      %v6961 = vpop.permute.xlu0 %6960
      %6962 = vrot.lane.b32.xlu0 %v959, 24
      %v6963 = vpop.permute.xlu0 %6962
      %6964 = vrot.lane.b32.xlu0 %v961, 24
      %v6965 = vpop.permute.xlu0 %6964
      %6966 = vrot.lane.b32.xlu0 %v963, 24
      %v6967 = vpop.permute.xlu0 %6966
      %6968 = vrot.lane.b32.xlu0 %v965, 24
      %v6969 = vpop.permute.xlu0 %6968
      %6970 = vrot.lane.b32.xlu0 %v967, 24
      %v6971 = vpop.permute.xlu0 %6970
      %6972 = vrot.lane.b32.xlu0 %v969, 24
      %v6973 = vpop.permute.xlu0 %6972
      %6974 = vrot.lane.b32.xlu0 %v974, 24
      %v6975 = vpop.permute.xlu0 %6974
      %6976 = vrot.lane.b32.xlu0 %v975, 24
      %v6977 = vpop.permute.xlu0 %6976
      %6978 = vrot.lane.b32.xlu0 %v977, 24
      %v6979 = vpop.permute.xlu0 %6978
      %6980 = vrot.lane.b32.xlu0 %v979, 24
      %v6981 = vpop.permute.xlu0 %6980
      %6982 = vrot.lane.b32.xlu0 %v981, 24
      %v6983 = vpop.permute.xlu0 %6982
      %6984 = vrot.lane.b32.xlu0 %v983, 24
      %v6985 = vpop.permute.xlu0 %6984
      %6986 = vrot.lane.b32.xlu0 %v985, 24
      %v6987 = vpop.permute.xlu0 %6986
      %6988 = vrot.lane.b32.xlu0 %v987, 24
      %v6989 = vpop.permute.xlu0 %6988
      %6990 = vrot.lane.b32.xlu0 %v989, 24
      %v6991 = vpop.permute.xlu0 %6990
      %6992 = vrot.lane.b32.xlu0 %v994, 24
      %v6993 = vpop.permute.xlu0 %6992
      %6994 = vrot.lane.b32.xlu0 %v995, 24
      %v6995 = vpop.permute.xlu0 %6994
      %6996 = vrot.lane.b32.xlu0 %v997, 24
      %v6997 = vpop.permute.xlu0 %6996
      %6998 = vrot.lane.b32.xlu0 %v999, 24
      %v6999 = vpop.permute.xlu0 %6998
      %7000 = vrot.lane.b32.xlu0 %v1001, 24
      %v7001 = vpop.permute.xlu0 %7000
      %7002 = vrot.lane.b32.xlu0 %v1003, 24
      %v7003 = vpop.permute.xlu0 %7002
      %7004 = vrot.lane.b32.xlu0 %v1005, 24
      %v7005 = vpop.permute.xlu0 %7004
      %7006 = vrot.lane.b32.xlu0 %v1007, 24
      %v7007 = vpop.permute.xlu0 %7006
      %7008 = vrot.lane.b32.xlu0 %v1009, 24
      %v7009 = vpop.permute.xlu0 %7008
      %7010 = vrot.lane.b32.xlu0 %v1014, 24
      %v7011 = vpop.permute.xlu0 %7010
      %7012 = vrot.lane.b32.xlu0 %v1015, 24
      %v7013 = vpop.permute.xlu0 %7012
      %7014 = vrot.lane.b32.xlu0 %v1017, 24
      %v7015 = vpop.permute.xlu0 %7014
      %7016 = vrot.lane.b32.xlu0 %v1019, 24
      %v7017 = vpop.permute.xlu0 %7016
      %7018 = vrot.lane.b32.xlu0 %v1021, 24
      %v7019 = vpop.permute.xlu0 %7018
      %7020 = vrot.lane.b32.xlu0 %v1023, 24
      %v7021 = vpop.permute.xlu0 %7020
      %7022 = vrot.lane.b32.xlu0 %v1025, 24
      %v7023 = vpop.permute.xlu0 %7022
      %7024 = vrot.lane.b32.xlu0 %v1027, 24
      %v7025 = vpop.permute.xlu0 %7024
      %7026 = vrot.lane.b32.xlu0 %v1029, 24
      %v7027 = vpop.permute.xlu0 %7026
      %7028 = vrot.lane.b32.xlu0 %v1034, 24
      %v7029 = vpop.permute.xlu0 %7028
      %7030 = vrot.lane.b32.xlu0 %v1035, 24
      %v7031 = vpop.permute.xlu0 %7030
      %7032 = vrot.lane.b32.xlu0 %v1037, 24
      %v7033 = vpop.permute.xlu0 %7032
      %7034 = vrot.lane.b32.xlu0 %v1039, 24
      %v7035 = vpop.permute.xlu0 %7034
      %7036 = vrot.lane.b32.xlu0 %v1041, 24
      %v7037 = vpop.permute.xlu0 %7036
      %7038 = vrot.lane.b32.xlu0 %v1043, 24
      %v7039 = vpop.permute.xlu0 %7038
      %7040 = vrot.lane.b32.xlu0 %v1045, 24
      %v7041 = vpop.permute.xlu0 %7040
      %7042 = vrot.lane.b32.xlu0 %v1047, 24
      %v7043 = vpop.permute.xlu0 %7042
      %7044 = vrot.lane.b32.xlu0 %v1049, 24
      %v7045 = vpop.permute.xlu0 %7044
      %7046 = vrot.lane.b32.xlu0 %v1054, 24
      %v7047 = vpop.permute.xlu0 %7046
      %7048 = vrot.lane.b32.xlu0 %v1055, 24
      %v7049 = vpop.permute.xlu0 %7048
      %7050 = vrot.lane.b32.xlu0 %v1056, 24
      %v7051 = vpop.permute.xlu0 %7050
      %7052 = vrot.lane.b32.xlu0 %v1057, 24
      %v7053 = vpop.permute.xlu0 %7052
      %7054 = vrot.lane.b32.xlu0 %v1058, 24
      %v7055 = vpop.permute.xlu0 %7054
      %7056 = vrot.lane.b32.xlu0 %v1059, 24
      %v7057 = vpop.permute.xlu0 %7056
      %7058 = vrot.lane.b32.xlu0 %v1060, 24
      %v7059 = vpop.permute.xlu0 %7058
      %7060 = vrot.lane.b32.xlu0 %v1061, 24
      %v7061 = vpop.permute.xlu0 %7060
      %7062 = vrot.lane.b32.xlu0 %v1062, 24
      %v7063 = vpop.permute.xlu0 %7062
      %7064 = vrot.lane.b32.xlu0 %v1063, 24
      %v7065 = vpop.permute.xlu0 %7064
      %7066 = vrot.lane.b32.xlu0 %v1064, 24
      %v7067 = vpop.permute.xlu0 %7066
      %7068 = vrot.lane.b32.xlu0 %v1065, 24
      %v7069 = vpop.permute.xlu0 %7068
      %7070 = vrot.lane.b32.xlu0 %v1066, 24
      %v7071 = vpop.permute.xlu0 %7070
      %7072 = vrot.lane.b32.xlu0 %v1067, 24
      %v7073 = vpop.permute.xlu0 %7072
      %7074 = vrot.lane.b32.xlu0 %v1068, 24
      %v7075 = vpop.permute.xlu0 %7074
      %7076 = vrot.lane.b32.xlu0 %v1069, 24
      %v7077 = vpop.permute.xlu0 %7076
      %7078 = vrot.lane.b32.xlu0 %v1074, 24
      %v7079 = vpop.permute.xlu0 %7078
      %7080 = vrot.lane.b32.xlu0 %v1075, 24
      %v7081 = vpop.permute.xlu0 %7080
      %7082 = vrot.lane.b32.xlu0 %v1076, 24
      %v7083 = vpop.permute.xlu0 %7082
      %7084 = vrot.lane.b32.xlu0 %v1077, 24
      %v7085 = vpop.permute.xlu0 %7084
      %7086 = vrot.lane.b32.xlu0 %v1078, 24
      %v7087 = vpop.permute.xlu0 %7086
      %7088 = vrot.lane.b32.xlu0 %v1079, 24
      %v7089 = vpop.permute.xlu0 %7088
      %7090 = vrot.lane.b32.xlu0 %v1080, 24
      %v7091 = vpop.permute.xlu0 %7090
      %7092 = vrot.lane.b32.xlu0 %v1081, 24
      %v7093 = vpop.permute.xlu0 %7092
      %7094 = vrot.lane.b32.xlu0 %v1082, 24
      %v7095 = vpop.permute.xlu0 %7094
      %7096 = vrot.lane.b32.xlu0 %v1083, 24
      %v7097 = vpop.permute.xlu0 %7096
      %7098 = vrot.lane.b32.xlu0 %v1084, 24
      %v7099 = vpop.permute.xlu0 %7098
      %7100 = vrot.lane.b32.xlu0 %v1085, 24
      %v7101 = vpop.permute.xlu0 %7100
      %7102 = vrot.lane.b32.xlu0 %v1086, 24
      %v7103 = vpop.permute.xlu0 %7102
      %7104 = vrot.lane.b32.xlu0 %v1087, 24
      %v7105 = vpop.permute.xlu0 %7104
      %7106 = vrot.lane.b32.xlu0 %v1088, 24
      %v7107 = vpop.permute.xlu0 %7106
      %7108 = vrot.lane.b32.xlu0 %v1089, 24
      %v7109 = vpop.permute.xlu0 %7108
      %v7196 = vrot.slane %v1088, 1
      %v7197 = vrot.slane %v1089, 1
      %v7198 = vsel %vm1220, %v7196, %v7197
      %7199 = vrot.lane.b32.xlu0 %v1274, 28
      %v7200 = vpop.permute.xlu0 %7199
      %7201 = vrot.lane.b32.xlu0 %v1273, 28
      %v7202 = vpop.permute.xlu0 %7201
      %7203 = vrot.lane.b32.xlu0 %v1276, 28
      %v7204 = vpop.permute.xlu0 %7203
      %7205 = vrot.lane.b32.xlu0 %v1279, 28
      %v7206 = vpop.permute.xlu0 %7205
      %7207 = vrot.lane.b32.xlu0 %v1282, 28
      %v7208 = vpop.permute.xlu0 %7207
      %7209 = vrot.lane.b32.xlu0 %v1285, 28
      %v7210 = vpop.permute.xlu0 %7209
      %7211 = vrot.lane.b32.xlu0 %v1288, 28
      %v7212 = vpop.permute.xlu0 %7211
      %7213 = vrot.lane.b32.xlu0 %v1291, 28
      %v7214 = vpop.permute.xlu0 %7213
      %7215 = vrot.lane.b32.xlu0 %v2205, 28
      %v7216 = vpop.permute.xlu0 %7215
      %7217 = vrot.lane.b32.xlu0 %v1298, 28
      %v7218 = vpop.permute.xlu0 %7217
      %7219 = vrot.lane.b32.xlu0 %v1297, 28
      %v7220 = vpop.permute.xlu0 %7219
      %7221 = vrot.lane.b32.xlu0 %v1300, 28
      %v7222 = vpop.permute.xlu0 %7221
      %7223 = vrot.lane.b32.xlu0 %v1303, 28
      %v7224 = vpop.permute.xlu0 %7223
      %7225 = vrot.lane.b32.xlu0 %v1306, 28
      %v7226 = vpop.permute.xlu0 %7225
      %7227 = vrot.lane.b32.xlu0 %v1309, 28
      %v7228 = vpop.permute.xlu0 %7227
      %7229 = vrot.lane.b32.xlu0 %v1312, 28
      %v7230 = vpop.permute.xlu0 %7229
      %7231 = vrot.lane.b32.xlu0 %v1315, 28
      %v7232 = vpop.permute.xlu0 %7231
      %7233 = vrot.lane.b32.xlu0 %v2208, 28
      %v7234 = vpop.permute.xlu0 %7233
      %7235 = vrot.lane.b32.xlu0 %v1322, 28
      %v7236 = vpop.permute.xlu0 %7235
      %7237 = vrot.lane.b32.xlu0 %v1321, 28
      %v7238 = vpop.permute.xlu0 %7237
      %7239 = vrot.lane.b32.xlu0 %v1324, 28
      %v7240 = vpop.permute.xlu0 %7239
      %7241 = vrot.lane.b32.xlu0 %v1327, 28
      %v7242 = vpop.permute.xlu0 %7241
      %7243 = vrot.lane.b32.xlu0 %v1330, 28
      %v7244 = vpop.permute.xlu0 %7243
      %7245 = vrot.lane.b32.xlu0 %v1333, 28
      %v7246 = vpop.permute.xlu0 %7245
      %7247 = vrot.lane.b32.xlu0 %v1336, 28
      %v7248 = vpop.permute.xlu0 %7247
      %7249 = vrot.lane.b32.xlu0 %v1339, 28
      %v7250 = vpop.permute.xlu0 %7249
      %7251 = vrot.lane.b32.xlu0 %v2211, 28
      %v7252 = vpop.permute.xlu0 %7251
      %7253 = vrot.lane.b32.xlu0 %v1346, 28
      %v7254 = vpop.permute.xlu0 %7253
      %7255 = vrot.lane.b32.xlu0 %v1345, 28
      %v7256 = vpop.permute.xlu0 %7255
      %7257 = vrot.lane.b32.xlu0 %v1348, 28
      %v7258 = vpop.permute.xlu0 %7257
      %7259 = vrot.lane.b32.xlu0 %v1351, 28
      %v7260 = vpop.permute.xlu0 %7259
      %7261 = vrot.lane.b32.xlu0 %v1354, 28
      %v7262 = vpop.permute.xlu0 %7261
      %7263 = vrot.lane.b32.xlu0 %v1357, 28
      %v7264 = vpop.permute.xlu0 %7263
      %7265 = vrot.lane.b32.xlu0 %v1360, 28
      %v7266 = vpop.permute.xlu0 %7265
      %7267 = vrot.lane.b32.xlu0 %v1363, 28
      %v7268 = vpop.permute.xlu0 %7267
      %7269 = vrot.lane.b32.xlu0 %v2214, 28
      %v7270 = vpop.permute.xlu0 %7269
      %7271 = vrot.lane.b32.xlu0 %v1370, 28
      %v7272 = vpop.permute.xlu0 %7271
      %7273 = vrot.lane.b32.xlu0 %v1369, 28
      %v7274 = vpop.permute.xlu0 %7273
      %7275 = vrot.lane.b32.xlu0 %v1372, 28
      %v7276 = vpop.permute.xlu0 %7275
      %7277 = vrot.lane.b32.xlu0 %v1375, 28
      %v7278 = vpop.permute.xlu0 %7277
      %7279 = vrot.lane.b32.xlu0 %v1378, 28
      %v7280 = vpop.permute.xlu0 %7279
      %7281 = vrot.lane.b32.xlu0 %v1381, 28
      %v7282 = vpop.permute.xlu0 %7281
      %7283 = vrot.lane.b32.xlu0 %v1384, 28
      %v7284 = vpop.permute.xlu0 %7283
      %7285 = vrot.lane.b32.xlu0 %v1387, 28
      %v7286 = vpop.permute.xlu0 %7285
      %7287 = vrot.lane.b32.xlu0 %v2217, 28
      %v7288 = vpop.permute.xlu0 %7287
      %7289 = vrot.lane.b32.xlu0 %v1394, 28
      %v7290 = vpop.permute.xlu0 %7289
      %7291 = vrot.lane.b32.xlu0 %v1393, 28
      %v7292 = vpop.permute.xlu0 %7291
      %7293 = vrot.lane.b32.xlu0 %v1396, 28
      %v7294 = vpop.permute.xlu0 %7293
      %7295 = vrot.lane.b32.xlu0 %v1399, 28
      %v7296 = vpop.permute.xlu0 %7295
      %7297 = vrot.lane.b32.xlu0 %v1402, 28
      %v7298 = vpop.permute.xlu0 %7297
      %7299 = vrot.lane.b32.xlu0 %v1405, 28
      %v7300 = vpop.permute.xlu0 %7299
      %7301 = vrot.lane.b32.xlu0 %v1408, 28
      %v7302 = vpop.permute.xlu0 %7301
      %7303 = vrot.lane.b32.xlu0 %v1411, 28
      %v7304 = vpop.permute.xlu0 %7303
      %7305 = vrot.lane.b32.xlu0 %v2220, 28
      %v7306 = vpop.permute.xlu0 %7305
      %7307 = vrot.lane.b32.xlu0 %v3483, 28
      %v7308 = vpop.permute.xlu0 %7307
      %7309 = vrot.lane.b32.xlu0 %v3482, 28
      %v7310 = vpop.permute.xlu0 %7309
      %7311 = vrot.lane.b32.xlu0 %v3486, 28
      %v7312 = vpop.permute.xlu0 %7311
      %7313 = vrot.lane.b32.xlu0 %v3485, 28
      %v7314 = vpop.permute.xlu0 %7313
      %7315 = vrot.lane.b32.xlu0 %v3489, 28
      %v7316 = vpop.permute.xlu0 %7315
      %7317 = vrot.lane.b32.xlu0 %v3488, 28
      %v7318 = vpop.permute.xlu0 %7317
      %7319 = vrot.lane.b32.xlu0 %v3492, 28
      %v7320 = vpop.permute.xlu0 %7319
      %7321 = vrot.lane.b32.xlu0 %v3491, 28
      %v7322 = vpop.permute.xlu0 %7321
      %7323 = vrot.lane.b32.xlu0 %v3495, 28
      %v7324 = vpop.permute.xlu0 %7323
      %7325 = vrot.lane.b32.xlu0 %v3494, 28
      %v7326 = vpop.permute.xlu0 %7325
      %7327 = vrot.lane.b32.xlu0 %v3498, 28
      %v7328 = vpop.permute.xlu0 %7327
      %7329 = vrot.lane.b32.xlu0 %v3497, 28
      %v7330 = vpop.permute.xlu0 %7329
      %7331 = vrot.lane.b32.xlu0 %v3501, 28
      %v7332 = vpop.permute.xlu0 %7331
      %7333 = vrot.lane.b32.xlu0 %v3500, 28
      %v7334 = vpop.permute.xlu0 %7333
      %7335 = vrot.lane.b32.xlu0 %v4106, 28
      %v7336 = vpop.permute.xlu0 %7335
      %7337 = vrot.lane.b32.xlu0 %v4105, 28
      %v7338 = vpop.permute.xlu0 %7337
      %7339 = vrot.lane.b32.xlu0 %v6459, 28
      %v7340 = vpop.permute.xlu0 %7339
      %7341 = vrot.lane.b32.xlu0 %v6458, 28
      %v7342 = vpop.permute.xlu0 %7341
      %7343 = vrot.lane.b32.xlu0 %v6462, 28
      %v7344 = vpop.permute.xlu0 %7343
      %7345 = vrot.lane.b32.xlu0 %v6461, 28
      %v7346 = vpop.permute.xlu0 %7345
      %7347 = vrot.lane.b32.xlu0 %v6465, 28
      %v7348 = vpop.permute.xlu0 %7347
      %7349 = vrot.lane.b32.xlu0 %v6464, 28
      %v7350 = vpop.permute.xlu0 %7349
      %7351 = vrot.lane.b32.xlu0 %v6468, 28
      %v7352 = vpop.permute.xlu0 %7351
      %7353 = vrot.lane.b32.xlu0 %v6467, 28
      %v7354 = vpop.permute.xlu0 %7353
      %7355 = vrot.lane.b32.xlu0 %v6471, 28
      %v7356 = vpop.permute.xlu0 %7355
      %7357 = vrot.lane.b32.xlu0 %v6470, 28
      %v7358 = vpop.permute.xlu0 %7357
      %7359 = vrot.lane.b32.xlu0 %v6474, 28
      %v7360 = vpop.permute.xlu0 %7359
      %7361 = vrot.lane.b32.xlu0 %v6473, 28
      %v7362 = vpop.permute.xlu0 %7361
      %7363 = vrot.lane.b32.xlu0 %v6477, 28
      %v7364 = vpop.permute.xlu0 %7363
      %7365 = vrot.lane.b32.xlu0 %v6476, 28
      %v7366 = vpop.permute.xlu0 %7365
      %7367 = vrot.lane.b32.xlu0 %v7198, 28
      %v7368 = vpop.permute.xlu0 %7367
      %7369 = vrot.lane.b32.xlu0 %v7197, 28
      %v7370 = vpop.permute.xlu0 %7369
      %v7458 = vrot.slane %v950, 7
      %v7459 = vrot.slane %v970, 7
      %v7460 = vrot.slane %v990, 7
      %v7461 = vrot.slane %v1010, 7
      %v7462 = vrot.slane %v1030, 7
      %v7463 = vrot.slane %v1050, 7
      %v7464 = vrot.slane %v1070, 7
      %v7465 = vrot.slane %v1090, 7
      %7466 = vrot.lane.b32.xlu0 %v5934, 32
      %v7467 = vpop.permute.xlu0 %7466
      %7468 = vrot.lane.b32.xlu0 %v5935, 32
      %v7469 = vpop.permute.xlu0 %7468
      %7470 = vrot.lane.b32.xlu0 %v5936, 32
      %v7471 = vpop.permute.xlu0 %7470
      %7472 = vrot.lane.b32.xlu0 %v5937, 32
      %v7473 = vpop.permute.xlu0 %7472
      %7474 = vrot.lane.b32.xlu0 %v5938, 32
      %v7475 = vpop.permute.xlu0 %7474
      %7476 = vrot.lane.b32.xlu0 %v5939, 32
      %v7477 = vpop.permute.xlu0 %7476
      %7478 = vrot.lane.b32.xlu0 %v6737, 32
      %v7479 = vpop.permute.xlu0 %7478
      %7480 = vrot.lane.b32.xlu0 %v7458, 32
      %v7481 = vpop.permute.xlu0 %7480
      %7482 = vrot.lane.b32.xlu0 %v5942, 32
      %v7483 = vpop.permute.xlu0 %7482
      %7484 = vrot.lane.b32.xlu0 %v5943, 32
      %v7485 = vpop.permute.xlu0 %7484
      %7486 = vrot.lane.b32.xlu0 %v5944, 32
      %v7487 = vpop.permute.xlu0 %7486
      %7488 = vrot.lane.b32.xlu0 %v5945, 32
      %v7489 = vpop.permute.xlu0 %7488
      %7490 = vrot.lane.b32.xlu0 %v5946, 32
      %v7491 = vpop.permute.xlu0 %7490
      %7492 = vrot.lane.b32.xlu0 %v5947, 32
      %v7493 = vpop.permute.xlu0 %7492
      %7494 = vrot.lane.b32.xlu0 %v6738, 32
      %v7495 = vpop.permute.xlu0 %7494
      %7496 = vrot.lane.b32.xlu0 %v7459, 32
      %v7497 = vpop.permute.xlu0 %7496
      %7498 = vrot.lane.b32.xlu0 %v5950, 32
      %v7499 = vpop.permute.xlu0 %7498
      %7500 = vrot.lane.b32.xlu0 %v5951, 32
      %v7501 = vpop.permute.xlu0 %7500
      %7502 = vrot.lane.b32.xlu0 %v5952, 32
      %v7503 = vpop.permute.xlu0 %7502
      %7504 = vrot.lane.b32.xlu0 %v5953, 32
      %v7505 = vpop.permute.xlu0 %7504
      %7506 = vrot.lane.b32.xlu0 %v5954, 32
      %v7507 = vpop.permute.xlu0 %7506
      %7508 = vrot.lane.b32.xlu0 %v5955, 32
      %v7509 = vpop.permute.xlu0 %7508
      %7510 = vrot.lane.b32.xlu0 %v6739, 32
      %v7511 = vpop.permute.xlu0 %7510
      %7512 = vrot.lane.b32.xlu0 %v7460, 32
      %v7513 = vpop.permute.xlu0 %7512
      %7514 = vrot.lane.b32.xlu0 %v5958, 32
      %v7515 = vpop.permute.xlu0 %7514
      %7516 = vrot.lane.b32.xlu0 %v5959, 32
      %v7517 = vpop.permute.xlu0 %7516
      %7518 = vrot.lane.b32.xlu0 %v5960, 32
      %v7519 = vpop.permute.xlu0 %7518
      %7520 = vrot.lane.b32.xlu0 %v5961, 32
      %v7521 = vpop.permute.xlu0 %7520
      %7522 = vrot.lane.b32.xlu0 %v5962, 32
      %v7523 = vpop.permute.xlu0 %7522
      %7524 = vrot.lane.b32.xlu0 %v5963, 32
      %v7525 = vpop.permute.xlu0 %7524
      %7526 = vrot.lane.b32.xlu0 %v6740, 32
      %v7527 = vpop.permute.xlu0 %7526
      %7528 = vrot.lane.b32.xlu0 %v7461, 32
      %v7529 = vpop.permute.xlu0 %7528
      %7530 = vrot.lane.b32.xlu0 %v5966, 32
      %v7531 = vpop.permute.xlu0 %7530
      %7532 = vrot.lane.b32.xlu0 %v5967, 32
      %v7533 = vpop.permute.xlu0 %7532
      %7534 = vrot.lane.b32.xlu0 %v5968, 32
      %v7535 = vpop.permute.xlu0 %7534
      %7536 = vrot.lane.b32.xlu0 %v5969, 32
      %v7537 = vpop.permute.xlu0 %7536
      %7538 = vrot.lane.b32.xlu0 %v5970, 32
      %v7539 = vpop.permute.xlu0 %7538
      %7540 = vrot.lane.b32.xlu0 %v5971, 32
      %v7541 = vpop.permute.xlu0 %7540
      %7542 = vrot.lane.b32.xlu0 %v6741, 32
      %v7543 = vpop.permute.xlu0 %7542
      %7544 = vrot.lane.b32.xlu0 %v7462, 32
      %v7545 = vpop.permute.xlu0 %7544
      %7546 = vrot.lane.b32.xlu0 %v5974, 32
      %v7547 = vpop.permute.xlu0 %7546
      %7548 = vrot.lane.b32.xlu0 %v5975, 32
      %v7549 = vpop.permute.xlu0 %7548
      %7550 = vrot.lane.b32.xlu0 %v5976, 32
      %v7551 = vpop.permute.xlu0 %7550
      %7552 = vrot.lane.b32.xlu0 %v5977, 32
      %v7553 = vpop.permute.xlu0 %7552
      %7554 = vrot.lane.b32.xlu0 %v5978, 32
      %v7555 = vpop.permute.xlu0 %7554
      %7556 = vrot.lane.b32.xlu0 %v5979, 32
      %v7557 = vpop.permute.xlu0 %7556
      %7558 = vrot.lane.b32.xlu0 %v6742, 32
      %v7559 = vpop.permute.xlu0 %7558
      %7560 = vrot.lane.b32.xlu0 %v7463, 32
      %v7561 = vpop.permute.xlu0 %7560
      %7562 = vrot.lane.b32.xlu0 %v5982, 32
      %v7563 = vpop.permute.xlu0 %7562
      %7564 = vrot.lane.b32.xlu0 %v5983, 32
      %v7565 = vpop.permute.xlu0 %7564
      %7566 = vrot.lane.b32.xlu0 %v5984, 32
      %v7567 = vpop.permute.xlu0 %7566
      %7568 = vrot.lane.b32.xlu0 %v5985, 32
      %v7569 = vpop.permute.xlu0 %7568
      %7570 = vrot.lane.b32.xlu0 %v5986, 32
      %v7571 = vpop.permute.xlu0 %7570
      %7572 = vrot.lane.b32.xlu0 %v5987, 32
      %v7573 = vpop.permute.xlu0 %7572
      %7574 = vrot.lane.b32.xlu0 %v6743, 32
      %v7575 = vpop.permute.xlu0 %7574
      %7576 = vrot.lane.b32.xlu0 %v7464, 32
      %v7577 = vpop.permute.xlu0 %7576
      %7578 = vrot.lane.b32.xlu0 %v5990, 32
      %v7579 = vpop.permute.xlu0 %7578
      %7580 = vrot.lane.b32.xlu0 %v5991, 32
      %v7581 = vpop.permute.xlu0 %7580
      %7582 = vrot.lane.b32.xlu0 %v5992, 32
      %v7583 = vpop.permute.xlu0 %7582
      %7584 = vrot.lane.b32.xlu0 %v5993, 32
      %v7585 = vpop.permute.xlu0 %7584
      %7586 = vrot.lane.b32.xlu0 %v5994, 32
      %v7587 = vpop.permute.xlu0 %7586
      %7588 = vrot.lane.b32.xlu0 %v5995, 32
      %v7589 = vpop.permute.xlu0 %7588
      %7590 = vrot.lane.b32.xlu0 %v6744, 32
      %v7591 = vpop.permute.xlu0 %7590
      %7592 = vrot.lane.b32.xlu0 %v7465, 32
      %v7593 = vpop.permute.xlu0 %7592
      %7659 = vrot.lane.b32.xlu0 %v937, 36
      %v7660 = vpop.permute.xlu0 %7659
      %7661 = vrot.lane.b32.xlu0 %v939, 36
      %v7662 = vpop.permute.xlu0 %7661
      %7663 = vrot.lane.b32.xlu0 %v941, 36
      %v7664 = vpop.permute.xlu0 %7663
      %7665 = vrot.lane.b32.xlu0 %v943, 36
      %v7666 = vpop.permute.xlu0 %7665
      %7667 = vrot.lane.b32.xlu0 %v945, 36
      %v7668 = vpop.permute.xlu0 %7667
      %7669 = vrot.lane.b32.xlu0 %v947, 36
      %v7670 = vpop.permute.xlu0 %7669
      %7671 = vrot.lane.b32.xlu0 %v948, 36
      %v7672 = vpop.permute.xlu0 %7671
      %7673 = vrot.lane.b32.xlu0 %v949, 36
      %v7674 = vpop.permute.xlu0 %7673
      %7675 = vrot.lane.b32.xlu0 %v950, 36
      %v7676 = vpop.permute.xlu0 %7675
      %7677 = vrot.lane.b32.xlu0 %v951, 36
      %v7678 = vpop.permute.xlu0 %7677
      %7679 = vrot.lane.b32.xlu0 %v957, 36
      %v7680 = vpop.permute.xlu0 %7679
      %7681 = vrot.lane.b32.xlu0 %v959, 36
      %v7682 = vpop.permute.xlu0 %7681
      %7683 = vrot.lane.b32.xlu0 %v961, 36
      %v7684 = vpop.permute.xlu0 %7683
      %7685 = vrot.lane.b32.xlu0 %v963, 36
      %v7686 = vpop.permute.xlu0 %7685
      %7687 = vrot.lane.b32.xlu0 %v965, 36
      %v7688 = vpop.permute.xlu0 %7687
      %7689 = vrot.lane.b32.xlu0 %v967, 36
      %v7690 = vpop.permute.xlu0 %7689
      %7691 = vrot.lane.b32.xlu0 %v968, 36
      %v7692 = vpop.permute.xlu0 %7691
      %7693 = vrot.lane.b32.xlu0 %v969, 36
      %v7694 = vpop.permute.xlu0 %7693
      %7695 = vrot.lane.b32.xlu0 %v970, 36
      %v7696 = vpop.permute.xlu0 %7695
      %7697 = vrot.lane.b32.xlu0 %v971, 36
      %v7698 = vpop.permute.xlu0 %7697
      %7699 = vrot.lane.b32.xlu0 %v977, 36
      %v7700 = vpop.permute.xlu0 %7699
      %7701 = vrot.lane.b32.xlu0 %v979, 36
      %v7702 = vpop.permute.xlu0 %7701
      %7703 = vrot.lane.b32.xlu0 %v981, 36
      %v7704 = vpop.permute.xlu0 %7703
      %7705 = vrot.lane.b32.xlu0 %v983, 36
      %v7706 = vpop.permute.xlu0 %7705
      %7707 = vrot.lane.b32.xlu0 %v985, 36
      %v7708 = vpop.permute.xlu0 %7707
      %7709 = vrot.lane.b32.xlu0 %v987, 36
      %v7710 = vpop.permute.xlu0 %7709
      %7711 = vrot.lane.b32.xlu0 %v988, 36
      %v7712 = vpop.permute.xlu0 %7711
      %7713 = vrot.lane.b32.xlu0 %v989, 36
      %v7714 = vpop.permute.xlu0 %7713
      %7715 = vrot.lane.b32.xlu0 %v990, 36
      %v7716 = vpop.permute.xlu0 %7715
      %7717 = vrot.lane.b32.xlu0 %v991, 36
      %v7718 = vpop.permute.xlu0 %7717
      %7719 = vrot.lane.b32.xlu0 %v997, 36
      %v7720 = vpop.permute.xlu0 %7719
      %7721 = vrot.lane.b32.xlu0 %v999, 36
      %v7722 = vpop.permute.xlu0 %7721
      %7723 = vrot.lane.b32.xlu0 %v1001, 36
      %v7724 = vpop.permute.xlu0 %7723
      %7725 = vrot.lane.b32.xlu0 %v1003, 36
      %v7726 = vpop.permute.xlu0 %7725
      %7727 = vrot.lane.b32.xlu0 %v1005, 36
      %v7728 = vpop.permute.xlu0 %7727
      %7729 = vrot.lane.b32.xlu0 %v1007, 36
      %v7730 = vpop.permute.xlu0 %7729
      %7731 = vrot.lane.b32.xlu0 %v1008, 36
      %v7732 = vpop.permute.xlu0 %7731
      %7733 = vrot.lane.b32.xlu0 %v1009, 36
      %v7734 = vpop.permute.xlu0 %7733
      %7735 = vrot.lane.b32.xlu0 %v1010, 36
      %v7736 = vpop.permute.xlu0 %7735
      %7737 = vrot.lane.b32.xlu0 %v1011, 36
      %v7738 = vpop.permute.xlu0 %7737
      %7739 = vrot.lane.b32.xlu0 %v1017, 36
      %v7740 = vpop.permute.xlu0 %7739
      %7741 = vrot.lane.b32.xlu0 %v1019, 36
      %v7742 = vpop.permute.xlu0 %7741
      %7743 = vrot.lane.b32.xlu0 %v1021, 36
      %v7744 = vpop.permute.xlu0 %7743
      %7745 = vrot.lane.b32.xlu0 %v1023, 36
      %v7746 = vpop.permute.xlu0 %7745
      %7747 = vrot.lane.b32.xlu0 %v1025, 36
      %v7748 = vpop.permute.xlu0 %7747
      %7749 = vrot.lane.b32.xlu0 %v1027, 36
      %v7750 = vpop.permute.xlu0 %7749
      %7751 = vrot.lane.b32.xlu0 %v1028, 36
      %v7752 = vpop.permute.xlu0 %7751
      %7753 = vrot.lane.b32.xlu0 %v1029, 36
      %v7754 = vpop.permute.xlu0 %7753
      %7755 = vrot.lane.b32.xlu0 %v1030, 36
      %v7756 = vpop.permute.xlu0 %7755
      %7757 = vrot.lane.b32.xlu0 %v1031, 36
      %v7758 = vpop.permute.xlu0 %7757
      %7759 = vrot.lane.b32.xlu0 %v1037, 36
      %v7760 = vpop.permute.xlu0 %7759
      %7761 = vrot.lane.b32.xlu0 %v1039, 36
      %v7762 = vpop.permute.xlu0 %7761
      %7763 = vrot.lane.b32.xlu0 %v1041, 36
      %v7764 = vpop.permute.xlu0 %7763
      %7765 = vrot.lane.b32.xlu0 %v1043, 36
      %v7766 = vpop.permute.xlu0 %7765
      %7767 = vrot.lane.b32.xlu0 %v1045, 36
      %v7768 = vpop.permute.xlu0 %7767
      %7769 = vrot.lane.b32.xlu0 %v1047, 36
      %v7770 = vpop.permute.xlu0 %7769
      %7771 = vrot.lane.b32.xlu0 %v1048, 36
      %v7772 = vpop.permute.xlu0 %7771
      %7773 = vrot.lane.b32.xlu0 %v1049, 36
      %v7774 = vpop.permute.xlu0 %7773
      %7775 = vrot.lane.b32.xlu0 %v1050, 36
      %v7776 = vpop.permute.xlu0 %7775
      %7777 = vrot.lane.b32.xlu0 %v1051, 36
      %v7778 = vpop.permute.xlu0 %7777
      %7779 = vrot.lane.b32.xlu0 %v1057, 36
      %v7780 = vpop.permute.xlu0 %7779
      %7781 = vrot.lane.b32.xlu0 %v1059, 36
      %v7782 = vpop.permute.xlu0 %7781
      %7783 = vrot.lane.b32.xlu0 %v1061, 36
      %v7784 = vpop.permute.xlu0 %7783
      %7785 = vrot.lane.b32.xlu0 %v1063, 36
      %v7786 = vpop.permute.xlu0 %7785
      %7787 = vrot.lane.b32.xlu0 %v1065, 36
      %v7788 = vpop.permute.xlu0 %7787
      %7789 = vrot.lane.b32.xlu0 %v1067, 36
      %v7790 = vpop.permute.xlu0 %7789
      %7791 = vrot.lane.b32.xlu0 %v1068, 36
      %v7792 = vpop.permute.xlu0 %7791
      %7793 = vrot.lane.b32.xlu0 %v1069, 36
      %v7794 = vpop.permute.xlu0 %7793
      %7795 = vrot.lane.b32.xlu0 %v1070, 36
      %v7796 = vpop.permute.xlu0 %7795
      %7797 = vrot.lane.b32.xlu0 %v1071, 36
      %v7798 = vpop.permute.xlu0 %7797
      %7799 = vrot.lane.b32.xlu0 %v1076, 36
      %v7800 = vpop.permute.xlu0 %7799
      %7801 = vrot.lane.b32.xlu0 %v1077, 36
      %v7802 = vpop.permute.xlu0 %7801
      %7803 = vrot.lane.b32.xlu0 %v1078, 36
      %v7804 = vpop.permute.xlu0 %7803
      %7805 = vrot.lane.b32.xlu0 %v1079, 36
      %v7806 = vpop.permute.xlu0 %7805
      %7807 = vrot.lane.b32.xlu0 %v1080, 36
      %v7808 = vpop.permute.xlu0 %7807
      %7809 = vrot.lane.b32.xlu0 %v1081, 36
      %v7810 = vpop.permute.xlu0 %7809
      %7811 = vrot.lane.b32.xlu0 %v1082, 36
      %v7812 = vpop.permute.xlu0 %7811
      %7813 = vrot.lane.b32.xlu0 %v1083, 36
      %v7814 = vpop.permute.xlu0 %7813
      %7815 = vrot.lane.b32.xlu0 %v1084, 36
      %v7816 = vpop.permute.xlu0 %7815
      %7817 = vrot.lane.b32.xlu0 %v1085, 36
      %v7818 = vpop.permute.xlu0 %7817
      %7819 = vrot.lane.b32.xlu0 %v1086, 36
      %v7820 = vpop.permute.xlu0 %7819
      %7821 = vrot.lane.b32.xlu0 %v1087, 36
      %v7822 = vpop.permute.xlu0 %7821
      %7823 = vrot.lane.b32.xlu0 %v1088, 36
      %v7824 = vpop.permute.xlu0 %7823
      %7825 = vrot.lane.b32.xlu0 %v1089, 36
      %v7826 = vpop.permute.xlu0 %7825
      %7827 = vrot.lane.b32.xlu0 %v1090, 36
      %v7828 = vpop.permute.xlu0 %7827
      %7829 = vrot.lane.b32.xlu0 %v1091, 36
      %v7830 = vpop.permute.xlu0 %7829
      %v7917 = vrot.slane %v1090, 1
      %v7918 = vrot.slane %v1091, 1
      %v7919 = vsel %vm1220, %v7917, %v7918
      %7920 = vrot.lane.b32.xlu0 %v1276, 40
      %v7921 = vpop.permute.xlu0 %7920
      %7922 = vrot.lane.b32.xlu0 %v1279, 40
      %v7923 = vpop.permute.xlu0 %7922
      %7924 = vrot.lane.b32.xlu0 %v1282, 40
      %v7925 = vpop.permute.xlu0 %7924
      %7926 = vrot.lane.b32.xlu0 %v1285, 40
      %v7927 = vpop.permute.xlu0 %7926
      %7928 = vrot.lane.b32.xlu0 %v1288, 40
      %v7929 = vpop.permute.xlu0 %7928
      %7930 = vrot.lane.b32.xlu0 %v1291, 40
      %v7931 = vpop.permute.xlu0 %7930
      %7932 = vrot.lane.b32.xlu0 %v2206, 40
      %v7933 = vpop.permute.xlu0 %7932
      %7934 = vrot.lane.b32.xlu0 %v2205, 40
      %v7935 = vpop.permute.xlu0 %7934
      %7936 = vrot.lane.b32.xlu0 %v2846, 40
      %v7937 = vpop.permute.xlu0 %7936
      %7938 = vrot.lane.b32.xlu0 %v2845, 40
      %v7939 = vpop.permute.xlu0 %7938
      %7940 = vrot.lane.b32.xlu0 %v1300, 40
      %v7941 = vpop.permute.xlu0 %7940
      %7942 = vrot.lane.b32.xlu0 %v1303, 40
      %v7943 = vpop.permute.xlu0 %7942
      %7944 = vrot.lane.b32.xlu0 %v1306, 40
      %v7945 = vpop.permute.xlu0 %7944
      %7946 = vrot.lane.b32.xlu0 %v1309, 40
      %v7947 = vpop.permute.xlu0 %7946
      %7948 = vrot.lane.b32.xlu0 %v1312, 40
      %v7949 = vpop.permute.xlu0 %7948
      %7950 = vrot.lane.b32.xlu0 %v1315, 40
      %v7951 = vpop.permute.xlu0 %7950
      %7952 = vrot.lane.b32.xlu0 %v2209, 40
      %v7953 = vpop.permute.xlu0 %7952
      %7954 = vrot.lane.b32.xlu0 %v2208, 40
      %v7955 = vpop.permute.xlu0 %7954
      %7956 = vrot.lane.b32.xlu0 %v2849, 40
      %v7957 = vpop.permute.xlu0 %7956
      %7958 = vrot.lane.b32.xlu0 %v2848, 40
      %v7959 = vpop.permute.xlu0 %7958
      %7960 = vrot.lane.b32.xlu0 %v1324, 40
      %v7961 = vpop.permute.xlu0 %7960
      %7962 = vrot.lane.b32.xlu0 %v1327, 40
      %v7963 = vpop.permute.xlu0 %7962
      %7964 = vrot.lane.b32.xlu0 %v1330, 40
      %v7965 = vpop.permute.xlu0 %7964
      %7966 = vrot.lane.b32.xlu0 %v1333, 40
      %v7967 = vpop.permute.xlu0 %7966
      %7968 = vrot.lane.b32.xlu0 %v1336, 40
      %v7969 = vpop.permute.xlu0 %7968
      %7970 = vrot.lane.b32.xlu0 %v1339, 40
      %v7971 = vpop.permute.xlu0 %7970
      %7972 = vrot.lane.b32.xlu0 %v2212, 40
      %v7973 = vpop.permute.xlu0 %7972
      %7974 = vrot.lane.b32.xlu0 %v2211, 40
      %v7975 = vpop.permute.xlu0 %7974
      %7976 = vrot.lane.b32.xlu0 %v2852, 40
      %v7977 = vpop.permute.xlu0 %7976
      %7978 = vrot.lane.b32.xlu0 %v2851, 40
      %v7979 = vpop.permute.xlu0 %7978
      %7980 = vrot.lane.b32.xlu0 %v1348, 40
      %v7981 = vpop.permute.xlu0 %7980
      %7982 = vrot.lane.b32.xlu0 %v1351, 40
      %v7983 = vpop.permute.xlu0 %7982
      %7984 = vrot.lane.b32.xlu0 %v1354, 40
      %v7985 = vpop.permute.xlu0 %7984
      %7986 = vrot.lane.b32.xlu0 %v1357, 40
      %v7987 = vpop.permute.xlu0 %7986
      %7988 = vrot.lane.b32.xlu0 %v1360, 40
      %v7989 = vpop.permute.xlu0 %7988
      %7990 = vrot.lane.b32.xlu0 %v1363, 40
      %v7991 = vpop.permute.xlu0 %7990
      %7992 = vrot.lane.b32.xlu0 %v2215, 40
      %v7993 = vpop.permute.xlu0 %7992
      %7994 = vrot.lane.b32.xlu0 %v2214, 40
      %v7995 = vpop.permute.xlu0 %7994
      %7996 = vrot.lane.b32.xlu0 %v2855, 40
      %v7997 = vpop.permute.xlu0 %7996
      %7998 = vrot.lane.b32.xlu0 %v2854, 40
      %v7999 = vpop.permute.xlu0 %7998
      %8000 = vrot.lane.b32.xlu0 %v1372, 40
      %v8001 = vpop.permute.xlu0 %8000
      %8002 = vrot.lane.b32.xlu0 %v1375, 40
      %v8003 = vpop.permute.xlu0 %8002
      %8004 = vrot.lane.b32.xlu0 %v1378, 40
      %v8005 = vpop.permute.xlu0 %8004
      %8006 = vrot.lane.b32.xlu0 %v1381, 40
      %v8007 = vpop.permute.xlu0 %8006
      %8008 = vrot.lane.b32.xlu0 %v1384, 40
      %v8009 = vpop.permute.xlu0 %8008
      %8010 = vrot.lane.b32.xlu0 %v1387, 40
      %v8011 = vpop.permute.xlu0 %8010
      %8012 = vrot.lane.b32.xlu0 %v2218, 40
      %v8013 = vpop.permute.xlu0 %8012
      %8014 = vrot.lane.b32.xlu0 %v2217, 40
      %v8015 = vpop.permute.xlu0 %8014
      %8016 = vrot.lane.b32.xlu0 %v2858, 40
      %v8017 = vpop.permute.xlu0 %8016
      %8018 = vrot.lane.b32.xlu0 %v2857, 40
      %v8019 = vpop.permute.xlu0 %8018
      %8020 = vrot.lane.b32.xlu0 %v1396, 40
      %v8021 = vpop.permute.xlu0 %8020
      %8022 = vrot.lane.b32.xlu0 %v1399, 40
      %v8023 = vpop.permute.xlu0 %8022
      %8024 = vrot.lane.b32.xlu0 %v1402, 40
      %v8025 = vpop.permute.xlu0 %8024
      %8026 = vrot.lane.b32.xlu0 %v1405, 40
      %v8027 = vpop.permute.xlu0 %8026
      %8028 = vrot.lane.b32.xlu0 %v1408, 40
      %v8029 = vpop.permute.xlu0 %8028
      %8030 = vrot.lane.b32.xlu0 %v1411, 40
      %v8031 = vpop.permute.xlu0 %8030
      %8032 = vrot.lane.b32.xlu0 %v2221, 40
      %v8033 = vpop.permute.xlu0 %8032
      %8034 = vrot.lane.b32.xlu0 %v2220, 40
      %v8035 = vpop.permute.xlu0 %8034
      %8036 = vrot.lane.b32.xlu0 %v2861, 40
      %v8037 = vpop.permute.xlu0 %8036
      %8038 = vrot.lane.b32.xlu0 %v2860, 40
      %v8039 = vpop.permute.xlu0 %8038
      %8040 = vrot.lane.b32.xlu0 %v3485, 40
      %v8041 = vpop.permute.xlu0 %8040
      %8042 = vrot.lane.b32.xlu0 %v3488, 40
      %v8043 = vpop.permute.xlu0 %8042
      %8044 = vrot.lane.b32.xlu0 %v3491, 40
      %v8045 = vpop.permute.xlu0 %8044
      %8046 = vrot.lane.b32.xlu0 %v3494, 40
      %v8047 = vpop.permute.xlu0 %8046
      %8048 = vrot.lane.b32.xlu0 %v3497, 40
      %v8049 = vpop.permute.xlu0 %8048
      %8050 = vrot.lane.b32.xlu0 %v3500, 40
      %v8051 = vpop.permute.xlu0 %8050
      %8052 = vrot.lane.b32.xlu0 %v4106, 40
      %v8053 = vpop.permute.xlu0 %8052
      %8054 = vrot.lane.b32.xlu0 %v4105, 40
      %v8055 = vpop.permute.xlu0 %8054
      %8056 = vrot.lane.b32.xlu0 %v5665, 40
      %v8057 = vpop.permute.xlu0 %8056
      %8058 = vrot.lane.b32.xlu0 %v5664, 40
      %v8059 = vpop.permute.xlu0 %8058
      %8060 = vrot.lane.b32.xlu0 %v6462, 40
      %v8061 = vpop.permute.xlu0 %8060
      %8062 = vrot.lane.b32.xlu0 %v6461, 40
      %v8063 = vpop.permute.xlu0 %8062
      %8064 = vrot.lane.b32.xlu0 %v6465, 40
      %v8065 = vpop.permute.xlu0 %8064
      %8066 = vrot.lane.b32.xlu0 %v6464, 40
      %v8067 = vpop.permute.xlu0 %8066
      %8068 = vrot.lane.b32.xlu0 %v6468, 40
      %v8069 = vpop.permute.xlu0 %8068
      %8070 = vrot.lane.b32.xlu0 %v6467, 40
      %v8071 = vpop.permute.xlu0 %8070
      %8072 = vrot.lane.b32.xlu0 %v6471, 40
      %v8073 = vpop.permute.xlu0 %8072
      %8074 = vrot.lane.b32.xlu0 %v6470, 40
      %v8075 = vpop.permute.xlu0 %8074
      %8076 = vrot.lane.b32.xlu0 %v6474, 40
      %v8077 = vpop.permute.xlu0 %8076
      %8078 = vrot.lane.b32.xlu0 %v6473, 40
      %v8079 = vpop.permute.xlu0 %8078
      %8080 = vrot.lane.b32.xlu0 %v6477, 40
      %v8081 = vpop.permute.xlu0 %8080
      %8082 = vrot.lane.b32.xlu0 %v6476, 40
      %v8083 = vpop.permute.xlu0 %8082
      %8084 = vrot.lane.b32.xlu0 %v7198, 40
      %v8085 = vpop.permute.xlu0 %8084
      %8086 = vrot.lane.b32.xlu0 %v7197, 40
      %v8087 = vpop.permute.xlu0 %8086
      %8088 = vrot.lane.b32.xlu0 %v7919, 40
      %v8089 = vpop.permute.xlu0 %8088
      %8090 = vrot.lane.b32.xlu0 %v7918, 40
      %v8091 = vpop.permute.xlu0 %8090
      %v8178 = vsel %vm4687, %v917, %v5667
      %v8179 = vsel %vm4687, %v919, %v5669
      %v8180 = vsel %vm4687, %v921, %v5671
      %v8181 = vsel %vm4687, %v923, %v5673
      %v8182 = vsel %vm4687, %v925, %v5675
      %v8183 = vsel %vm4687, %v927, %v5677
      %v8184 = vsel %vm4687, %v928, %v5679
      %v8185 = vsel %vm4687, %v929, %v5681
      %v8186 = vsel %vm4687, %v930, %v5683
      %v8187 = vsel %vm4687, %v931, %v5685
      %v8188 = vsel %vm4687, %v937, %v5687
      %v8189 = vsel %vm4687, %v939, %v5689
      %v8190 = vsel %vm4687, %v941, %v5691
      %v8191 = vsel %vm4687, %v943, %v5693
      %v8192 = vsel %vm4687, %v945, %v5695
      %v8193 = vsel %vm4687, %v947, %v5697
      %v8194 = vsel %vm4687, %v948, %v5699
      %v8195 = vsel %vm4687, %v949, %v5701
      %v8196 = vsel %vm4687, %v950, %v5703
      %v8197 = vsel %vm4687, %v951, %v5705
      %v8198 = vsel %vm4687, %v957, %v5707
      %v8199 = vsel %vm4687, %v959, %v5709
      %v8200 = vsel %vm4687, %v961, %v5711
      %v8201 = vsel %vm4687, %v963, %v5713
      %v8202 = vsel %vm4687, %v965, %v5715
      %v8203 = vsel %vm4687, %v967, %v5717
      %v8204 = vsel %vm4687, %v968, %v5719
      %v8205 = vsel %vm4687, %v969, %v5721
      %v8206 = vsel %vm4687, %v970, %v5723
      %v8207 = vsel %vm4687, %v971, %v5725
      %v8208 = vsel %vm4687, %v977, %v5727
      %v8209 = vsel %vm4687, %v979, %v5729
      %v8210 = vsel %vm4687, %v981, %v5731
      %v8211 = vsel %vm4687, %v983, %v5733
      %v8212 = vsel %vm4687, %v985, %v5735
      %v8213 = vsel %vm4687, %v987, %v5737
      %v8214 = vsel %vm4687, %v988, %v5739
      %v8215 = vsel %vm4687, %v989, %v5741
      %v8216 = vsel %vm4687, %v990, %v5743
      %v8217 = vsel %vm4687, %v991, %v5745
      %v8218 = vsel %vm4687, %v997, %v5747
      %v8219 = vsel %vm4687, %v999, %v5749
      %v8220 = vsel %vm4687, %v1001, %v5751
      %v8221 = vsel %vm4687, %v1003, %v5753
      %v8222 = vsel %vm4687, %v1005, %v5755
      %v8223 = vsel %vm4687, %v1007, %v5757
      %v8224 = vsel %vm4687, %v1008, %v5759
      %v8225 = vsel %vm4687, %v1009, %v5761
      %v8226 = vsel %vm4687, %v1010, %v5763
      %v8227 = vsel %vm4687, %v1011, %v5765
      %v8228 = vsel %vm4687, %v1017, %v5767
      %v8229 = vsel %vm4687, %v1019, %v5769
      %v8230 = vsel %vm4687, %v1021, %v5771
      %v8231 = vsel %vm4687, %v1023, %v5773
      %v8232 = vsel %vm4687, %v1025, %v5775
      %v8233 = vsel %vm4687, %v1027, %v5777
      %v8234 = vsel %vm4687, %v1028, %v5779
      %v8235 = vsel %vm4687, %v1029, %v5781
      %v8236 = vsel %vm4687, %v1030, %v5783
      %v8237 = vsel %vm4687, %v1031, %v5785
      %v8238 = vsel %vm4687, %v1037, %v5787
      %v8239 = vsel %vm4687, %v1039, %v5789
      %v8240 = vsel %vm4687, %v1041, %v5791
      %v8241 = vsel %vm4687, %v1043, %v5793
      %v8242 = vsel %vm4687, %v1045, %v5795
      %v8243 = vsel %vm4687, %v1047, %v5797
      %v8244 = vsel %vm4687, %v1048, %v5799
      %v8245 = vsel %vm4687, %v1049, %v5801
      %v8246 = vsel %vm4687, %v1050, %v5803
      %v8247 = vsel %vm4687, %v1051, %v5805
      %v8248 = vsel %vm4687, %v1056, %v5807
      %v8249 = vsel %vm4687, %v1057, %v5809
      %v8250 = vsel %vm4687, %v1058, %v5811
      %v8251 = vsel %vm4687, %v1059, %v5813
      %v8252 = vsel %vm4687, %v1060, %v5815
      %v8253 = vsel %vm4687, %v1061, %v5817
      %v8254 = vsel %vm4687, %v1062, %v5819
      %v8255 = vsel %vm4687, %v1063, %v5821
      %v8256 = vsel %vm4687, %v1064, %v5823
      %v8257 = vsel %vm4687, %v1065, %v5825
      %v8258 = vsel %vm4687, %v1066, %v5827
      %v8259 = vsel %vm4687, %v1067, %v5829
      %v8260 = vsel %vm4687, %v1068, %v5831
      %v8261 = vsel %vm4687, %v1069, %v5833
      %v8262 = vsel %vm4687, %v1070, %v5835
      %v8263 = vsel %vm4687, %v1071, %v5837
      %v8264 = vsel %vm4752, %v4698, %v5997
      %v8265 = vsel %vm4752, %v8178, %v5997
      %v8266 = vsel %vm4752, %v4699, %v5999
      %v8267 = vsel %vm4752, %v8179, %v5999
      %v8268 = vsel %vm4752, %v4700, %v6001
      %v8269 = vsel %vm4752, %v8180, %v6001
      %v8270 = vsel %vm4752, %v4701, %v6003
      %v8271 = vsel %vm4752, %v8181, %v6003
      %v8272 = vsel %vm4752, %v4702, %v6005
      %v8273 = vsel %vm4752, %v8182, %v6005
      %v8274 = vsel %vm4752, %v4703, %v6007
      %v8275 = vsel %vm4752, %v8183, %v6007
      %v8276 = vsel %vm4752, %v8184, %v6009
      %v8277 = vsel %vm4752, %v8185, %v6009
      %v8278 = vsel %vm4752, %v8186, %v6011
      %v8279 = vsel %vm4752, %v8187, %v6011
      %v8280 = vsel %vm4752, %v4706, %v6013
      %v8281 = vsel %vm4752, %v8188, %v6013
      %v8282 = vsel %vm4752, %v4707, %v6015
      %v8283 = vsel %vm4752, %v8189, %v6015
      %v8284 = vsel %vm4752, %v4708, %v6017
      %v8285 = vsel %vm4752, %v8190, %v6017
      %v8286 = vsel %vm4752, %v4709, %v6019
      %v8287 = vsel %vm4752, %v8191, %v6019
      %v8288 = vsel %vm4752, %v4710, %v6021
      %v8289 = vsel %vm4752, %v8192, %v6021
      %v8290 = vsel %vm4752, %v4711, %v6023
      %v8291 = vsel %vm4752, %v8193, %v6023
      %v8292 = vsel %vm4752, %v8194, %v6025
      %v8293 = vsel %vm4752, %v8195, %v6025
      %v8294 = vsel %vm4752, %v8196, %v6027
      %v8295 = vsel %vm4752, %v8197, %v6027
      %v8296 = vsel %vm4752, %v4714, %v6029
      %v8297 = vsel %vm4752, %v8198, %v6029
      %v8298 = vsel %vm4752, %v4715, %v6031
      %v8299 = vsel %vm4752, %v8199, %v6031
      %v8300 = vsel %vm4752, %v4716, %v6033
      %v8301 = vsel %vm4752, %v8200, %v6033
      %v8302 = vsel %vm4752, %v4717, %v6035
      %v8303 = vsel %vm4752, %v8201, %v6035
      %v8304 = vsel %vm4752, %v4718, %v6037
      %v8305 = vsel %vm4752, %v8202, %v6037
      %v8306 = vsel %vm4752, %v4719, %v6039
      %v8307 = vsel %vm4752, %v8203, %v6039
      %v8308 = vsel %vm4752, %v8204, %v6041
      %v8309 = vsel %vm4752, %v8205, %v6041
      %v8310 = vsel %vm4752, %v8206, %v6043
      %v8311 = vsel %vm4752, %v8207, %v6043
      %v8312 = vsel %vm4752, %v4722, %v6045
      %v8313 = vsel %vm4752, %v8208, %v6045
      %v8314 = vsel %vm4752, %v4723, %v6047
      %v8315 = vsel %vm4752, %v8209, %v6047
      %v8316 = vsel %vm4752, %v4724, %v6049
      %v8317 = vsel %vm4752, %v8210, %v6049
      %v8318 = vsel %vm4752, %v4725, %v6051
      %v8319 = vsel %vm4752, %v8211, %v6051
      %v8320 = vsel %vm4752, %v4726, %v6053
      %v8321 = vsel %vm4752, %v8212, %v6053
      %v8322 = vsel %vm4752, %v4727, %v6055
      %v8323 = vsel %vm4752, %v8213, %v6055
      %v8324 = vsel %vm4752, %v8214, %v6057
      %v8325 = vsel %vm4752, %v8215, %v6057
      %v8326 = vsel %vm4752, %v8216, %v6059
      %v8327 = vsel %vm4752, %v8217, %v6059
      %v8328 = vsel %vm4752, %v4730, %v6061
      %v8329 = vsel %vm4752, %v8218, %v6061
      %v8330 = vsel %vm4752, %v4731, %v6063
      %v8331 = vsel %vm4752, %v8219, %v6063
      %v8332 = vsel %vm4752, %v4732, %v6065
      %v8333 = vsel %vm4752, %v8220, %v6065
      %v8334 = vsel %vm4752, %v4733, %v6067
      %v8335 = vsel %vm4752, %v8221, %v6067
      %v8336 = vsel %vm4752, %v4734, %v6069
      %v8337 = vsel %vm4752, %v8222, %v6069
      %v8338 = vsel %vm4752, %v4735, %v6071
      %v8339 = vsel %vm4752, %v8223, %v6071
      %v8340 = vsel %vm4752, %v8224, %v6073
      %v8341 = vsel %vm4752, %v8225, %v6073
      %v8342 = vsel %vm4752, %v8226, %v6075
      %v8343 = vsel %vm4752, %v8227, %v6075
      %v8344 = vsel %vm4752, %v4738, %v6077
      %v8345 = vsel %vm4752, %v8228, %v6077
      %v8346 = vsel %vm4752, %v4739, %v6079
      %v8347 = vsel %vm4752, %v8229, %v6079
      %v8348 = vsel %vm4752, %v4740, %v6081
      %v8349 = vsel %vm4752, %v8230, %v6081
      %v8350 = vsel %vm4752, %v4741, %v6083
      %v8351 = vsel %vm4752, %v8231, %v6083
      %v8352 = vsel %vm4752, %v4742, %v6085
      %v8353 = vsel %vm4752, %v8232, %v6085
      %v8354 = vsel %vm4752, %v4743, %v6087
      %v8355 = vsel %vm4752, %v8233, %v6087
      %v8356 = vsel %vm4752, %v8234, %v6089
      %v8357 = vsel %vm4752, %v8235, %v6089
      %v8358 = vsel %vm4752, %v8236, %v6091
      %v8359 = vsel %vm4752, %v8237, %v6091
      %v8360 = vsel %vm4752, %v4746, %v6093
      %v8361 = vsel %vm4752, %v8238, %v6093
      %v8362 = vsel %vm4752, %v4747, %v6095
      %v8363 = vsel %vm4752, %v8239, %v6095
      %v8364 = vsel %vm4752, %v4748, %v6097
      %v8365 = vsel %vm4752, %v8240, %v6097
      %v8366 = vsel %vm4752, %v4749, %v6099
      %v8367 = vsel %vm4752, %v8241, %v6099
      %v8368 = vsel %vm4752, %v4750, %v6101
      %v8369 = vsel %vm4752, %v8242, %v6101
      %v8370 = vsel %vm4752, %v4751, %v6103
      %v8371 = vsel %vm4752, %v8243, %v6103
      %v8372 = vsel %vm4752, %v8244, %v6105
      %v8373 = vsel %vm4752, %v8245, %v6105
      %v8374 = vsel %vm4752, %v8246, %v6107
      %v8375 = vsel %vm4752, %v8247, %v6107
      %v8376 = vsel %vm4752, %v8248, %v6109
      %v8377 = vsel %vm4752, %v8249, %v6109
      %v8378 = vsel %vm4752, %v8250, %v6111
      %v8379 = vsel %vm4752, %v8251, %v6111
      %v8380 = vsel %vm4752, %v8252, %v6113
      %v8381 = vsel %vm4752, %v8253, %v6113
      %v8382 = vsel %vm4752, %v8254, %v6115
      %v8383 = vsel %vm4752, %v8255, %v6115
      %v8384 = vsel %vm4752, %v8256, %v6117
      %v8385 = vsel %vm4752, %v8257, %v6117
      %v8386 = vsel %vm4752, %v8258, %v6119
      %v8387 = vsel %vm4752, %v8259, %v6119
      %v8388 = vsel %vm4752, %v8260, %v6121
      %v8389 = vsel %vm4752, %v8261, %v6121
      %v8390 = vsel %vm4752, %v8262, %v6123
      %v8391 = vsel %vm4752, %v8263, %v6123
      %v8392 = vsel %vm4817, %v8264, %v6197
      %v8393 = vsel %vm4817, %v8265, %v6199
      %v8394 = vsel %vm4817, %v8266, %v2031
      %v8395 = vsel %vm4817, %v8267, %v6201
      %v8396 = vsel %vm4817, %v8268, %v2033
      %v8397 = vsel %vm4817, %v8269, %v6203
      %v8398 = vsel %vm4817, %v8270, %v2035
      %v8399 = vsel %vm4817, %v8271, %v6205
      %v8400 = vsel %vm4817, %v8272, %v2037
      %v8401 = vsel %vm4817, %v8273, %v6207
      %v8402 = vsel %vm4817, %v8274, %v2039
      %v8403 = vsel %vm4817, %v8275, %v6209
      %v8404 = vsel %vm4817, %v8276, %v2041
      %v8405 = vsel %vm4817, %v8277, %v6211
      %v8406 = vsel %vm4817, %v8278, %v2043
      %v8407 = vsel %vm4817, %v8279, %v6213
      %v8408 = vsel %vm4817, %v8280, %v6215
      %v8409 = vsel %vm4817, %v8281, %v6217
      %v8410 = vsel %vm4817, %v8282, %v2047
      %v8411 = vsel %vm4817, %v8283, %v6219
      %v8412 = vsel %vm4817, %v8284, %v2049
      %v8413 = vsel %vm4817, %v8285, %v6221
      %v8414 = vsel %vm4817, %v8286, %v2051
      %v8415 = vsel %vm4817, %v8287, %v6223
      %v8416 = vsel %vm4817, %v8288, %v2053
      %v8417 = vsel %vm4817, %v8289, %v6225
      %v8418 = vsel %vm4817, %v8290, %v2055
      %v8419 = vsel %vm4817, %v8291, %v6227
      %v8420 = vsel %vm4817, %v8292, %v2057
      %v8421 = vsel %vm4817, %v8293, %v6229
      %v8422 = vsel %vm4817, %v8294, %v2059
      %v8423 = vsel %vm4817, %v8295, %v6231
      %v8424 = vsel %vm4817, %v8296, %v6233
      %v8425 = vsel %vm4817, %v8297, %v6235
      %v8426 = vsel %vm4817, %v8298, %v2063
      %v8427 = vsel %vm4817, %v8299, %v6237
      %v8428 = vsel %vm4817, %v8300, %v2065
      %v8429 = vsel %vm4817, %v8301, %v6239
      %v8430 = vsel %vm4817, %v8302, %v2067
      %v8431 = vsel %vm4817, %v8303, %v6241
      %v8432 = vsel %vm4817, %v8304, %v2069
      %v8433 = vsel %vm4817, %v8305, %v6243
      %v8434 = vsel %vm4817, %v8306, %v2071
      %v8435 = vsel %vm4817, %v8307, %v6245
      %v8436 = vsel %vm4817, %v8308, %v2073
      %v8437 = vsel %vm4817, %v8309, %v6247
      %v8438 = vsel %vm4817, %v8310, %v2075
      %v8439 = vsel %vm4817, %v8311, %v6249
      %v8440 = vsel %vm4817, %v8312, %v6251
      %v8441 = vsel %vm4817, %v8313, %v6253
      %v8442 = vsel %vm4817, %v8314, %v2079
      %v8443 = vsel %vm4817, %v8315, %v6255
      %v8444 = vsel %vm4817, %v8316, %v2081
      %v8445 = vsel %vm4817, %v8317, %v6257
      %v8446 = vsel %vm4817, %v8318, %v2083
      %v8447 = vsel %vm4817, %v8319, %v6259
      %v8448 = vsel %vm4817, %v8320, %v2085
      %v8449 = vsel %vm4817, %v8321, %v6261
      %v8450 = vsel %vm4817, %v8322, %v2087
      %v8451 = vsel %vm4817, %v8323, %v6263
      %v8452 = vsel %vm4817, %v8324, %v2089
      %v8453 = vsel %vm4817, %v8325, %v6265
      %v8454 = vsel %vm4817, %v8326, %v2091
      %v8455 = vsel %vm4817, %v8327, %v6267
      %v8456 = vsel %vm4817, %v8328, %v6269
      %v8457 = vsel %vm4817, %v8329, %v6271
      %v8458 = vsel %vm4817, %v8330, %v2095
      %v8459 = vsel %vm4817, %v8331, %v6273
      %v8460 = vsel %vm4817, %v8332, %v2097
      %v8461 = vsel %vm4817, %v8333, %v6275
      %v8462 = vsel %vm4817, %v8334, %v2099
      %v8463 = vsel %vm4817, %v8335, %v6277
      %v8464 = vsel %vm4817, %v8336, %v2101
      %v8465 = vsel %vm4817, %v8337, %v6279
      %v8466 = vsel %vm4817, %v8338, %v2103
      %v8467 = vsel %vm4817, %v8339, %v6281
      %v8468 = vsel %vm4817, %v8340, %v2105
      %v8469 = vsel %vm4817, %v8341, %v6283
      %v8470 = vsel %vm4817, %v8342, %v2107
      %v8471 = vsel %vm4817, %v8343, %v6285
      %v8472 = vsel %vm4817, %v8344, %v6287
      %v8473 = vsel %vm4817, %v8345, %v6289
      %v8474 = vsel %vm4817, %v8346, %v2111
      %v8475 = vsel %vm4817, %v8347, %v6291
      %v8476 = vsel %vm4817, %v8348, %v2113
      %v8477 = vsel %vm4817, %v8349, %v6293
      %v8478 = vsel %vm4817, %v8350, %v2115
      %v8479 = vsel %vm4817, %v8351, %v6295
      %v8480 = vsel %vm4817, %v8352, %v2117
      %v8481 = vsel %vm4817, %v8353, %v6297
      %v8482 = vsel %vm4817, %v8354, %v2119
      %v8483 = vsel %vm4817, %v8355, %v6299
      %v8484 = vsel %vm4817, %v8356, %v2121
      %v8485 = vsel %vm4817, %v8357, %v6301
      %v8486 = vsel %vm4817, %v8358, %v2123
      %v8487 = vsel %vm4817, %v8359, %v6303
      %v8488 = vsel %vm4817, %v8360, %v6305
      %v8489 = vsel %vm4817, %v8361, %v6307
      %v8490 = vsel %vm4817, %v8362, %v6309
      %v8491 = vsel %vm4817, %v8363, %v6311
      %v8492 = vsel %vm4817, %v8364, %v6313
      %v8493 = vsel %vm4817, %v8365, %v6315
      %v8494 = vsel %vm4817, %v8366, %v6317
      %v8495 = vsel %vm4817, %v8367, %v6319
      %v8496 = vsel %vm4817, %v8368, %v6321
      %v8497 = vsel %vm4817, %v8369, %v6323
      %v8498 = vsel %vm4817, %v8370, %v6325
      %v8499 = vsel %vm4817, %v8371, %v6327
      %v8500 = vsel %vm4817, %v8372, %v6329
      %v8501 = vsel %vm4817, %v8373, %v6331
      %v8502 = vsel %vm4817, %v8374, %v6333
      %v8503 = vsel %vm4817, %v8375, %v6335
      %v8504 = vsel %vm4817, %v8376, %v6337
      %v8505 = vsel %vm4817, %v8377, %v6339
      %v8506 = vsel %vm4817, %v8378, %v6341
      %v8507 = vsel %vm4817, %v8379, %v6343
      %v8508 = vsel %vm4817, %v8380, %v6345
      %v8509 = vsel %vm4817, %v8381, %v6347
      %v8510 = vsel %vm4817, %v8382, %v6349
      %v8511 = vsel %vm4817, %v8383, %v6351
      %v8512 = vsel %vm4817, %v8384, %v6353
      %v8513 = vsel %vm4817, %v8385, %v6355
      %v8514 = vsel %vm4817, %v8386, %v6357
      %v8515 = vsel %vm4817, %v8387, %v6359
      %v8516 = vsel %vm4817, %v8388, %v6361
      %v8517 = vsel %vm4817, %v8389, %v6363
      %v8518 = vsel %vm4817, %v8390, %v6365
      %v8519 = vsel %vm4817, %v8391, %v6367
      %v8520 = vsel %vm4882, %v8392, %v6479
      %v8521 = vsel %vm4882, %v8393, %v6481
      %v8522 = vsel %vm4882, %v8394, %v2255
      %v8523 = vsel %vm4882, %v8395, %v6483
      %v8524 = vsel %vm4882, %v8396, %v2257
      %v8525 = vsel %vm4882, %v8397, %v6485
      %v8526 = vsel %vm4882, %v8398, %v2259
      %v8527 = vsel %vm4882, %v8399, %v6487
      %v8528 = vsel %vm4882, %v8400, %v2261
      %v8529 = vsel %vm4882, %v8401, %v6489
      %v8530 = vsel %vm4882, %v8402, %v2263
      %v8531 = vsel %vm4882, %v8403, %v6491
      %v8532 = vsel %vm4882, %v8404, %v2265
      %v8533 = vsel %vm4882, %v8405, %v6493
      %v8534 = vsel %vm4882, %v8406, %v2267
      %v8535 = vsel %vm4882, %v8407, %v6495
      %v8536 = vsel %vm4882, %v8408, %v6497
      %v8537 = vsel %vm4882, %v8409, %v6499
      %v8538 = vsel %vm4882, %v8410, %v2271
      %v8539 = vsel %vm4882, %v8411, %v6501
      %v8540 = vsel %vm4882, %v8412, %v2273
      %v8541 = vsel %vm4882, %v8413, %v6503
      %v8542 = vsel %vm4882, %v8414, %v2275
      %v8543 = vsel %vm4882, %v8415, %v6505
      %v8544 = vsel %vm4882, %v8416, %v2277
      %v8545 = vsel %vm4882, %v8417, %v6507
      %v8546 = vsel %vm4882, %v8418, %v2279
      %v8547 = vsel %vm4882, %v8419, %v6509
      %v8548 = vsel %vm4882, %v8420, %v2281
      %v8549 = vsel %vm4882, %v8421, %v6511
      %v8550 = vsel %vm4882, %v8422, %v2283
      %v8551 = vsel %vm4882, %v8423, %v6513
      %v8552 = vsel %vm4882, %v8424, %v6515
      %v8553 = vsel %vm4882, %v8425, %v6517
      %v8554 = vsel %vm4882, %v8426, %v2287
      %v8555 = vsel %vm4882, %v8427, %v6519
      %v8556 = vsel %vm4882, %v8428, %v2289
      %v8557 = vsel %vm4882, %v8429, %v6521
      %v8558 = vsel %vm4882, %v8430, %v2291
      %v8559 = vsel %vm4882, %v8431, %v6523
      %v8560 = vsel %vm4882, %v8432, %v2293
      %v8561 = vsel %vm4882, %v8433, %v6525
      %v8562 = vsel %vm4882, %v8434, %v2295
      %v8563 = vsel %vm4882, %v8435, %v6527
      %v8564 = vsel %vm4882, %v8436, %v2297
      %v8565 = vsel %vm4882, %v8437, %v6529
      %v8566 = vsel %vm4882, %v8438, %v2299
      %v8567 = vsel %vm4882, %v8439, %v6531
      %v8568 = vsel %vm4882, %v8440, %v6533
      %v8569 = vsel %vm4882, %v8441, %v6535
      %v8570 = vsel %vm4882, %v8442, %v2303
      %v8571 = vsel %vm4882, %v8443, %v6537
      %v8572 = vsel %vm4882, %v8444, %v2305
      %v8573 = vsel %vm4882, %v8445, %v6539
      %v8574 = vsel %vm4882, %v8446, %v2307
      %v8575 = vsel %vm4882, %v8447, %v6541
      %v8576 = vsel %vm4882, %v8448, %v2309
      %v8577 = vsel %vm4882, %v8449, %v6543
      %v8578 = vsel %vm4882, %v8450, %v2311
      %v8579 = vsel %vm4882, %v8451, %v6545
      %v8580 = vsel %vm4882, %v8452, %v2313
      %v8581 = vsel %vm4882, %v8453, %v6547
      %v8582 = vsel %vm4882, %v8454, %v2315
      %v8583 = vsel %vm4882, %v8455, %v6549
      %v8584 = vsel %vm4882, %v8456, %v6551
      %v8585 = vsel %vm4882, %v8457, %v6553
      %v8586 = vsel %vm4882, %v8458, %v2319
      %v8587 = vsel %vm4882, %v8459, %v6555
      %v8588 = vsel %vm4882, %v8460, %v2321
      %v8589 = vsel %vm4882, %v8461, %v6557
      %v8590 = vsel %vm4882, %v8462, %v2323
      %v8591 = vsel %vm4882, %v8463, %v6559
      %v8592 = vsel %vm4882, %v8464, %v2325
      %v8593 = vsel %vm4882, %v8465, %v6561
      %v8594 = vsel %vm4882, %v8466, %v2327
      %v8595 = vsel %vm4882, %v8467, %v6563
      %v8596 = vsel %vm4882, %v8468, %v2329
      %v8597 = vsel %vm4882, %v8469, %v6565
      %v8598 = vsel %vm4882, %v8470, %v2331
      %v8599 = vsel %vm4882, %v8471, %v6567
      %v8600 = vsel %vm4882, %v8472, %v6569
      %v8601 = vsel %vm4882, %v8473, %v6571
      %v8602 = vsel %vm4882, %v8474, %v2335
      %v8603 = vsel %vm4882, %v8475, %v6573
      %v8604 = vsel %vm4882, %v8476, %v2337
      %v8605 = vsel %vm4882, %v8477, %v6575
      %v8606 = vsel %vm4882, %v8478, %v2339
      %v8607 = vsel %vm4882, %v8479, %v6577
      %v8608 = vsel %vm4882, %v8480, %v2341
      %v8609 = vsel %vm4882, %v8481, %v6579
      %v8610 = vsel %vm4882, %v8482, %v2343
      %v8611 = vsel %vm4882, %v8483, %v6581
      %v8612 = vsel %vm4882, %v8484, %v2345
      %v8613 = vsel %vm4882, %v8485, %v6583
      %v8614 = vsel %vm4882, %v8486, %v2347
      %v8615 = vsel %vm4882, %v8487, %v6585
      %v8616 = vsel %vm4882, %v8488, %v6587
      %v8617 = vsel %vm4882, %v8489, %v6589
      %v8618 = vsel %vm4882, %v8490, %v6591
      %v8619 = vsel %vm4882, %v8491, %v6593
      %v8620 = vsel %vm4882, %v8492, %v6595
      %v8621 = vsel %vm4882, %v8493, %v6597
      %v8622 = vsel %vm4882, %v8494, %v6599
      %v8623 = vsel %vm4882, %v8495, %v6601
      %v8624 = vsel %vm4882, %v8496, %v6603
      %v8625 = vsel %vm4882, %v8497, %v6605
      %v8626 = vsel %vm4882, %v8498, %v6607
      %v8627 = vsel %vm4882, %v8499, %v6609
      %v8628 = vsel %vm4882, %v8500, %v6611
      %v8629 = vsel %vm4882, %v8501, %v6613
      %v8630 = vsel %vm4882, %v8502, %v6615
      %v8631 = vsel %vm4882, %v8503, %v6617
      %v8632 = vsel %vm4882, %v8504, %v6619
      %v8633 = vsel %vm4882, %v8505, %v6621
      %v8634 = vsel %vm4882, %v8506, %v6623
      %v8635 = vsel %vm4882, %v8507, %v6625
      %v8636 = vsel %vm4882, %v8508, %v6627
      %v8637 = vsel %vm4882, %v8509, %v6629
      %v8638 = vsel %vm4882, %v8510, %v6631
      %v8639 = vsel %vm4882, %v8511, %v6633
      %v8640 = vsel %vm4882, %v8512, %v6635
      %v8641 = vsel %vm4882, %v8513, %v6637
      %v8642 = vsel %vm4882, %v8514, %v6639
      %v8643 = vsel %vm4882, %v8515, %v6641
      %v8644 = vsel %vm4882, %v8516, %v6643
      %v8645 = vsel %vm4882, %v8517, %v6645
      %v8646 = vsel %vm4882, %v8518, %v6647
      %v8647 = vsel %vm4882, %v8519, %v6649
      %v8648 = vsel %vm4947, %v8520, %v6746
      %v8649 = vsel %vm4947, %v8521, %v6746
      %v8650 = vsel %vm4947, %v8522, %v6748
      %v8651 = vsel %vm4947, %v8523, %v6748
      %v8652 = vsel %vm4947, %v8524, %v6750
      %v8653 = vsel %vm4947, %v8525, %v6750
      %v8654 = vsel %vm4947, %v8526, %v6752
      %v8655 = vsel %vm4947, %v8527, %v6752
      %v8656 = vsel %vm4947, %v8528, %v6754
      %v8657 = vsel %vm4947, %v8529, %v6754
      %v8658 = vsel %vm4947, %v8530, %v6756
      %v8659 = vsel %vm4947, %v8531, %v6756
      %v8660 = vsel %vm4947, %v8532, %v6758
      %v8661 = vsel %vm4947, %v8533, %v6758
      %v8662 = vsel %vm4947, %v8534, %v6760
      %v8663 = vsel %vm4947, %v8535, %v6760
      %v8664 = vsel %vm4947, %v8536, %v6762
      %v8665 = vsel %vm4947, %v8537, %v6762
      %v8666 = vsel %vm4947, %v8538, %v6764
      %v8667 = vsel %vm4947, %v8539, %v6764
      %v8668 = vsel %vm4947, %v8540, %v6766
      %v8669 = vsel %vm4947, %v8541, %v6766
      %v8670 = vsel %vm4947, %v8542, %v6768
      %v8671 = vsel %vm4947, %v8543, %v6768
      %v8672 = vsel %vm4947, %v8544, %v6770
      %v8673 = vsel %vm4947, %v8545, %v6770
      %v8674 = vsel %vm4947, %v8546, %v6772
      %v8675 = vsel %vm4947, %v8547, %v6772
      %v8676 = vsel %vm4947, %v8548, %v6774
      %v8677 = vsel %vm4947, %v8549, %v6774
      %v8678 = vsel %vm4947, %v8550, %v6776
      %v8679 = vsel %vm4947, %v8551, %v6776
      %v8680 = vsel %vm4947, %v8552, %v6778
      %v8681 = vsel %vm4947, %v8553, %v6778
      %v8682 = vsel %vm4947, %v8554, %v6780
      %v8683 = vsel %vm4947, %v8555, %v6780
      %v8684 = vsel %vm4947, %v8556, %v6782
      %v8685 = vsel %vm4947, %v8557, %v6782
      %v8686 = vsel %vm4947, %v8558, %v6784
      %v8687 = vsel %vm4947, %v8559, %v6784
      %v8688 = vsel %vm4947, %v8560, %v6786
      %v8689 = vsel %vm4947, %v8561, %v6786
      %v8690 = vsel %vm4947, %v8562, %v6788
      %v8691 = vsel %vm4947, %v8563, %v6788
      %v8692 = vsel %vm4947, %v8564, %v6790
      %v8693 = vsel %vm4947, %v8565, %v6790
      %v8694 = vsel %vm4947, %v8566, %v6792
      %v8695 = vsel %vm4947, %v8567, %v6792
      %v8696 = vsel %vm4947, %v8568, %v6794
      %v8697 = vsel %vm4947, %v8569, %v6794
      %v8698 = vsel %vm4947, %v8570, %v6796
      %v8699 = vsel %vm4947, %v8571, %v6796
      %v8700 = vsel %vm4947, %v8572, %v6798
      %v8701 = vsel %vm4947, %v8573, %v6798
      %v8702 = vsel %vm4947, %v8574, %v6800
      %v8703 = vsel %vm4947, %v8575, %v6800
      %v8704 = vsel %vm4947, %v8576, %v6802
      %v8705 = vsel %vm4947, %v8577, %v6802
      %v8706 = vsel %vm4947, %v8578, %v6804
      %v8707 = vsel %vm4947, %v8579, %v6804
      %v8708 = vsel %vm4947, %v8580, %v6806
      %v8709 = vsel %vm4947, %v8581, %v6806
      %v8710 = vsel %vm4947, %v8582, %v6808
      %v8711 = vsel %vm4947, %v8583, %v6808
      %v8712 = vsel %vm4947, %v8584, %v6810
      %v8713 = vsel %vm4947, %v8585, %v6810
      %v8714 = vsel %vm4947, %v8586, %v6812
      %v8715 = vsel %vm4947, %v8587, %v6812
      %v8716 = vsel %vm4947, %v8588, %v6814
      %v8717 = vsel %vm4947, %v8589, %v6814
      %v8718 = vsel %vm4947, %v8590, %v6816
      %v8719 = vsel %vm4947, %v8591, %v6816
      %v8720 = vsel %vm4947, %v8592, %v6818
      %v8721 = vsel %vm4947, %v8593, %v6818
      %v8722 = vsel %vm4947, %v8594, %v6820
      %v8723 = vsel %vm4947, %v8595, %v6820
      %v8724 = vsel %vm4947, %v8596, %v6822
      %v8725 = vsel %vm4947, %v8597, %v6822
      %v8726 = vsel %vm4947, %v8598, %v6824
      %v8727 = vsel %vm4947, %v8599, %v6824
      %v8728 = vsel %vm4947, %v8600, %v6826
      %v8729 = vsel %vm4947, %v8601, %v6826
      %v8730 = vsel %vm4947, %v8602, %v6828
      %v8731 = vsel %vm4947, %v8603, %v6828
      %v8732 = vsel %vm4947, %v8604, %v6830
      %v8733 = vsel %vm4947, %v8605, %v6830
      %v8734 = vsel %vm4947, %v8606, %v6832
      %v8735 = vsel %vm4947, %v8607, %v6832
      %v8736 = vsel %vm4947, %v8608, %v6834
      %v8737 = vsel %vm4947, %v8609, %v6834
      %v8738 = vsel %vm4947, %v8610, %v6836
      %v8739 = vsel %vm4947, %v8611, %v6836
      %v8740 = vsel %vm4947, %v8612, %v6838
      %v8741 = vsel %vm4947, %v8613, %v6838
      %v8742 = vsel %vm4947, %v8614, %v6840
      %v8743 = vsel %vm4947, %v8615, %v6840
      %v8744 = vsel %vm4947, %v8616, %v6842
      %v8745 = vsel %vm4947, %v8617, %v6842
      %v8746 = vsel %vm4947, %v8618, %v6844
      %v8747 = vsel %vm4947, %v8619, %v6844
      %v8748 = vsel %vm4947, %v8620, %v6846
      %v8749 = vsel %vm4947, %v8621, %v6846
      %v8750 = vsel %vm4947, %v8622, %v6848
      %v8751 = vsel %vm4947, %v8623, %v6848
      %v8752 = vsel %vm4947, %v8624, %v6850
      %v8753 = vsel %vm4947, %v8625, %v6850
      %v8754 = vsel %vm4947, %v8626, %v6852
      %v8755 = vsel %vm4947, %v8627, %v6852
      %v8756 = vsel %vm4947, %v8628, %v6854
      %v8757 = vsel %vm4947, %v8629, %v6854
      %v8758 = vsel %vm4947, %v8630, %v6856
      %v8759 = vsel %vm4947, %v8631, %v6856
      %v8760 = vsel %vm4947, %v8632, %v6858
      %v8761 = vsel %vm4947, %v8633, %v6858
      %v8762 = vsel %vm4947, %v8634, %v6860
      %v8763 = vsel %vm4947, %v8635, %v6860
      %v8764 = vsel %vm4947, %v8636, %v6862
      %v8765 = vsel %vm4947, %v8637, %v6862
      %v8766 = vsel %vm4947, %v8638, %v6864
      %v8767 = vsel %vm4947, %v8639, %v6864
      %v8768 = vsel %vm4947, %v8640, %v6866
      %v8769 = vsel %vm4947, %v8641, %v6866
      %v8770 = vsel %vm4947, %v8642, %v6868
      %v8771 = vsel %vm4947, %v8643, %v6868
      %v8772 = vsel %vm4947, %v8644, %v6870
      %v8773 = vsel %vm4947, %v8645, %v6870
      %v8774 = vsel %vm4947, %v8646, %v6872
      %v8775 = vsel %vm4947, %v8647, %v6872
      %v8776 = vsel %vm5012, %v8648, %v6939
      %v8777 = vsel %vm5012, %v8649, %v6941
      %v8778 = vsel %vm5012, %v8650, %v2671
      %v8779 = vsel %vm5012, %v8651, %v6943
      %v8780 = vsel %vm5012, %v8652, %v2673
      %v8781 = vsel %vm5012, %v8653, %v6945
      %v8782 = vsel %vm5012, %v8654, %v2675
      %v8783 = vsel %vm5012, %v8655, %v6947
      %v8784 = vsel %vm5012, %v8656, %v2677
      %v8785 = vsel %vm5012, %v8657, %v6949
      %v8786 = vsel %vm5012, %v8658, %v2679
      %v8787 = vsel %vm5012, %v8659, %v6951
      %v8788 = vsel %vm5012, %v8660, %v2681
      %v8789 = vsel %vm5012, %v8661, %v6953
      %v8790 = vsel %vm5012, %v8662, %v2683
      %v8791 = vsel %vm5012, %v8663, %v6955
      %v8792 = vsel %vm5012, %v8664, %v6957
      %v8793 = vsel %vm5012, %v8665, %v6959
      %v8794 = vsel %vm5012, %v8666, %v2687
      %v8795 = vsel %vm5012, %v8667, %v6961
      %v8796 = vsel %vm5012, %v8668, %v2689
      %v8797 = vsel %vm5012, %v8669, %v6963
      %v8798 = vsel %vm5012, %v8670, %v2691
      %v8799 = vsel %vm5012, %v8671, %v6965
      %v8800 = vsel %vm5012, %v8672, %v2693
      %v8801 = vsel %vm5012, %v8673, %v6967
      %v8802 = vsel %vm5012, %v8674, %v2695
      %v8803 = vsel %vm5012, %v8675, %v6969
      %v8804 = vsel %vm5012, %v8676, %v2697
      %v8805 = vsel %vm5012, %v8677, %v6971
      %v8806 = vsel %vm5012, %v8678, %v2699
      %v8807 = vsel %vm5012, %v8679, %v6973
      %v8808 = vsel %vm5012, %v8680, %v6975
      %v8809 = vsel %vm5012, %v8681, %v6977
      %v8810 = vsel %vm5012, %v8682, %v2703
      %v8811 = vsel %vm5012, %v8683, %v6979
      %v8812 = vsel %vm5012, %v8684, %v2705
      %v8813 = vsel %vm5012, %v8685, %v6981
      %v8814 = vsel %vm5012, %v8686, %v2707
      %v8815 = vsel %vm5012, %v8687, %v6983
      %v8816 = vsel %vm5012, %v8688, %v2709
      %v8817 = vsel %vm5012, %v8689, %v6985
      %v8818 = vsel %vm5012, %v8690, %v2711
      %v8819 = vsel %vm5012, %v8691, %v6987
      %v8820 = vsel %vm5012, %v8692, %v2713
      %v8821 = vsel %vm5012, %v8693, %v6989
      %v8822 = vsel %vm5012, %v8694, %v2715
      %v8823 = vsel %vm5012, %v8695, %v6991
      %v8824 = vsel %vm5012, %v8696, %v6993
      %v8825 = vsel %vm5012, %v8697, %v6995
      %v8826 = vsel %vm5012, %v8698, %v2719
      %v8827 = vsel %vm5012, %v8699, %v6997
      %v8828 = vsel %vm5012, %v8700, %v2721
      %v8829 = vsel %vm5012, %v8701, %v6999
      %v8830 = vsel %vm5012, %v8702, %v2723
      %v8831 = vsel %vm5012, %v8703, %v7001
      %v8832 = vsel %vm5012, %v8704, %v2725
      %v8833 = vsel %vm5012, %v8705, %v7003
      %v8834 = vsel %vm5012, %v8706, %v2727
      %v8835 = vsel %vm5012, %v8707, %v7005
      %v8836 = vsel %vm5012, %v8708, %v2729
      %v8837 = vsel %vm5012, %v8709, %v7007
      %v8838 = vsel %vm5012, %v8710, %v2731
      %v8839 = vsel %vm5012, %v8711, %v7009
      %v8840 = vsel %vm5012, %v8712, %v7011
      %v8841 = vsel %vm5012, %v8713, %v7013
      %v8842 = vsel %vm5012, %v8714, %v2735
      %v8843 = vsel %vm5012, %v8715, %v7015
      %v8844 = vsel %vm5012, %v8716, %v2737
      %v8845 = vsel %vm5012, %v8717, %v7017
      %v8846 = vsel %vm5012, %v8718, %v2739
      %v8847 = vsel %vm5012, %v8719, %v7019
      %v8848 = vsel %vm5012, %v8720, %v2741
      %v8849 = vsel %vm5012, %v8721, %v7021
      %v8850 = vsel %vm5012, %v8722, %v2743
      %v8851 = vsel %vm5012, %v8723, %v7023
      %v8852 = vsel %vm5012, %v8724, %v2745
      %v8853 = vsel %vm5012, %v8725, %v7025
      %v8854 = vsel %vm5012, %v8726, %v2747
      %v8855 = vsel %vm5012, %v8727, %v7027
      %v8856 = vsel %vm5012, %v8728, %v7029
      %v8857 = vsel %vm5012, %v8729, %v7031
      %v8858 = vsel %vm5012, %v8730, %v2751
      %v8859 = vsel %vm5012, %v8731, %v7033
      %v8860 = vsel %vm5012, %v8732, %v2753
      %v8861 = vsel %vm5012, %v8733, %v7035
      %v8862 = vsel %vm5012, %v8734, %v2755
      %v8863 = vsel %vm5012, %v8735, %v7037
      %v8864 = vsel %vm5012, %v8736, %v2757
      %v8865 = vsel %vm5012, %v8737, %v7039
      %v8866 = vsel %vm5012, %v8738, %v2759
      %v8867 = vsel %vm5012, %v8739, %v7041
      %v8868 = vsel %vm5012, %v8740, %v2761
      %v8869 = vsel %vm5012, %v8741, %v7043
      %v8870 = vsel %vm5012, %v8742, %v2763
      %v8871 = vsel %vm5012, %v8743, %v7045
      %v8872 = vsel %vm5012, %v8744, %v7047
      %v8873 = vsel %vm5012, %v8745, %v7049
      %v8874 = vsel %vm5012, %v8746, %v7051
      %v8875 = vsel %vm5012, %v8747, %v7053
      %v8876 = vsel %vm5012, %v8748, %v7055
      %v8877 = vsel %vm5012, %v8749, %v7057
      %v8878 = vsel %vm5012, %v8750, %v7059
      %v8879 = vsel %vm5012, %v8751, %v7061
      %v8880 = vsel %vm5012, %v8752, %v7063
      %v8881 = vsel %vm5012, %v8753, %v7065
      %v8882 = vsel %vm5012, %v8754, %v7067
      %v8883 = vsel %vm5012, %v8755, %v7069
      %v8884 = vsel %vm5012, %v8756, %v7071
      %v8885 = vsel %vm5012, %v8757, %v7073
      %v8886 = vsel %vm5012, %v8758, %v7075
      %v8887 = vsel %vm5012, %v8759, %v7077
      %v8888 = vsel %vm5012, %v8760, %v7079
      %v8889 = vsel %vm5012, %v8761, %v7081
      %v8890 = vsel %vm5012, %v8762, %v7083
      %v8891 = vsel %vm5012, %v8763, %v7085
      %v8892 = vsel %vm5012, %v8764, %v7087
      %v8893 = vsel %vm5012, %v8765, %v7089
      %v8894 = vsel %vm5012, %v8766, %v7091
      %v8895 = vsel %vm5012, %v8767, %v7093
      %v8896 = vsel %vm5012, %v8768, %v7095
      %v8897 = vsel %vm5012, %v8769, %v7097
      %v8898 = vsel %vm5012, %v8770, %v7099
      %v8899 = vsel %vm5012, %v8771, %v7101
      %v8900 = vsel %vm5012, %v8772, %v7103
      %v8901 = vsel %vm5012, %v8773, %v7105
      %v8902 = vsel %vm5012, %v8774, %v7107
      %v8903 = vsel %vm5012, %v8775, %v7109
      %v8904 = vsel %vm5077, %v8776, %v7200
      %v8905 = vsel %vm5077, %v8777, %v7202
      %v8906 = vsel %vm5077, %v8778, %v2895
      %v8907 = vsel %vm5077, %v8779, %v7204
      %v8908 = vsel %vm5077, %v8780, %v2897
      %v8909 = vsel %vm5077, %v8781, %v7206
      %v8910 = vsel %vm5077, %v8782, %v2899
      %v8911 = vsel %vm5077, %v8783, %v7208
      %v8912 = vsel %vm5077, %v8784, %v2901
      %v8913 = vsel %vm5077, %v8785, %v7210
      %v8914 = vsel %vm5077, %v8786, %v2903
      %v8915 = vsel %vm5077, %v8787, %v7212
      %v8916 = vsel %vm5077, %v8788, %v2905
      %v8917 = vsel %vm5077, %v8789, %v7214
      %v8918 = vsel %vm5077, %v8790, %v2907
      %v8919 = vsel %vm5077, %v8791, %v7216
      %v8920 = vsel %vm5077, %v8792, %v7218
      %v8921 = vsel %vm5077, %v8793, %v7220
      %v8922 = vsel %vm5077, %v8794, %v2911
      %v8923 = vsel %vm5077, %v8795, %v7222
      %v8924 = vsel %vm5077, %v8796, %v2913
      %v8925 = vsel %vm5077, %v8797, %v7224
      %v8926 = vsel %vm5077, %v8798, %v2915
      %v8927 = vsel %vm5077, %v8799, %v7226
      %v8928 = vsel %vm5077, %v8800, %v2917
      %v8929 = vsel %vm5077, %v8801, %v7228
      %v8930 = vsel %vm5077, %v8802, %v2919
      %v8931 = vsel %vm5077, %v8803, %v7230
      %v8932 = vsel %vm5077, %v8804, %v2921
      %v8933 = vsel %vm5077, %v8805, %v7232
      %v8934 = vsel %vm5077, %v8806, %v2923
      %v8935 = vsel %vm5077, %v8807, %v7234
      %v8936 = vsel %vm5077, %v8808, %v7236
      %v8937 = vsel %vm5077, %v8809, %v7238
      %v8938 = vsel %vm5077, %v8810, %v2927
      %v8939 = vsel %vm5077, %v8811, %v7240
      %v8940 = vsel %vm5077, %v8812, %v2929
      %v8941 = vsel %vm5077, %v8813, %v7242
      %v8942 = vsel %vm5077, %v8814, %v2931
      %v8943 = vsel %vm5077, %v8815, %v7244
      %v8944 = vsel %vm5077, %v8816, %v2933
      %v8945 = vsel %vm5077, %v8817, %v7246
      %v8946 = vsel %vm5077, %v8818, %v2935
      %v8947 = vsel %vm5077, %v8819, %v7248
      %v8948 = vsel %vm5077, %v8820, %v2937
      %v8949 = vsel %vm5077, %v8821, %v7250
      %v8950 = vsel %vm5077, %v8822, %v2939
      %v8951 = vsel %vm5077, %v8823, %v7252
      %v8952 = vsel %vm5077, %v8824, %v7254
      %v8953 = vsel %vm5077, %v8825, %v7256
      %v8954 = vsel %vm5077, %v8826, %v2943
      %v8955 = vsel %vm5077, %v8827, %v7258
      %v8956 = vsel %vm5077, %v8828, %v2945
      %v8957 = vsel %vm5077, %v8829, %v7260
      %v8958 = vsel %vm5077, %v8830, %v2947
      %v8959 = vsel %vm5077, %v8831, %v7262
      %v8960 = vsel %vm5077, %v8832, %v2949
      %v8961 = vsel %vm5077, %v8833, %v7264
      %v8962 = vsel %vm5077, %v8834, %v2951
      %v8963 = vsel %vm5077, %v8835, %v7266
      %v8964 = vsel %vm5077, %v8836, %v2953
      %v8965 = vsel %vm5077, %v8837, %v7268
      %v8966 = vsel %vm5077, %v8838, %v2955
      %v8967 = vsel %vm5077, %v8839, %v7270
      %v8968 = vsel %vm5077, %v8840, %v7272
      %v8969 = vsel %vm5077, %v8841, %v7274
      %v8970 = vsel %vm5077, %v8842, %v2959
      %v8971 = vsel %vm5077, %v8843, %v7276
      %v8972 = vsel %vm5077, %v8844, %v2961
      %v8973 = vsel %vm5077, %v8845, %v7278
      %v8974 = vsel %vm5077, %v8846, %v2963
      %v8975 = vsel %vm5077, %v8847, %v7280
      %v8976 = vsel %vm5077, %v8848, %v2965
      %v8977 = vsel %vm5077, %v8849, %v7282
      %v8978 = vsel %vm5077, %v8850, %v2967
      %v8979 = vsel %vm5077, %v8851, %v7284
      %v8980 = vsel %vm5077, %v8852, %v2969
      %v8981 = vsel %vm5077, %v8853, %v7286
      %v8982 = vsel %vm5077, %v8854, %v2971
      %v8983 = vsel %vm5077, %v8855, %v7288
      %v8984 = vsel %vm5077, %v8856, %v7290
      %v8985 = vsel %vm5077, %v8857, %v7292
      %v8986 = vsel %vm5077, %v8858, %v2975
      %v8987 = vsel %vm5077, %v8859, %v7294
      %v8988 = vsel %vm5077, %v8860, %v2977
      %v8989 = vsel %vm5077, %v8861, %v7296
      %v8990 = vsel %vm5077, %v8862, %v2979
      %v8991 = vsel %vm5077, %v8863, %v7298
      %v8992 = vsel %vm5077, %v8864, %v2981
      %v8993 = vsel %vm5077, %v8865, %v7300
      %v8994 = vsel %vm5077, %v8866, %v2983
      %v8995 = vsel %vm5077, %v8867, %v7302
      %v8996 = vsel %vm5077, %v8868, %v2985
      %v8997 = vsel %vm5077, %v8869, %v7304
      %v8998 = vsel %vm5077, %v8870, %v2987
      %v8999 = vsel %vm5077, %v8871, %v7306
      %v9000 = vsel %vm5077, %v8872, %v7308
      %v9001 = vsel %vm5077, %v8873, %v7310
      %v9002 = vsel %vm5077, %v8874, %v7312
      %v9003 = vsel %vm5077, %v8875, %v7314
      %v9004 = vsel %vm5077, %v8876, %v7316
      %v9005 = vsel %vm5077, %v8877, %v7318
      %v9006 = vsel %vm5077, %v8878, %v7320
      %v9007 = vsel %vm5077, %v8879, %v7322
      %v9008 = vsel %vm5077, %v8880, %v7324
      %v9009 = vsel %vm5077, %v8881, %v7326
      %v9010 = vsel %vm5077, %v8882, %v7328
      %v9011 = vsel %vm5077, %v8883, %v7330
      %v9012 = vsel %vm5077, %v8884, %v7332
      %v9013 = vsel %vm5077, %v8885, %v7334
      %v9014 = vsel %vm5077, %v8886, %v7336
      %v9015 = vsel %vm5077, %v8887, %v7338
      %v9016 = vsel %vm5077, %v8888, %v7340
      %v9017 = vsel %vm5077, %v8889, %v7342
      %v9018 = vsel %vm5077, %v8890, %v7344
      %v9019 = vsel %vm5077, %v8891, %v7346
      %v9020 = vsel %vm5077, %v8892, %v7348
      %v9021 = vsel %vm5077, %v8893, %v7350
      %v9022 = vsel %vm5077, %v8894, %v7352
      %v9023 = vsel %vm5077, %v8895, %v7354
      %v9024 = vsel %vm5077, %v8896, %v7356
      %v9025 = vsel %vm5077, %v8897, %v7358
      %v9026 = vsel %vm5077, %v8898, %v7360
      %v9027 = vsel %vm5077, %v8899, %v7362
      %v9028 = vsel %vm5077, %v8900, %v7364
      %v9029 = vsel %vm5077, %v8901, %v7366
      %v9030 = vsel %vm5077, %v8902, %v7368
      %v9031 = vsel %vm5077, %v8903, %v7370
      %v9032 = vsel %vm5142, %v8904, %v7467
      %v9033 = vsel %vm5142, %v8905, %v7467
      %v9034 = vsel %vm5142, %v8906, %v7469
      %v9035 = vsel %vm5142, %v8907, %v7469
      %v9036 = vsel %vm5142, %v8908, %v7471
      %v9037 = vsel %vm5142, %v8909, %v7471
      %v9038 = vsel %vm5142, %v8910, %v7473
      %v9039 = vsel %vm5142, %v8911, %v7473
      %v9040 = vsel %vm5142, %v8912, %v7475
      %v9041 = vsel %vm5142, %v8913, %v7475
      %v9042 = vsel %vm5142, %v8914, %v7477
      %v9043 = vsel %vm5142, %v8915, %v7477
      %v9044 = vsel %vm5142, %v8916, %v7479
      %v9045 = vsel %vm5142, %v8917, %v7479
      %v9046 = vsel %vm5142, %v8918, %v7481
      %v9047 = vsel %vm5142, %v8919, %v7481
      %v9048 = vsel %vm5142, %v8920, %v7483
      %v9049 = vsel %vm5142, %v8921, %v7483
      %v9050 = vsel %vm5142, %v8922, %v7485
      %v9051 = vsel %vm5142, %v8923, %v7485
      %v9052 = vsel %vm5142, %v8924, %v7487
      %v9053 = vsel %vm5142, %v8925, %v7487
      %v9054 = vsel %vm5142, %v8926, %v7489
      %v9055 = vsel %vm5142, %v8927, %v7489
      %v9056 = vsel %vm5142, %v8928, %v7491
      %v9057 = vsel %vm5142, %v8929, %v7491
      %v9058 = vsel %vm5142, %v8930, %v7493
      %v9059 = vsel %vm5142, %v8931, %v7493
      %v9060 = vsel %vm5142, %v8932, %v7495
      %v9061 = vsel %vm5142, %v8933, %v7495
      %v9062 = vsel %vm5142, %v8934, %v7497
      %v9063 = vsel %vm5142, %v8935, %v7497
      %v9064 = vsel %vm5142, %v8936, %v7499
      %v9065 = vsel %vm5142, %v8937, %v7499
      %v9066 = vsel %vm5142, %v8938, %v7501
      %v9067 = vsel %vm5142, %v8939, %v7501
      %v9068 = vsel %vm5142, %v8940, %v7503
      %v9069 = vsel %vm5142, %v8941, %v7503
      %v9070 = vsel %vm5142, %v8942, %v7505
      %v9071 = vsel %vm5142, %v8943, %v7505
      %v9072 = vsel %vm5142, %v8944, %v7507
      %v9073 = vsel %vm5142, %v8945, %v7507
      %v9074 = vsel %vm5142, %v8946, %v7509
      %v9075 = vsel %vm5142, %v8947, %v7509
      %v9076 = vsel %vm5142, %v8948, %v7511
      %v9077 = vsel %vm5142, %v8949, %v7511
      %v9078 = vsel %vm5142, %v8950, %v7513
      %v9079 = vsel %vm5142, %v8951, %v7513
      %v9080 = vsel %vm5142, %v8952, %v7515
      %v9081 = vsel %vm5142, %v8953, %v7515
      %v9082 = vsel %vm5142, %v8954, %v7517
      %v9083 = vsel %vm5142, %v8955, %v7517
      %v9084 = vsel %vm5142, %v8956, %v7519
      %v9085 = vsel %vm5142, %v8957, %v7519
      %v9086 = vsel %vm5142, %v8958, %v7521
      %v9087 = vsel %vm5142, %v8959, %v7521
      %v9088 = vsel %vm5142, %v8960, %v7523
      %v9089 = vsel %vm5142, %v8961, %v7523
      %v9090 = vsel %vm5142, %v8962, %v7525
      %v9091 = vsel %vm5142, %v8963, %v7525
      %v9092 = vsel %vm5142, %v8964, %v7527
      %v9093 = vsel %vm5142, %v8965, %v7527
      %v9094 = vsel %vm5142, %v8966, %v7529
      %v9095 = vsel %vm5142, %v8967, %v7529
      %v9096 = vsel %vm5142, %v8968, %v7531
      %v9097 = vsel %vm5142, %v8969, %v7531
      %v9098 = vsel %vm5142, %v8970, %v7533
      %v9099 = vsel %vm5142, %v8971, %v7533
      %v9100 = vsel %vm5142, %v8972, %v7535
      %v9101 = vsel %vm5142, %v8973, %v7535
      %v9102 = vsel %vm5142, %v8974, %v7537
      %v9103 = vsel %vm5142, %v8975, %v7537
      %v9104 = vsel %vm5142, %v8976, %v7539
      %v9105 = vsel %vm5142, %v8977, %v7539
      %v9106 = vsel %vm5142, %v8978, %v7541
      %v9107 = vsel %vm5142, %v8979, %v7541
      %v9108 = vsel %vm5142, %v8980, %v7543
      %v9109 = vsel %vm5142, %v8981, %v7543
      %v9110 = vsel %vm5142, %v8982, %v7545
      %v9111 = vsel %vm5142, %v8983, %v7545
      %v9112 = vsel %vm5142, %v8984, %v7547
      %v9113 = vsel %vm5142, %v8985, %v7547
      %v9114 = vsel %vm5142, %v8986, %v7549
      %v9115 = vsel %vm5142, %v8987, %v7549
      %v9116 = vsel %vm5142, %v8988, %v7551
      %v9117 = vsel %vm5142, %v8989, %v7551
      %v9118 = vsel %vm5142, %v8990, %v7553
      %v9119 = vsel %vm5142, %v8991, %v7553
      %v9120 = vsel %vm5142, %v8992, %v7555
      %v9121 = vsel %vm5142, %v8993, %v7555
      %v9122 = vsel %vm5142, %v8994, %v7557
      %v9123 = vsel %vm5142, %v8995, %v7557
      %v9124 = vsel %vm5142, %v8996, %v7559
      %v9125 = vsel %vm5142, %v8997, %v7559
      %v9126 = vsel %vm5142, %v8998, %v7561
      %v9127 = vsel %vm5142, %v8999, %v7561
      %v9128 = vsel %vm5142, %v9000, %v7563
      %v9129 = vsel %vm5142, %v9001, %v7563
      %v9130 = vsel %vm5142, %v9002, %v7565
      %v9131 = vsel %vm5142, %v9003, %v7565
      %v9132 = vsel %vm5142, %v9004, %v7567
      %v9133 = vsel %vm5142, %v9005, %v7567
      %v9134 = vsel %vm5142, %v9006, %v7569
      %v9135 = vsel %vm5142, %v9007, %v7569
      %v9136 = vsel %vm5142, %v9008, %v7571
      %v9137 = vsel %vm5142, %v9009, %v7571
      %v9138 = vsel %vm5142, %v9010, %v7573
      %v9139 = vsel %vm5142, %v9011, %v7573
      %v9140 = vsel %vm5142, %v9012, %v7575
      %v9141 = vsel %vm5142, %v9013, %v7575
      %v9142 = vsel %vm5142, %v9014, %v7577
      %v9143 = vsel %vm5142, %v9015, %v7577
      %v9144 = vsel %vm5142, %v9016, %v7579
      %v9145 = vsel %vm5142, %v9017, %v7579
      %v9146 = vsel %vm5142, %v9018, %v7581
      %v9147 = vsel %vm5142, %v9019, %v7581
      %v9148 = vsel %vm5142, %v9020, %v7583
      %v9149 = vsel %vm5142, %v9021, %v7583
      %v9150 = vsel %vm5142, %v9022, %v7585
      %v9151 = vsel %vm5142, %v9023, %v7585
      %v9152 = vsel %vm5142, %v9024, %v7587
      %v9153 = vsel %vm5142, %v9025, %v7587
      %v9154 = vsel %vm5142, %v9026, %v7589
      %v9155 = vsel %vm5142, %v9027, %v7589
      %v9156 = vsel %vm5142, %v9028, %v7591
      %v9157 = vsel %vm5142, %v9029, %v7591
      %v9158 = vsel %vm5142, %v9030, %v7593
      %v9159 = vsel %vm5142, %v9031, %v7593
      %v9160 = vsel %vm5207, %v9032, %v3299
      %v9161 = vsel %vm5207, %v9033, %v7660
      %v9162 = vsel %vm5207, %v9034, %v3301
      %v9163 = vsel %vm5207, %v9035, %v7662
      %v9164 = vsel %vm5207, %v9036, %v3303
      %v9165 = vsel %vm5207, %v9037, %v7664
      %v9166 = vsel %vm5207, %v9038, %v3305
      %v9167 = vsel %vm5207, %v9039, %v7666
      %v9168 = vsel %vm5207, %v9040, %v3307
      %v9169 = vsel %vm5207, %v9041, %v7668
      %v9170 = vsel %vm5207, %v9042, %v3309
      %v9171 = vsel %vm5207, %v9043, %v7670
      %v9172 = vsel %vm5207, %v9044, %v7672
      %v9173 = vsel %vm5207, %v9045, %v7674
      %v9174 = vsel %vm5207, %v9046, %v7676
      %v9175 = vsel %vm5207, %v9047, %v7678
      %v9176 = vsel %vm5207, %v9048, %v3315
      %v9177 = vsel %vm5207, %v9049, %v7680
      %v9178 = vsel %vm5207, %v9050, %v3317
      %v9179 = vsel %vm5207, %v9051, %v7682
      %v9180 = vsel %vm5207, %v9052, %v3319
      %v9181 = vsel %vm5207, %v9053, %v7684
      %v9182 = vsel %vm5207, %v9054, %v3321
      %v9183 = vsel %vm5207, %v9055, %v7686
      %v9184 = vsel %vm5207, %v9056, %v3323
      %v9185 = vsel %vm5207, %v9057, %v7688
      %v9186 = vsel %vm5207, %v9058, %v3325
      %v9187 = vsel %vm5207, %v9059, %v7690
      %v9188 = vsel %vm5207, %v9060, %v7692
      %v9189 = vsel %vm5207, %v9061, %v7694
      %v9190 = vsel %vm5207, %v9062, %v7696
      %v9191 = vsel %vm5207, %v9063, %v7698
      %v9192 = vsel %vm5207, %v9064, %v3331
      %v9193 = vsel %vm5207, %v9065, %v7700
      %v9194 = vsel %vm5207, %v9066, %v3333
      %v9195 = vsel %vm5207, %v9067, %v7702
      %v9196 = vsel %vm5207, %v9068, %v3335
      %v9197 = vsel %vm5207, %v9069, %v7704
      %v9198 = vsel %vm5207, %v9070, %v3337
      %v9199 = vsel %vm5207, %v9071, %v7706
      %v9200 = vsel %vm5207, %v9072, %v3339
      %v9201 = vsel %vm5207, %v9073, %v7708
      %v9202 = vsel %vm5207, %v9074, %v3341
      %v9203 = vsel %vm5207, %v9075, %v7710
      %v9204 = vsel %vm5207, %v9076, %v7712
      %v9205 = vsel %vm5207, %v9077, %v7714
      %v9206 = vsel %vm5207, %v9078, %v7716
      %v9207 = vsel %vm5207, %v9079, %v7718
      %v9208 = vsel %vm5207, %v9080, %v3347
      %v9209 = vsel %vm5207, %v9081, %v7720
      %v9210 = vsel %vm5207, %v9082, %v3349
      %v9211 = vsel %vm5207, %v9083, %v7722
      %v9212 = vsel %vm5207, %v9084, %v3351
      %v9213 = vsel %vm5207, %v9085, %v7724
      %v9214 = vsel %vm5207, %v9086, %v3353
      %v9215 = vsel %vm5207, %v9087, %v7726
      %v9216 = vsel %vm5207, %v9088, %v3355
      %v9217 = vsel %vm5207, %v9089, %v7728
      %v9218 = vsel %vm5207, %v9090, %v3357
      %v9219 = vsel %vm5207, %v9091, %v7730
      %v9220 = vsel %vm5207, %v9092, %v7732
      %v9221 = vsel %vm5207, %v9093, %v7734
      %v9222 = vsel %vm5207, %v9094, %v7736
      %v9223 = vsel %vm5207, %v9095, %v7738
      %v9224 = vsel %vm5207, %v9096, %v3363
      %v9225 = vsel %vm5207, %v9097, %v7740
      %v9226 = vsel %vm5207, %v9098, %v3365
      %v9227 = vsel %vm5207, %v9099, %v7742
      %v9228 = vsel %vm5207, %v9100, %v3367
      %v9229 = vsel %vm5207, %v9101, %v7744
      %v9230 = vsel %vm5207, %v9102, %v3369
      %v9231 = vsel %vm5207, %v9103, %v7746
      %v9232 = vsel %vm5207, %v9104, %v3371
      %v9233 = vsel %vm5207, %v9105, %v7748
      %v9234 = vsel %vm5207, %v9106, %v3373
      %v9235 = vsel %vm5207, %v9107, %v7750
      %v9236 = vsel %vm5207, %v9108, %v7752
      %v9237 = vsel %vm5207, %v9109, %v7754
      %v9238 = vsel %vm5207, %v9110, %v7756
      %v9239 = vsel %vm5207, %v9111, %v7758
      %v9240 = vsel %vm5207, %v9112, %v3379
      %v9241 = vsel %vm5207, %v9113, %v7760
      %v9242 = vsel %vm5207, %v9114, %v3381
      %v9243 = vsel %vm5207, %v9115, %v7762
      %v9244 = vsel %vm5207, %v9116, %v3383
      %v9245 = vsel %vm5207, %v9117, %v7764
      %v9246 = vsel %vm5207, %v9118, %v3385
      %v9247 = vsel %vm5207, %v9119, %v7766
      %v9248 = vsel %vm5207, %v9120, %v3387
      %v9249 = vsel %vm5207, %v9121, %v7768
      %v9250 = vsel %vm5207, %v9122, %v3389
      %v9251 = vsel %vm5207, %v9123, %v7770
      %v9252 = vsel %vm5207, %v9124, %v7772
      %v9253 = vsel %vm5207, %v9125, %v7774
      %v9254 = vsel %vm5207, %v9126, %v7776
      %v9255 = vsel %vm5207, %v9127, %v7778
      %v9256 = vsel %vm5207, %v9128, %v3395
      %v9257 = vsel %vm5207, %v9129, %v7780
      %v9258 = vsel %vm5207, %v9130, %v3397
      %v9259 = vsel %vm5207, %v9131, %v7782
      %v9260 = vsel %vm5207, %v9132, %v3399
      %v9261 = vsel %vm5207, %v9133, %v7784
      %v9262 = vsel %vm5207, %v9134, %v3401
      %v9263 = vsel %vm5207, %v9135, %v7786
      %v9264 = vsel %vm5207, %v9136, %v3403
      %v9265 = vsel %vm5207, %v9137, %v7788
      %v9266 = vsel %vm5207, %v9138, %v3405
      %v9267 = vsel %vm5207, %v9139, %v7790
      %v9268 = vsel %vm5207, %v9140, %v7792
      %v9269 = vsel %vm5207, %v9141, %v7794
      %v9270 = vsel %vm5207, %v9142, %v7796
      %v9271 = vsel %vm5207, %v9143, %v7798
      %v9272 = vsel %vm5207, %v9144, %v7800
      %v9273 = vsel %vm5207, %v9145, %v7802
      %v9274 = vsel %vm5207, %v9146, %v7804
      %v9275 = vsel %vm5207, %v9147, %v7806
      %v9276 = vsel %vm5207, %v9148, %v7808
      %v9277 = vsel %vm5207, %v9149, %v7810
      %v9278 = vsel %vm5207, %v9150, %v7812
      %v9279 = vsel %vm5207, %v9151, %v7814
      %v9280 = vsel %vm5207, %v9152, %v7816
      %v9281 = vsel %vm5207, %v9153, %v7818
      %v9282 = vsel %vm5207, %v9154, %v7820
      %v9283 = vsel %vm5207, %v9155, %v7822
      %v9284 = vsel %vm5207, %v9156, %v7824
      %v9285 = vsel %vm5207, %v9157, %v7826
      %v9286 = vsel %vm5207, %v9158, %v7828
      %v9287 = vsel %vm5207, %v9159, %v7830
      %v9288 = vsel %vm5272, %v9160, %v3523
      %v9289 = vsel %vm5272, %v9161, %v7921
      %v9290 = vsel %vm5272, %v9162, %v3525
      %v9291 = vsel %vm5272, %v9163, %v7923
      %v9292 = vsel %vm5272, %v9164, %v3527
      %v9293 = vsel %vm5272, %v9165, %v7925
      %v9294 = vsel %vm5272, %v9166, %v3529
      %v9295 = vsel %vm5272, %v9167, %v7927
      %v9296 = vsel %vm5272, %v9168, %v3531
      %v9297 = vsel %vm5272, %v9169, %v7929
      %v9298 = vsel %vm5272, %v9170, %v3533
      %v9299 = vsel %vm5272, %v9171, %v7931
      %v9300 = vsel %vm5272, %v9172, %v7933
      %v9301 = vsel %vm5272, %v9173, %v7935
      %v9302 = vsel %vm5272, %v9174, %v7937
      %v9303 = vsel %vm5272, %v9175, %v7939
      %v9304 = vsel %vm5272, %v9176, %v3539
      %v9305 = vsel %vm5272, %v9177, %v7941
      %v9306 = vsel %vm5272, %v9178, %v3541
      %v9307 = vsel %vm5272, %v9179, %v7943
      %v9308 = vsel %vm5272, %v9180, %v3543
      %v9309 = vsel %vm5272, %v9181, %v7945
      %v9310 = vsel %vm5272, %v9182, %v3545
      %v9311 = vsel %vm5272, %v9183, %v7947
      %v9312 = vsel %vm5272, %v9184, %v3547
      %v9313 = vsel %vm5272, %v9185, %v7949
      %v9314 = vsel %vm5272, %v9186, %v3549
      %v9315 = vsel %vm5272, %v9187, %v7951
      %v9316 = vsel %vm5272, %v9188, %v7953
      %v9317 = vsel %vm5272, %v9189, %v7955
      %v9318 = vsel %vm5272, %v9190, %v7957
      %v9319 = vsel %vm5272, %v9191, %v7959
      %v9320 = vsel %vm5272, %v9192, %v3555
      %v9321 = vsel %vm5272, %v9193, %v7961
      %v9322 = vsel %vm5272, %v9194, %v3557
      %v9323 = vsel %vm5272, %v9195, %v7963
      %v9324 = vsel %vm5272, %v9196, %v3559
      %v9325 = vsel %vm5272, %v9197, %v7965
      %v9326 = vsel %vm5272, %v9198, %v3561
      %v9327 = vsel %vm5272, %v9199, %v7967
      %v9328 = vsel %vm5272, %v9200, %v3563
      %v9329 = vsel %vm5272, %v9201, %v7969
      %v9330 = vsel %vm5272, %v9202, %v3565
      %v9331 = vsel %vm5272, %v9203, %v7971
      %v9332 = vsel %vm5272, %v9204, %v7973
      %v9333 = vsel %vm5272, %v9205, %v7975
      %v9334 = vsel %vm5272, %v9206, %v7977
      %v9335 = vsel %vm5272, %v9207, %v7979
      %v9336 = vsel %vm5272, %v9208, %v3571
      %v9337 = vsel %vm5272, %v9209, %v7981
      %v9338 = vsel %vm5272, %v9210, %v3573
      %v9339 = vsel %vm5272, %v9211, %v7983
      %v9340 = vsel %vm5272, %v9212, %v3575
      %v9341 = vsel %vm5272, %v9213, %v7985
      %v9342 = vsel %vm5272, %v9214, %v3577
      %v9343 = vsel %vm5272, %v9215, %v7987
      %v9344 = vsel %vm5272, %v9216, %v3579
      %v9345 = vsel %vm5272, %v9217, %v7989
      %v9346 = vsel %vm5272, %v9218, %v3581
      %v9347 = vsel %vm5272, %v9219, %v7991
      %v9348 = vsel %vm5272, %v9220, %v7993
      %v9349 = vsel %vm5272, %v9221, %v7995
      %v9350 = vsel %vm5272, %v9222, %v7997
      %v9351 = vsel %vm5272, %v9223, %v7999
      %v9352 = vsel %vm5272, %v9224, %v3587
      %v9353 = vsel %vm5272, %v9225, %v8001
      %v9354 = vsel %vm5272, %v9226, %v3589
      %v9355 = vsel %vm5272, %v9227, %v8003
      %v9356 = vsel %vm5272, %v9228, %v3591
      %v9357 = vsel %vm5272, %v9229, %v8005
      %v9358 = vsel %vm5272, %v9230, %v3593
      %v9359 = vsel %vm5272, %v9231, %v8007
      %v9360 = vsel %vm5272, %v9232, %v3595
      %v9361 = vsel %vm5272, %v9233, %v8009
      %v9362 = vsel %vm5272, %v9234, %v3597
      %v9363 = vsel %vm5272, %v9235, %v8011
      %v9364 = vsel %vm5272, %v9236, %v8013
      %v9365 = vsel %vm5272, %v9237, %v8015
      %v9366 = vsel %vm5272, %v9238, %v8017
      %v9367 = vsel %vm5272, %v9239, %v8019
      %v9368 = vsel %vm5272, %v9240, %v3603
      %v9369 = vsel %vm5272, %v9241, %v8021
      %v9370 = vsel %vm5272, %v9242, %v3605
      %v9371 = vsel %vm5272, %v9243, %v8023
      %v9372 = vsel %vm5272, %v9244, %v3607
      %v9373 = vsel %vm5272, %v9245, %v8025
      %v9374 = vsel %vm5272, %v9246, %v3609
      %v9375 = vsel %vm5272, %v9247, %v8027
      %v9376 = vsel %vm5272, %v9248, %v3611
      %v9377 = vsel %vm5272, %v9249, %v8029
      %v9378 = vsel %vm5272, %v9250, %v3613
      %v9379 = vsel %vm5272, %v9251, %v8031
      %v9380 = vsel %vm5272, %v9252, %v8033
      %v9381 = vsel %vm5272, %v9253, %v8035
      %v9382 = vsel %vm5272, %v9254, %v8037
      %v9383 = vsel %vm5272, %v9255, %v8039
      %v9384 = vsel %vm5272, %v9256, %v3619
      %v9385 = vsel %vm5272, %v9257, %v8041
      %v9386 = vsel %vm5272, %v9258, %v3621
      %v9387 = vsel %vm5272, %v9259, %v8043
      %v9388 = vsel %vm5272, %v9260, %v3623
      %v9389 = vsel %vm5272, %v9261, %v8045
      %v9390 = vsel %vm5272, %v9262, %v3625
      %v9391 = vsel %vm5272, %v9263, %v8047
      %v9392 = vsel %vm5272, %v9264, %v3627
      %v9393 = vsel %vm5272, %v9265, %v8049
      %v9394 = vsel %vm5272, %v9266, %v3629
      %v9395 = vsel %vm5272, %v9267, %v8051
      %v9396 = vsel %vm5272, %v9268, %v8053
      %v9397 = vsel %vm5272, %v9269, %v8055
      %v9398 = vsel %vm5272, %v9270, %v8057
      %v9399 = vsel %vm5272, %v9271, %v8059
      %v9400 = vsel %vm5272, %v9272, %v8061
      %v9401 = vsel %vm5272, %v9273, %v8063
      %v9402 = vsel %vm5272, %v9274, %v8065
      %v9403 = vsel %vm5272, %v9275, %v8067
      %v9404 = vsel %vm5272, %v9276, %v8069
      %v9405 = vsel %vm5272, %v9277, %v8071
      %v9406 = vsel %vm5272, %v9278, %v8073
      %v9407 = vsel %vm5272, %v9279, %v8075
      %v9408 = vsel %vm5272, %v9280, %v8077
      %v9409 = vsel %vm5272, %v9281, %v8079
      %v9410 = vsel %vm5272, %v9282, %v8081
      %v9411 = vsel %vm5272, %v9283, %v8083
      %v9412 = vsel %vm5272, %v9284, %v8085
      %v9413 = vsel %vm5272, %v9285, %v8087
      %v9414 = vsel %vm5272, %v9286, %v8089
      %v9415 = vsel %vm5272, %v9287, %v8091
      %v9416 = vsel %vm5337, %v9288, 0.0
      %v9417 = vsel %vm5337, %v9289, 0.0
      %v9418 = vsel %vm5337, %v9290, 0.0
      %v9419 = vsel %vm5337, %v9291, 0.0
      %v9420 = vsel %vm5337, %v9292, 0.0
      %v9421 = vsel %vm5337, %v9293, 0.0
      %v9422 = vsel %vm5337, %v9294, 0.0
      %v9423 = vsel %vm5337, %v9295, 0.0
      %v9424 = vsel %vm5337, %v9296, 0.0
      %v9425 = vsel %vm5337, %v9297, 0.0
      %v9426 = vsel %vm5337, %v9298, 0.0
      %v9427 = vsel %vm5337, %v9299, 0.0
      %v9428 = vsel %vm5337, %v9300, 0.0
      %v9429 = vsel %vm5337, %v9301, 0.0
      %v9430 = vsel %vm5337, %v9302, 0.0
      %v9431 = vsel %vm5337, %v9303, 0.0
      %v9432 = vsel %vm5337, %v9304, 0.0
      %v9433 = vsel %vm5337, %v9305, 0.0
      %v9434 = vsel %vm5337, %v9306, 0.0
      %v9435 = vsel %vm5337, %v9307, 0.0
      %v9436 = vsel %vm5337, %v9308, 0.0
      %v9437 = vsel %vm5337, %v9309, 0.0
      %v9438 = vsel %vm5337, %v9310, 0.0
      %v9439 = vsel %vm5337, %v9311, 0.0
      %v9440 = vsel %vm5337, %v9312, 0.0
      %v9441 = vsel %vm5337, %v9313, 0.0
      %v9442 = vsel %vm5337, %v9314, 0.0
      %v9443 = vsel %vm5337, %v9315, 0.0
      %v9444 = vsel %vm5337, %v9316, 0.0
      %v9445 = vsel %vm5337, %v9317, 0.0
      %v9446 = vsel %vm5337, %v9318, 0.0
      %v9447 = vsel %vm5337, %v9319, 0.0
      %v9448 = vsel %vm5337, %v9320, 0.0
      %v9449 = vsel %vm5337, %v9321, 0.0
      %v9450 = vsel %vm5337, %v9322, 0.0
      %v9451 = vsel %vm5337, %v9323, 0.0
      %v9452 = vsel %vm5337, %v9324, 0.0
      %v9453 = vsel %vm5337, %v9325, 0.0
      %v9454 = vsel %vm5337, %v9326, 0.0
      %v9455 = vsel %vm5337, %v9327, 0.0
      %v9456 = vsel %vm5337, %v9328, 0.0
      %v9457 = vsel %vm5337, %v9329, 0.0
      %v9458 = vsel %vm5337, %v9330, 0.0
      %v9459 = vsel %vm5337, %v9331, 0.0
      %v9460 = vsel %vm5337, %v9332, 0.0
      %v9461 = vsel %vm5337, %v9333, 0.0
      %v9462 = vsel %vm5337, %v9334, 0.0
      %v9463 = vsel %vm5337, %v9335, 0.0
      %v9464 = vsel %vm5337, %v9336, 0.0
      %v9465 = vsel %vm5337, %v9337, 0.0
      %v9466 = vsel %vm5337, %v9338, 0.0
      %v9467 = vsel %vm5337, %v9339, 0.0
      %v9468 = vsel %vm5337, %v9340, 0.0
      %v9469 = vsel %vm5337, %v9341, 0.0
      %v9470 = vsel %vm5337, %v9342, 0.0
      %v9471 = vsel %vm5337, %v9343, 0.0
      %v9472 = vsel %vm5337, %v9344, 0.0
      %v9473 = vsel %vm5337, %v9345, 0.0
      %v9474 = vsel %vm5337, %v9346, 0.0
      %v9475 = vsel %vm5337, %v9347, 0.0
      %v9476 = vsel %vm5337, %v9348, 0.0
      %v9477 = vsel %vm5337, %v9349, 0.0
      %v9478 = vsel %vm5337, %v9350, 0.0
      %v9479 = vsel %vm5337, %v9351, 0.0
      %v9480 = vsel %vm5337, %v9352, 0.0
      %v9481 = vsel %vm5337, %v9353, 0.0
      %v9482 = vsel %vm5337, %v9354, 0.0
      %v9483 = vsel %vm5337, %v9355, 0.0
      %v9484 = vsel %vm5337, %v9356, 0.0
      %v9485 = vsel %vm5337, %v9357, 0.0
      %v9486 = vsel %vm5337, %v9358, 0.0
      %v9487 = vsel %vm5337, %v9359, 0.0
      %v9488 = vsel %vm5337, %v9360, 0.0
      %v9489 = vsel %vm5337, %v9361, 0.0
      %v9490 = vsel %vm5337, %v9362, 0.0
      %v9491 = vsel %vm5337, %v9363, 0.0
      %v9492 = vsel %vm5337, %v9364, 0.0
      %v9493 = vsel %vm5337, %v9365, 0.0
      %v9494 = vsel %vm5337, %v9366, 0.0
      %v9495 = vsel %vm5337, %v9367, 0.0
      %v9496 = vsel %vm5337, %v9368, 0.0
      %v9497 = vsel %vm5337, %v9369, 0.0
      %v9498 = vsel %vm5337, %v9370, 0.0
      %v9499 = vsel %vm5337, %v9371, 0.0
      %v9500 = vsel %vm5337, %v9372, 0.0
      %v9501 = vsel %vm5337, %v9373, 0.0
      %v9502 = vsel %vm5337, %v9374, 0.0
      %v9503 = vsel %vm5337, %v9375, 0.0
      %v9504 = vsel %vm5337, %v9376, 0.0
      %v9505 = vsel %vm5337, %v9377, 0.0
      %v9506 = vsel %vm5337, %v9378, 0.0
      %v9507 = vsel %vm5337, %v9379, 0.0
      %v9508 = vsel %vm5337, %v9380, 0.0
      %v9509 = vsel %vm5337, %v9381, 0.0
      %v9510 = vsel %vm5337, %v9382, 0.0
      %v9511 = vsel %vm5337, %v9383, 0.0
      %v9512 = vsel %vm5337, %v9384, 0.0
      %v9513 = vsel %vm5337, %v9385, 0.0
      %v9514 = vsel %vm5337, %v9386, 0.0
      %v9515 = vsel %vm5337, %v9387, 0.0
      %v9516 = vsel %vm5337, %v9388, 0.0
      %v9517 = vsel %vm5337, %v9389, 0.0
      %v9518 = vsel %vm5337, %v9390, 0.0
      %v9519 = vsel %vm5337, %v9391, 0.0
      %v9520 = vsel %vm5337, %v9392, 0.0
      %v9521 = vsel %vm5337, %v9393, 0.0
      %v9522 = vsel %vm5337, %v9394, 0.0
      %v9523 = vsel %vm5337, %v9395, 0.0
      %v9524 = vsel %vm5337, %v9396, 0.0
      %v9525 = vsel %vm5337, %v9397, 0.0
      %v9526 = vsel %vm5337, %v9398, 0.0
      %v9527 = vsel %vm5337, %v9399, 0.0
      %v9528 = vsel %vm5337, %v9400, 0.0
      %v9529 = vsel %vm5337, %v9401, 0.0
      %v9530 = vsel %vm5337, %v9402, 0.0
      %v9531 = vsel %vm5337, %v9403, 0.0
      %v9532 = vsel %vm5337, %v9404, 0.0
      %v9533 = vsel %vm5337, %v9405, 0.0
      %v9534 = vsel %vm5337, %v9406, 0.0
      %v9535 = vsel %vm5337, %v9407, 0.0
      %v9536 = vsel %vm5337, %v9408, 0.0
      %v9537 = vsel %vm5337, %v9409, 0.0
      %v9538 = vsel %vm5337, %v9410, 0.0
      %v9539 = vsel %vm5337, %v9411, 0.0
      %v9540 = vsel %vm5337, %v9412, 0.0
      %v9541 = vsel %vm5337, %v9413, 0.0
      %v9542 = vsel %vm5337, %v9414, 0.0
      %v9543 = vsel %vm5337, %v9415, 0.0
      %v9672 = vrot.slane %v9416, 1
      %v9673 = vrot.slane %v9417, 1
      %v9674 = vsel %vm1220, %v9672, %v9673
      %v9675 = vrot.slane %v9418, 1
      %v9676 = vrot.slane %v9419, 1
      %v9677 = vsel %vm1220, %v9675, %v9676
      %v9678 = vrot.slane %v9420, 1
      %v9679 = vrot.slane %v9421, 1
      %v9680 = vsel %vm1220, %v9678, %v9679
      %v9681 = vrot.slane %v9422, 1
      %v9682 = vrot.slane %v9423, 1
      %v9683 = vsel %vm1220, %v9681, %v9682
      %v9684 = vrot.slane %v9424, 1
      %v9685 = vrot.slane %v9425, 1
      %v9686 = vsel %vm1220, %v9684, %v9685
      %v9687 = vrot.slane %v9426, 1
      %v9688 = vrot.slane %v9427, 1
      %v9689 = vsel %vm1220, %v9687, %v9688
      %v9690 = vrot.slane %v9428, 1
      %v9691 = vrot.slane %v9429, 1
      %v9692 = vsel %vm1220, %v9690, %v9691
      %v9693 = vrot.slane %v9430, 1
      %v9694 = vrot.slane %v9431, 1
      %v9695 = vsel %vm1220, %v9693, %v9694
      %v9696 = vrot.slane %v9432, 1
      %v9697 = vrot.slane %v9433, 1
      %v9698 = vsel %vm1220, %v9696, %v9697
      %v9699 = vrot.slane %v9434, 1
      %v9700 = vrot.slane %v9435, 1
      %v9701 = vsel %vm1220, %v9699, %v9700
      %v9702 = vrot.slane %v9436, 1
      %v9703 = vrot.slane %v9437, 1
      %v9704 = vsel %vm1220, %v9702, %v9703
      %v9705 = vrot.slane %v9438, 1
      %v9706 = vrot.slane %v9439, 1
      %v9707 = vsel %vm1220, %v9705, %v9706
      %v9708 = vrot.slane %v9440, 1
      %v9709 = vrot.slane %v9441, 1
      %v9710 = vsel %vm1220, %v9708, %v9709
      %v9711 = vrot.slane %v9442, 1
      %v9712 = vrot.slane %v9443, 1
      %v9713 = vsel %vm1220, %v9711, %v9712
      %v9714 = vrot.slane %v9444, 1
      %v9715 = vrot.slane %v9445, 1
      %v9716 = vsel %vm1220, %v9714, %v9715
      %v9717 = vrot.slane %v9446, 1
      %v9718 = vrot.slane %v9447, 1
      %v9719 = vsel %vm1220, %v9717, %v9718
      %v9720 = vrot.slane %v9448, 1
      %v9721 = vrot.slane %v9449, 1
      %v9722 = vsel %vm1220, %v9720, %v9721
      %v9723 = vrot.slane %v9450, 1
      %v9724 = vrot.slane %v9451, 1
      %v9725 = vsel %vm1220, %v9723, %v9724
      %v9726 = vrot.slane %v9452, 1
      %v9727 = vrot.slane %v9453, 1
      %v9728 = vsel %vm1220, %v9726, %v9727
      %v9729 = vrot.slane %v9454, 1
      %v9730 = vrot.slane %v9455, 1
      %v9731 = vsel %vm1220, %v9729, %v9730
      %v9732 = vrot.slane %v9456, 1
      %v9733 = vrot.slane %v9457, 1
      %v9734 = vsel %vm1220, %v9732, %v9733
      %v9735 = vrot.slane %v9458, 1
      %v9736 = vrot.slane %v9459, 1
      %v9737 = vsel %vm1220, %v9735, %v9736
      %v9738 = vrot.slane %v9460, 1
      %v9739 = vrot.slane %v9461, 1
      %v9740 = vsel %vm1220, %v9738, %v9739
      %v9741 = vrot.slane %v9462, 1
      %v9742 = vrot.slane %v9463, 1
      %v9743 = vsel %vm1220, %v9741, %v9742
      %v9744 = vrot.slane %v9464, 1
      %v9745 = vrot.slane %v9465, 1
      %v9746 = vsel %vm1220, %v9744, %v9745
      %v9747 = vrot.slane %v9466, 1
      %v9748 = vrot.slane %v9467, 1
      %v9749 = vsel %vm1220, %v9747, %v9748
      %v9750 = vrot.slane %v9468, 1
      %v9751 = vrot.slane %v9469, 1
      %v9752 = vsel %vm1220, %v9750, %v9751
      %v9753 = vrot.slane %v9470, 1
      %v9754 = vrot.slane %v9471, 1
      %v9755 = vsel %vm1220, %v9753, %v9754
      %v9756 = vrot.slane %v9472, 1
      %v9757 = vrot.slane %v9473, 1
      %v9758 = vsel %vm1220, %v9756, %v9757
      %v9759 = vrot.slane %v9474, 1
      %v9760 = vrot.slane %v9475, 1
      %v9761 = vsel %vm1220, %v9759, %v9760
      %v9762 = vrot.slane %v9476, 1
      %v9763 = vrot.slane %v9477, 1
      %v9764 = vsel %vm1220, %v9762, %v9763
      %v9765 = vrot.slane %v9478, 1
      %v9766 = vrot.slane %v9479, 1
      %v9767 = vsel %vm1220, %v9765, %v9766
      %v9768 = vrot.slane %v9480, 1
      %v9769 = vrot.slane %v9481, 1
      %v9770 = vsel %vm1220, %v9768, %v9769
      %v9771 = vrot.slane %v9482, 1
      %v9772 = vrot.slane %v9483, 1
      %v9773 = vsel %vm1220, %v9771, %v9772
      %v9774 = vrot.slane %v9484, 1
      %v9775 = vrot.slane %v9485, 1
      %v9776 = vsel %vm1220, %v9774, %v9775
      %v9777 = vrot.slane %v9486, 1
      %v9778 = vrot.slane %v9487, 1
      %v9779 = vsel %vm1220, %v9777, %v9778
      %v9780 = vrot.slane %v9488, 1
      %v9781 = vrot.slane %v9489, 1
      %v9782 = vsel %vm1220, %v9780, %v9781
      %v9783 = vrot.slane %v9490, 1
      %v9784 = vrot.slane %v9491, 1
      %v9785 = vsel %vm1220, %v9783, %v9784
      %v9786 = vrot.slane %v9492, 1
      %v9787 = vrot.slane %v9493, 1
      %v9788 = vsel %vm1220, %v9786, %v9787
      %v9789 = vrot.slane %v9494, 1
      %v9790 = vrot.slane %v9495, 1
      %v9791 = vsel %vm1220, %v9789, %v9790
      %v9792 = vrot.slane %v9496, 1
      %v9793 = vrot.slane %v9497, 1
      %v9794 = vsel %vm1220, %v9792, %v9793
      %v9795 = vrot.slane %v9498, 1
      %v9796 = vrot.slane %v9499, 1
      %v9797 = vsel %vm1220, %v9795, %v9796
      %v9798 = vrot.slane %v9500, 1
      %v9799 = vrot.slane %v9501, 1
      %v9800 = vsel %vm1220, %v9798, %v9799
      %v9801 = vrot.slane %v9502, 1
      %v9802 = vrot.slane %v9503, 1
      %v9803 = vsel %vm1220, %v9801, %v9802
      %v9804 = vrot.slane %v9504, 1
      %v9805 = vrot.slane %v9505, 1
      %v9806 = vsel %vm1220, %v9804, %v9805
      %v9807 = vrot.slane %v9506, 1
      %v9808 = vrot.slane %v9507, 1
      %v9809 = vsel %vm1220, %v9807, %v9808
      %v9810 = vrot.slane %v9508, 1
      %v9811 = vrot.slane %v9509, 1
      %v9812 = vsel %vm1220, %v9810, %v9811
      %v9813 = vrot.slane %v9510, 1
      %v9814 = vrot.slane %v9511, 1
      %v9815 = vsel %vm1220, %v9813, %v9814
      %v9816 = vrot.slane %v9512, 1
      %v9817 = vrot.slane %v9513, 1
      %v9818 = vsel %vm1220, %v9816, %v9817
      %v9819 = vrot.slane %v9514, 1
      %v9820 = vrot.slane %v9515, 1
      %v9821 = vsel %vm1220, %v9819, %v9820
      %v9822 = vrot.slane %v9516, 1
      %v9823 = vrot.slane %v9517, 1
      %v9824 = vsel %vm1220, %v9822, %v9823
      %v9825 = vrot.slane %v9518, 1
      %v9826 = vrot.slane %v9519, 1
      %v9827 = vsel %vm1220, %v9825, %v9826
      %v9828 = vrot.slane %v9520, 1
      %v9829 = vrot.slane %v9521, 1
      %v9830 = vsel %vm1220, %v9828, %v9829
      %v9831 = vrot.slane %v9522, 1
      %v9832 = vrot.slane %v9523, 1
      %v9833 = vsel %vm1220, %v9831, %v9832
      %v9834 = vrot.slane %v9524, 1
      %v9835 = vrot.slane %v9525, 1
      %v9836 = vsel %vm1220, %v9834, %v9835
      %v9837 = vrot.slane %v9526, 1
      %v9838 = vrot.slane %v9527, 1
      %v9839 = vsel %vm1220, %v9837, %v9838
      %v9840 = vrot.slane %v9528, 1
      %v9841 = vrot.slane %v9529, 1
      %v9842 = vsel %vm1220, %v9840, %v9841
      %v9843 = vrot.slane %v9530, 1
      %v9844 = vrot.slane %v9531, 1
      %v9845 = vsel %vm1220, %v9843, %v9844
      %v9846 = vrot.slane %v9532, 1
      %v9847 = vrot.slane %v9533, 1
      %v9848 = vsel %vm1220, %v9846, %v9847
      %v9849 = vrot.slane %v9534, 1
      %v9850 = vrot.slane %v9535, 1
      %v9851 = vsel %vm1220, %v9849, %v9850
      %v9852 = vrot.slane %v9536, 1
      %v9853 = vrot.slane %v9537, 1
      %v9854 = vsel %vm1220, %v9852, %v9853
      %v9855 = vrot.slane %v9538, 1
      %v9856 = vrot.slane %v9539, 1
      %v9857 = vsel %vm1220, %v9855, %v9856
      %v9858 = vrot.slane %v9540, 1
      %v9859 = vrot.slane %v9541, 1
      %v9860 = vsel %vm1220, %v9858, %v9859
      %v9861 = vrot.slane %v9542, 1
      %v9862 = vrot.slane %v9543, 1
      %v9863 = vsel %vm1220, %v9861, %v9862
      %9864 = vrot.lane.b32.xlu0 %v9674, 64
      %v9865 = vpop.permute.xlu0 %9864
      %9866 = vrot.lane.b32.xlu0 %v9677, 64
      %v9867 = vpop.permute.xlu0 %9866
      %9868 = vrot.lane.b32.xlu0 %v9680, 64
      %v9869 = vpop.permute.xlu0 %9868
      %9870 = vrot.lane.b32.xlu0 %v9683, 64
      %v9871 = vpop.permute.xlu0 %9870
      %9872 = vrot.lane.b32.xlu0 %v9686, 64
      %v9873 = vpop.permute.xlu0 %9872
      %9874 = vrot.lane.b32.xlu0 %v9689, 64
      %v9875 = vpop.permute.xlu0 %9874
      %9876 = vrot.lane.b32.xlu0 %v9692, 64
      %v9877 = vpop.permute.xlu0 %9876
      %9878 = vrot.lane.b32.xlu0 %v9695, 64
      %v9879 = vpop.permute.xlu0 %9878
      %9880 = vrot.lane.b32.xlu0 %v9698, 64
      %v9881 = vpop.permute.xlu0 %9880
      %9882 = vrot.lane.b32.xlu0 %v9701, 64
      %v9883 = vpop.permute.xlu0 %9882
      %9884 = vrot.lane.b32.xlu0 %v9704, 64
      %v9885 = vpop.permute.xlu0 %9884
      %9886 = vrot.lane.b32.xlu0 %v9707, 64
      %v9887 = vpop.permute.xlu0 %9886
      %9888 = vrot.lane.b32.xlu0 %v9710, 64
      %v9889 = vpop.permute.xlu0 %9888
      %9890 = vrot.lane.b32.xlu0 %v9713, 64
      %v9891 = vpop.permute.xlu0 %9890
      %9892 = vrot.lane.b32.xlu0 %v9716, 64
      %v9893 = vpop.permute.xlu0 %9892
      %9894 = vrot.lane.b32.xlu0 %v9719, 64
      %v9895 = vpop.permute.xlu0 %9894
      %9896 = vrot.lane.b32.xlu0 %v9722, 64
      %v9897 = vpop.permute.xlu0 %9896
      %9898 = vrot.lane.b32.xlu0 %v9725, 64
      %v9899 = vpop.permute.xlu0 %9898
      %9900 = vrot.lane.b32.xlu0 %v9728, 64
      %v9901 = vpop.permute.xlu0 %9900
      %9902 = vrot.lane.b32.xlu0 %v9731, 64
      %v9903 = vpop.permute.xlu0 %9902
      %9904 = vrot.lane.b32.xlu0 %v9734, 64
      %v9905 = vpop.permute.xlu0 %9904
      %9906 = vrot.lane.b32.xlu0 %v9737, 64
      %v9907 = vpop.permute.xlu0 %9906
      %9908 = vrot.lane.b32.xlu0 %v9740, 64
      %v9909 = vpop.permute.xlu0 %9908
      %9910 = vrot.lane.b32.xlu0 %v9743, 64
      %v9911 = vpop.permute.xlu0 %9910
      %9912 = vrot.lane.b32.xlu0 %v9746, 64
      %v9913 = vpop.permute.xlu0 %9912
      %9914 = vrot.lane.b32.xlu0 %v9749, 64
      %v9915 = vpop.permute.xlu0 %9914
      %9916 = vrot.lane.b32.xlu0 %v9752, 64
      %v9917 = vpop.permute.xlu0 %9916
      %9918 = vrot.lane.b32.xlu0 %v9755, 64
      %v9919 = vpop.permute.xlu0 %9918
      %9920 = vrot.lane.b32.xlu0 %v9758, 64
      %v9921 = vpop.permute.xlu0 %9920
      %9922 = vrot.lane.b32.xlu0 %v9761, 64
      %v9923 = vpop.permute.xlu0 %9922
      %9924 = vrot.lane.b32.xlu0 %v9764, 64
      %v9925 = vpop.permute.xlu0 %9924
      %9926 = vrot.lane.b32.xlu0 %v9767, 64
      %v9927 = vpop.permute.xlu0 %9926
      %9928 = vrot.lane.b32.xlu0 %v9770, 64
      %v9929 = vpop.permute.xlu0 %9928
      %9930 = vrot.lane.b32.xlu0 %v9773, 64
      %v9931 = vpop.permute.xlu0 %9930
      %9932 = vrot.lane.b32.xlu0 %v9776, 64
      %v9933 = vpop.permute.xlu0 %9932
      %9934 = vrot.lane.b32.xlu0 %v9779, 64
      %v9935 = vpop.permute.xlu0 %9934
      %9936 = vrot.lane.b32.xlu0 %v9782, 64
      %v9937 = vpop.permute.xlu0 %9936
      %9938 = vrot.lane.b32.xlu0 %v9785, 64
      %v9939 = vpop.permute.xlu0 %9938
      %9940 = vrot.lane.b32.xlu0 %v9788, 64
      %v9941 = vpop.permute.xlu0 %9940
      %9942 = vrot.lane.b32.xlu0 %v9791, 64
      %v9943 = vpop.permute.xlu0 %9942
      %9944 = vrot.lane.b32.xlu0 %v9794, 64
      %v9945 = vpop.permute.xlu0 %9944
      %9946 = vrot.lane.b32.xlu0 %v9797, 64
      %v9947 = vpop.permute.xlu0 %9946
      %9948 = vrot.lane.b32.xlu0 %v9800, 64
      %v9949 = vpop.permute.xlu0 %9948
      %9950 = vrot.lane.b32.xlu0 %v9803, 64
      %v9951 = vpop.permute.xlu0 %9950
      %9952 = vrot.lane.b32.xlu0 %v9806, 64
      %v9953 = vpop.permute.xlu0 %9952
      %9954 = vrot.lane.b32.xlu0 %v9809, 64
      %v9955 = vpop.permute.xlu0 %9954
      %9956 = vrot.lane.b32.xlu0 %v9812, 64
      %v9957 = vpop.permute.xlu0 %9956
      %9958 = vrot.lane.b32.xlu0 %v9815, 64
      %v9959 = vpop.permute.xlu0 %9958
      %9960 = vrot.lane.b32.xlu0 %v9818, 64
      %v9961 = vpop.permute.xlu0 %9960
      %9962 = vrot.lane.b32.xlu0 %v9821, 64
      %v9963 = vpop.permute.xlu0 %9962
      %9964 = vrot.lane.b32.xlu0 %v9824, 64
      %v9965 = vpop.permute.xlu0 %9964
      %9966 = vrot.lane.b32.xlu0 %v9827, 64
      %v9967 = vpop.permute.xlu0 %9966
      %9968 = vrot.lane.b32.xlu0 %v9830, 64
      %v9969 = vpop.permute.xlu0 %9968
      %9970 = vrot.lane.b32.xlu0 %v9833, 64
      %v9971 = vpop.permute.xlu0 %9970
      %9972 = vrot.lane.b32.xlu0 %v9836, 64
      %v9973 = vpop.permute.xlu0 %9972
      %9974 = vrot.lane.b32.xlu0 %v9839, 64
      %v9975 = vpop.permute.xlu0 %9974
      %9976 = vrot.lane.b32.xlu0 %v9842, 64
      %v9977 = vpop.permute.xlu0 %9976
      %9978 = vrot.lane.b32.xlu0 %v9845, 64
      %v9979 = vpop.permute.xlu0 %9978
      %9980 = vrot.lane.b32.xlu0 %v9848, 64
      %v9981 = vpop.permute.xlu0 %9980
      %9982 = vrot.lane.b32.xlu0 %v9851, 64
      %v9983 = vpop.permute.xlu0 %9982
      %9984 = vrot.lane.b32.xlu0 %v9854, 64
      %v9985 = vpop.permute.xlu0 %9984
      %9986 = vrot.lane.b32.xlu0 %v9857, 64
      %v9987 = vpop.permute.xlu0 %9986
      %9988 = vrot.lane.b32.xlu0 %v9860, 64
      %v9989 = vpop.permute.xlu0 %9988
      %9990 = vrot.lane.b32.xlu0 %v9863, 64
      %v9991 = vpop.permute.xlu0 %9990
      %vm10056 = vcmask 523264
      %v10057 = vsel %vm10056, %v5598, %v9865
      %v10058 = vsel %vm10056, %v5599, %v9867
      %v10059 = vsel %vm10056, %v5600, %v9869
      %v10060 = vsel %vm10056, %v5601, %v9871
      %v10061 = vsel %vm10056, %v5602, %v9873
      %v10062 = vsel %vm10056, %v5603, %v9875
      %v10063 = vsel %vm10056, %v5604, %v9877
      %v10064 = vsel %vm10056, %v5605, %v9879
      %v10065 = vsel %vm10056, %v5606, %v9881
      %v10066 = vsel %vm10056, %v5607, %v9883
      %v10067 = vsel %vm10056, %v5608, %v9885
      %v10068 = vsel %vm10056, %v5609, %v9887
      %v10069 = vsel %vm10056, %v5610, %v9889
      %v10070 = vsel %vm10056, %v5611, %v9891
      %v10071 = vsel %vm10056, %v5612, %v9893
      %v10072 = vsel %vm10056, %v5613, %v9895
      %v10073 = vsel %vm10056, %v5614, %v9897
      %v10074 = vsel %vm10056, %v5615, %v9899
      %v10075 = vsel %vm10056, %v5616, %v9901
      %v10076 = vsel %vm10056, %v5617, %v9903
      %v10077 = vsel %vm10056, %v5618, %v9905
      %v10078 = vsel %vm10056, %v5619, %v9907
      %v10079 = vsel %vm10056, %v5620, %v9909
      %v10080 = vsel %vm10056, %v5621, %v9911
      %v10081 = vsel %vm10056, %v5622, %v9913
      %v10082 = vsel %vm10056, %v5623, %v9915
      %v10083 = vsel %vm10056, %v5624, %v9917
      %v10084 = vsel %vm10056, %v5625, %v9919
      %v10085 = vsel %vm10056, %v5626, %v9921
      %v10086 = vsel %vm10056, %v5627, %v9923
      %v10087 = vsel %vm10056, %v5628, %v9925
      %v10088 = vsel %vm10056, %v5629, %v9927
      %v10089 = vsel %vm10056, %v5630, %v9929
      %v10090 = vsel %vm10056, %v5631, %v9931
      %v10091 = vsel %vm10056, %v5632, %v9933
      %v10092 = vsel %vm10056, %v5633, %v9935
      %v10093 = vsel %vm10056, %v5634, %v9937
      %v10094 = vsel %vm10056, %v5635, %v9939
      %v10095 = vsel %vm10056, %v5636, %v9941
      %v10096 = vsel %vm10056, %v5637, %v9943
      %v10097 = vsel %vm10056, %v5638, %v9945
      %v10098 = vsel %vm10056, %v5639, %v9947
      %v10099 = vsel %vm10056, %v5640, %v9949
      %v10100 = vsel %vm10056, %v5641, %v9951
      %v10101 = vsel %vm10056, %v5642, %v9953
      %v10102 = vsel %vm10056, %v5643, %v9955
      %v10103 = vsel %vm10056, %v5644, %v9957
      %v10104 = vsel %vm10056, %v5645, %v9959
      %v10105 = vsel %vm10056, %v5646, %v9961
      %v10106 = vsel %vm10056, %v5647, %v9963
      %v10107 = vsel %vm10056, %v5648, %v9965
      %v10108 = vsel %vm10056, %v5649, %v9967
      %v10109 = vsel %vm10056, %v5650, %v9969
      %v10110 = vsel %vm10056, %v5651, %v9971
      %v10111 = vsel %vm10056, %v5652, %v9973
      %v10112 = vsel %vm10056, %v5653, %v9975
      %v10113 = vsel %vm10056, %v5654, %v9977
      %v10114 = vsel %vm10056, %v5655, %v9979
      %v10115 = vsel %vm10056, %v5656, %v9981
      %v10116 = vsel %vm10056, %v5657, %v9983
      %v10117 = vsel %vm10056, %v5658, %v9985
      %v10118 = vsel %vm10056, %v5659, %v9987
      %v10119 = vsel %vm10056, %v5660, %v9989
      %v10120 = vsel %vm10056, %v5661, %v9991
      %v10121 = vld [vmem:[%s10] sm:$0xff]
      %v10122 = vld [vmem:[%s10 + $0x8] sm:$0xff]
      %v10123 = vld [vmem:[%s10 + $0x10] sm:$0xff]
      %v10124 = vld [vmem:[%s10 + $0x18] sm:$0xff]
      %v10125 = vld [vmem:[%s10 + $0x20] sm:$0xff]
      %v10126 = vld [vmem:[%s10 + $0x28] sm:$0xff]
      %v10127 = vld [vmem:[%s10 + $0x30] sm:$0xff]
      %v10128 = vld [vmem:[%s10 + $0x38] sm:$0xff]
      %v10129 = vld [vmem:[%s10 + $0x40] sm:$0xff]
      %v10130 = vld [vmem:[%s10 + $0x48] sm:$0xff]
      %v10131 = vld [vmem:[%s10 + $0x50] sm:$0xff]
      %v10132 = vld [vmem:[%s10 + $0x58] sm:$0xff]
      %v10133 = vld [vmem:[%s10 + $0x60] sm:$0xff]
      %v10134 = vld [vmem:[%s10 + $0x68] sm:$0xff]
      %v10135 = vld [vmem:[%s10 + $0x70] sm:$0xff]
      %v10136 = vld [vmem:[%s10 + $0x78] sm:$0xff]
      %v10137 = vld [vmem:[%s11] sm:$0x1]
      %v10139 = vperm.slane %v10137, 0
      %10141 = vmatpush.msra.mxu0 %v10136
      %10142 = vmatpush.msra.mxu0 %v10135
      %10143 = vmatpush.msra.mxu0 %v10134
      %10144 = vmatpush.msra.mxu0 %v10133
      %10145 = vmatpush.msra.mxu0 %v10132
      %10146 = vmatpush.msra.mxu0 %v10131
      %10147 = vmatpush.msra.mxu0 %v10130
      %10148 = vmatpush.msra.mxu0 %v10129
      %10149 = vmatpush.msra.mxu0 %v10128
      %10150 = vmatpush.msra.mxu0 %v10127
      %10151 = vmatpush.msra.mxu0 %v10126
      %10152 = vmatpush.msra.mxu0 %v10125
      %10153 = vmatpush.msra.mxu0 %v10124
      %10154 = vmatpush.msra.mxu0 %v10123
      %10155 = vmatpush.msra.mxu0 %v10122
      %10156 = vmatpush.msra.mxu0 %v10121
      %10157 = vmatmul.f32.gmra.mxu0 %v10057
      %v10158 = vpop.f32.mrf.mxu0
      %v10159 = vadd.f32 %v10139, %v10158
      %10160 = vmatmul.f32.gmra.mxu0 %v10058
      %v10161 = vpop.f32.mrf.mxu0
      %v10162 = vadd.f32 %v10139, %v10161
      %10163 = vmatmul.f32.gmra.mxu0 %v10059
      %v10164 = vpop.f32.mrf.mxu0
      %v10165 = vadd.f32 %v10139, %v10164
      %10166 = vmatmul.f32.gmra.mxu0 %v10060
      %v10167 = vpop.f32.mrf.mxu0
      %v10168 = vadd.f32 %v10139, %v10167
      %10169 = vmatmul.f32.gmra.mxu0 %v10061
      %v10170 = vpop.f32.mrf.mxu0
      %v10171 = vadd.f32 %v10139, %v10170
      %10172 = vmatmul.f32.gmra.mxu0 %v10062
      %v10173 = vpop.f32.mrf.mxu0
      %v10174 = vadd.f32 %v10139, %v10173
      %10175 = vmatmul.f32.gmra.mxu0 %v10063
      %v10176 = vpop.f32.mrf.mxu0
      %v10177 = vadd.f32 %v10139, %v10176
      %10178 = vmatmul.f32.gmra.mxu0 %v10064
      %v10179 = vpop.f32.mrf.mxu0
      %v10180 = vadd.f32 %v10139, %v10179
      %10181 = vmatmul.f32.gmra.mxu0 %v10065
      %v10182 = vpop.f32.mrf.mxu0
      %v10183 = vadd.f32 %v10139, %v10182
      %10184 = vmatmul.f32.gmra.mxu0 %v10066
      %v10185 = vpop.f32.mrf.mxu0
      %v10186 = vadd.f32 %v10139, %v10185
      %10187 = vmatmul.f32.gmra.mxu0 %v10067
      %v10188 = vpop.f32.mrf.mxu0
      %v10189 = vadd.f32 %v10139, %v10188
      %10190 = vmatmul.f32.gmra.mxu0 %v10068
      %v10191 = vpop.f32.mrf.mxu0
      %v10192 = vadd.f32 %v10139, %v10191
      %10193 = vmatmul.f32.gmra.mxu0 %v10069
      %v10194 = vpop.f32.mrf.mxu0
      %v10195 = vadd.f32 %v10139, %v10194
      %10196 = vmatmul.f32.gmra.mxu0 %v10070
      %v10197 = vpop.f32.mrf.mxu0
      %v10198 = vadd.f32 %v10139, %v10197
      %10199 = vmatmul.f32.gmra.mxu0 %v10071
      %v10200 = vpop.f32.mrf.mxu0
      %v10201 = vadd.f32 %v10139, %v10200
      %10202 = vmatmul.f32.gmra.mxu0 %v10072
      %v10203 = vpop.f32.mrf.mxu0
      %v10204 = vadd.f32 %v10139, %v10203
      %10205 = vmatmul.f32.gmra.mxu0 %v10073
      %v10206 = vpop.f32.mrf.mxu0
      %v10207 = vadd.f32 %v10139, %v10206
      %10208 = vmatmul.f32.gmra.mxu0 %v10074
      %v10209 = vpop.f32.mrf.mxu0
      %v10210 = vadd.f32 %v10139, %v10209
      %10211 = vmatmul.f32.gmra.mxu0 %v10075
      %v10212 = vpop.f32.mrf.mxu0
      %v10213 = vadd.f32 %v10139, %v10212
      %10214 = vmatmul.f32.gmra.mxu0 %v10076
      %v10215 = vpop.f32.mrf.mxu0
      %v10216 = vadd.f32 %v10139, %v10215
      %10217 = vmatmul.f32.gmra.mxu0 %v10077
      %v10218 = vpop.f32.mrf.mxu0
      %v10219 = vadd.f32 %v10139, %v10218
      %10220 = vmatmul.f32.gmra.mxu0 %v10078
      %v10221 = vpop.f32.mrf.mxu0
      %v10222 = vadd.f32 %v10139, %v10221
      %10223 = vmatmul.f32.gmra.mxu0 %v10079
      %v10224 = vpop.f32.mrf.mxu0
      %v10225 = vadd.f32 %v10139, %v10224
      %10226 = vmatmul.f32.gmra.mxu0 %v10080
      %v10227 = vpop.f32.mrf.mxu0
      %v10228 = vadd.f32 %v10139, %v10227
      %10229 = vmatmul.f32.gmra.mxu0 %v10081
      %v10230 = vpop.f32.mrf.mxu0
      %v10231 = vadd.f32 %v10139, %v10230
      %10232 = vmatmul.f32.gmra.mxu0 %v10082
      %v10233 = vpop.f32.mrf.mxu0
      %v10234 = vadd.f32 %v10139, %v10233
      %10235 = vmatmul.f32.gmra.mxu0 %v10083
      %v10236 = vpop.f32.mrf.mxu0
      %v10237 = vadd.f32 %v10139, %v10236
      %10238 = vmatmul.f32.gmra.mxu0 %v10084
      %v10239 = vpop.f32.mrf.mxu0
      %v10240 = vadd.f32 %v10139, %v10239
      %10241 = vmatmul.f32.gmra.mxu0 %v10085
      %v10242 = vpop.f32.mrf.mxu0
      %v10243 = vadd.f32 %v10139, %v10242
      %10244 = vmatmul.f32.gmra.mxu0 %v10086
      %v10245 = vpop.f32.mrf.mxu0
      %v10246 = vadd.f32 %v10139, %v10245
      %10247 = vmatmul.f32.gmra.mxu0 %v10087
      %v10248 = vpop.f32.mrf.mxu0
      %v10249 = vadd.f32 %v10139, %v10248
      %10250 = vmatmul.f32.gmra.mxu0 %v10088
      %v10251 = vpop.f32.mrf.mxu0
      %v10252 = vadd.f32 %v10139, %v10251
      %10253 = vmatmul.f32.gmra.mxu0 %v10089
      %v10254 = vpop.f32.mrf.mxu0
      %v10255 = vadd.f32 %v10139, %v10254
      %10256 = vmatmul.f32.gmra.mxu0 %v10090
      %v10257 = vpop.f32.mrf.mxu0
      %v10258 = vadd.f32 %v10139, %v10257
      %10259 = vmatmul.f32.gmra.mxu0 %v10091
      %v10260 = vpop.f32.mrf.mxu0
      %v10261 = vadd.f32 %v10139, %v10260
      %10262 = vmatmul.f32.gmra.mxu0 %v10092
      %v10263 = vpop.f32.mrf.mxu0
      %v10264 = vadd.f32 %v10139, %v10263
      %10265 = vmatmul.f32.gmra.mxu0 %v10093
      %v10266 = vpop.f32.mrf.mxu0
      %v10267 = vadd.f32 %v10139, %v10266
      %10268 = vmatmul.f32.gmra.mxu0 %v10094
      %v10269 = vpop.f32.mrf.mxu0
      %v10270 = vadd.f32 %v10139, %v10269
      %10271 = vmatmul.f32.gmra.mxu0 %v10095
      %v10272 = vpop.f32.mrf.mxu0
      %v10273 = vadd.f32 %v10139, %v10272
      %10274 = vmatmul.f32.gmra.mxu0 %v10096
      %v10275 = vpop.f32.mrf.mxu0
      %v10276 = vadd.f32 %v10139, %v10275
      %10277 = vmatmul.f32.gmra.mxu0 %v10097
      %v10278 = vpop.f32.mrf.mxu0
      %v10279 = vadd.f32 %v10139, %v10278
      %10280 = vmatmul.f32.gmra.mxu0 %v10098
      %v10281 = vpop.f32.mrf.mxu0
      %v10282 = vadd.f32 %v10139, %v10281
      %10283 = vmatmul.f32.gmra.mxu0 %v10099
      %v10284 = vpop.f32.mrf.mxu0
      %v10285 = vadd.f32 %v10139, %v10284
      %10286 = vmatmul.f32.gmra.mxu0 %v10100
      %v10287 = vpop.f32.mrf.mxu0
      %v10288 = vadd.f32 %v10139, %v10287
      %10289 = vmatmul.f32.gmra.mxu0 %v10101
      %v10290 = vpop.f32.mrf.mxu0
      %v10291 = vadd.f32 %v10139, %v10290
      %10292 = vmatmul.f32.gmra.mxu0 %v10102
      %v10293 = vpop.f32.mrf.mxu0
      %v10294 = vadd.f32 %v10139, %v10293
      %10295 = vmatmul.f32.gmra.mxu0 %v10103
      %v10296 = vpop.f32.mrf.mxu0
      %v10297 = vadd.f32 %v10139, %v10296
      %10298 = vmatmul.f32.gmra.mxu0 %v10104
      %v10299 = vpop.f32.mrf.mxu0
      %v10300 = vadd.f32 %v10139, %v10299
      %10301 = vmatmul.f32.gmra.mxu0 %v10105
      %v10302 = vpop.f32.mrf.mxu0
      %v10303 = vadd.f32 %v10139, %v10302
      %10304 = vmatmul.f32.gmra.mxu0 %v10106
      %v10305 = vpop.f32.mrf.mxu0
      %v10306 = vadd.f32 %v10139, %v10305
      %10307 = vmatmul.f32.gmra.mxu0 %v10107
      %v10308 = vpop.f32.mrf.mxu0
      %v10309 = vadd.f32 %v10139, %v10308
      %10310 = vmatmul.f32.gmra.mxu0 %v10108
      %v10311 = vpop.f32.mrf.mxu0
      %v10312 = vadd.f32 %v10139, %v10311
      %10313 = vmatmul.f32.gmra.mxu0 %v10109
      %v10314 = vpop.f32.mrf.mxu0
      %v10315 = vadd.f32 %v10139, %v10314
      %10316 = vmatmul.f32.gmra.mxu0 %v10110
      %v10317 = vpop.f32.mrf.mxu0
      %v10318 = vadd.f32 %v10139, %v10317
      %10319 = vmatmul.f32.gmra.mxu0 %v10111
      %v10320 = vpop.f32.mrf.mxu0
      %v10321 = vadd.f32 %v10139, %v10320
      %10322 = vmatmul.f32.gmra.mxu0 %v10112
      %v10323 = vpop.f32.mrf.mxu0
      %v10324 = vadd.f32 %v10139, %v10323
      %10325 = vmatmul.f32.gmra.mxu0 %v10113
      %v10326 = vpop.f32.mrf.mxu0
      %v10327 = vadd.f32 %v10139, %v10326
      %10328 = vmatmul.f32.gmra.mxu0 %v10114
      %v10329 = vpop.f32.mrf.mxu0
      %v10330 = vadd.f32 %v10139, %v10329
      %10331 = vmatmul.f32.gmra.mxu0 %v10115
      %v10332 = vpop.f32.mrf.mxu0
      %v10333 = vadd.f32 %v10139, %v10332
      %10334 = vmatmul.f32.gmra.mxu0 %v10116
      %v10335 = vpop.f32.mrf.mxu0
      %v10336 = vadd.f32 %v10139, %v10335
      %10337 = vmatmul.f32.gmra.mxu0 %v10117
      %v10338 = vpop.f32.mrf.mxu0
      %v10339 = vadd.f32 %v10139, %v10338
      %10340 = vmatmul.f32.gmra.mxu0 %v10118
      %v10341 = vpop.f32.mrf.mxu0
      %v10342 = vadd.f32 %v10139, %v10341
      %10343 = vmatmul.f32.gmra.mxu0 %v10119
      %v10344 = vpop.f32.mrf.mxu0
      %v10345 = vadd.f32 %v10139, %v10344
      %10346 = vmatmul.f32.gmra.mxu0 %v10120
      %v10347 = vpop.f32.mrf.mxu0
      %v10348 = vadd.f32 %v10139, %v10347
      %10349 = vdwg.mxu0
      %v10350 = vmax.f32 %v10159, 0.0
      %v10351 = vmax.f32 %v10162, 0.0
      %v10352 = vmax.f32 %v10165, 0.0
      %v10353 = vmax.f32 %v10168, 0.0
      %v10354 = vmax.f32 %v10171, 0.0
      %v10355 = vmax.f32 %v10174, 0.0
      %v10356 = vmax.f32 %v10177, 0.0
      %v10357 = vmax.f32 %v10180, 0.0
      %v10358 = vmax.f32 %v10183, 0.0
      %v10359 = vmax.f32 %v10186, 0.0
      %v10360 = vmax.f32 %v10189, 0.0
      %v10361 = vmax.f32 %v10192, 0.0
      %v10362 = vmax.f32 %v10195, 0.0
      %v10363 = vmax.f32 %v10198, 0.0
      %v10364 = vmax.f32 %v10201, 0.0
      %v10365 = vmax.f32 %v10204, 0.0
      %v10366 = vmax.f32 %v10207, 0.0
      %v10367 = vmax.f32 %v10210, 0.0
      %v10368 = vmax.f32 %v10213, 0.0
      %v10369 = vmax.f32 %v10216, 0.0
      %v10370 = vmax.f32 %v10219, 0.0
      %v10371 = vmax.f32 %v10222, 0.0
      %v10372 = vmax.f32 %v10225, 0.0
      %v10373 = vmax.f32 %v10228, 0.0
      %v10374 = vmax.f32 %v10231, 0.0
      %v10375 = vmax.f32 %v10234, 0.0
      %v10376 = vmax.f32 %v10237, 0.0
      %v10377 = vmax.f32 %v10240, 0.0
      %v10378 = vmax.f32 %v10243, 0.0
      %v10379 = vmax.f32 %v10246, 0.0
      %v10380 = vmax.f32 %v10249, 0.0
      %v10381 = vmax.f32 %v10252, 0.0
      %v10382 = vmax.f32 %v10255, 0.0
      %v10383 = vmax.f32 %v10258, 0.0
      %v10384 = vmax.f32 %v10261, 0.0
      %v10385 = vmax.f32 %v10264, 0.0
      %v10386 = vmax.f32 %v10267, 0.0
      %v10387 = vmax.f32 %v10270, 0.0
      %v10388 = vmax.f32 %v10273, 0.0
      %v10389 = vmax.f32 %v10276, 0.0
      %v10390 = vmax.f32 %v10279, 0.0
      %v10391 = vmax.f32 %v10282, 0.0
      %v10392 = vmax.f32 %v10285, 0.0
      %v10393 = vmax.f32 %v10288, 0.0
      %v10394 = vmax.f32 %v10291, 0.0
      %v10395 = vmax.f32 %v10294, 0.0
      %v10396 = vmax.f32 %v10297, 0.0
      %v10397 = vmax.f32 %v10300, 0.0
      %v10398 = vmax.f32 %v10303, 0.0
      %v10399 = vmax.f32 %v10306, 0.0
      %v10400 = vmax.f32 %v10309, 0.0
      %v10401 = vmax.f32 %v10312, 0.0
      %v10402 = vmax.f32 %v10315, 0.0
      %v10403 = vmax.f32 %v10318, 0.0
      %v10404 = vmax.f32 %v10321, 0.0
      %v10405 = vmax.f32 %v10324, 0.0
      %v10406 = vmax.f32 %v10327, 0.0
      %v10407 = vmax.f32 %v10330, 0.0
      %v10408 = vmax.f32 %v10333, 0.0
      %v10409 = vmax.f32 %v10336, 0.0
      %v10410 = vmax.f32 %v10339, 0.0
      %v10411 = vmax.f32 %v10342, 0.0
      %v10412 = vmax.f32 %v10345, 0.0
      %v10413 = vmax.f32 %v10348, 0.0
      %10414 = vst [vmem:[%s890] sm:$0xff] %v10350
      %10415 = vst [vmem:[%s890 + $0x8] sm:$0xff] %v10351
      %10416 = vst [vmem:[%s890 + $0x10] sm:$0xff] %v10352
      %10417 = vst [vmem:[%s890 + $0x18] sm:$0xff] %v10353
      %10418 = vst [vmem:[%s890 + $0x20] sm:$0xff] %v10354
      %10419 = vst [vmem:[%s890 + $0x28] sm:$0xff] %v10355
      %10420 = vst [vmem:[%s890 + $0x30] sm:$0xff] %v10356
      %10421 = vst [vmem:[%s890 + $0x38] sm:$0xff] %v10357
      %10422 = vst [vmem:[%s890 + $0x40] sm:$0xff] %v10358
      %10423 = vst [vmem:[%s890 + $0x48] sm:$0xff] %v10359
      %10424 = vst [vmem:[%s890 + $0x50] sm:$0xff] %v10360
      %10425 = vst [vmem:[%s890 + $0x58] sm:$0xff] %v10361
      %10426 = vst [vmem:[%s890 + $0x60] sm:$0xff] %v10362
      %10427 = vst [vmem:[%s890 + $0x68] sm:$0xff] %v10363
      %10428 = vst [vmem:[%s890 + $0x70] sm:$0xff] %v10364
      %10429 = vst [vmem:[%s890 + $0x78] sm:$0xff] %v10365
      %10430 = vst [vmem:[%s890 + $0x80] sm:$0xff] %v10366
      %10431 = vst [vmem:[%s890 + $0x88] sm:$0xff] %v10367
      %10432 = vst [vmem:[%s890 + $0x90] sm:$0xff] %v10368
      %10433 = vst [vmem:[%s890 + $0x98] sm:$0xff] %v10369
      %10434 = vst [vmem:[%s890 + $0xa0] sm:$0xff] %v10370
      %10435 = vst [vmem:[%s890 + $0xa8] sm:$0xff] %v10371
      %10436 = vst [vmem:[%s890 + $0xb0] sm:$0xff] %v10372
      %10437 = vst [vmem:[%s890 + $0xb8] sm:$0xff] %v10373
      %10438 = vst [vmem:[%s890 + $0xc0] sm:$0xff] %v10374
      %10439 = vst [vmem:[%s890 + $0xc8] sm:$0xff] %v10375
      %10440 = vst [vmem:[%s890 + $0xd0] sm:$0xff] %v10376
      %10441 = vst [vmem:[%s890 + $0xd8] sm:$0xff] %v10377
      %10442 = vst [vmem:[%s890 + $0xe0] sm:$0xff] %v10378
      %10443 = vst [vmem:[%s890 + $0xe8] sm:$0xff] %v10379
      %10444 = vst [vmem:[%s890 + $0xf0] sm:$0xff] %v10380
      %10445 = vst [vmem:[%s890 + $0xf8] sm:$0xff] %v10381
      %10446 = vst [vmem:[%s890 + $0x100] sm:$0xff] %v10382
      %10447 = vst [vmem:[%s890 + $0x108] sm:$0xff] %v10383
      %10448 = vst [vmem:[%s890 + $0x110] sm:$0xff] %v10384
      %10449 = vst [vmem:[%s890 + $0x118] sm:$0xff] %v10385
      %10450 = vst [vmem:[%s890 + $0x120] sm:$0xff] %v10386
      %10451 = vst [vmem:[%s890 + $0x128] sm:$0xff] %v10387
      %10452 = vst [vmem:[%s890 + $0x130] sm:$0xff] %v10388
      %10453 = vst [vmem:[%s890 + $0x138] sm:$0xff] %v10389
      %10454 = vst [vmem:[%s890 + $0x140] sm:$0xff] %v10390
      %10455 = vst [vmem:[%s890 + $0x148] sm:$0xff] %v10391
      %10456 = vst [vmem:[%s890 + $0x150] sm:$0xff] %v10392
      %10457 = vst [vmem:[%s890 + $0x158] sm:$0xff] %v10393
      %10458 = vst [vmem:[%s890 + $0x160] sm:$0xff] %v10394
      %10459 = vst [vmem:[%s890 + $0x168] sm:$0xff] %v10395
      %10460 = vst [vmem:[%s890 + $0x170] sm:$0xff] %v10396
      %10461 = vst [vmem:[%s890 + $0x178] sm:$0xff] %v10397
      %10462 = vst [vmem:[%s890 + $0x180] sm:$0xff] %v10398
      %10463 = vst [vmem:[%s890 + $0x188] sm:$0xff] %v10399
      %10464 = vst [vmem:[%s890 + $0x190] sm:$0xff] %v10400
      %10465 = vst [vmem:[%s890 + $0x198] sm:$0xff] %v10401
      %10466 = vst [vmem:[%s890 + $0x1a0] sm:$0xff] %v10402
      %10467 = vst [vmem:[%s890 + $0x1a8] sm:$0xff] %v10403
      %10468 = vst [vmem:[%s890 + $0x1b0] sm:$0xff] %v10404
      %10469 = vst [vmem:[%s890 + $0x1b8] sm:$0xff] %v10405
      %10470 = vst [vmem:[%s890 + $0x1c0] sm:$0xff] %v10406
      %10471 = vst [vmem:[%s890 + $0x1c8] sm:$0xff] %v10407
      %10472 = vst [vmem:[%s890 + $0x1d0] sm:$0xff] %v10408
      %10473 = vst [vmem:[%s890 + $0x1d8] sm:$0xff] %v10409
      %10474 = vst [vmem:[%s890 + $0x1e0] sm:$0xff] %v10410
      %10475 = vst [vmem:[%s890 + $0x1e8] sm:$0xff] %v10411
      %10476 = vst [vmem:[%s890 + $0x1f0] sm:$0xff] %v10412
      %10477 = vst [vmem:[%s890 + $0x1f8] sm:$0xff] %v10413
      %s10478 = smul.u32 8, %s28
      %p10479 = scmp.lt.s32.totalorder %s27, 1
      %s10480 = scalar_select %p10479, %s27, 1
      %p10481 = scmp.lt.s32.totalorder %s10478, 7
      %s10482 = scalar_select %p10481, %s10478, 7
      %s10483 = smul.addr %s10482, 8
      %s10484 = smul.addr %s10480, 64
      %s10485 = sadd.s32 %s10483, %s10484
      %s10486 = smul.addr %s10485, 8
      %s10487 = scalar_lea.vmem %s12, %s10486
      // Predicated region
      $region69: #{repvgg_block_pallas.1} parent=67 // pred_check
        %p10488 = pneg %p415
      $region70: #{repvgg_block_pallas.1} parent=67 // pred_check_branch
        %10490 = sbr.rel (%p10488) target = $region72
      $region71: #{repvgg_block_pallas.1} parent=67 // pred_region
        %s10491 = smul.u32 8, %s28
      $region72: #{repvgg_block_pallas.1} parent=67 // pred_fallthru
        _
    $region68: #{repvgg_block_pallas.1} parent=5 // pred_fallthru
      _
    %p10492 = scmp.le.s32.totalorder 2, %s18
    // Predicated region
    $region73: #{repvgg_block_pallas.1} parent=5 // pred_check
      %p10493 = pneg %p10492
    $region74: #{repvgg_block_pallas.1} parent=5 // pred_check_branch
      %10495 = sbr.rel (%p10493) target = $region76
    $region75: #{repvgg_block_pallas.1} parent=5 // pred_region
      %s10496 = ssub.s32 %s18, 2
      // Predicated region
      $region77: #{repvgg_block_pallas.1} parent=75 // pred_check
        %p10497 = pneg %p421
      $region78: #{repvgg_block_pallas.1} parent=75 // pred_check_branch
        %10499 = sbr.rel (%p10497) target = $region80
      $region79: #{repvgg_block_pallas.1} parent=75 // pred_region
        %s10500 = smul.u32 8, %s30
        %p10501 = scmp.lt.s32.totalorder %s29, 1
        %s10502 = scalar_select %p10501, %s29, 1
        %p10503 = scmp.lt.s32.totalorder %s10500, 7
        %s10504 = scalar_select %p10503, %s10500, 7
        %s10505 = smul.addr %s10504, 8
        %s10506 = smul.addr %s10502, 64
        %s10507 = sadd.s32 %s10505, %s10506
        %s10508 = smul.addr %s10507, 8
        %s10509 = scalar_lea.vmem %s12, %s10508
      $region80: #{repvgg_block_pallas.1} parent=75 // pred_fallthru
        _
    $region76: #{repvgg_block_pallas.1} parent=5 // pred_fallthru
      _
  $region6: #{repvgg_block_pallas.1} parent=0 // loop_footer
    %s22 = sadd.s32 1, %s18
  $region7: #{repvgg_block_pallas.1} parent=0 // loop_footer_branch
    %17 = sbr.rel target = $region3
  $region8: #{repvgg_block_pallas.1} parent=0 // loop_exit
    _

</llo_original>
